<compile_context>
chip_gen: v7x
topology: tpu7x:2x2x1
jax: 0.10.0
libtpu: 0.0.40
codegen_flags: <defaults>
</compile_context>

<pallas_src>
import functools

import jax
import jax.numpy as jnp
from jax.experimental import pallas as pl
from jax.experimental.pallas import tpu as pltpu


WPAD = 8           # left zero-halo of the conv2 padded buffer (sublane-tile aligned)
SLOT = 128         # lane width of one spatial-position slot in the fc1 im2col slab
NC_PAD = 128       # lane-dense slab width for the fc2 logits / softmax output


# ---------------------------------------------------------------------------
# Fused forward kernel: conv1+bn1+relu+pool -> conv2+bn2+relu+pool -> fc1+relu
#                       -> fc2 -> softmax, all VMEM-resident.
# ---------------------------------------------------------------------------
def eegcnn_fused_kernel(x_col_ref, w1_ref, b1_ref, w2_ref, b2_ref,
                        w3_ref, b3_ref, w4_ref, b4_ref,
                        o_ref, hpad_ref, fcin_ref, *, N, H, W):
    C1 = w1_ref.shape[-1]                  # 32
    C2 = w2_ref.shape[-1]                  # 64
    H2, W2 = H // 2, W // 2
    H4, W4 = H // 4, W // 4
    S = H4 * W4

    # ---- conv1 (BN folded) + ReLU: single im2col matmul, K = 9*Cin ----
    a1 = jnp.dot(x_col_ref[...], w1_ref[...], preferred_element_type=jnp.float32)
    a1 = jnp.maximum(a1 + b1_ref[...], 0.0)                             # (N*H*W, C1)

    # ---- 2x2 max pool, stride 2 (lane/channel axis untouched) ----
    a1 = jnp.max(a1.reshape(N * H, W2, 2, C1), axis=2)                  # (N*H, W2, C1)
    a1 = jnp.max(a1.reshape(N, H2, 2, W2, C1), axis=2)                  # (N, H2, W2, C1)

    # ---- conv2 (BN folded) + ReLU: halo-only zeroing, tap-wise bf16 matmuls ----
    WP2 = hpad_ref.shape[2]
    hpad_ref[:, 0:1, :, :] = jnp.zeros((N, 1, WP2, C1), jnp.float32)            # top row
    hpad_ref[:, H2 + 1:H2 + 2, :, :] = jnp.zeros((N, 1, WP2, C1), jnp.float32)  # bottom row
    hpad_ref[:, :, 0:WPAD, :] = jnp.zeros((N, H2 + 2, WPAD, C1), jnp.float32)   # left band
    hpad_ref[:, :, WPAD + W2:WPAD + W2 + 8, :] = jnp.zeros(
        (N, H2 + 2, 8, C1), jnp.float32)                                        # right band
    hpad_ref[:, 1:H2 + 1, WPAD:WPAD + W2, :] = a1                               # interior

    acc2 = jnp.zeros((N * H2 * W2, C2), jnp.float32)
    for dy in range(3):
        for dx in range(3):
            c0 = WPAD - 1 + dx
            tap = hpad_ref[:, dy:dy + H2, c0:c0 + W2, :]                # (N,H2,W2,C1)
            acc2 = acc2 + jnp.dot(
                tap.reshape(N * H2 * W2, C1).astype(jnp.bfloat16),
                w2_ref[dy, dx],
                preferred_element_type=jnp.float32)
    a2 = jnp.maximum(acc2 + b2_ref[...], 0.0)                           # (N*H2*W2, C2)

    # ---- 2x2 max pool, stride 2 ----
    a2 = jnp.max(a2.reshape(N * H2, W4, 2, C2), axis=2)                 # (N*H2, W4, C2)
    a2 = jnp.max(a2.reshape(N, H4, 2, W4, C2), axis=2)                  # (N, H4, W4, C2)

    # ---- fc1 + ReLU: scatter pooled maps into a lane-flat slab, ONE K = S*128 matmul.
    #      Slot offsets are multiples of 128 so the stores need no lane rotate; the
    #      padded lanes are zero on both the slab and the weight rows. ----
    fcin_ref[...] = jnp.zeros_like(fcin_ref)
    for s in range(S):
        hi, wi = s // W4, s % W4
        fcin_ref[:, s * SLOT:s * SLOT + C2] = a2[:, hi, wi, :]
    h = jnp.dot(fcin_ref[...].astype(jnp.bfloat16), w3_ref[...],
                preferred_element_type=jnp.float32)
    h = jnp.maximum(h + b3_ref[...], 0.0)                               # (N, 128)
    # TODO(synk): Dropout(p=0.1) implemented as identity (eval / inference mode).

    # ---- fc2 + softmax(dim=1) on a 128-lane slab (pad cols: weight 0, bias -1e30) ----
    logits = jnp.dot(h.astype(jnp.bfloat16), w4_ref[...],
                     preferred_element_type=jnp.float32) + b4_ref[...]
    m = jnp.max(logits, axis=-1, keepdims=True)
    e = jnp.exp(logits - m)
    denom = jnp.sum(e, axis=-1, keepdims=True)
    o_ref[...] = (e / denom).astype(o_ref.dtype)                        # lane-dense store


# ---------------------------------------------------------------------------
# Parameter init (deterministic, synthetic) — BN folded into conv (eval mode)
# ---------------------------------------------------------------------------
def init_params(key, in_channels, num_classes, height, width):
    ks = jax.random.split(key, 16)
    nrm = lambda k, s, sc: jax.random.normal(k, s, jnp.float32) * sc
    uni = lambda k, s, lo, hi: jax.random.uniform(k, s, jnp.float32, lo, hi)
    eps = 1e-5

    def folded_conv(kw, kb, kg, kbe, km, kv, cin, cout, scale):
        w = nrm(kw, (3, 3, cin, cout), scale)
        cb = nrm(kb, (cout,), 0.05)
        gamma = uni(kg, (cout,), 0.5, 1.5)
        beta = nrm(kbe, (cout,), 0.1)
        rmean = nrm(km, (cout,), 0.1)
        rvar = uni(kv, (cout,), 0.5, 1.5)
        s = gamma / jnp.sqrt(rvar + eps)
        return w * s, (cb - rmean) * s + beta

    conv1_w, conv1_b = folded_conv(*ks[0:6], in_channels, 32, 0.10)
    conv2_w, conv2_b = folded_conv(*ks[6:12], 32, 64, 0.05)

    flat = 64 * (height // 4) * (width // 4)
    fc1_w = nrm(ks[12], (flat, 128), 0.03)
    fc1_b = nrm(ks[13], (128,), 0.05)
    fc2_w = nrm(ks[14], (128, num_classes), 0.05)
    fc2_b = nrm(ks[15], (num_classes,), 0.05)

    return dict(conv1_w=conv1_w, conv1_b=conv1_b,
                conv2_w=conv2_w, conv2_b=conv2_b,
                fc1_w=fc1_w, fc1_b=fc1_b, fc2_w=fc2_w, fc2_b=fc2_b)


@jax.jit
def eegcnn_forward(x_nchw, params):
    N, Cin, H, W = x_nchw.shape
    assert H % 4 == 0 and W % 4 == 0
    H2, W2, H4, W4 = H // 2, W // 2, H // 4, W // 4
    C1 = params["conv1_w"].shape[-1]
    C2 = params["conv2_w"].shape[-1]
    Dh = params["fc1_w"].shape[1]
    NC = params["fc2_w"].shape[1]
    S = H4 * W4
    assert NC <= NC_PAD

    # NCHW -> NHWC, spatial zero-pad, and 3x3 im2col (tiny wrapper-side XLA prep).
    x = jnp.transpose(x_nchw, (0, 2, 3, 1))
    xp = jnp.pad(x, ((0, 0), (1, 1), (1, 1), (0, 0)))
    cols = [xp[:, dy:dy + H, dx:dx + W, :] for dy in range(3) for dx in range(3)]
    x_col = jnp.concatenate(cols, axis=-1).reshape(N * H * W, 9 * Cin).astype(jnp.bfloat16)

    # conv weights/biases (bf16 operands, f32 biases).
    w1 = params["conv1_w"].reshape(9 * Cin, C1).astype(jnp.bfloat16)   # (dy,dx,cin) order
    b1 = params["conv1_b"].reshape(1, C1)
    w2 = params["conv2_w"].astype(jnp.bfloat16)                        # (3,3,C1,C2)
    b2 = params["conv2_b"].reshape(1, C2)

    # fc1 weight: torch flattens NCHW as c*H4*W4 + h*W4 + w; re-order to per-position
    # 128-lane slots [(h*W4 + w)*128 + c] matching the kernel's fcin scatter layout,
    # zero-padding the unused 64 lanes of each slot.
    w3 = params["fc1_w"].reshape(C2, H4, W4, Dh).transpose(1, 2, 0, 3)  # (H4,W4,C2,Dh)
    w3 = jnp.pad(w3.reshape(S, C2, Dh), ((0, 0), (0, SLOT - C2), (0, 0)))
    w3 = w3.reshape(S * SLOT, Dh).astype(jnp.bfloat16)
    b3 = params["fc1_b"].reshape(1, Dh)

    # fc2: pad to a 128-lane slab (zero weights, -1e30 bias) for lane-dense softmax.
    w4 = jnp.pad(params["fc2_w"], ((0, 0), (0, NC_PAD - NC))).astype(jnp.bfloat16)
    b4 = jnp.pad(params["fc2_b"], (0, NC_PAD - NC),
                 constant_values=-1e30).reshape(1, NC_PAD)

    kernel = functools.partial(eegcnn_fused_kernel, N=N, H=H, W=W)
    probs_slab = pl.pallas_call(
        kernel,
        out_shape=jax.ShapeDtypeStruct((N, NC_PAD), jnp.float32),
        scratch_shapes=[
            pltpu.VMEM((N, H2 + 2, WPAD + W2 + 8, C1), jnp.float32),   # conv2 padded input
            pltpu.VMEM((N, S * SLOT), jnp.float32),                    # fc1 lane-flat slab
        ],
        compiler_params=pltpu.CompilerParams(vmem_limit_bytes=32 * 1024 * 1024),
    )(x_col, w1, b1, w2, b2, w3, b3, w4, b4)

    return probs_slab[:, :NC]


if __name__ == "__main__":
    key = jax.random.PRNGKey(0)
    k_param, k_x = jax.random.split(key)

    batch, in_channels, height, width, num_classes = 2, 4, 16, 16, 5
    params = init_params(k_param, in_channels, num_classes, height, width)
    x = jax.random.normal(k_x, (batch, in_channels, height, width), jnp.float32)

    out = eegcnn_forward(x, params)
    out = jax.block_until_ready(out)

    assert out.shape == (batch, num_classes)
    assert bool(jnp.all(jnp.isfinite(out)))
    assert bool(jnp.allclose(out.sum(axis=1), 1.0, atol=1e-4))
    print("KERNEL_OK")
</pallas_src>

<mosaic_0001>
module attributes {stable_mosaic.version = 11 : i64} {
  func.func @eegcnn_fused_kernel(%arg0: memref<512x36xbf16, #tpu.memory_space<vmem>>, %arg1: memref<36x32xbf16, #tpu.memory_space<vmem>>, %arg2: memref<1x32xf32, #tpu.memory_space<vmem>>, %arg3: memref<3x3x32x64xbf16, #tpu.memory_space<vmem>>, %arg4: memref<1x64xf32, #tpu.memory_space<vmem>>, %arg5: memref<2048x128xbf16, #tpu.memory_space<vmem>>, %arg6: memref<1x128xf32, #tpu.memory_space<vmem>>, %arg7: memref<128x128xbf16, #tpu.memory_space<vmem>>, %arg8: memref<1x128xf32, #tpu.memory_space<vmem>>, %arg9: memref<2x128xf32, #tpu.memory_space<vmem>>, %arg10: memref<2x10x24x32xf32, #tpu.memory_space<vmem>>, %arg11: memref<2x2048xf32, #tpu.memory_space<vmem>>) attributes {dimension_semantics = [], scalar_prefetch = 0 : i64, scratch_operands = 2 : i64, tpu.core_type = #tpu.core_type<tc>} {
    %c0 = arith.constant 0 : index
    %c0_0 = arith.constant 0 : index
    %0 = vector.load %arg0[%c0, %c0_0] : memref<512x36xbf16, #tpu.memory_space<vmem>>, vector<512x36xbf16>
    %c0_1 = arith.constant 0 : index
    %c0_2 = arith.constant 0 : index
    %1 = vector.load %arg1[%c0_1, %c0_2] : memref<36x32xbf16, #tpu.memory_space<vmem>>, vector<36x32xbf16>
    %cst = arith.constant dense<0.000000e+00> : vector<512x32xf32>
    %2 = tpu.matmul %0, %1, %cst {dimension_numbers = #tpu.dot_dimension_numbers<[1], [0], [0], [1], [0, 0, 1, 1], [], []>} : vector<512x36xbf16>, vector<36x32xbf16>, vector<512x32xf32> -> vector<512x32xf32>
    %c0_3 = arith.constant 0 : index
    %c0_4 = arith.constant 0 : index
    %3 = vector.load %arg2[%c0_3, %c0_4] : memref<1x32xf32, #tpu.memory_space<vmem>>, vector<1x32xf32>
    %4 = vector.broadcast %3 : vector<1x32xf32> to vector<512x32xf32>
    %5 = arith.addf %2, %4 : vector<512x32xf32>
    %cst_5 = arith.constant 0.000000e+00 : f32
    %6 = vector.broadcast %cst_5 : f32 to vector<512x32xf32>
    %7 = arith.maximumf %5, %6 : vector<512x32xf32>
    %8 = vector.shape_cast %7 : vector<512x32xf32> to vector<32x8x2x32xf32>
    %cst_6 = arith.constant dense<0xFF800000> : vector<32x8x32xf32>
    %9 = vector.multi_reduction <maximumf>, %8, %cst_6 [2] : vector<32x8x2x32xf32> to vector<32x8x32xf32>
    %10 = vector.shape_cast %9 : vector<32x8x32xf32> to vector<2x8x2x8x32xf32>
    %cst_7 = arith.constant dense<0xFF800000> : vector<2x8x8x32xf32>
    %11 = vector.multi_reduction <maximumf>, %10, %cst_7 [2] : vector<2x8x2x8x32xf32> to vector<2x8x8x32xf32>
    %cst_8 = arith.constant 0.000000e+00 : f32
    %12 = vector.broadcast %cst_8 : f32 to vector<2x1x24x32xf32>
    %c0_9 = arith.constant 0 : index
    %c0_10 = arith.constant 0 : index
    %c0_11 = arith.constant 0 : index
    %c0_12 = arith.constant 0 : index
    %13 = vector.load %arg10[%c0_9, %c0_10, %c0_11, %c0_12] : memref<2x10x24x32xf32, #tpu.memory_space<vmem>>, vector<2x1x24x32xf32>
    tpu.vector_store %arg10[%c0_9, %c0_10, %c0_11, %c0_12], %12 {strides = array<i32>} : memref<2x10x24x32xf32, #tpu.memory_space<vmem>>, vector<2x1x24x32xf32>,
    %cst_13 = arith.constant 0.000000e+00 : f32
    %14 = vector.broadcast %cst_13 : f32 to vector<2x1x24x32xf32>
    %c0_14 = arith.constant 0 : index
    %c9 = arith.constant 9 : index
    %c0_15 = arith.constant 0 : index
    %c0_16 = arith.constant 0 : index
    %15 = vector.load %arg10[%c0_14, %c9, %c0_15, %c0_16] : memref<2x10x24x32xf32, #tpu.memory_space<vmem>>, vector<2x1x24x32xf32>
    tpu.vector_store %arg10[%c0_14, %c9, %c0_15, %c0_16], %14 {strides = array<i32>} : memref<2x10x24x32xf32, #tpu.memory_space<vmem>>, vector<2x1x24x32xf32>,
    %cst_17 = arith.constant 0.000000e+00 : f32
    %16 = vector.broadcast %cst_17 : f32 to vector<2x10x8x32xf32>
    %c0_18 = arith.constant 0 : index
    %c0_19 = arith.constant 0 : index
    %c0_20 = arith.constant 0 : index
    %c0_21 = arith.constant 0 : index
    %17 = vector.load %arg10[%c0_18, %c0_19, %c0_20, %c0_21] : memref<2x10x24x32xf32, #tpu.memory_space<vmem>>, vector<2x10x8x32xf32>
    tpu.vector_store %arg10[%c0_18, %c0_19, %c0_20, %c0_21], %16 {strides = array<i32>} : memref<2x10x24x32xf32, #tpu.memory_space<vmem>>, vector<2x10x8x32xf32>,
    %cst_22 = arith.constant 0.000000e+00 : f32
    %18 = vector.broadcast %cst_22 : f32 to vector<2x10x8x32xf32>
    %c0_23 = arith.constant 0 : index
    %c0_24 = arith.constant 0 : index
    %c16 = arith.constant 16 : index
    %c0_25 = arith.constant 0 : index
    %19 = vector.load %arg10[%c0_23, %c0_24, %c16, %c0_25] : memref<2x10x24x32xf32, #tpu.memory_space<vmem>>, vector<2x10x8x32xf32>
    tpu.vector_store %arg10[%c0_23, %c0_24, %c16, %c0_25], %18 {strides = array<i32>} : memref<2x10x24x32xf32, #tpu.memory_space<vmem>>, vector<2x10x8x32xf32>,
    %c0_26 = arith.constant 0 : index
    %c1 = arith.constant 1 : index
    %c8 = arith.constant 8 : index
    %c0_27 = arith.constant 0 : index
    %20 = vector.load %arg10[%c0_26, %c1, %c8, %c0_27] : memref<2x10x24x32xf32, #tpu.memory_space<vmem>>, vector<2x8x8x32xf32>
    tpu.vector_store %arg10[%c0_26, %c1, %c8, %c0_27], %11 {strides = array<i32>} : memref<2x10x24x32xf32, #tpu.memory_space<vmem>>, vector<2x8x8x32xf32>,
    %cst_28 = arith.constant 0.000000e+00 : f32
    %21 = vector.broadcast %cst_28 : f32 to vector<128x64xf32>
    %c0_29 = arith.constant 0 : index
    %c0_30 = arith.constant 0 : index
    %c7 = arith.constant 7 : index
    %c0_31 = arith.constant 0 : index
    %22 = vector.load %arg10[%c0_29, %c0_30, %c7, %c0_31] : memref<2x10x24x32xf32, #tpu.memory_space<vmem>>, vector<2x8x8x32xf32>
    %23 = vector.shape_cast %22 : vector<2x8x8x32xf32> to vector<128x32xf32>
    %24 = arith.truncf %23 : vector<128x32xf32> to vector<128x32xbf16>
    %c0_32 = arith.constant 0 : index
    %c0_33 = arith.constant 0 : index
    %c0_34 = arith.constant 0 : index
    %c0_35 = arith.constant 0 : index
    %25 = vector.load %arg3[%c0_32, %c0_33, %c0_34, %c0_35] : memref<3x3x32x64xbf16, #tpu.memory_space<vmem>>, vector<1x1x32x64xbf16>
    %26 = vector.shape_cast %25 : vector<1x1x32x64xbf16> to vector<32x64xbf16>
    %cst_36 = arith.constant dense<0.000000e+00> : vector<128x64xf32>
    %27 = tpu.matmul %24, %26, %cst_36 {dimension_numbers = #tpu.dot_dimension_numbers<[1], [0], [0], [1], [0, 0, 1, 1], [], []>} : vector<128x32xbf16>, vector<32x64xbf16>, vector<128x64xf32> -> vector<128x64xf32>
    %28 = arith.addf %21, %27 : vector<128x64xf32>
    %c0_37 = arith.constant 0 : index
    %c0_38 = arith.constant 0 : index
    %c8_39 = arith.constant 8 : index
    %c0_40 = arith.constant 0 : index
    %29 = vector.load %arg10[%c0_37, %c0_38, %c8_39, %c0_40] : memref<2x10x24x32xf32, #tpu.memory_space<vmem>>, vector<2x8x8x32xf32>
    %30 = vector.shape_cast %29 : vector<2x8x8x32xf32> to vector<128x32xf32>
    %31 = arith.truncf %30 : vector<128x32xf32> to vector<128x32xbf16>
    %c0_41 = arith.constant 0 : index
    %c1_42 = arith.constant 1 : index
    %c0_43 = arith.constant 0 : index
    %c0_44 = arith.constant 0 : index
    %32 = vector.load %arg3[%c0_41, %c1_42, %c0_43, %c0_44] : memref<3x3x32x64xbf16, #tpu.memory_space<vmem>>, vector<1x1x32x64xbf16>
    %33 = vector.shape_cast %32 : vector<1x1x32x64xbf16> to vector<32x64xbf16>
    %cst_45 = arith.constant dense<0.000000e+00> : vector<128x64xf32>
    %34 = tpu.matmul %31, %33, %cst_45 {dimension_numbers = #tpu.dot_dimension_numbers<[1], [0], [0], [1], [0, 0, 1, 1], [], []>} : vector<128x32xbf16>, vector<32x64xbf16>, vector<128x64xf32> -> vector<128x64xf32>
    %35 = arith.addf %28, %34 : vector<128x64xf32>
    %c0_46 = arith.constant 0 : index
    %c0_47 = arith.constant 0 : index
    %c9_48 = arith.constant 9 : index
    %c0_49 = arith.constant 0 : index
    %36 = vector.load %arg10[%c0_46, %c0_47, %c9_48, %c0_49] : memref<2x10x24x32xf32, #tpu.memory_space<vmem>>, vector<2x8x8x32xf32>
    %37 = vector.shape_cast %36 : vector<2x8x8x32xf32> to vector<128x32xf32>
    %38 = arith.truncf %37 : vector<128x32xf32> to vector<128x32xbf16>
    %c0_50 = arith.constant 0 : index
    %c2 = arith.constant 2 : index
    %c0_51 = arith.constant 0 : index
    %c0_52 = arith.constant 0 : index
    %39 = vector.load %arg3[%c0_50, %c2, %c0_51, %c0_52] : memref<3x3x32x64xbf16, #tpu.memory_space<vmem>>, vector<1x1x32x64xbf16>
    %40 = vector.shape_cast %39 : vector<1x1x32x64xbf16> to vector<32x64xbf16>
    %cst_53 = arith.constant dense<0.000000e+00> : vector<128x64xf32>
    %41 = tpu.matmul %38, %40, %cst_53 {dimension_numbers = #tpu.dot_dimension_numbers<[1], [0], [0], [1], [0, 0, 1, 1], [], []>} : vector<128x32xbf16>, vector<32x64xbf16>, vector<128x64xf32> -> vector<128x64xf32>
    %42 = arith.addf %35, %41 : vector<128x64xf32>
    %c0_54 = arith.constant 0 : index
    %c1_55 = arith.constant 1 : index
    %c7_56 = arith.constant 7 : index
    %c0_57 = arith.constant 0 : index
    %43 = vector.load %arg10[%c0_54, %c1_55, %c7_56, %c0_57] : memref<2x10x24x32xf32, #tpu.memory_space<vmem>>, vector<2x8x8x32xf32>
    %44 = vector.shape_cast %43 : vector<2x8x8x32xf32> to vector<128x32xf32>
    %45 = arith.truncf %44 : vector<128x32xf32> to vector<128x32xbf16>
    %c1_58 = arith.constant 1 : index
    %c0_59 = arith.constant 0 : index
    %c0_60 = arith.constant 0 : index
    %c0_61 = arith.constant 0 : index
    %46 = vector.load %arg3[%c1_58, %c0_59, %c0_60, %c0_61] : memref<3x3x32x64xbf16, #tpu.memory_space<vmem>>, vector<1x1x32x64xbf16>
    %47 = vector.shape_cast %46 : vector<1x1x32x64xbf16> to vector<32x64xbf16>
    %cst_62 = arith.constant dense<0.000000e+00> : vector<128x64xf32>
    %48 = tpu.matmul %45, %47, %cst_62 {dimension_numbers = #tpu.dot_dimension_numbers<[1], [0], [0], [1], [0, 0, 1, 1], [], []>} : vector<128x32xbf16>, vector<32x64xbf16>, vector<128x64xf32> -> vector<128x64xf32>
    %49 = arith.addf %42, %48 : vector<128x64xf32>
    %c0_63 = arith.constant 0 : index
    %c1_64 = arith.constant 1 : index
    %c8_65 = arith.constant 8 : index
    %c0_66 = arith.constant 0 : index
    %50 = vector.load %arg10[%c0_63, %c1_64, %c8_65, %c0_66] : memref<2x10x24x32xf32, #tpu.memory_space<vmem>>, vector<2x8x8x32xf32>
    %51 = vector.shape_cast %50 : vector<2x8x8x32xf32> to vector<128x32xf32>
    %52 = arith.truncf %51 : vector<128x32xf32> to vector<128x32xbf16>
    %c1_67 = arith.constant 1 : index
    %c1_68 = arith.constant 1 : index
    %c0_69 = arith.constant 0 : index
    %c0_70 = arith.constant 0 : index
    %53 = vector.load %arg3[%c1_67, %c1_68, %c0_69, %c0_70] : memref<3x3x32x64xbf16, #tpu.memory_space<vmem>>, vector<1x1x32x64xbf16>
    %54 = vector.shape_cast %53 : vector<1x1x32x64xbf16> to vector<32x64xbf16>
    %cst_71 = arith.constant dense<0.000000e+00> : vector<128x64xf32>
    %55 = tpu.matmul %52, %54, %cst_71 {dimension_numbers = #tpu.dot_dimension_numbers<[1], [0], [0], [1], [0, 0, 1, 1], [], []>} : vector<128x32xbf16>, vector<32x64xbf16>, vector<128x64xf32> -> vector<128x64xf32>
    %56 = arith.addf %49, %55 : vector<128x64xf32>
    %c0_72 = arith.constant 0 : index
    %c1_73 = arith.constant 1 : index
    %c9_74 = arith.constant 9 : index
    %c0_75 = arith.constant 0 : index
    %57 = vector.load %arg10[%c0_72, %c1_73, %c9_74, %c0_75] : memref<2x10x24x32xf32, #tpu.memory_space<vmem>>, vector<2x8x8x32xf32>
    %58 = vector.shape_cast %57 : vector<2x8x8x32xf32> to vector<128x32xf32>
    %59 = arith.truncf %58 : vector<128x32xf32> to vector<128x32xbf16>
    %c1_76 = arith.constant 1 : index
    %c2_77 = arith.constant 2 : index
    %c0_78 = arith.constant 0 : index
    %c0_79 = arith.constant 0 : index
    %60 = vector.load %arg3[%c1_76, %c2_77, %c0_78, %c0_79] : memref<3x3x32x64xbf16, #tpu.memory_space<vmem>>, vector<1x1x32x64xbf16>
    %61 = vector.shape_cast %60 : vector<1x1x32x64xbf16> to vector<32x64xbf16>
    %cst_80 = arith.constant dense<0.000000e+00> : vector<128x64xf32>
    %62 = tpu.matmul %59, %61, %cst_80 {dimension_numbers = #tpu.dot_dimension_numbers<[1], [0], [0], [1], [0, 0, 1, 1], [], []>} : vector<128x32xbf16>, vector<32x64xbf16>, vector<128x64xf32> -> vector<128x64xf32>
    %63 = arith.addf %56, %62 : vector<128x64xf32>
    %c0_81 = arith.constant 0 : index
    %c2_82 = arith.constant 2 : index
    %c7_83 = arith.constant 7 : index
    %c0_84 = arith.constant 0 : index
    %64 = vector.load %arg10[%c0_81, %c2_82, %c7_83, %c0_84] : memref<2x10x24x32xf32, #tpu.memory_space<vmem>>, vector<2x8x8x32xf32>
    %65 = vector.shape_cast %64 : vector<2x8x8x32xf32> to vector<128x32xf32>
    %66 = arith.truncf %65 : vector<128x32xf32> to vector<128x32xbf16>
    %c2_85 = arith.constant 2 : index
    %c0_86 = arith.constant 0 : index
    %c0_87 = arith.constant 0 : index
    %c0_88 = arith.constant 0 : index
    %67 = vector.load %arg3[%c2_85, %c0_86, %c0_87, %c0_88] : memref<3x3x32x64xbf16, #tpu.memory_space<vmem>>, vector<1x1x32x64xbf16>
    %68 = vector.shape_cast %67 : vector<1x1x32x64xbf16> to vector<32x64xbf16>
    %cst_89 = arith.constant dense<0.000000e+00> : vector<128x64xf32>
    %69 = tpu.matmul %66, %68, %cst_89 {dimension_numbers = #tpu.dot_dimension_numbers<[1], [0], [0], [1], [0, 0, 1, 1], [], []>} : vector<128x32xbf16>, vector<32x64xbf16>, vector<128x64xf32> -> vector<128x64xf32>
    %70 = arith.addf %63, %69 : vector<128x64xf32>
    %c0_90 = arith.constant 0 : index
    %c2_91 = arith.constant 2 : index
    %c8_92 = arith.constant 8 : index
    %c0_93 = arith.constant 0 : index
    %71 = vector.load %arg10[%c0_90, %c2_91, %c8_92, %c0_93] : memref<2x10x24x32xf32, #tpu.memory_space<vmem>>, vector<2x8x8x32xf32>
    %72 = vector.shape_cast %71 : vector<2x8x8x32xf32> to vector<128x32xf32>
    %73 = arith.truncf %72 : vector<128x32xf32> to vector<128x32xbf16>
    %c2_94 = arith.constant 2 : index
    %c1_95 = arith.constant 1 : index
    %c0_96 = arith.constant 0 : index
    %c0_97 = arith.constant 0 : index
    %74 = vector.load %arg3[%c2_94, %c1_95, %c0_96, %c0_97] : memref<3x3x32x64xbf16, #tpu.memory_space<vmem>>, vector<1x1x32x64xbf16>
    %75 = vector.shape_cast %74 : vector<1x1x32x64xbf16> to vector<32x64xbf16>
    %cst_98 = arith.constant dense<0.000000e+00> : vector<128x64xf32>
    %76 = tpu.matmul %73, %75, %cst_98 {dimension_numbers = #tpu.dot_dimension_numbers<[1], [0], [0], [1], [0, 0, 1, 1], [], []>} : vector<128x32xbf16>, vector<32x64xbf16>, vector<128x64xf32> -> vector<128x64xf32>
    %77 = arith.addf %70, %76 : vector<128x64xf32>
    %c0_99 = arith.constant 0 : index
    %c2_100 = arith.constant 2 : index
    %c9_101 = arith.constant 9 : index
    %c0_102 = arith.constant 0 : index
    %78 = vector.load %arg10[%c0_99, %c2_100, %c9_101, %c0_102] : memref<2x10x24x32xf32, #tpu.memory_space<vmem>>, vector<2x8x8x32xf32>
    %79 = vector.shape_cast %78 : vector<2x8x8x32xf32> to vector<128x32xf32>
    %80 = arith.truncf %79 : vector<128x32xf32> to vector<128x32xbf16>
    %c2_103 = arith.constant 2 : index
    %c2_104 = arith.constant 2 : index
    %c0_105 = arith.constant 0 : index
    %c0_106 = arith.constant 0 : index
    %81 = vector.load %arg3[%c2_103, %c2_104, %c0_105, %c0_106] : memref<3x3x32x64xbf16, #tpu.memory_space<vmem>>, vector<1x1x32x64xbf16>
    %82 = vector.shape_cast %81 : vector<1x1x32x64xbf16> to vector<32x64xbf16>
    %cst_107 = arith.constant dense<0.000000e+00> : vector<128x64xf32>
    %83 = tpu.matmul %80, %82, %cst_107 {dimension_numbers = #tpu.dot_dimension_numbers<[1], [0], [0], [1], [0, 0, 1, 1], [], []>} : vector<128x32xbf16>, vector<32x64xbf16>, vector<128x64xf32> -> vector<128x64xf32>
    %84 = arith.addf %77, %83 : vector<128x64xf32>
    %c0_108 = arith.constant 0 : index
    %c0_109 = arith.constant 0 : index
    %85 = vector.load %arg4[%c0_108, %c0_109] : memref<1x64xf32, #tpu.memory_space<vmem>>, vector<1x64xf32>
    %86 = vector.broadcast %85 : vector<1x64xf32> to vector<128x64xf32>
    %87 = arith.addf %84, %86 : vector<128x64xf32>
    %cst_110 = arith.constant 0.000000e+00 : f32
    %88 = vector.broadcast %cst_110 : f32 to vector<128x64xf32>
    %89 = arith.maximumf %87, %88 : vector<128x64xf32>
    %90 = vector.shape_cast %89 : vector<128x64xf32> to vector<16x4x2x64xf32>
    %cst_111 = arith.constant dense<0xFF800000> : vector<16x4x64xf32>
    %91 = vector.multi_reduction <maximumf>, %90, %cst_111 [2] : vector<16x4x2x64xf32> to vector<16x4x64xf32>
    %92 = vector.shape_cast %91 : vector<16x4x64xf32> to vector<2x4x2x4x64xf32>
    %cst_112 = arith.constant dense<0xFF800000> : vector<2x4x4x64xf32>
    %93 = vector.multi_reduction <maximumf>, %92, %cst_112 [2] : vector<2x4x2x4x64xf32> to vector<2x4x4x64xf32>
    %cst_113 = arith.constant 0.000000e+00 : f32
    %94 = vector.broadcast %cst_113 : f32 to vector<2x2048xf32>
    %c0_114 = arith.constant 0 : index
    %c0_115 = arith.constant 0 : index
    %95 = vector.load %arg11[%c0_114, %c0_115] : memref<2x2048xf32, #tpu.memory_space<vmem>>, vector<2x2048xf32>
    tpu.vector_store %arg11[%c0_114, %c0_115], %94 {strides = array<i32>} : memref<2x2048xf32, #tpu.memory_space<vmem>>, vector<2x2048xf32>,
    %96 = vector.extract_strided_slice %93 {offsets = [0, 0, 0, 0], sizes = [2, 1, 1, 64], strides = [1, 1, 1, 1]} : vector<2x4x4x64xf32> to vector<2x1x1x64xf32>
    %97 = vector.shape_cast %96 : vector<2x1x1x64xf32> to vector<2x64xf32>
    %c0_116 = arith.constant 0 : index
    %c0_117 = arith.constant 0 : index
    %98 = vector.load %arg11[%c0_116, %c0_117] : memref<2x2048xf32, #tpu.memory_space<vmem>>, vector<2x64xf32>
    tpu.vector_store %arg11[%c0_116, %c0_117], %97 {strides = array<i32>} : memref<2x2048xf32, #tpu.memory_space<vmem>>, vector<2x64xf32>,
    %99 = vector.extract_strided_slice %93 {offsets = [0, 0, 1, 0], sizes = [2, 1, 1, 64], strides = [1, 1, 1, 1]} : vector<2x4x4x64xf32> to vector<2x1x1x64xf32>
    %100 = vector.shape_cast %99 : vector<2x1x1x64xf32> to vector<2x64xf32>
    %c0_118 = arith.constant 0 : index
    %c128 = arith.constant 128 : index
    %101 = vector.load %arg11[%c0_118, %c128] : memref<2x2048xf32, #tpu.memory_space<vmem>>, vector<2x64xf32>
    tpu.vector_store %arg11[%c0_118, %c128], %100 {strides = array<i32>} : memref<2x2048xf32, #tpu.memory_space<vmem>>, vector<2x64xf32>,
    %102 = vector.extract_strided_slice %93 {offsets = [0, 0, 2, 0], sizes = [2, 1, 1, 64], strides = [1, 1, 1, 1]} : vector<2x4x4x64xf32> to vector<2x1x1x64xf32>
    %103 = vector.shape_cast %102 : vector<2x1x1x64xf32> to vector<2x64xf32>
    %c0_119 = arith.constant 0 : index
    %c256 = arith.constant 256 : index
    %104 = vector.load %arg11[%c0_119, %c256] : memref<2x2048xf32, #tpu.memory_space<vmem>>, vector<2x64xf32>
    tpu.vector_store %arg11[%c0_119, %c256], %103 {strides = array<i32>} : memref<2x2048xf32, #tpu.memory_space<vmem>>, vector<2x64xf32>,
    %105 = vector.extract_strided_slice %93 {offsets = [0, 0, 3, 0], sizes = [2, 1, 1, 64], strides = [1, 1, 1, 1]} : vector<2x4x4x64xf32> to vector<2x1x1x64xf32>
    %106 = vector.shape_cast %105 : vector<2x1x1x64xf32> to vector<2x64xf32>
    %c0_120 = arith.constant 0 : index
    %c384 = arith.constant 384 : index
    %107 = vector.load %arg11[%c0_120, %c384] : memref<2x2048xf32, #tpu.memory_space<vmem>>, vector<2x64xf32>
    tpu.vector_store %arg11[%c0_120, %c384], %106 {strides = array<i32>} : memref<2x2048xf32, #tpu.memory_space<vmem>>, vector<2x64xf32>,
    %108 = vector.extract_strided_slice %93 {offsets = [0, 1, 0, 0], sizes = [2, 1, 1, 64], strides = [1, 1, 1, 1]} : vector<2x4x4x64xf32> to vector<2x1x1x64xf32>
    %109 = vector.shape_cast %108 : vector<2x1x1x64xf32> to vector<2x64xf32>
    %c0_121 = arith.constant 0 : index
    %c512 = arith.constant 512 : index
    %110 = vector.load %arg11[%c0_121, %c512] : memref<2x2048xf32, #tpu.memory_space<vmem>>, vector<2x64xf32>
    tpu.vector_store %arg11[%c0_121, %c512], %109 {strides = array<i32>} : memref<2x2048xf32, #tpu.memory_space<vmem>>, vector<2x64xf32>,
    %111 = vector.extract_strided_slice %93 {offsets = [0, 1, 1, 0], sizes = [2, 1, 1, 64], strides = [1, 1, 1, 1]} : vector<2x4x4x64xf32> to vector<2x1x1x64xf32>
    %112 = vector.shape_cast %111 : vector<2x1x1x64xf32> to vector<2x64xf32>
    %c0_122 = arith.constant 0 : index
    %c640 = arith.constant 640 : index
    %113 = vector.load %arg11[%c0_122, %c640] : memref<2x2048xf32, #tpu.memory_space<vmem>>, vector<2x64xf32>
    tpu.vector_store %arg11[%c0_122, %c640], %112 {strides = array<i32>} : memref<2x2048xf32, #tpu.memory_space<vmem>>, vector<2x64xf32>,
    %114 = vector.extract_strided_slice %93 {offsets = [0, 1, 2, 0], sizes = [2, 1, 1, 64], strides = [1, 1, 1, 1]} : vector<2x4x4x64xf32> to vector<2x1x1x64xf32>
    %115 = vector.shape_cast %114 : vector<2x1x1x64xf32> to vector<2x64xf32>
    %c0_123 = arith.constant 0 : index
    %c768 = arith.constant 768 : index
    %116 = vector.load %arg11[%c0_123, %c768] : memref<2x2048xf32, #tpu.memory_space<vmem>>, vector<2x64xf32>
    tpu.vector_store %arg11[%c0_123, %c768], %115 {strides = array<i32>} : memref<2x2048xf32, #tpu.memory_space<vmem>>, vector<2x64xf32>,
    %117 = vector.extract_strided_slice %93 {offsets = [0, 1, 3, 0], sizes = [2, 1, 1, 64], strides = [1, 1, 1, 1]} : vector<2x4x4x64xf32> to vector<2x1x1x64xf32>
    %118 = vector.shape_cast %117 : vector<2x1x1x64xf32> to vector<2x64xf32>
    %c0_124 = arith.constant 0 : index
    %c896 = arith.constant 896 : index
    %119 = vector.load %arg11[%c0_124, %c896] : memref<2x2048xf32, #tpu.memory_space<vmem>>, vector<2x64xf32>
    tpu.vector_store %arg11[%c0_124, %c896], %118 {strides = array<i32>} : memref<2x2048xf32, #tpu.memory_space<vmem>>, vector<2x64xf32>,
    %120 = vector.extract_strided_slice %93 {offsets = [0, 2, 0, 0], sizes = [2, 1, 1, 64], strides = [1, 1, 1, 1]} : vector<2x4x4x64xf32> to vector<2x1x1x64xf32>
    %121 = vector.shape_cast %120 : vector<2x1x1x64xf32> to vector<2x64xf32>
    %c0_125 = arith.constant 0 : index
    %c1024 = arith.constant 1024 : index
    %122 = vector.load %arg11[%c0_125, %c1024] : memref<2x2048xf32, #tpu.memory_space<vmem>>, vector<2x64xf32>
    tpu.vector_store %arg11[%c0_125, %c1024], %121 {strides = array<i32>} : memref<2x2048xf32, #tpu.memory_space<vmem>>, vector<2x64xf32>,
    %123 = vector.extract_strided_slice %93 {offsets = [0, 2, 1, 0], sizes = [2, 1, 1, 64], strides = [1, 1, 1, 1]} : vector<2x4x4x64xf32> to vector<2x1x1x64xf32>
    %124 = vector.shape_cast %123 : vector<2x1x1x64xf32> to vector<2x64xf32>
    %c0_126 = arith.constant 0 : index
    %c1152 = arith.constant 1152 : index
    %125 = vector.load %arg11[%c0_126, %c1152] : memref<2x2048xf32, #tpu.memory_space<vmem>>, vector<2x64xf32>
    tpu.vector_store %arg11[%c0_126, %c1152], %124 {strides = array<i32>} : memref<2x2048xf32, #tpu.memory_space<vmem>>, vector<2x64xf32>,
    %126 = vector.extract_strided_slice %93 {offsets = [0, 2, 2, 0], sizes = [2, 1, 1, 64], strides = [1, 1, 1, 1]} : vector<2x4x4x64xf32> to vector<2x1x1x64xf32>
    %127 = vector.shape_cast %126 : vector<2x1x1x64xf32> to vector<2x64xf32>
    %c0_127 = arith.constant 0 : index
    %c1280 = arith.constant 1280 : index
    %128 = vector.load %arg11[%c0_127, %c1280] : memref<2x2048xf32, #tpu.memory_space<vmem>>, vector<2x64xf32>
    tpu.vector_store %arg11[%c0_127, %c1280], %127 {strides = array<i32>} : memref<2x2048xf32, #tpu.memory_space<vmem>>, vector<2x64xf32>,
    %129 = vector.extract_strided_slice %93 {offsets = [0, 2, 3, 0], sizes = [2, 1, 1, 64], strides = [1, 1, 1, 1]} : vector<2x4x4x64xf32> to vector<2x1x1x64xf32>
    %130 = vector.shape_cast %129 : vector<2x1x1x64xf32> to vector<2x64xf32>
    %c0_128 = arith.constant 0 : index
    %c1408 = arith.constant 1408 : index
    %131 = vector.load %arg11[%c0_128, %c1408] : memref<2x2048xf32, #tpu.memory_space<vmem>>, vector<2x64xf32>
    tpu.vector_store %arg11[%c0_128, %c1408], %130 {strides = array<i32>} : memref<2x2048xf32, #tpu.memory_space<vmem>>, vector<2x64xf32>,
    %132 = vector.extract_strided_slice %93 {offsets = [0, 3, 0, 0], sizes = [2, 1, 1, 64], strides = [1, 1, 1, 1]} : vector<2x4x4x64xf32> to vector<2x1x1x64xf32>
    %133 = vector.shape_cast %132 : vector<2x1x1x64xf32> to vector<2x64xf32>
    %c0_129 = arith.constant 0 : index
    %c1536 = arith.constant 1536 : index
    %134 = vector.load %arg11[%c0_129, %c1536] : memref<2x2048xf32, #tpu.memory_space<vmem>>, vector<2x64xf32>
    tpu.vector_store %arg11[%c0_129, %c1536], %133 {strides = array<i32>} : memref<2x2048xf32, #tpu.memory_space<vmem>>, vector<2x64xf32>,
    %135 = vector.extract_strided_slice %93 {offsets = [0, 3, 1, 0], sizes = [2, 1, 1, 64], strides = [1, 1, 1, 1]} : vector<2x4x4x64xf32> to vector<2x1x1x64xf32>
    %136 = vector.shape_cast %135 : vector<2x1x1x64xf32> to vector<2x64xf32>
    %c0_130 = arith.constant 0 : index
    %c1664 = arith.constant 1664 : index
    %137 = vector.load %arg11[%c0_130, %c1664] : memref<2x2048xf32, #tpu.memory_space<vmem>>, vector<2x64xf32>
    tpu.vector_store %arg11[%c0_130, %c1664], %136 {strides = array<i32>} : memref<2x2048xf32, #tpu.memory_space<vmem>>, vector<2x64xf32>,
    %138 = vector.extract_strided_slice %93 {offsets = [0, 3, 2, 0], sizes = [2, 1, 1, 64], strides = [1, 1, 1, 1]} : vector<2x4x4x64xf32> to vector<2x1x1x64xf32>
    %139 = vector.shape_cast %138 : vector<2x1x1x64xf32> to vector<2x64xf32>
    %c0_131 = arith.constant 0 : index
    %c1792 = arith.constant 1792 : index
    %140 = vector.load %arg11[%c0_131, %c1792] : memref<2x2048xf32, #tpu.memory_space<vmem>>, vector<2x64xf32>
    tpu.vector_store %arg11[%c0_131, %c1792], %139 {strides = array<i32>} : memref<2x2048xf32, #tpu.memory_space<vmem>>, vector<2x64xf32>,
    %141 = vector.extract_strided_slice %93 {offsets = [0, 3, 3, 0], sizes = [2, 1, 1, 64], strides = [1, 1, 1, 1]} : vector<2x4x4x64xf32> to vector<2x1x1x64xf32>
    %142 = vector.shape_cast %141 : vector<2x1x1x64xf32> to vector<2x64xf32>
    %c0_132 = arith.constant 0 : index
    %c1920 = arith.constant 1920 : index
    %143 = vector.load %arg11[%c0_132, %c1920] : memref<2x2048xf32, #tpu.memory_space<vmem>>, vector<2x64xf32>
    tpu.vector_store %arg11[%c0_132, %c1920], %142 {strides = array<i32>} : memref<2x2048xf32, #tpu.memory_space<vmem>>, vector<2x64xf32>,
    %c0_133 = arith.constant 0 : index
    %c0_134 = arith.constant 0 : index
    %144 = vector.load %arg11[%c0_133, %c0_134] : memref<2x2048xf32, #tpu.memory_space<vmem>>, vector<2x2048xf32>
    %145 = arith.truncf %144 : vector<2x2048xf32> to vector<2x2048xbf16>
    %c0_135 = arith.constant 0 : index
    %c0_136 = arith.constant 0 : index
    %146 = vector.load %arg5[%c0_135, %c0_136] : memref<2048x128xbf16, #tpu.memory_space<vmem>>, vector<2048x128xbf16>
    %cst_137 = arith.constant dense<0.000000e+00> : vector<2x128xf32>
    %147 = tpu.matmul %145, %146, %cst_137 {dimension_numbers = #tpu.dot_dimension_numbers<[1], [0], [0], [1], [0, 0, 1, 1], [], []>} : vector<2x2048xbf16>, vector<2048x128xbf16>, vector<2x128xf32> -> vector<2x128xf32>
    %c0_138 = arith.constant 0 : index
    %c0_139 = arith.constant 0 : index
    %148 = vector.load %arg6[%c0_138, %c0_139] : memref<1x128xf32, #tpu.memory_space<vmem>>, vector<1x128xf32>
    %149 = vector.broadcast %148 : vector<1x128xf32> to vector<2x128xf32>
    %150 = arith.addf %147, %149 : vector<2x128xf32>
    %cst_140 = arith.constant 0.000000e+00 : f32
    %151 = vector.broadcast %cst_140 : f32 to vector<2x128xf32>
    %152 = arith.maximumf %150, %151 : vector<2x128xf32>
    %153 = arith.truncf %152 : vector<2x128xf32> to vector<2x128xbf16>
    %c0_141 = arith.constant 0 : index
    %c0_142 = arith.constant 0 : index
    %154 = vector.load %arg7[%c0_141, %c0_142] : memref<128x128xbf16, #tpu.memory_space<vmem>>, vector<128x128xbf16>
    %cst_143 = arith.constant dense<0.000000e+00> : vector<2x128xf32>
    %155 = tpu.matmul %153, %154, %cst_143 {dimension_numbers = #tpu.dot_dimension_numbers<[1], [0], [0], [1], [0, 0, 1, 1], [], []>} : vector<2x128xbf16>, vector<128x128xbf16>, vector<2x128xf32> -> vector<2x128xf32>
    %c0_144 = arith.constant 0 : index
    %c0_145 = arith.constant 0 : index
    %156 = vector.load %arg8[%c0_144, %c0_145] : memref<1x128xf32, #tpu.memory_space<vmem>>, vector<1x128xf32>
    %157 = vector.broadcast %156 : vector<1x128xf32> to vector<2x128xf32>
    %158 = arith.addf %155, %157 : vector<2x128xf32>
    %cst_146 = arith.constant dense<0xFF800000> : vector<2xf32>
    %159 = vector.multi_reduction <maximumf>, %158, %cst_146 [1] : vector<2x128xf32> to vector<2xf32>
    %160 = vector.shape_cast %159 : vector<2xf32> to vector<2x1xf32>
    %161 = vector.broadcast %160 : vector<2x1xf32> to vector<2x128xf32>
    %162 = arith.subf %158, %161 : vector<2x128xf32>
    %163 = math.exp %162 : vector<2x128xf32>
    %cst_147 = arith.constant dense<0.000000e+00> : vector<2xf32>
    %164 = vector.multi_reduction <add>, %163, %cst_147 [1] : vector<2x128xf32> to vector<2xf32>
    %165 = vector.shape_cast %164 : vector<2xf32> to vector<2x1xf32>
    %166 = vector.broadcast %165 : vector<2x1xf32> to vector<2x128xf32>
    %167 = arith.divf %163, %166 : vector<2x128xf32>
    %c0_148 = arith.constant 0 : index
    %c0_149 = arith.constant 0 : index
    %168 = vector.load %arg9[%c0_148, %c0_149] : memref<2x128xf32, #tpu.memory_space<vmem>>, vector<2x128xf32>
    tpu.vector_store %arg9[%c0_148, %c0_149], %167 {strides = array<i32>} : memref<2x128xf32, #tpu.memory_space<vmem>>, vector<2x128xf32>,
    return
  }
}

</mosaic_0001>

<llo_original>
// kernel: eegcnn_forward.1
$region0: #{eegcnn_forward.1}
  #allocation0 [shape = 'u32[]', space=smem, size = 0x4, offset = 0x4, fixed_abs, tag = 'smem constant byte address 0x4 - core index']
  #allocation1 [shape = 'u32[144,128]{1,0:T(1,128)}', space=vmem, size = 0x12000, scoped, tag = 'internal scratch']
  #allocation2 [shape = 'f32[2,10,24,32]{3,2,1,0:T(8,128)}', space=vmem, size = 0x3c000, scoped, tag = 'scratch operand']
  #allocation3 [shape = 'f32[2,2048]{1,0:T(2,128)}', space=vmem, size = 0x4000, scoped, tag = 'scratch operand']
  %s0 = inlined_call_operand.vmem [shape: bf16[512,36], index: 0, kind: input, shape index: {}]
  %s1 = inlined_call_operand.vmem [shape: bf16[36,32], index: 1, kind: input, shape index: {}]
  %s2 = inlined_call_operand.vmem [shape: f32[1,32], index: 2, kind: input, shape index: {}]
  %s3 = inlined_call_operand.vmem [shape: bf16[3,3,32,64], index: 3, kind: input, shape index: {}]
  %s4 = inlined_call_operand.vmem [shape: f32[1,64], index: 4, kind: input, shape index: {}]
  %s5 = inlined_call_operand.vmem [shape: bf16[2048,128], index: 5, kind: input, shape index: {}]
  %s6 = inlined_call_operand.vmem [shape: f32[1,128], index: 6, kind: input, shape index: {}]
  %s7 = inlined_call_operand.vmem [shape: bf16[128,128], index: 7, kind: input, shape index: {}]
  %s8 = inlined_call_operand.vmem [shape: f32[1,128], index: 8, kind: input, shape index: {}]
  %s9 = inlined_call_operand.hbm [shape: f32[2,128], index: 9, kind: output, shape index: {}]
  %s10 = sld [smem:[#allocation0]]
  $region46: #{eegcnn_forward.1} parent=0
    _
  %s12 = ssub.s32 1, %s10
  %s13 = scalar_select 0, %s12, %s10
  $region1: #{eegcnn_forward.1} parent=0
    #allocation4 [shape = 'u8[1024]{0}', space=vmem, size = 0x400, scoped, tag = 'output window, operand 0, single buffered']
    #allocation5 [shape = 's32[1]{0}', space=sflag, size = 0x4, scoped, tag = 'scoped memory for eegcnn_forward.1']
    %14 = vsyncpa [#allocation5], 0
    // Predicated region
    $region2: #{eegcnn_forward.1} parent=1 // pred_check
      _
    $region3: #{eegcnn_forward.1} parent=1 // pred_check_branch
      %16 = sbr.rel (0) target = $region5
    $region4: #{eegcnn_forward.1} parent=1 // pred_region
      _
    $region5: #{eegcnn_forward.1} parent=1 // pred_fallthru
      _
    // Predicated region
    $region6: #{eegcnn_forward.1} parent=1 // pred_check
      _
    $region7: #{eegcnn_forward.1} parent=1 // pred_check_branch
      %18 = sbr.rel (0) target = $region9
    $region8: #{eegcnn_forward.1} parent=1 // pred_region
      _
    $region9: #{eegcnn_forward.1} parent=1 // pred_fallthru
      _
    // Predicated region
    $region10: #{eegcnn_forward.1} parent=1 // pred_check
      _
    $region11: #{eegcnn_forward.1} parent=1 // pred_check_branch
      %20 = sbr.rel (0) target = $region13
    $region12: #{eegcnn_forward.1} parent=1 // pred_region
      _
    $region13: #{eegcnn_forward.1} parent=1 // pred_fallthru
      _
    // Predicated region
    $region14: #{eegcnn_forward.1} parent=1 // pred_check
      _
    $region15: #{eegcnn_forward.1} parent=1 // pred_check_branch
      %22 = sbr.rel (0) target = $region17
    $region16: #{eegcnn_forward.1} parent=1 // pred_region
      _
    $region17: #{eegcnn_forward.1} parent=1 // pred_fallthru
      _
    // Predicated region
    $region18: #{eegcnn_forward.1} parent=1 // pred_check
      _
    $region19: #{eegcnn_forward.1} parent=1 // pred_check_branch
      %24 = sbr.rel (0) target = $region21
    $region20: #{eegcnn_forward.1} parent=1 // pred_region
      _
    $region21: #{eegcnn_forward.1} parent=1 // pred_fallthru
      _
    // Predicated region
    $region22: #{eegcnn_forward.1} parent=1 // pred_check
      _
    $region23: #{eegcnn_forward.1} parent=1 // pred_check_branch
      %26 = sbr.rel (0) target = $region25
    $region24: #{eegcnn_forward.1} parent=1 // pred_region
      _
    $region25: #{eegcnn_forward.1} parent=1 // pred_fallthru
      _
    // Predicated region
    $region26: #{eegcnn_forward.1} parent=1 // pred_check
      _
    $region27: #{eegcnn_forward.1} parent=1 // pred_check_branch
      %28 = sbr.rel (0) target = $region29
    $region28: #{eegcnn_forward.1} parent=1 // pred_region
      _
    $region29: #{eegcnn_forward.1} parent=1 // pred_fallthru
      _
    // Predicated region
    $region30: #{eegcnn_forward.1} parent=1 // pred_check
      _
    $region31: #{eegcnn_forward.1} parent=1 // pred_check_branch
      %30 = sbr.rel (0) target = $region33
    $region32: #{eegcnn_forward.1} parent=1 // pred_region
      _
    $region33: #{eegcnn_forward.1} parent=1 // pred_fallthru
      _
    // Predicated region
    $region34: #{eegcnn_forward.1} parent=1 // pred_check
      _
    $region35: #{eegcnn_forward.1} parent=1 // pred_check_branch
      %32 = sbr.rel (0) target = $region37
    $region36: #{eegcnn_forward.1} parent=1 // pred_region
      _
    $region37: #{eegcnn_forward.1} parent=1 // pred_fallthru
      _
    %v34 = vld [vmem:[%s0] sm:$0xf]
    %v35 = vld [vmem:[%s0 + $0x4] sm:$0xf]
    %v36 = vld [vmem:[%s0 + $0x8] sm:$0xf]
    %v37 = vld [vmem:[%s0 + $0xc] sm:$0xf]
    %v38 = vld [vmem:[%s0 + $0x10] sm:$0xf]
    %v39 = vld [vmem:[%s0 + $0x14] sm:$0xf]
    %v40 = vld [vmem:[%s0 + $0x18] sm:$0xf]
    %v41 = vld [vmem:[%s0 + $0x1c] sm:$0xf]
    %v42 = vld [vmem:[%s0 + $0x20] sm:$0xf]
    %v43 = vld [vmem:[%s0 + $0x24] sm:$0xf]
    %v44 = vld [vmem:[%s0 + $0x28] sm:$0xf]
    %v45 = vld [vmem:[%s0 + $0x2c] sm:$0xf]
    %v46 = vld [vmem:[%s0 + $0x30] sm:$0xf]
    %v47 = vld [vmem:[%s0 + $0x34] sm:$0xf]
    %v48 = vld [vmem:[%s0 + $0x38] sm:$0xf]
    %v49 = vld [vmem:[%s0 + $0x3c] sm:$0xf]
    %v50 = vld [vmem:[%s0 + $0x40] sm:$0xf]
    %v51 = vld [vmem:[%s0 + $0x44] sm:$0xf]
    %v52 = vld [vmem:[%s0 + $0x48] sm:$0xf]
    %v53 = vld [vmem:[%s0 + $0x4c] sm:$0xf]
    %v54 = vld [vmem:[%s0 + $0x50] sm:$0xf]
    %v55 = vld [vmem:[%s0 + $0x54] sm:$0xf]
    %v56 = vld [vmem:[%s0 + $0x58] sm:$0xf]
    %v57 = vld [vmem:[%s0 + $0x5c] sm:$0xf]
    %v58 = vld [vmem:[%s0 + $0x60] sm:$0xf]
    %v59 = vld [vmem:[%s0 + $0x64] sm:$0xf]
    %v60 = vld [vmem:[%s0 + $0x68] sm:$0xf]
    %v61 = vld [vmem:[%s0 + $0x6c] sm:$0xf]
    %v62 = vld [vmem:[%s0 + $0x70] sm:$0xf]
    %v63 = vld [vmem:[%s0 + $0x74] sm:$0xf]
    %v64 = vld [vmem:[%s0 + $0x78] sm:$0xf]
    %v65 = vld [vmem:[%s0 + $0x7c] sm:$0xf]
    %v66 = vld [vmem:[%s0 + $0x80] sm:$0xf]
    %v67 = vld [vmem:[%s0 + $0x84] sm:$0xf]
    %v68 = vld [vmem:[%s0 + $0x88] sm:$0xf]
    %v69 = vld [vmem:[%s0 + $0x8c] sm:$0xf]
    %v70 = vld [vmem:[%s0 + $0x90] sm:$0xf]
    %v71 = vld [vmem:[%s0 + $0x94] sm:$0xf]
    %v72 = vld [vmem:[%s0 + $0x98] sm:$0xf]
    %v73 = vld [vmem:[%s0 + $0x9c] sm:$0xf]
    %v74 = vld [vmem:[%s0 + $0xa0] sm:$0xf]
    %v75 = vld [vmem:[%s0 + $0xa4] sm:$0xf]
    %v76 = vld [vmem:[%s0 + $0xa8] sm:$0xf]
    %v77 = vld [vmem:[%s0 + $0xac] sm:$0xf]
    %v78 = vld [vmem:[%s0 + $0xb0] sm:$0xf]
    %v79 = vld [vmem:[%s0 + $0xb4] sm:$0xf]
    %v80 = vld [vmem:[%s0 + $0xb8] sm:$0xf]
    %v81 = vld [vmem:[%s0 + $0xbc] sm:$0xf]
    %v82 = vld [vmem:[%s0 + $0xc0] sm:$0xf]
    %v83 = vld [vmem:[%s0 + $0xc4] sm:$0xf]
    %v84 = vld [vmem:[%s0 + $0xc8] sm:$0xf]
    %v85 = vld [vmem:[%s0 + $0xcc] sm:$0xf]
    %v86 = vld [vmem:[%s0 + $0xd0] sm:$0xf]
    %v87 = vld [vmem:[%s0 + $0xd4] sm:$0xf]
    %v88 = vld [vmem:[%s0 + $0xd8] sm:$0xf]
    %v89 = vld [vmem:[%s0 + $0xdc] sm:$0xf]
    %v90 = vld [vmem:[%s0 + $0xe0] sm:$0xf]
    %v91 = vld [vmem:[%s0 + $0xe4] sm:$0xf]
    %v92 = vld [vmem:[%s0 + $0xe8] sm:$0xf]
    %v93 = vld [vmem:[%s0 + $0xec] sm:$0xf]
    %v94 = vld [vmem:[%s0 + $0xf0] sm:$0xf]
    %v95 = vld [vmem:[%s0 + $0xf4] sm:$0xf]
    %v96 = vld [vmem:[%s0 + $0xf8] sm:$0xf]
    %v97 = vld [vmem:[%s0 + $0xfc] sm:$0xf]
    %v98 = vld [vmem:[%s1] sm:$0xf]
    %v99 = vld [vmem:[%s1 + $0x4] sm:$0xf]
    %v100 = vld [vmem:[%s1 + $0x8] sm:$0xf]
    %v101 = vld [vmem:[%s1 + $0xc] sm:$0xf]
    %v102 = vld [vmem:[%s1 + $0x10] sm:$0x3]
    %v103 = vld [vmem:[%s2] sm:$0x1]
    %v105 = vlaneseq
    %v106 = vshrl.u32 %v105, 7
    %v107 = vsub.s32 0, %v106
    %v108 = vrot.slane %v103, %v107
    %v174 = vunpack.c.l.b16 %v34
    %v175 = vunpack.c.l.b16 %v35
    %v176 = vunpack.c.l.b16 %v36
    %v177 = vunpack.c.l.b16 %v37
    %v178 = vunpack.c.l.b16 %v38
    %v179 = vunpack.c.l.b16 %v39
    %v180 = vunpack.c.l.b16 %v40
    %v181 = vunpack.c.l.b16 %v41
    %v182 = vunpack.c.l.b16 %v42
    %v183 = vunpack.c.l.b16 %v43
    %v184 = vunpack.c.l.b16 %v44
    %v185 = vunpack.c.l.b16 %v45
    %v186 = vunpack.c.l.b16 %v46
    %v187 = vunpack.c.l.b16 %v47
    %v188 = vunpack.c.l.b16 %v48
    %v189 = vunpack.c.l.b16 %v49
    %v190 = vunpack.c.l.b16 %v50
    %v191 = vunpack.c.l.b16 %v51
    %v192 = vunpack.c.l.b16 %v52
    %v193 = vunpack.c.l.b16 %v53
    %v194 = vunpack.c.l.b16 %v54
    %v195 = vunpack.c.l.b16 %v55
    %v196 = vunpack.c.l.b16 %v56
    %v197 = vunpack.c.l.b16 %v57
    %v198 = vunpack.c.l.b16 %v58
    %v199 = vunpack.c.l.b16 %v59
    %v200 = vunpack.c.l.b16 %v60
    %v201 = vunpack.c.l.b16 %v61
    %v202 = vunpack.c.l.b16 %v62
    %v203 = vunpack.c.l.b16 %v63
    %v204 = vunpack.c.l.b16 %v64
    %v205 = vunpack.c.l.b16 %v65
    %v206 = vunpack.c.l.b16 %v66
    %v207 = vunpack.c.l.b16 %v67
    %v208 = vunpack.c.l.b16 %v68
    %v209 = vunpack.c.l.b16 %v69
    %v210 = vunpack.c.l.b16 %v70
    %v211 = vunpack.c.l.b16 %v71
    %v212 = vunpack.c.l.b16 %v72
    %v213 = vunpack.c.l.b16 %v73
    %v214 = vunpack.c.l.b16 %v74
    %v215 = vunpack.c.l.b16 %v75
    %v216 = vunpack.c.l.b16 %v76
    %v217 = vunpack.c.l.b16 %v77
    %v218 = vunpack.c.l.b16 %v78
    %v219 = vunpack.c.l.b16 %v79
    %v220 = vunpack.c.l.b16 %v80
    %v221 = vunpack.c.l.b16 %v81
    %v222 = vunpack.c.l.b16 %v82
    %v223 = vunpack.c.l.b16 %v83
    %v224 = vunpack.c.l.b16 %v84
    %v225 = vunpack.c.l.b16 %v85
    %v226 = vunpack.c.l.b16 %v86
    %v227 = vunpack.c.l.b16 %v87
    %v228 = vunpack.c.l.b16 %v88
    %v229 = vunpack.c.l.b16 %v89
    %v230 = vunpack.c.l.b16 %v90
    %v231 = vunpack.c.l.b16 %v91
    %v232 = vunpack.c.l.b16 %v92
    %v233 = vunpack.c.l.b16 %v93
    %v234 = vunpack.c.l.b16 %v94
    %v235 = vunpack.c.l.b16 %v95
    %v236 = vunpack.c.l.b16 %v96
    %v237 = vunpack.c.l.b16 %v97
    %v238 = vpack.c.b16 %v175, %v174
    %v239 = vpack.c.b16 %v177, %v176
    %v240 = vpack.c.b16 %v179, %v178
    %v241 = vpack.c.b16 %v181, %v180
    %v242 = vpack.c.b16 %v183, %v182
    %v243 = vpack.c.b16 %v185, %v184
    %v244 = vpack.c.b16 %v187, %v186
    %v245 = vpack.c.b16 %v189, %v188
    %v246 = vpack.c.b16 %v191, %v190
    %v247 = vpack.c.b16 %v193, %v192
    %v248 = vpack.c.b16 %v195, %v194
    %v249 = vpack.c.b16 %v197, %v196
    %v250 = vpack.c.b16 %v199, %v198
    %v251 = vpack.c.b16 %v201, %v200
    %v252 = vpack.c.b16 %v203, %v202
    %v253 = vpack.c.b16 %v205, %v204
    %v254 = vpack.c.b16 %v207, %v206
    %v255 = vpack.c.b16 %v209, %v208
    %v256 = vpack.c.b16 %v211, %v210
    %v257 = vpack.c.b16 %v213, %v212
    %v258 = vpack.c.b16 %v215, %v214
    %v259 = vpack.c.b16 %v217, %v216
    %v260 = vpack.c.b16 %v219, %v218
    %v261 = vpack.c.b16 %v221, %v220
    %v262 = vpack.c.b16 %v223, %v222
    %v263 = vpack.c.b16 %v225, %v224
    %v264 = vpack.c.b16 %v227, %v226
    %v265 = vpack.c.b16 %v229, %v228
    %v266 = vpack.c.b16 %v231, %v230
    %v267 = vpack.c.b16 %v233, %v232
    %v268 = vpack.c.b16 %v235, %v234
    %v269 = vpack.c.b16 %v237, %v236
    %v275 = vunpack.c.l.b16 %v98
    %v276 = vunpack.c.l.b16 %v99
    %v277 = vunpack.c.l.b16 %v100
    %v278 = vunpack.c.l.b16 %v101
    %v279 = vunpack.c.l.b16 %v102
    %v280 = vpack.c.b16 %v276, %v275
    %v281 = vpack.c.b16 %v278, %v277
    %v282 = vpack.c.b16 %v279, %v279
    %vm285 = vcmask 293888
    %v287 = vsel %vm285, %v238, 0
    %v290 = vsel %vm285, %v239, 0
    %v293 = vsel %vm285, %v240, 0
    %v296 = vsel %vm285, %v241, 0
    %v299 = vsel %vm285, %v242, 0
    %v302 = vsel %vm285, %v243, 0
    %v305 = vsel %vm285, %v244, 0
    %v308 = vsel %vm285, %v245, 0
    %v311 = vsel %vm285, %v246, 0
    %v314 = vsel %vm285, %v247, 0
    %v317 = vsel %vm285, %v248, 0
    %v320 = vsel %vm285, %v249, 0
    %v323 = vsel %vm285, %v250, 0
    %v326 = vsel %vm285, %v251, 0
    %v329 = vsel %vm285, %v252, 0
    %v332 = vsel %vm285, %v253, 0
    %v335 = vsel %vm285, %v254, 0
    %v338 = vsel %vm285, %v255, 0
    %v341 = vsel %vm285, %v256, 0
    %v344 = vsel %vm285, %v257, 0
    %v347 = vsel %vm285, %v258, 0
    %v350 = vsel %vm285, %v259, 0
    %v353 = vsel %vm285, %v260, 0
    %v356 = vsel %vm285, %v261, 0
    %v359 = vsel %vm285, %v262, 0
    %v362 = vsel %vm285, %v263, 0
    %v365 = vsel %vm285, %v264, 0
    %v368 = vsel %vm285, %v265, 0
    %v371 = vsel %vm285, %v266, 0
    %v374 = vsel %vm285, %v267, 0
    %v377 = vsel %vm285, %v268, 0
    %v380 = vsel %vm285, %v269, 0
    %vm382 = vcmask 1041408
    %v384 = vsel %vm382, %v282, 0
    %386 = vmatprep.subr.bf16.mxu0 0
    %387 = vmatpush1.bf16.msra.mxu0 %v280
    %388 = vmatprep.subr.bf16.mxu0 0
    %389 = vmatpush1.bf16.msra.mxu0 %v281
    %390 = vmatprep.subr.bf16.mxu0 0
    %391 = vmatpush1.bf16.msra.mxu0 %v384
    %392 = vmatprep.subr.bf16.mxu0 0
    %393 = vmatpush1.bf16.msra.mxu0 0
    %394 = vmatprep.subr.bf16.mxu0 0
    %395 = vmatpush1.bf16.msra.mxu0 0
    %396 = vmatprep.subr.bf16.mxu0 0
    %397 = vmatpush1.bf16.msra.mxu0 0
    %398 = vmatprep.subr.bf16.mxu0 0
    %399 = vmatpush1.bf16.msra.mxu0 0
    %400 = vmatprep.subr.bf16.mxu0 0
    %401 = vmatpush1.bf16.msra.mxu0 0
    %402 = vmatprep.subr.bf16.mxu0 0
    %403 = vmatpush1.bf16.msra.mxu0 0
    %404 = vmatprep.subr.bf16.mxu0 0
    %405 = vmatpush1.bf16.msra.mxu0 0
    %406 = vmatprep.subr.bf16.mxu0 0
    %407 = vmatpush1.bf16.msra.mxu0 0
    %408 = vmatprep.subr.bf16.mxu0 0
    %409 = vmatpush1.bf16.msra.mxu0 0
    %410 = vmatprep.subr.bf16.mxu0 0
    %411 = vmatpush1.bf16.msra.mxu0 0
    %412 = vmatprep.subr.bf16.mxu0 0
    %413 = vmatpush1.bf16.msra.mxu0 0
    %414 = vmatprep.subr.bf16.mxu0 0
    %415 = vmatpush1.bf16.msra.mxu0 0
    %416 = vmatprep.subr.bf16.mxu0 0
    %417 = vmatpush1.bf16.msra.mxu0 0
    %418 = vmatprep.mubr.bf16.mxu0 0
    %419 = vmatmul.mubr.bf16.gmra.mrb[0].mxu0 %v287
    %v420 = vpop.f32.mrb[0].mxu0
    %v421 = vadd.f32 %v108, %v420
    %v422 = vpop.f32.mrb[0].mxu0
    %v423 = vpop.f32.mrb[0].mxu0
    %v424 = vadd.f32 %v108, %v423
    %v425 = vpop.f32.mrb[0].mxu0
    %426 = vmatprep.mubr.bf16.mxu0 0
    %427 = vmatmul.mubr.bf16.gmra.mrb[0].mxu0 %v290
    %v428 = vpop.f32.mrb[0].mxu0
    %v429 = vadd.f32 %v108, %v428
    %v430 = vpop.f32.mrb[0].mxu0
    %v431 = vpop.f32.mrb[0].mxu0
    %v432 = vadd.f32 %v108, %v431
    %v433 = vpop.f32.mrb[0].mxu0
    %434 = vmatprep.mubr.bf16.mxu0 0
    %435 = vmatmul.mubr.bf16.gmra.mrb[0].mxu0 %v293
    %v436 = vpop.f32.mrb[0].mxu0
    %v437 = vadd.f32 %v108, %v436
    %v438 = vpop.f32.mrb[0].mxu0
    %v439 = vpop.f32.mrb[0].mxu0
    %v440 = vadd.f32 %v108, %v439
    %v441 = vpop.f32.mrb[0].mxu0
    %442 = vmatprep.mubr.bf16.mxu0 0
    %443 = vmatmul.mubr.bf16.gmra.mrb[0].mxu0 %v296
    %v444 = vpop.f32.mrb[0].mxu0
    %v445 = vadd.f32 %v108, %v444
    %v446 = vpop.f32.mrb[0].mxu0
    %v447 = vpop.f32.mrb[0].mxu0
    %v448 = vadd.f32 %v108, %v447
    %v449 = vpop.f32.mrb[0].mxu0
    %450 = vmatprep.mubr.bf16.mxu0 0
    %451 = vmatmul.mubr.bf16.gmra.mrb[0].mxu0 %v299
    %v452 = vpop.f32.mrb[0].mxu0
    %v453 = vadd.f32 %v108, %v452
    %v454 = vpop.f32.mrb[0].mxu0
    %v455 = vpop.f32.mrb[0].mxu0
    %v456 = vadd.f32 %v108, %v455
    %v457 = vpop.f32.mrb[0].mxu0
    %458 = vmatprep.mubr.bf16.mxu0 0
    %459 = vmatmul.mubr.bf16.gmra.mrb[0].mxu0 %v302
    %v460 = vpop.f32.mrb[0].mxu0
    %v461 = vadd.f32 %v108, %v460
    %v462 = vpop.f32.mrb[0].mxu0
    %v463 = vpop.f32.mrb[0].mxu0
    %v464 = vadd.f32 %v108, %v463
    %v465 = vpop.f32.mrb[0].mxu0
    %466 = vmatprep.mubr.bf16.mxu0 0
    %467 = vmatmul.mubr.bf16.gmra.mrb[0].mxu0 %v305
    %v468 = vpop.f32.mrb[0].mxu0
    %v469 = vadd.f32 %v108, %v468
    %v470 = vpop.f32.mrb[0].mxu0
    %v471 = vpop.f32.mrb[0].mxu0
    %v472 = vadd.f32 %v108, %v471
    %v473 = vpop.f32.mrb[0].mxu0
    %474 = vmatprep.mubr.bf16.mxu0 0
    %475 = vmatmul.mubr.bf16.gmra.mrb[0].mxu0 %v308
    %v476 = vpop.f32.mrb[0].mxu0
    %v477 = vadd.f32 %v108, %v476
    %v478 = vpop.f32.mrb[0].mxu0
    %v479 = vpop.f32.mrb[0].mxu0
    %v480 = vadd.f32 %v108, %v479
    %v481 = vpop.f32.mrb[0].mxu0
    %482 = vmatprep.mubr.bf16.mxu0 0
    %483 = vmatmul.mubr.bf16.gmra.mrb[0].mxu0 %v311
    %v484 = vpop.f32.mrb[0].mxu0
    %v485 = vadd.f32 %v108, %v484
    %v486 = vpop.f32.mrb[0].mxu0
    %v487 = vpop.f32.mrb[0].mxu0
    %v488 = vadd.f32 %v108, %v487
    %v489 = vpop.f32.mrb[0].mxu0
    %490 = vmatprep.mubr.bf16.mxu0 0
    %491 = vmatmul.mubr.bf16.gmra.mrb[0].mxu0 %v314
    %v492 = vpop.f32.mrb[0].mxu0
    %v493 = vadd.f32 %v108, %v492
    %v494 = vpop.f32.mrb[0].mxu0
    %v495 = vpop.f32.mrb[0].mxu0
    %v496 = vadd.f32 %v108, %v495
    %v497 = vpop.f32.mrb[0].mxu0
    %498 = vmatprep.mubr.bf16.mxu0 0
    %499 = vmatmul.mubr.bf16.gmra.mrb[0].mxu0 %v317
    %v500 = vpop.f32.mrb[0].mxu0
    %v501 = vadd.f32 %v108, %v500
    %v502 = vpop.f32.mrb[0].mxu0
    %v503 = vpop.f32.mrb[0].mxu0
    %v504 = vadd.f32 %v108, %v503
    %v505 = vpop.f32.mrb[0].mxu0
    %506 = vmatprep.mubr.bf16.mxu0 0
    %507 = vmatmul.mubr.bf16.gmra.mrb[0].mxu0 %v320
    %v508 = vpop.f32.mrb[0].mxu0
    %v509 = vadd.f32 %v108, %v508
    %v510 = vpop.f32.mrb[0].mxu0
    %v511 = vpop.f32.mrb[0].mxu0
    %v512 = vadd.f32 %v108, %v511
    %v513 = vpop.f32.mrb[0].mxu0
    %514 = vmatprep.mubr.bf16.mxu0 0
    %515 = vmatmul.mubr.bf16.gmra.mrb[0].mxu0 %v323
    %v516 = vpop.f32.mrb[0].mxu0
    %v517 = vadd.f32 %v108, %v516
    %v518 = vpop.f32.mrb[0].mxu0
    %v519 = vpop.f32.mrb[0].mxu0
    %v520 = vadd.f32 %v108, %v519
    %v521 = vpop.f32.mrb[0].mxu0
    %522 = vmatprep.mubr.bf16.mxu0 0
    %523 = vmatmul.mubr.bf16.gmra.mrb[0].mxu0 %v326
    %v524 = vpop.f32.mrb[0].mxu0
    %v525 = vadd.f32 %v108, %v524
    %v526 = vpop.f32.mrb[0].mxu0
    %v527 = vpop.f32.mrb[0].mxu0
    %v528 = vadd.f32 %v108, %v527
    %v529 = vpop.f32.mrb[0].mxu0
    %530 = vmatprep.mubr.bf16.mxu0 0
    %531 = vmatmul.mubr.bf16.gmra.mrb[0].mxu0 %v329
    %v532 = vpop.f32.mrb[0].mxu0
    %v533 = vadd.f32 %v108, %v532
    %v534 = vpop.f32.mrb[0].mxu0
    %v535 = vpop.f32.mrb[0].mxu0
    %v536 = vadd.f32 %v108, %v535
    %v537 = vpop.f32.mrb[0].mxu0
    %538 = vmatprep.mubr.bf16.mxu0 0
    %539 = vmatmul.mubr.bf16.gmra.mrb[0].mxu0 %v332
    %v540 = vpop.f32.mrb[0].mxu0
    %v541 = vadd.f32 %v108, %v540
    %v542 = vpop.f32.mrb[0].mxu0
    %v543 = vpop.f32.mrb[0].mxu0
    %v544 = vadd.f32 %v108, %v543
    %v545 = vpop.f32.mrb[0].mxu0
    %546 = vmatprep.mubr.bf16.mxu0 0
    %547 = vmatmul.mubr.bf16.gmra.mrb[0].mxu0 %v335
    %v548 = vpop.f32.mrb[0].mxu0
    %v549 = vadd.f32 %v108, %v548
    %v550 = vpop.f32.mrb[0].mxu0
    %v551 = vpop.f32.mrb[0].mxu0
    %v552 = vadd.f32 %v108, %v551
    %v553 = vpop.f32.mrb[0].mxu0
    %554 = vmatprep.mubr.bf16.mxu0 0
    %555 = vmatmul.mubr.bf16.gmra.mrb[0].mxu0 %v338
    %v556 = vpop.f32.mrb[0].mxu0
    %v557 = vadd.f32 %v108, %v556
    %v558 = vpop.f32.mrb[0].mxu0
    %v559 = vpop.f32.mrb[0].mxu0
    %v560 = vadd.f32 %v108, %v559
    %v561 = vpop.f32.mrb[0].mxu0
    %562 = vmatprep.mubr.bf16.mxu0 0
    %563 = vmatmul.mubr.bf16.gmra.mrb[0].mxu0 %v341
    %v564 = vpop.f32.mrb[0].mxu0
    %v565 = vadd.f32 %v108, %v564
    %v566 = vpop.f32.mrb[0].mxu0
    %v567 = vpop.f32.mrb[0].mxu0
    %v568 = vadd.f32 %v108, %v567
    %v569 = vpop.f32.mrb[0].mxu0
    %570 = vmatprep.mubr.bf16.mxu0 0
    %571 = vmatmul.mubr.bf16.gmra.mrb[0].mxu0 %v344
    %v572 = vpop.f32.mrb[0].mxu0
    %v573 = vadd.f32 %v108, %v572
    %v574 = vpop.f32.mrb[0].mxu0
    %v575 = vpop.f32.mrb[0].mxu0
    %v576 = vadd.f32 %v108, %v575
    %v577 = vpop.f32.mrb[0].mxu0
    %578 = vmatprep.mubr.bf16.mxu0 0
    %579 = vmatmul.mubr.bf16.gmra.mrb[0].mxu0 %v347
    %v580 = vpop.f32.mrb[0].mxu0
    %v581 = vadd.f32 %v108, %v580
    %v582 = vpop.f32.mrb[0].mxu0
    %v583 = vpop.f32.mrb[0].mxu0
    %v584 = vadd.f32 %v108, %v583
    %v585 = vpop.f32.mrb[0].mxu0
    %586 = vmatprep.mubr.bf16.mxu0 0
    %587 = vmatmul.mubr.bf16.gmra.mrb[0].mxu0 %v350
    %v588 = vpop.f32.mrb[0].mxu0
    %v589 = vadd.f32 %v108, %v588
    %v590 = vpop.f32.mrb[0].mxu0
    %v591 = vpop.f32.mrb[0].mxu0
    %v592 = vadd.f32 %v108, %v591
    %v593 = vpop.f32.mrb[0].mxu0
    %594 = vmatprep.mubr.bf16.mxu0 0
    %595 = vmatmul.mubr.bf16.gmra.mrb[0].mxu0 %v353
    %v596 = vpop.f32.mrb[0].mxu0
    %v597 = vadd.f32 %v108, %v596
    %v598 = vpop.f32.mrb[0].mxu0
    %v599 = vpop.f32.mrb[0].mxu0
    %v600 = vadd.f32 %v108, %v599
    %v601 = vpop.f32.mrb[0].mxu0
    %602 = vmatprep.mubr.bf16.mxu0 0
    %603 = vmatmul.mubr.bf16.gmra.mrb[0].mxu0 %v356
    %v604 = vpop.f32.mrb[0].mxu0
    %v605 = vadd.f32 %v108, %v604
    %v606 = vpop.f32.mrb[0].mxu0
    %v607 = vpop.f32.mrb[0].mxu0
    %v608 = vadd.f32 %v108, %v607
    %v609 = vpop.f32.mrb[0].mxu0
    %610 = vmatprep.mubr.bf16.mxu0 0
    %611 = vmatmul.mubr.bf16.gmra.mrb[0].mxu0 %v359
    %v612 = vpop.f32.mrb[0].mxu0
    %v613 = vadd.f32 %v108, %v612
    %v614 = vpop.f32.mrb[0].mxu0
    %v615 = vpop.f32.mrb[0].mxu0
    %v616 = vadd.f32 %v108, %v615
    %v617 = vpop.f32.mrb[0].mxu0
    %618 = vmatprep.mubr.bf16.mxu0 0
    %619 = vmatmul.mubr.bf16.gmra.mrb[0].mxu0 %v362
    %v620 = vpop.f32.mrb[0].mxu0
    %v621 = vadd.f32 %v108, %v620
    %v622 = vpop.f32.mrb[0].mxu0
    %v623 = vpop.f32.mrb[0].mxu0
    %v624 = vadd.f32 %v108, %v623
    %v625 = vpop.f32.mrb[0].mxu0
    %626 = vmatprep.mubr.bf16.mxu0 0
    %627 = vmatmul.mubr.bf16.gmra.mrb[0].mxu0 %v365
    %v628 = vpop.f32.mrb[0].mxu0
    %v629 = vadd.f32 %v108, %v628
    %v630 = vpop.f32.mrb[0].mxu0
    %v631 = vpop.f32.mrb[0].mxu0
    %v632 = vadd.f32 %v108, %v631
    %v633 = vpop.f32.mrb[0].mxu0
    %634 = vmatprep.mubr.bf16.mxu0 0
    %635 = vmatmul.mubr.bf16.gmra.mrb[0].mxu0 %v368
    %v636 = vpop.f32.mrb[0].mxu0
    %v637 = vadd.f32 %v108, %v636
    %v638 = vpop.f32.mrb[0].mxu0
    %v639 = vpop.f32.mrb[0].mxu0
    %v640 = vadd.f32 %v108, %v639
    %v641 = vpop.f32.mrb[0].mxu0
    %642 = vmatprep.mubr.bf16.mxu0 0
    %643 = vmatmul.mubr.bf16.gmra.mrb[0].mxu0 %v371
    %v644 = vpop.f32.mrb[0].mxu0
    %v645 = vadd.f32 %v108, %v644
    %v646 = vpop.f32.mrb[0].mxu0
    %v647 = vpop.f32.mrb[0].mxu0
    %v648 = vadd.f32 %v108, %v647
    %v649 = vpop.f32.mrb[0].mxu0
    %650 = vmatprep.mubr.bf16.mxu0 0
    %651 = vmatmul.mubr.bf16.gmra.mrb[0].mxu0 %v374
    %v652 = vpop.f32.mrb[0].mxu0
    %v653 = vadd.f32 %v108, %v652
    %v654 = vpop.f32.mrb[0].mxu0
    %v655 = vpop.f32.mrb[0].mxu0
    %v656 = vadd.f32 %v108, %v655
    %v657 = vpop.f32.mrb[0].mxu0
    %658 = vmatprep.mubr.bf16.mxu0 0
    %659 = vmatmul.mubr.bf16.gmra.mrb[0].mxu0 %v377
    %v660 = vpop.f32.mrb[0].mxu0
    %v661 = vadd.f32 %v108, %v660
    %v662 = vpop.f32.mrb[0].mxu0
    %v663 = vpop.f32.mrb[0].mxu0
    %v664 = vadd.f32 %v108, %v663
    %v665 = vpop.f32.mrb[0].mxu0
    %666 = vmatprep.mubr.bf16.mxu0 0
    %667 = vmatmul.mubr.bf16.gmra.mrb[0].mxu0 %v380
    %v668 = vpop.f32.mrb[0].mxu0
    %v669 = vadd.f32 %v108, %v668
    %v670 = vpop.f32.mrb[0].mxu0
    %v671 = vpop.f32.mrb[0].mxu0
    %v672 = vadd.f32 %v108, %v671
    %v673 = vpop.f32.mrb[0].mxu0
    %674 = vdwg.mxu0
    %v675 = vmax.f32 %v421, 0.0
    %v676 = vmax.f32 %v424, 0.0
    %v677 = vmax.f32 %v429, 0.0
    %v678 = vmax.f32 %v432, 0.0
    %v679 = vmax.f32 %v437, 0.0
    %v680 = vmax.f32 %v440, 0.0
    %v681 = vmax.f32 %v445, 0.0
    %v682 = vmax.f32 %v448, 0.0
    %v683 = vmax.f32 %v453, 0.0
    %v684 = vmax.f32 %v456, 0.0
    %v685 = vmax.f32 %v461, 0.0
    %v686 = vmax.f32 %v464, 0.0
    %v687 = vmax.f32 %v469, 0.0
    %v688 = vmax.f32 %v472, 0.0
    %v689 = vmax.f32 %v477, 0.0
    %v690 = vmax.f32 %v480, 0.0
    %v691 = vmax.f32 %v485, 0.0
    %v692 = vmax.f32 %v488, 0.0
    %v693 = vmax.f32 %v493, 0.0
    %v694 = vmax.f32 %v496, 0.0
    %v695 = vmax.f32 %v501, 0.0
    %v696 = vmax.f32 %v504, 0.0
    %v697 = vmax.f32 %v509, 0.0
    %v698 = vmax.f32 %v512, 0.0
    %v699 = vmax.f32 %v517, 0.0
    %v700 = vmax.f32 %v520, 0.0
    %v701 = vmax.f32 %v525, 0.0
    %v702 = vmax.f32 %v528, 0.0
    %v703 = vmax.f32 %v533, 0.0
    %v704 = vmax.f32 %v536, 0.0
    %v705 = vmax.f32 %v541, 0.0
    %v706 = vmax.f32 %v544, 0.0
    %v707 = vmax.f32 %v549, 0.0
    %v708 = vmax.f32 %v552, 0.0
    %v709 = vmax.f32 %v557, 0.0
    %v710 = vmax.f32 %v560, 0.0
    %v711 = vmax.f32 %v565, 0.0
    %v712 = vmax.f32 %v568, 0.0
    %v713 = vmax.f32 %v573, 0.0
    %v714 = vmax.f32 %v576, 0.0
    %v715 = vmax.f32 %v581, 0.0
    %v716 = vmax.f32 %v584, 0.0
    %v717 = vmax.f32 %v589, 0.0
    %v718 = vmax.f32 %v592, 0.0
    %v719 = vmax.f32 %v597, 0.0
    %v720 = vmax.f32 %v600, 0.0
    %v721 = vmax.f32 %v605, 0.0
    %v722 = vmax.f32 %v608, 0.0
    %v723 = vmax.f32 %v613, 0.0
    %v724 = vmax.f32 %v616, 0.0
    %v725 = vmax.f32 %v621, 0.0
    %v726 = vmax.f32 %v624, 0.0
    %v727 = vmax.f32 %v629, 0.0
    %v728 = vmax.f32 %v632, 0.0
    %v729 = vmax.f32 %v637, 0.0
    %v730 = vmax.f32 %v640, 0.0
    %v731 = vmax.f32 %v645, 0.0
    %v732 = vmax.f32 %v648, 0.0
    %v733 = vmax.f32 %v653, 0.0
    %v734 = vmax.f32 %v656, 0.0
    %v735 = vmax.f32 %v661, 0.0
    %v736 = vmax.f32 %v664, 0.0
    %v737 = vmax.f32 %v669, 0.0
    %v738 = vmax.f32 %v672, 0.0
    %v803 = vcombine.high %v675, %v675
    %v805 = vunpack.c.l.s4 1983009808
    %v806 = vunpack.c.0.s8 %v805
    %v807 = vlaneseq
    %v808 = vshrl.u32 %v807, 7
    %v809 = vsub.s32 %v806, %v808
    %v810 = vrot.slane %v675, %v809
    %v812 = vunpack.c.l.s4 1983009808
    %v813 = vunpack.c.0.s8 %v812
    %v814 = vlaneseq
    %v815 = vshrl.u32 %v814, 7
    %v816 = vsub.s32 %v813, %v815
    %v817 = vrot.slane %v803, %v816
    %v818 = vcombine.high %v810, %v810
    %v819 = vcombine.high %v817, %v817
    %v820 = vcombine.high %v676, %v676
    %v822 = vunpack.c.l.s4 1983009808
    %v823 = vunpack.c.0.s8 %v822
    %v824 = vlaneseq
    %v825 = vshrl.u32 %v824, 7
    %v826 = vsub.s32 %v823, %v825
    %v827 = vrot.slane %v676, %v826
    %v829 = vunpack.c.l.s4 1983009808
    %v830 = vunpack.c.0.s8 %v829
    %v831 = vlaneseq
    %v832 = vshrl.u32 %v831, 7
    %v833 = vsub.s32 %v830, %v832
    %v834 = vrot.slane %v820, %v833
    %v835 = vcombine.high %v827, %v827
    %v836 = vcombine.high %v834, %v834
    %v837 = vcombine.high %v677, %v677
    %v839 = vunpack.c.l.s4 1983009808
    %v840 = vunpack.c.0.s8 %v839
    %v841 = vlaneseq
    %v842 = vshrl.u32 %v841, 7
    %v843 = vsub.s32 %v840, %v842
    %v844 = vrot.slane %v677, %v843
    %v846 = vunpack.c.l.s4 1983009808
    %v847 = vunpack.c.0.s8 %v846
    %v848 = vlaneseq
    %v849 = vshrl.u32 %v848, 7
    %v850 = vsub.s32 %v847, %v849
    %v851 = vrot.slane %v837, %v850
    %v852 = vcombine.high %v844, %v844
    %v853 = vcombine.high %v851, %v851
    %v854 = vcombine.high %v678, %v678
    %v856 = vunpack.c.l.s4 1983009808
    %v857 = vunpack.c.0.s8 %v856
    %v858 = vlaneseq
    %v859 = vshrl.u32 %v858, 7
    %v860 = vsub.s32 %v857, %v859
    %v861 = vrot.slane %v678, %v860
    %v863 = vunpack.c.l.s4 1983009808
    %v864 = vunpack.c.0.s8 %v863
    %v865 = vlaneseq
    %v866 = vshrl.u32 %v865, 7
    %v867 = vsub.s32 %v864, %v866
    %v868 = vrot.slane %v854, %v867
    %v869 = vcombine.high %v861, %v861
    %v870 = vcombine.high %v868, %v868
    %v871 = vcombine.high %v679, %v679
    %v873 = vunpack.c.l.s4 1983009808
    %v874 = vunpack.c.0.s8 %v873
    %v875 = vlaneseq
    %v876 = vshrl.u32 %v875, 7
    %v877 = vsub.s32 %v874, %v876
    %v878 = vrot.slane %v679, %v877
    %v880 = vunpack.c.l.s4 1983009808
    %v881 = vunpack.c.0.s8 %v880
    %v882 = vlaneseq
    %v883 = vshrl.u32 %v882, 7
    %v884 = vsub.s32 %v881, %v883
    %v885 = vrot.slane %v871, %v884
    %v886 = vcombine.high %v878, %v878
    %v887 = vcombine.high %v885, %v885
    %v888 = vcombine.high %v680, %v680
    %v890 = vunpack.c.l.s4 1983009808
    %v891 = vunpack.c.0.s8 %v890
    %v892 = vlaneseq
    %v893 = vshrl.u32 %v892, 7
    %v894 = vsub.s32 %v891, %v893
    %v895 = vrot.slane %v680, %v894
    %v897 = vunpack.c.l.s4 1983009808
    %v898 = vunpack.c.0.s8 %v897
    %v899 = vlaneseq
    %v900 = vshrl.u32 %v899, 7
    %v901 = vsub.s32 %v898, %v900
    %v902 = vrot.slane %v888, %v901
    %v903 = vcombine.high %v895, %v895
    %v904 = vcombine.high %v902, %v902
    %v905 = vcombine.high %v681, %v681
    %v907 = vunpack.c.l.s4 1983009808
    %v908 = vunpack.c.0.s8 %v907
    %v909 = vlaneseq
    %v910 = vshrl.u32 %v909, 7
    %v911 = vsub.s32 %v908, %v910
    %v912 = vrot.slane %v681, %v911
    %v914 = vunpack.c.l.s4 1983009808
    %v915 = vunpack.c.0.s8 %v914
    %v916 = vlaneseq
    %v917 = vshrl.u32 %v916, 7
    %v918 = vsub.s32 %v915, %v917
    %v919 = vrot.slane %v905, %v918
    %v920 = vcombine.high %v912, %v912
    %v921 = vcombine.high %v919, %v919
    %v922 = vcombine.high %v682, %v682
    %v924 = vunpack.c.l.s4 1983009808
    %v925 = vunpack.c.0.s8 %v924
    %v926 = vlaneseq
    %v927 = vshrl.u32 %v926, 7
    %v928 = vsub.s32 %v925, %v927
    %v929 = vrot.slane %v682, %v928
    %v931 = vunpack.c.l.s4 1983009808
    %v932 = vunpack.c.0.s8 %v931
    %v933 = vlaneseq
    %v934 = vshrl.u32 %v933, 7
    %v935 = vsub.s32 %v932, %v934
    %v936 = vrot.slane %v922, %v935
    %v937 = vcombine.high %v929, %v929
    %v938 = vcombine.high %v936, %v936
    %v939 = vcombine.high %v683, %v683
    %v941 = vunpack.c.l.s4 1983009808
    %v942 = vunpack.c.0.s8 %v941
    %v943 = vlaneseq
    %v944 = vshrl.u32 %v943, 7
    %v945 = vsub.s32 %v942, %v944
    %v946 = vrot.slane %v683, %v945
    %v948 = vunpack.c.l.s4 1983009808
    %v949 = vunpack.c.0.s8 %v948
    %v950 = vlaneseq
    %v951 = vshrl.u32 %v950, 7
    %v952 = vsub.s32 %v949, %v951
    %v953 = vrot.slane %v939, %v952
    %v954 = vcombine.high %v946, %v946
    %v955 = vcombine.high %v953, %v953
    %v956 = vcombine.high %v684, %v684
    %v958 = vunpack.c.l.s4 1983009808
    %v959 = vunpack.c.0.s8 %v958
    %v960 = vlaneseq
    %v961 = vshrl.u32 %v960, 7
    %v962 = vsub.s32 %v959, %v961
    %v963 = vrot.slane %v684, %v962
    %v965 = vunpack.c.l.s4 1983009808
    %v966 = vunpack.c.0.s8 %v965
    %v967 = vlaneseq
    %v968 = vshrl.u32 %v967, 7
    %v969 = vsub.s32 %v966, %v968
    %v970 = vrot.slane %v956, %v969
    %v971 = vcombine.high %v963, %v963
    %v972 = vcombine.high %v970, %v970
    %v973 = vcombine.high %v685, %v685
    %v975 = vunpack.c.l.s4 1983009808
    %v976 = vunpack.c.0.s8 %v975
    %v977 = vlaneseq
    %v978 = vshrl.u32 %v977, 7
    %v979 = vsub.s32 %v976, %v978
    %v980 = vrot.slane %v685, %v979
    %v982 = vunpack.c.l.s4 1983009808
    %v983 = vunpack.c.0.s8 %v982
    %v984 = vlaneseq
    %v985 = vshrl.u32 %v984, 7
    %v986 = vsub.s32 %v983, %v985
    %v987 = vrot.slane %v973, %v986
    %v988 = vcombine.high %v980, %v980
    %v989 = vcombine.high %v987, %v987
    %v990 = vcombine.high %v686, %v686
    %v992 = vunpack.c.l.s4 1983009808
    %v993 = vunpack.c.0.s8 %v992
    %v994 = vlaneseq
    %v995 = vshrl.u32 %v994, 7
    %v996 = vsub.s32 %v993, %v995
    %v997 = vrot.slane %v686, %v996
    %v999 = vunpack.c.l.s4 1983009808
    %v1000 = vunpack.c.0.s8 %v999
    %v1001 = vlaneseq
    %v1002 = vshrl.u32 %v1001, 7
    %v1003 = vsub.s32 %v1000, %v1002
    %v1004 = vrot.slane %v990, %v1003
    %v1005 = vcombine.high %v997, %v997
    %v1006 = vcombine.high %v1004, %v1004
    %v1007 = vcombine.high %v687, %v687
    %v1009 = vunpack.c.l.s4 1983009808
    %v1010 = vunpack.c.0.s8 %v1009
    %v1011 = vlaneseq
    %v1012 = vshrl.u32 %v1011, 7
    %v1013 = vsub.s32 %v1010, %v1012
    %v1014 = vrot.slane %v687, %v1013
    %v1016 = vunpack.c.l.s4 1983009808
    %v1017 = vunpack.c.0.s8 %v1016
    %v1018 = vlaneseq
    %v1019 = vshrl.u32 %v1018, 7
    %v1020 = vsub.s32 %v1017, %v1019
    %v1021 = vrot.slane %v1007, %v1020
    %v1022 = vcombine.high %v1014, %v1014
    %v1023 = vcombine.high %v1021, %v1021
    %v1024 = vcombine.high %v688, %v688
    %v1026 = vunpack.c.l.s4 1983009808
    %v1027 = vunpack.c.0.s8 %v1026
    %v1028 = vlaneseq
    %v1029 = vshrl.u32 %v1028, 7
    %v1030 = vsub.s32 %v1027, %v1029
    %v1031 = vrot.slane %v688, %v1030
    %v1033 = vunpack.c.l.s4 1983009808
    %v1034 = vunpack.c.0.s8 %v1033
    %v1035 = vlaneseq
    %v1036 = vshrl.u32 %v1035, 7
    %v1037 = vsub.s32 %v1034, %v1036
    %v1038 = vrot.slane %v1024, %v1037
    %v1039 = vcombine.high %v1031, %v1031
    %v1040 = vcombine.high %v1038, %v1038
    %v1041 = vcombine.high %v689, %v689
    %v1043 = vunpack.c.l.s4 1983009808
    %v1044 = vunpack.c.0.s8 %v1043
    %v1045 = vlaneseq
    %v1046 = vshrl.u32 %v1045, 7
    %v1047 = vsub.s32 %v1044, %v1046
    %v1048 = vrot.slane %v689, %v1047
    %v1050 = vunpack.c.l.s4 1983009808
    %v1051 = vunpack.c.0.s8 %v1050
    %v1052 = vlaneseq
    %v1053 = vshrl.u32 %v1052, 7
    %v1054 = vsub.s32 %v1051, %v1053
    %v1055 = vrot.slane %v1041, %v1054
    %v1056 = vcombine.high %v1048, %v1048
    %v1057 = vcombine.high %v1055, %v1055
    %v1058 = vcombine.high %v690, %v690
    %v1060 = vunpack.c.l.s4 1983009808
    %v1061 = vunpack.c.0.s8 %v1060
    %v1062 = vlaneseq
    %v1063 = vshrl.u32 %v1062, 7
    %v1064 = vsub.s32 %v1061, %v1063
    %v1065 = vrot.slane %v690, %v1064
    %v1067 = vunpack.c.l.s4 1983009808
    %v1068 = vunpack.c.0.s8 %v1067
    %v1069 = vlaneseq
    %v1070 = vshrl.u32 %v1069, 7
    %v1071 = vsub.s32 %v1068, %v1070
    %v1072 = vrot.slane %v1058, %v1071
    %v1073 = vcombine.high %v1065, %v1065
    %v1074 = vcombine.high %v1072, %v1072
    %v1075 = vcombine.high %v691, %v691
    %v1077 = vunpack.c.l.s4 1983009808
    %v1078 = vunpack.c.0.s8 %v1077
    %v1079 = vlaneseq
    %v1080 = vshrl.u32 %v1079, 7
    %v1081 = vsub.s32 %v1078, %v1080
    %v1082 = vrot.slane %v691, %v1081
    %v1084 = vunpack.c.l.s4 1983009808
    %v1085 = vunpack.c.0.s8 %v1084
    %v1086 = vlaneseq
    %v1087 = vshrl.u32 %v1086, 7
    %v1088 = vsub.s32 %v1085, %v1087
    %v1089 = vrot.slane %v1075, %v1088
    %v1090 = vcombine.high %v1082, %v1082
    %v1091 = vcombine.high %v1089, %v1089
    %v1092 = vcombine.high %v692, %v692
    %v1094 = vunpack.c.l.s4 1983009808
    %v1095 = vunpack.c.0.s8 %v1094
    %v1096 = vlaneseq
    %v1097 = vshrl.u32 %v1096, 7
    %v1098 = vsub.s32 %v1095, %v1097
    %v1099 = vrot.slane %v692, %v1098
    %v1101 = vunpack.c.l.s4 1983009808
    %v1102 = vunpack.c.0.s8 %v1101
    %v1103 = vlaneseq
    %v1104 = vshrl.u32 %v1103, 7
    %v1105 = vsub.s32 %v1102, %v1104
    %v1106 = vrot.slane %v1092, %v1105
    %v1107 = vcombine.high %v1099, %v1099
    %v1108 = vcombine.high %v1106, %v1106
    %v1109 = vcombine.high %v693, %v693
    %v1111 = vunpack.c.l.s4 1983009808
    %v1112 = vunpack.c.0.s8 %v1111
    %v1113 = vlaneseq
    %v1114 = vshrl.u32 %v1113, 7
    %v1115 = vsub.s32 %v1112, %v1114
    %v1116 = vrot.slane %v693, %v1115
    %v1118 = vunpack.c.l.s4 1983009808
    %v1119 = vunpack.c.0.s8 %v1118
    %v1120 = vlaneseq
    %v1121 = vshrl.u32 %v1120, 7
    %v1122 = vsub.s32 %v1119, %v1121
    %v1123 = vrot.slane %v1109, %v1122
    %v1124 = vcombine.high %v1116, %v1116
    %v1125 = vcombine.high %v1123, %v1123
    %v1126 = vcombine.high %v694, %v694
    %v1128 = vunpack.c.l.s4 1983009808
    %v1129 = vunpack.c.0.s8 %v1128
    %v1130 = vlaneseq
    %v1131 = vshrl.u32 %v1130, 7
    %v1132 = vsub.s32 %v1129, %v1131
    %v1133 = vrot.slane %v694, %v1132
    %v1135 = vunpack.c.l.s4 1983009808
    %v1136 = vunpack.c.0.s8 %v1135
    %v1137 = vlaneseq
    %v1138 = vshrl.u32 %v1137, 7
    %v1139 = vsub.s32 %v1136, %v1138
    %v1140 = vrot.slane %v1126, %v1139
    %v1141 = vcombine.high %v1133, %v1133
    %v1142 = vcombine.high %v1140, %v1140
    %v1143 = vcombine.high %v695, %v695
    %v1145 = vunpack.c.l.s4 1983009808
    %v1146 = vunpack.c.0.s8 %v1145
    %v1147 = vlaneseq
    %v1148 = vshrl.u32 %v1147, 7
    %v1149 = vsub.s32 %v1146, %v1148
    %v1150 = vrot.slane %v695, %v1149
    %v1152 = vunpack.c.l.s4 1983009808
    %v1153 = vunpack.c.0.s8 %v1152
    %v1154 = vlaneseq
    %v1155 = vshrl.u32 %v1154, 7
    %v1156 = vsub.s32 %v1153, %v1155
    %v1157 = vrot.slane %v1143, %v1156
    %v1158 = vcombine.high %v1150, %v1150
    %v1159 = vcombine.high %v1157, %v1157
    %v1160 = vcombine.high %v696, %v696
    %v1162 = vunpack.c.l.s4 1983009808
    %v1163 = vunpack.c.0.s8 %v1162
    %v1164 = vlaneseq
    %v1165 = vshrl.u32 %v1164, 7
    %v1166 = vsub.s32 %v1163, %v1165
    %v1167 = vrot.slane %v696, %v1166
    %v1169 = vunpack.c.l.s4 1983009808
    %v1170 = vunpack.c.0.s8 %v1169
    %v1171 = vlaneseq
    %v1172 = vshrl.u32 %v1171, 7
    %v1173 = vsub.s32 %v1170, %v1172
    %v1174 = vrot.slane %v1160, %v1173
    %v1175 = vcombine.high %v1167, %v1167
    %v1176 = vcombine.high %v1174, %v1174
    %v1177 = vcombine.high %v697, %v697
    %v1179 = vunpack.c.l.s4 1983009808
    %v1180 = vunpack.c.0.s8 %v1179
    %v1181 = vlaneseq
    %v1182 = vshrl.u32 %v1181, 7
    %v1183 = vsub.s32 %v1180, %v1182
    %v1184 = vrot.slane %v697, %v1183
    %v1186 = vunpack.c.l.s4 1983009808
    %v1187 = vunpack.c.0.s8 %v1186
    %v1188 = vlaneseq
    %v1189 = vshrl.u32 %v1188, 7
    %v1190 = vsub.s32 %v1187, %v1189
    %v1191 = vrot.slane %v1177, %v1190
    %v1192 = vcombine.high %v1184, %v1184
    %v1193 = vcombine.high %v1191, %v1191
    %v1194 = vcombine.high %v698, %v698
    %v1196 = vunpack.c.l.s4 1983009808
    %v1197 = vunpack.c.0.s8 %v1196
    %v1198 = vlaneseq
    %v1199 = vshrl.u32 %v1198, 7
    %v1200 = vsub.s32 %v1197, %v1199
    %v1201 = vrot.slane %v698, %v1200
    %v1203 = vunpack.c.l.s4 1983009808
    %v1204 = vunpack.c.0.s8 %v1203
    %v1205 = vlaneseq
    %v1206 = vshrl.u32 %v1205, 7
    %v1207 = vsub.s32 %v1204, %v1206
    %v1208 = vrot.slane %v1194, %v1207
    %v1209 = vcombine.high %v1201, %v1201
    %v1210 = vcombine.high %v1208, %v1208
    %v1211 = vcombine.high %v699, %v699
    %v1213 = vunpack.c.l.s4 1983009808
    %v1214 = vunpack.c.0.s8 %v1213
    %v1215 = vlaneseq
    %v1216 = vshrl.u32 %v1215, 7
    %v1217 = vsub.s32 %v1214, %v1216
    %v1218 = vrot.slane %v699, %v1217
    %v1220 = vunpack.c.l.s4 1983009808
    %v1221 = vunpack.c.0.s8 %v1220
    %v1222 = vlaneseq
    %v1223 = vshrl.u32 %v1222, 7
    %v1224 = vsub.s32 %v1221, %v1223
    %v1225 = vrot.slane %v1211, %v1224
    %v1226 = vcombine.high %v1218, %v1218
    %v1227 = vcombine.high %v1225, %v1225
    %v1228 = vcombine.high %v700, %v700
    %v1230 = vunpack.c.l.s4 1983009808
    %v1231 = vunpack.c.0.s8 %v1230
    %v1232 = vlaneseq
    %v1233 = vshrl.u32 %v1232, 7
    %v1234 = vsub.s32 %v1231, %v1233
    %v1235 = vrot.slane %v700, %v1234
    %v1237 = vunpack.c.l.s4 1983009808
    %v1238 = vunpack.c.0.s8 %v1237
    %v1239 = vlaneseq
    %v1240 = vshrl.u32 %v1239, 7
    %v1241 = vsub.s32 %v1238, %v1240
    %v1242 = vrot.slane %v1228, %v1241
    %v1243 = vcombine.high %v1235, %v1235
    %v1244 = vcombine.high %v1242, %v1242
    %v1245 = vcombine.high %v701, %v701
    %v1247 = vunpack.c.l.s4 1983009808
    %v1248 = vunpack.c.0.s8 %v1247
    %v1249 = vlaneseq
    %v1250 = vshrl.u32 %v1249, 7
    %v1251 = vsub.s32 %v1248, %v1250
    %v1252 = vrot.slane %v701, %v1251
    %v1254 = vunpack.c.l.s4 1983009808
    %v1255 = vunpack.c.0.s8 %v1254
    %v1256 = vlaneseq
    %v1257 = vshrl.u32 %v1256, 7
    %v1258 = vsub.s32 %v1255, %v1257
    %v1259 = vrot.slane %v1245, %v1258
    %v1260 = vcombine.high %v1252, %v1252
    %v1261 = vcombine.high %v1259, %v1259
    %v1262 = vcombine.high %v702, %v702
    %v1264 = vunpack.c.l.s4 1983009808
    %v1265 = vunpack.c.0.s8 %v1264
    %v1266 = vlaneseq
    %v1267 = vshrl.u32 %v1266, 7
    %v1268 = vsub.s32 %v1265, %v1267
    %v1269 = vrot.slane %v702, %v1268
    %v1271 = vunpack.c.l.s4 1983009808
    %v1272 = vunpack.c.0.s8 %v1271
    %v1273 = vlaneseq
    %v1274 = vshrl.u32 %v1273, 7
    %v1275 = vsub.s32 %v1272, %v1274
    %v1276 = vrot.slane %v1262, %v1275
    %v1277 = vcombine.high %v1269, %v1269
    %v1278 = vcombine.high %v1276, %v1276
    %v1279 = vcombine.high %v703, %v703
    %v1281 = vunpack.c.l.s4 1983009808
    %v1282 = vunpack.c.0.s8 %v1281
    %v1283 = vlaneseq
    %v1284 = vshrl.u32 %v1283, 7
    %v1285 = vsub.s32 %v1282, %v1284
    %v1286 = vrot.slane %v703, %v1285
    %v1288 = vunpack.c.l.s4 1983009808
    %v1289 = vunpack.c.0.s8 %v1288
    %v1290 = vlaneseq
    %v1291 = vshrl.u32 %v1290, 7
    %v1292 = vsub.s32 %v1289, %v1291
    %v1293 = vrot.slane %v1279, %v1292
    %v1294 = vcombine.high %v1286, %v1286
    %v1295 = vcombine.high %v1293, %v1293
    %v1296 = vcombine.high %v704, %v704
    %v1298 = vunpack.c.l.s4 1983009808
    %v1299 = vunpack.c.0.s8 %v1298
    %v1300 = vlaneseq
    %v1301 = vshrl.u32 %v1300, 7
    %v1302 = vsub.s32 %v1299, %v1301
    %v1303 = vrot.slane %v704, %v1302
    %v1305 = vunpack.c.l.s4 1983009808
    %v1306 = vunpack.c.0.s8 %v1305
    %v1307 = vlaneseq
    %v1308 = vshrl.u32 %v1307, 7
    %v1309 = vsub.s32 %v1306, %v1308
    %v1310 = vrot.slane %v1296, %v1309
    %v1311 = vcombine.high %v1303, %v1303
    %v1312 = vcombine.high %v1310, %v1310
    %v1313 = vcombine.high %v705, %v705
    %v1315 = vunpack.c.l.s4 1983009808
    %v1316 = vunpack.c.0.s8 %v1315
    %v1317 = vlaneseq
    %v1318 = vshrl.u32 %v1317, 7
    %v1319 = vsub.s32 %v1316, %v1318
    %v1320 = vrot.slane %v705, %v1319
    %v1322 = vunpack.c.l.s4 1983009808
    %v1323 = vunpack.c.0.s8 %v1322
    %v1324 = vlaneseq
    %v1325 = vshrl.u32 %v1324, 7
    %v1326 = vsub.s32 %v1323, %v1325
    %v1327 = vrot.slane %v1313, %v1326
    %v1328 = vcombine.high %v1320, %v1320
    %v1329 = vcombine.high %v1327, %v1327
    %v1330 = vcombine.high %v706, %v706
    %v1332 = vunpack.c.l.s4 1983009808
    %v1333 = vunpack.c.0.s8 %v1332
    %v1334 = vlaneseq
    %v1335 = vshrl.u32 %v1334, 7
    %v1336 = vsub.s32 %v1333, %v1335
    %v1337 = vrot.slane %v706, %v1336
    %v1339 = vunpack.c.l.s4 1983009808
    %v1340 = vunpack.c.0.s8 %v1339
    %v1341 = vlaneseq
    %v1342 = vshrl.u32 %v1341, 7
    %v1343 = vsub.s32 %v1340, %v1342
    %v1344 = vrot.slane %v1330, %v1343
    %v1345 = vcombine.high %v1337, %v1337
    %v1346 = vcombine.high %v1344, %v1344
    %v1347 = vcombine.high %v707, %v707
    %v1349 = vunpack.c.l.s4 1983009808
    %v1350 = vunpack.c.0.s8 %v1349
    %v1351 = vlaneseq
    %v1352 = vshrl.u32 %v1351, 7
    %v1353 = vsub.s32 %v1350, %v1352
    %v1354 = vrot.slane %v707, %v1353
    %v1356 = vunpack.c.l.s4 1983009808
    %v1357 = vunpack.c.0.s8 %v1356
    %v1358 = vlaneseq
    %v1359 = vshrl.u32 %v1358, 7
    %v1360 = vsub.s32 %v1357, %v1359
    %v1361 = vrot.slane %v1347, %v1360
    %v1362 = vcombine.high %v1354, %v1354
    %v1363 = vcombine.high %v1361, %v1361
    %v1364 = vcombine.high %v708, %v708
    %v1366 = vunpack.c.l.s4 1983009808
    %v1367 = vunpack.c.0.s8 %v1366
    %v1368 = vlaneseq
    %v1369 = vshrl.u32 %v1368, 7
    %v1370 = vsub.s32 %v1367, %v1369
    %v1371 = vrot.slane %v708, %v1370
    %v1373 = vunpack.c.l.s4 1983009808
    %v1374 = vunpack.c.0.s8 %v1373
    %v1375 = vlaneseq
    %v1376 = vshrl.u32 %v1375, 7
    %v1377 = vsub.s32 %v1374, %v1376
    %v1378 = vrot.slane %v1364, %v1377
    %v1379 = vcombine.high %v1371, %v1371
    %v1380 = vcombine.high %v1378, %v1378
    %v1381 = vcombine.high %v709, %v709
    %v1383 = vunpack.c.l.s4 1983009808
    %v1384 = vunpack.c.0.s8 %v1383
    %v1385 = vlaneseq
    %v1386 = vshrl.u32 %v1385, 7
    %v1387 = vsub.s32 %v1384, %v1386
    %v1388 = vrot.slane %v709, %v1387
    %v1390 = vunpack.c.l.s4 1983009808
    %v1391 = vunpack.c.0.s8 %v1390
    %v1392 = vlaneseq
    %v1393 = vshrl.u32 %v1392, 7
    %v1394 = vsub.s32 %v1391, %v1393
    %v1395 = vrot.slane %v1381, %v1394
    %v1396 = vcombine.high %v1388, %v1388
    %v1397 = vcombine.high %v1395, %v1395
    %v1398 = vcombine.high %v710, %v710
    %v1400 = vunpack.c.l.s4 1983009808
    %v1401 = vunpack.c.0.s8 %v1400
    %v1402 = vlaneseq
    %v1403 = vshrl.u32 %v1402, 7
    %v1404 = vsub.s32 %v1401, %v1403
    %v1405 = vrot.slane %v710, %v1404
    %v1407 = vunpack.c.l.s4 1983009808
    %v1408 = vunpack.c.0.s8 %v1407
    %v1409 = vlaneseq
    %v1410 = vshrl.u32 %v1409, 7
    %v1411 = vsub.s32 %v1408, %v1410
    %v1412 = vrot.slane %v1398, %v1411
    %v1413 = vcombine.high %v1405, %v1405
    %v1414 = vcombine.high %v1412, %v1412
    %v1415 = vcombine.high %v711, %v711
    %v1417 = vunpack.c.l.s4 1983009808
    %v1418 = vunpack.c.0.s8 %v1417
    %v1419 = vlaneseq
    %v1420 = vshrl.u32 %v1419, 7
    %v1421 = vsub.s32 %v1418, %v1420
    %v1422 = vrot.slane %v711, %v1421
    %v1424 = vunpack.c.l.s4 1983009808
    %v1425 = vunpack.c.0.s8 %v1424
    %v1426 = vlaneseq
    %v1427 = vshrl.u32 %v1426, 7
    %v1428 = vsub.s32 %v1425, %v1427
    %v1429 = vrot.slane %v1415, %v1428
    %v1430 = vcombine.high %v1422, %v1422
    %v1431 = vcombine.high %v1429, %v1429
    %v1432 = vcombine.high %v712, %v712
    %v1434 = vunpack.c.l.s4 1983009808
    %v1435 = vunpack.c.0.s8 %v1434
    %v1436 = vlaneseq
    %v1437 = vshrl.u32 %v1436, 7
    %v1438 = vsub.s32 %v1435, %v1437
    %v1439 = vrot.slane %v712, %v1438
    %v1441 = vunpack.c.l.s4 1983009808
    %v1442 = vunpack.c.0.s8 %v1441
    %v1443 = vlaneseq
    %v1444 = vshrl.u32 %v1443, 7
    %v1445 = vsub.s32 %v1442, %v1444
    %v1446 = vrot.slane %v1432, %v1445
    %v1447 = vcombine.high %v1439, %v1439
    %v1448 = vcombine.high %v1446, %v1446
    %v1449 = vcombine.high %v713, %v713
    %v1451 = vunpack.c.l.s4 1983009808
    %v1452 = vunpack.c.0.s8 %v1451
    %v1453 = vlaneseq
    %v1454 = vshrl.u32 %v1453, 7
    %v1455 = vsub.s32 %v1452, %v1454
    %v1456 = vrot.slane %v713, %v1455
    %v1458 = vunpack.c.l.s4 1983009808
    %v1459 = vunpack.c.0.s8 %v1458
    %v1460 = vlaneseq
    %v1461 = vshrl.u32 %v1460, 7
    %v1462 = vsub.s32 %v1459, %v1461
    %v1463 = vrot.slane %v1449, %v1462
    %v1464 = vcombine.high %v1456, %v1456
    %v1465 = vcombine.high %v1463, %v1463
    %v1466 = vcombine.high %v714, %v714
    %v1468 = vunpack.c.l.s4 1983009808
    %v1469 = vunpack.c.0.s8 %v1468
    %v1470 = vlaneseq
    %v1471 = vshrl.u32 %v1470, 7
    %v1472 = vsub.s32 %v1469, %v1471
    %v1473 = vrot.slane %v714, %v1472
    %v1475 = vunpack.c.l.s4 1983009808
    %v1476 = vunpack.c.0.s8 %v1475
    %v1477 = vlaneseq
    %v1478 = vshrl.u32 %v1477, 7
    %v1479 = vsub.s32 %v1476, %v1478
    %v1480 = vrot.slane %v1466, %v1479
    %v1481 = vcombine.high %v1473, %v1473
    %v1482 = vcombine.high %v1480, %v1480
    %v1483 = vcombine.high %v715, %v715
    %v1485 = vunpack.c.l.s4 1983009808
    %v1486 = vunpack.c.0.s8 %v1485
    %v1487 = vlaneseq
    %v1488 = vshrl.u32 %v1487, 7
    %v1489 = vsub.s32 %v1486, %v1488
    %v1490 = vrot.slane %v715, %v1489
    %v1492 = vunpack.c.l.s4 1983009808
    %v1493 = vunpack.c.0.s8 %v1492
    %v1494 = vlaneseq
    %v1495 = vshrl.u32 %v1494, 7
    %v1496 = vsub.s32 %v1493, %v1495
    %v1497 = vrot.slane %v1483, %v1496
    %v1498 = vcombine.high %v1490, %v1490
    %v1499 = vcombine.high %v1497, %v1497
    %v1500 = vcombine.high %v716, %v716
    %v1502 = vunpack.c.l.s4 1983009808
    %v1503 = vunpack.c.0.s8 %v1502
    %v1504 = vlaneseq
    %v1505 = vshrl.u32 %v1504, 7
    %v1506 = vsub.s32 %v1503, %v1505
    %v1507 = vrot.slane %v716, %v1506
    %v1509 = vunpack.c.l.s4 1983009808
    %v1510 = vunpack.c.0.s8 %v1509
    %v1511 = vlaneseq
    %v1512 = vshrl.u32 %v1511, 7
    %v1513 = vsub.s32 %v1510, %v1512
    %v1514 = vrot.slane %v1500, %v1513
    %v1515 = vcombine.high %v1507, %v1507
    %v1516 = vcombine.high %v1514, %v1514
    %v1517 = vcombine.high %v717, %v717
    %v1519 = vunpack.c.l.s4 1983009808
    %v1520 = vunpack.c.0.s8 %v1519
    %v1521 = vlaneseq
    %v1522 = vshrl.u32 %v1521, 7
    %v1523 = vsub.s32 %v1520, %v1522
    %v1524 = vrot.slane %v717, %v1523
    %v1526 = vunpack.c.l.s4 1983009808
    %v1527 = vunpack.c.0.s8 %v1526
    %v1528 = vlaneseq
    %v1529 = vshrl.u32 %v1528, 7
    %v1530 = vsub.s32 %v1527, %v1529
    %v1531 = vrot.slane %v1517, %v1530
    %v1532 = vcombine.high %v1524, %v1524
    %v1533 = vcombine.high %v1531, %v1531
    %v1534 = vcombine.high %v718, %v718
    %v1536 = vunpack.c.l.s4 1983009808
    %v1537 = vunpack.c.0.s8 %v1536
    %v1538 = vlaneseq
    %v1539 = vshrl.u32 %v1538, 7
    %v1540 = vsub.s32 %v1537, %v1539
    %v1541 = vrot.slane %v718, %v1540
    %v1543 = vunpack.c.l.s4 1983009808
    %v1544 = vunpack.c.0.s8 %v1543
    %v1545 = vlaneseq
    %v1546 = vshrl.u32 %v1545, 7
    %v1547 = vsub.s32 %v1544, %v1546
    %v1548 = vrot.slane %v1534, %v1547
    %v1549 = vcombine.high %v1541, %v1541
    %v1550 = vcombine.high %v1548, %v1548
    %v1551 = vcombine.high %v719, %v719
    %v1553 = vunpack.c.l.s4 1983009808
    %v1554 = vunpack.c.0.s8 %v1553
    %v1555 = vlaneseq
    %v1556 = vshrl.u32 %v1555, 7
    %v1557 = vsub.s32 %v1554, %v1556
    %v1558 = vrot.slane %v719, %v1557
    %v1560 = vunpack.c.l.s4 1983009808
    %v1561 = vunpack.c.0.s8 %v1560
    %v1562 = vlaneseq
    %v1563 = vshrl.u32 %v1562, 7
    %v1564 = vsub.s32 %v1561, %v1563
    %v1565 = vrot.slane %v1551, %v1564
    %v1566 = vcombine.high %v1558, %v1558
    %v1567 = vcombine.high %v1565, %v1565
    %v1568 = vcombine.high %v720, %v720
    %v1570 = vunpack.c.l.s4 1983009808
    %v1571 = vunpack.c.0.s8 %v1570
    %v1572 = vlaneseq
    %v1573 = vshrl.u32 %v1572, 7
    %v1574 = vsub.s32 %v1571, %v1573
    %v1575 = vrot.slane %v720, %v1574
    %v1577 = vunpack.c.l.s4 1983009808
    %v1578 = vunpack.c.0.s8 %v1577
    %v1579 = vlaneseq
    %v1580 = vshrl.u32 %v1579, 7
    %v1581 = vsub.s32 %v1578, %v1580
    %v1582 = vrot.slane %v1568, %v1581
    %v1583 = vcombine.high %v1575, %v1575
    %v1584 = vcombine.high %v1582, %v1582
    %v1585 = vcombine.high %v721, %v721
    %v1587 = vunpack.c.l.s4 1983009808
    %v1588 = vunpack.c.0.s8 %v1587
    %v1589 = vlaneseq
    %v1590 = vshrl.u32 %v1589, 7
    %v1591 = vsub.s32 %v1588, %v1590
    %v1592 = vrot.slane %v721, %v1591
    %v1594 = vunpack.c.l.s4 1983009808
    %v1595 = vunpack.c.0.s8 %v1594
    %v1596 = vlaneseq
    %v1597 = vshrl.u32 %v1596, 7
    %v1598 = vsub.s32 %v1595, %v1597
    %v1599 = vrot.slane %v1585, %v1598
    %v1600 = vcombine.high %v1592, %v1592
    %v1601 = vcombine.high %v1599, %v1599
    %v1602 = vcombine.high %v722, %v722
    %v1604 = vunpack.c.l.s4 1983009808
    %v1605 = vunpack.c.0.s8 %v1604
    %v1606 = vlaneseq
    %v1607 = vshrl.u32 %v1606, 7
    %v1608 = vsub.s32 %v1605, %v1607
    %v1609 = vrot.slane %v722, %v1608
    %v1611 = vunpack.c.l.s4 1983009808
    %v1612 = vunpack.c.0.s8 %v1611
    %v1613 = vlaneseq
    %v1614 = vshrl.u32 %v1613, 7
    %v1615 = vsub.s32 %v1612, %v1614
    %v1616 = vrot.slane %v1602, %v1615
    %v1617 = vcombine.high %v1609, %v1609
    %v1618 = vcombine.high %v1616, %v1616
    %v1619 = vcombine.high %v723, %v723
    %v1621 = vunpack.c.l.s4 1983009808
    %v1622 = vunpack.c.0.s8 %v1621
    %v1623 = vlaneseq
    %v1624 = vshrl.u32 %v1623, 7
    %v1625 = vsub.s32 %v1622, %v1624
    %v1626 = vrot.slane %v723, %v1625
    %v1628 = vunpack.c.l.s4 1983009808
    %v1629 = vunpack.c.0.s8 %v1628
    %v1630 = vlaneseq
    %v1631 = vshrl.u32 %v1630, 7
    %v1632 = vsub.s32 %v1629, %v1631
    %v1633 = vrot.slane %v1619, %v1632
    %v1634 = vcombine.high %v1626, %v1626
    %v1635 = vcombine.high %v1633, %v1633
    %v1636 = vcombine.high %v724, %v724
    %v1638 = vunpack.c.l.s4 1983009808
    %v1639 = vunpack.c.0.s8 %v1638
    %v1640 = vlaneseq
    %v1641 = vshrl.u32 %v1640, 7
    %v1642 = vsub.s32 %v1639, %v1641
    %v1643 = vrot.slane %v724, %v1642
    %v1645 = vunpack.c.l.s4 1983009808
    %v1646 = vunpack.c.0.s8 %v1645
    %v1647 = vlaneseq
    %v1648 = vshrl.u32 %v1647, 7
    %v1649 = vsub.s32 %v1646, %v1648
    %v1650 = vrot.slane %v1636, %v1649
    %v1651 = vcombine.high %v1643, %v1643
    %v1652 = vcombine.high %v1650, %v1650
    %v1653 = vcombine.high %v725, %v725
    %v1655 = vunpack.c.l.s4 1983009808
    %v1656 = vunpack.c.0.s8 %v1655
    %v1657 = vlaneseq
    %v1658 = vshrl.u32 %v1657, 7
    %v1659 = vsub.s32 %v1656, %v1658
    %v1660 = vrot.slane %v725, %v1659
    %v1662 = vunpack.c.l.s4 1983009808
    %v1663 = vunpack.c.0.s8 %v1662
    %v1664 = vlaneseq
    %v1665 = vshrl.u32 %v1664, 7
    %v1666 = vsub.s32 %v1663, %v1665
    %v1667 = vrot.slane %v1653, %v1666
    %v1668 = vcombine.high %v1660, %v1660
    %v1669 = vcombine.high %v1667, %v1667
    %v1670 = vcombine.high %v726, %v726
    %v1672 = vunpack.c.l.s4 1983009808
    %v1673 = vunpack.c.0.s8 %v1672
    %v1674 = vlaneseq
    %v1675 = vshrl.u32 %v1674, 7
    %v1676 = vsub.s32 %v1673, %v1675
    %v1677 = vrot.slane %v726, %v1676
    %v1679 = vunpack.c.l.s4 1983009808
    %v1680 = vunpack.c.0.s8 %v1679
    %v1681 = vlaneseq
    %v1682 = vshrl.u32 %v1681, 7
    %v1683 = vsub.s32 %v1680, %v1682
    %v1684 = vrot.slane %v1670, %v1683
    %v1685 = vcombine.high %v1677, %v1677
    %v1686 = vcombine.high %v1684, %v1684
    %v1687 = vcombine.high %v727, %v727
    %v1689 = vunpack.c.l.s4 1983009808
    %v1690 = vunpack.c.0.s8 %v1689
    %v1691 = vlaneseq
    %v1692 = vshrl.u32 %v1691, 7
    %v1693 = vsub.s32 %v1690, %v1692
    %v1694 = vrot.slane %v727, %v1693
    %v1696 = vunpack.c.l.s4 1983009808
    %v1697 = vunpack.c.0.s8 %v1696
    %v1698 = vlaneseq
    %v1699 = vshrl.u32 %v1698, 7
    %v1700 = vsub.s32 %v1697, %v1699
    %v1701 = vrot.slane %v1687, %v1700
    %v1702 = vcombine.high %v1694, %v1694
    %v1703 = vcombine.high %v1701, %v1701
    %v1704 = vcombine.high %v728, %v728
    %v1706 = vunpack.c.l.s4 1983009808
    %v1707 = vunpack.c.0.s8 %v1706
    %v1708 = vlaneseq
    %v1709 = vshrl.u32 %v1708, 7
    %v1710 = vsub.s32 %v1707, %v1709
    %v1711 = vrot.slane %v728, %v1710
    %v1713 = vunpack.c.l.s4 1983009808
    %v1714 = vunpack.c.0.s8 %v1713
    %v1715 = vlaneseq
    %v1716 = vshrl.u32 %v1715, 7
    %v1717 = vsub.s32 %v1714, %v1716
    %v1718 = vrot.slane %v1704, %v1717
    %v1719 = vcombine.high %v1711, %v1711
    %v1720 = vcombine.high %v1718, %v1718
    %v1721 = vcombine.high %v729, %v729
    %v1723 = vunpack.c.l.s4 1983009808
    %v1724 = vunpack.c.0.s8 %v1723
    %v1725 = vlaneseq
    %v1726 = vshrl.u32 %v1725, 7
    %v1727 = vsub.s32 %v1724, %v1726
    %v1728 = vrot.slane %v729, %v1727
    %v1730 = vunpack.c.l.s4 1983009808
    %v1731 = vunpack.c.0.s8 %v1730
    %v1732 = vlaneseq
    %v1733 = vshrl.u32 %v1732, 7
    %v1734 = vsub.s32 %v1731, %v1733
    %v1735 = vrot.slane %v1721, %v1734
    %v1736 = vcombine.high %v1728, %v1728
    %v1737 = vcombine.high %v1735, %v1735
    %v1738 = vcombine.high %v730, %v730
    %v1740 = vunpack.c.l.s4 1983009808
    %v1741 = vunpack.c.0.s8 %v1740
    %v1742 = vlaneseq
    %v1743 = vshrl.u32 %v1742, 7
    %v1744 = vsub.s32 %v1741, %v1743
    %v1745 = vrot.slane %v730, %v1744
    %v1747 = vunpack.c.l.s4 1983009808
    %v1748 = vunpack.c.0.s8 %v1747
    %v1749 = vlaneseq
    %v1750 = vshrl.u32 %v1749, 7
    %v1751 = vsub.s32 %v1748, %v1750
    %v1752 = vrot.slane %v1738, %v1751
    %v1753 = vcombine.high %v1745, %v1745
    %v1754 = vcombine.high %v1752, %v1752
    %v1755 = vcombine.high %v731, %v731
    %v1757 = vunpack.c.l.s4 1983009808
    %v1758 = vunpack.c.0.s8 %v1757
    %v1759 = vlaneseq
    %v1760 = vshrl.u32 %v1759, 7
    %v1761 = vsub.s32 %v1758, %v1760
    %v1762 = vrot.slane %v731, %v1761
    %v1764 = vunpack.c.l.s4 1983009808
    %v1765 = vunpack.c.0.s8 %v1764
    %v1766 = vlaneseq
    %v1767 = vshrl.u32 %v1766, 7
    %v1768 = vsub.s32 %v1765, %v1767
    %v1769 = vrot.slane %v1755, %v1768
    %v1770 = vcombine.high %v1762, %v1762
    %v1771 = vcombine.high %v1769, %v1769
    %v1772 = vcombine.high %v732, %v732
    %v1774 = vunpack.c.l.s4 1983009808
    %v1775 = vunpack.c.0.s8 %v1774
    %v1776 = vlaneseq
    %v1777 = vshrl.u32 %v1776, 7
    %v1778 = vsub.s32 %v1775, %v1777
    %v1779 = vrot.slane %v732, %v1778
    %v1781 = vunpack.c.l.s4 1983009808
    %v1782 = vunpack.c.0.s8 %v1781
    %v1783 = vlaneseq
    %v1784 = vshrl.u32 %v1783, 7
    %v1785 = vsub.s32 %v1782, %v1784
    %v1786 = vrot.slane %v1772, %v1785
    %v1787 = vcombine.high %v1779, %v1779
    %v1788 = vcombine.high %v1786, %v1786
    %v1789 = vcombine.high %v733, %v733
    %v1791 = vunpack.c.l.s4 1983009808
    %v1792 = vunpack.c.0.s8 %v1791
    %v1793 = vlaneseq
    %v1794 = vshrl.u32 %v1793, 7
    %v1795 = vsub.s32 %v1792, %v1794
    %v1796 = vrot.slane %v733, %v1795
    %v1798 = vunpack.c.l.s4 1983009808
    %v1799 = vunpack.c.0.s8 %v1798
    %v1800 = vlaneseq
    %v1801 = vshrl.u32 %v1800, 7
    %v1802 = vsub.s32 %v1799, %v1801
    %v1803 = vrot.slane %v1789, %v1802
    %v1804 = vcombine.high %v1796, %v1796
    %v1805 = vcombine.high %v1803, %v1803
    %v1806 = vcombine.high %v734, %v734
    %v1808 = vunpack.c.l.s4 1983009808
    %v1809 = vunpack.c.0.s8 %v1808
    %v1810 = vlaneseq
    %v1811 = vshrl.u32 %v1810, 7
    %v1812 = vsub.s32 %v1809, %v1811
    %v1813 = vrot.slane %v734, %v1812
    %v1815 = vunpack.c.l.s4 1983009808
    %v1816 = vunpack.c.0.s8 %v1815
    %v1817 = vlaneseq
    %v1818 = vshrl.u32 %v1817, 7
    %v1819 = vsub.s32 %v1816, %v1818
    %v1820 = vrot.slane %v1806, %v1819
    %v1821 = vcombine.high %v1813, %v1813
    %v1822 = vcombine.high %v1820, %v1820
    %v1823 = vcombine.high %v735, %v735
    %v1825 = vunpack.c.l.s4 1983009808
    %v1826 = vunpack.c.0.s8 %v1825
    %v1827 = vlaneseq
    %v1828 = vshrl.u32 %v1827, 7
    %v1829 = vsub.s32 %v1826, %v1828
    %v1830 = vrot.slane %v735, %v1829
    %v1832 = vunpack.c.l.s4 1983009808
    %v1833 = vunpack.c.0.s8 %v1832
    %v1834 = vlaneseq
    %v1835 = vshrl.u32 %v1834, 7
    %v1836 = vsub.s32 %v1833, %v1835
    %v1837 = vrot.slane %v1823, %v1836
    %v1838 = vcombine.high %v1830, %v1830
    %v1839 = vcombine.high %v1837, %v1837
    %v1840 = vcombine.high %v736, %v736
    %v1842 = vunpack.c.l.s4 1983009808
    %v1843 = vunpack.c.0.s8 %v1842
    %v1844 = vlaneseq
    %v1845 = vshrl.u32 %v1844, 7
    %v1846 = vsub.s32 %v1843, %v1845
    %v1847 = vrot.slane %v736, %v1846
    %v1849 = vunpack.c.l.s4 1983009808
    %v1850 = vunpack.c.0.s8 %v1849
    %v1851 = vlaneseq
    %v1852 = vshrl.u32 %v1851, 7
    %v1853 = vsub.s32 %v1850, %v1852
    %v1854 = vrot.slane %v1840, %v1853
    %v1855 = vcombine.high %v1847, %v1847
    %v1856 = vcombine.high %v1854, %v1854
    %v1857 = vcombine.high %v737, %v737
    %v1859 = vunpack.c.l.s4 1983009808
    %v1860 = vunpack.c.0.s8 %v1859
    %v1861 = vlaneseq
    %v1862 = vshrl.u32 %v1861, 7
    %v1863 = vsub.s32 %v1860, %v1862
    %v1864 = vrot.slane %v737, %v1863
    %v1866 = vunpack.c.l.s4 1983009808
    %v1867 = vunpack.c.0.s8 %v1866
    %v1868 = vlaneseq
    %v1869 = vshrl.u32 %v1868, 7
    %v1870 = vsub.s32 %v1867, %v1869
    %v1871 = vrot.slane %v1857, %v1870
    %v1872 = vcombine.high %v1864, %v1864
    %v1873 = vcombine.high %v1871, %v1871
    %v1874 = vcombine.high %v738, %v738
    %v1876 = vunpack.c.l.s4 1983009808
    %v1877 = vunpack.c.0.s8 %v1876
    %v1878 = vlaneseq
    %v1879 = vshrl.u32 %v1878, 7
    %v1880 = vsub.s32 %v1877, %v1879
    %v1881 = vrot.slane %v738, %v1880
    %v1883 = vunpack.c.l.s4 1983009808
    %v1884 = vunpack.c.0.s8 %v1883
    %v1885 = vlaneseq
    %v1886 = vshrl.u32 %v1885, 7
    %v1887 = vsub.s32 %v1884, %v1886
    %v1888 = vrot.slane %v1874, %v1887
    %v1889 = vcombine.high %v1881, %v1881
    %v1890 = vcombine.high %v1888, %v1888
    %vm2147 = vcmask 254976
    %v2148 = vsel %vm2147, %v810, -inf
    %v2149 = vrot.slane %v2148, 4
    %v2150 = vmax.f32 %v2148, %v2149
    %v2151 = vrot.slane %v2150, 2
    %v2152 = vmax.f32 %v2150, %v2151
    %v2153 = vrot.slane %v2152, 1
    %v2154 = vmax.f32 %v2152, %v2153
    %v2155 = vsel %vm2147, %v818, -inf
    %v2156 = vrot.slane %v2155, 4
    %v2157 = vmax.f32 %v2155, %v2156
    %v2158 = vrot.slane %v2157, 2
    %v2159 = vmax.f32 %v2157, %v2158
    %v2160 = vrot.slane %v2159, 1
    %v2161 = vmax.f32 %v2159, %v2160
    %v2162 = vsel %vm2147, %v817, -inf
    %v2163 = vrot.slane %v2162, 4
    %v2164 = vmax.f32 %v2162, %v2163
    %v2165 = vrot.slane %v2164, 2
    %v2166 = vmax.f32 %v2164, %v2165
    %v2167 = vrot.slane %v2166, 1
    %v2168 = vmax.f32 %v2166, %v2167
    %v2169 = vsel %vm2147, %v819, -inf
    %v2170 = vrot.slane %v2169, 4
    %v2171 = vmax.f32 %v2169, %v2170
    %v2172 = vrot.slane %v2171, 2
    %v2173 = vmax.f32 %v2171, %v2172
    %v2174 = vrot.slane %v2173, 1
    %v2175 = vmax.f32 %v2173, %v2174
    %v2176 = vsel %vm2147, %v827, -inf
    %v2177 = vrot.slane %v2176, 4
    %v2178 = vmax.f32 %v2176, %v2177
    %v2179 = vrot.slane %v2178, 2
    %v2180 = vmax.f32 %v2178, %v2179
    %v2181 = vrot.slane %v2180, 1
    %v2182 = vmax.f32 %v2180, %v2181
    %v2183 = vsel %vm2147, %v835, -inf
    %v2184 = vrot.slane %v2183, 4
    %v2185 = vmax.f32 %v2183, %v2184
    %v2186 = vrot.slane %v2185, 2
    %v2187 = vmax.f32 %v2185, %v2186
    %v2188 = vrot.slane %v2187, 1
    %v2189 = vmax.f32 %v2187, %v2188
    %v2190 = vsel %vm2147, %v834, -inf
    %v2191 = vrot.slane %v2190, 4
    %v2192 = vmax.f32 %v2190, %v2191
    %v2193 = vrot.slane %v2192, 2
    %v2194 = vmax.f32 %v2192, %v2193
    %v2195 = vrot.slane %v2194, 1
    %v2196 = vmax.f32 %v2194, %v2195
    %v2197 = vsel %vm2147, %v836, -inf
    %v2198 = vrot.slane %v2197, 4
    %v2199 = vmax.f32 %v2197, %v2198
    %v2200 = vrot.slane %v2199, 2
    %v2201 = vmax.f32 %v2199, %v2200
    %v2202 = vrot.slane %v2201, 1
    %v2203 = vmax.f32 %v2201, %v2202
    %v2204 = vsel %vm2147, %v844, -inf
    %v2205 = vrot.slane %v2204, 4
    %v2206 = vmax.f32 %v2204, %v2205
    %v2207 = vrot.slane %v2206, 2
    %v2208 = vmax.f32 %v2206, %v2207
    %v2209 = vrot.slane %v2208, 1
    %v2210 = vmax.f32 %v2208, %v2209
    %v2211 = vsel %vm2147, %v852, -inf
    %v2212 = vrot.slane %v2211, 4
    %v2213 = vmax.f32 %v2211, %v2212
    %v2214 = vrot.slane %v2213, 2
    %v2215 = vmax.f32 %v2213, %v2214
    %v2216 = vrot.slane %v2215, 1
    %v2217 = vmax.f32 %v2215, %v2216
    %v2218 = vsel %vm2147, %v851, -inf
    %v2219 = vrot.slane %v2218, 4
    %v2220 = vmax.f32 %v2218, %v2219
    %v2221 = vrot.slane %v2220, 2
    %v2222 = vmax.f32 %v2220, %v2221
    %v2223 = vrot.slane %v2222, 1
    %v2224 = vmax.f32 %v2222, %v2223
    %v2225 = vsel %vm2147, %v853, -inf
    %v2226 = vrot.slane %v2225, 4
    %v2227 = vmax.f32 %v2225, %v2226
    %v2228 = vrot.slane %v2227, 2
    %v2229 = vmax.f32 %v2227, %v2228
    %v2230 = vrot.slane %v2229, 1
    %v2231 = vmax.f32 %v2229, %v2230
    %v2232 = vsel %vm2147, %v861, -inf
    %v2233 = vrot.slane %v2232, 4
    %v2234 = vmax.f32 %v2232, %v2233
    %v2235 = vrot.slane %v2234, 2
    %v2236 = vmax.f32 %v2234, %v2235
    %v2237 = vrot.slane %v2236, 1
    %v2238 = vmax.f32 %v2236, %v2237
    %v2239 = vsel %vm2147, %v869, -inf
    %v2240 = vrot.slane %v2239, 4
    %v2241 = vmax.f32 %v2239, %v2240
    %v2242 = vrot.slane %v2241, 2
    %v2243 = vmax.f32 %v2241, %v2242
    %v2244 = vrot.slane %v2243, 1
    %v2245 = vmax.f32 %v2243, %v2244
    %v2246 = vsel %vm2147, %v868, -inf
    %v2247 = vrot.slane %v2246, 4
    %v2248 = vmax.f32 %v2246, %v2247
    %v2249 = vrot.slane %v2248, 2
    %v2250 = vmax.f32 %v2248, %v2249
    %v2251 = vrot.slane %v2250, 1
    %v2252 = vmax.f32 %v2250, %v2251
    %v2253 = vsel %vm2147, %v870, -inf
    %v2254 = vrot.slane %v2253, 4
    %v2255 = vmax.f32 %v2253, %v2254
    %v2256 = vrot.slane %v2255, 2
    %v2257 = vmax.f32 %v2255, %v2256
    %v2258 = vrot.slane %v2257, 1
    %v2259 = vmax.f32 %v2257, %v2258
    %v2260 = vsel %vm2147, %v878, -inf
    %v2261 = vrot.slane %v2260, 4
    %v2262 = vmax.f32 %v2260, %v2261
    %v2263 = vrot.slane %v2262, 2
    %v2264 = vmax.f32 %v2262, %v2263
    %v2265 = vrot.slane %v2264, 1
    %v2266 = vmax.f32 %v2264, %v2265
    %v2267 = vsel %vm2147, %v886, -inf
    %v2268 = vrot.slane %v2267, 4
    %v2269 = vmax.f32 %v2267, %v2268
    %v2270 = vrot.slane %v2269, 2
    %v2271 = vmax.f32 %v2269, %v2270
    %v2272 = vrot.slane %v2271, 1
    %v2273 = vmax.f32 %v2271, %v2272
    %v2274 = vsel %vm2147, %v885, -inf
    %v2275 = vrot.slane %v2274, 4
    %v2276 = vmax.f32 %v2274, %v2275
    %v2277 = vrot.slane %v2276, 2
    %v2278 = vmax.f32 %v2276, %v2277
    %v2279 = vrot.slane %v2278, 1
    %v2280 = vmax.f32 %v2278, %v2279
    %v2281 = vsel %vm2147, %v887, -inf
    %v2282 = vrot.slane %v2281, 4
    %v2283 = vmax.f32 %v2281, %v2282
    %v2284 = vrot.slane %v2283, 2
    %v2285 = vmax.f32 %v2283, %v2284
    %v2286 = vrot.slane %v2285, 1
    %v2287 = vmax.f32 %v2285, %v2286
    %v2288 = vsel %vm2147, %v895, -inf
    %v2289 = vrot.slane %v2288, 4
    %v2290 = vmax.f32 %v2288, %v2289
    %v2291 = vrot.slane %v2290, 2
    %v2292 = vmax.f32 %v2290, %v2291
    %v2293 = vrot.slane %v2292, 1
    %v2294 = vmax.f32 %v2292, %v2293
    %v2295 = vsel %vm2147, %v903, -inf
    %v2296 = vrot.slane %v2295, 4
    %v2297 = vmax.f32 %v2295, %v2296
    %v2298 = vrot.slane %v2297, 2
    %v2299 = vmax.f32 %v2297, %v2298
    %v2300 = vrot.slane %v2299, 1
    %v2301 = vmax.f32 %v2299, %v2300
    %v2302 = vsel %vm2147, %v902, -inf
    %v2303 = vrot.slane %v2302, 4
    %v2304 = vmax.f32 %v2302, %v2303
    %v2305 = vrot.slane %v2304, 2
    %v2306 = vmax.f32 %v2304, %v2305
    %v2307 = vrot.slane %v2306, 1
    %v2308 = vmax.f32 %v2306, %v2307
    %v2309 = vsel %vm2147, %v904, -inf
    %v2310 = vrot.slane %v2309, 4
    %v2311 = vmax.f32 %v2309, %v2310
    %v2312 = vrot.slane %v2311, 2
    %v2313 = vmax.f32 %v2311, %v2312
    %v2314 = vrot.slane %v2313, 1
    %v2315 = vmax.f32 %v2313, %v2314
    %v2316 = vsel %vm2147, %v912, -inf
    %v2317 = vrot.slane %v2316, 4
    %v2318 = vmax.f32 %v2316, %v2317
    %v2319 = vrot.slane %v2318, 2
    %v2320 = vmax.f32 %v2318, %v2319
    %v2321 = vrot.slane %v2320, 1
    %v2322 = vmax.f32 %v2320, %v2321
    %v2323 = vsel %vm2147, %v920, -inf
    %v2324 = vrot.slane %v2323, 4
    %v2325 = vmax.f32 %v2323, %v2324
    %v2326 = vrot.slane %v2325, 2
    %v2327 = vmax.f32 %v2325, %v2326
    %v2328 = vrot.slane %v2327, 1
    %v2329 = vmax.f32 %v2327, %v2328
    %v2330 = vsel %vm2147, %v919, -inf
    %v2331 = vrot.slane %v2330, 4
    %v2332 = vmax.f32 %v2330, %v2331
    %v2333 = vrot.slane %v2332, 2
    %v2334 = vmax.f32 %v2332, %v2333
    %v2335 = vrot.slane %v2334, 1
    %v2336 = vmax.f32 %v2334, %v2335
    %v2337 = vsel %vm2147, %v921, -inf
    %v2338 = vrot.slane %v2337, 4
    %v2339 = vmax.f32 %v2337, %v2338
    %v2340 = vrot.slane %v2339, 2
    %v2341 = vmax.f32 %v2339, %v2340
    %v2342 = vrot.slane %v2341, 1
    %v2343 = vmax.f32 %v2341, %v2342
    %v2344 = vsel %vm2147, %v929, -inf
    %v2345 = vrot.slane %v2344, 4
    %v2346 = vmax.f32 %v2344, %v2345
    %v2347 = vrot.slane %v2346, 2
    %v2348 = vmax.f32 %v2346, %v2347
    %v2349 = vrot.slane %v2348, 1
    %v2350 = vmax.f32 %v2348, %v2349
    %v2351 = vsel %vm2147, %v937, -inf
    %v2352 = vrot.slane %v2351, 4
    %v2353 = vmax.f32 %v2351, %v2352
    %v2354 = vrot.slane %v2353, 2
    %v2355 = vmax.f32 %v2353, %v2354
    %v2356 = vrot.slane %v2355, 1
    %v2357 = vmax.f32 %v2355, %v2356
    %v2358 = vsel %vm2147, %v936, -inf
    %v2359 = vrot.slane %v2358, 4
    %v2360 = vmax.f32 %v2358, %v2359
    %v2361 = vrot.slane %v2360, 2
    %v2362 = vmax.f32 %v2360, %v2361
    %v2363 = vrot.slane %v2362, 1
    %v2364 = vmax.f32 %v2362, %v2363
    %v2365 = vsel %vm2147, %v938, -inf
    %v2366 = vrot.slane %v2365, 4
    %v2367 = vmax.f32 %v2365, %v2366
    %v2368 = vrot.slane %v2367, 2
    %v2369 = vmax.f32 %v2367, %v2368
    %v2370 = vrot.slane %v2369, 1
    %v2371 = vmax.f32 %v2369, %v2370
    %v2372 = vsel %vm2147, %v946, -inf
    %v2373 = vrot.slane %v2372, 4
    %v2374 = vmax.f32 %v2372, %v2373
    %v2375 = vrot.slane %v2374, 2
    %v2376 = vmax.f32 %v2374, %v2375
    %v2377 = vrot.slane %v2376, 1
    %v2378 = vmax.f32 %v2376, %v2377
    %v2379 = vsel %vm2147, %v954, -inf
    %v2380 = vrot.slane %v2379, 4
    %v2381 = vmax.f32 %v2379, %v2380
    %v2382 = vrot.slane %v2381, 2
    %v2383 = vmax.f32 %v2381, %v2382
    %v2384 = vrot.slane %v2383, 1
    %v2385 = vmax.f32 %v2383, %v2384
    %v2386 = vsel %vm2147, %v953, -inf
    %v2387 = vrot.slane %v2386, 4
    %v2388 = vmax.f32 %v2386, %v2387
    %v2389 = vrot.slane %v2388, 2
    %v2390 = vmax.f32 %v2388, %v2389
    %v2391 = vrot.slane %v2390, 1
    %v2392 = vmax.f32 %v2390, %v2391
    %v2393 = vsel %vm2147, %v955, -inf
    %v2394 = vrot.slane %v2393, 4
    %v2395 = vmax.f32 %v2393, %v2394
    %v2396 = vrot.slane %v2395, 2
    %v2397 = vmax.f32 %v2395, %v2396
    %v2398 = vrot.slane %v2397, 1
    %v2399 = vmax.f32 %v2397, %v2398
    %v2400 = vsel %vm2147, %v963, -inf
    %v2401 = vrot.slane %v2400, 4
    %v2402 = vmax.f32 %v2400, %v2401
    %v2403 = vrot.slane %v2402, 2
    %v2404 = vmax.f32 %v2402, %v2403
    %v2405 = vrot.slane %v2404, 1
    %v2406 = vmax.f32 %v2404, %v2405
    %v2407 = vsel %vm2147, %v971, -inf
    %v2408 = vrot.slane %v2407, 4
    %v2409 = vmax.f32 %v2407, %v2408
    %v2410 = vrot.slane %v2409, 2
    %v2411 = vmax.f32 %v2409, %v2410
    %v2412 = vrot.slane %v2411, 1
    %v2413 = vmax.f32 %v2411, %v2412
    %v2414 = vsel %vm2147, %v970, -inf
    %v2415 = vrot.slane %v2414, 4
    %v2416 = vmax.f32 %v2414, %v2415
    %v2417 = vrot.slane %v2416, 2
    %v2418 = vmax.f32 %v2416, %v2417
    %v2419 = vrot.slane %v2418, 1
    %v2420 = vmax.f32 %v2418, %v2419
    %v2421 = vsel %vm2147, %v972, -inf
    %v2422 = vrot.slane %v2421, 4
    %v2423 = vmax.f32 %v2421, %v2422
    %v2424 = vrot.slane %v2423, 2
    %v2425 = vmax.f32 %v2423, %v2424
    %v2426 = vrot.slane %v2425, 1
    %v2427 = vmax.f32 %v2425, %v2426
    %v2428 = vsel %vm2147, %v980, -inf
    %v2429 = vrot.slane %v2428, 4
    %v2430 = vmax.f32 %v2428, %v2429
    %v2431 = vrot.slane %v2430, 2
    %v2432 = vmax.f32 %v2430, %v2431
    %v2433 = vrot.slane %v2432, 1
    %v2434 = vmax.f32 %v2432, %v2433
    %v2435 = vsel %vm2147, %v988, -inf
    %v2436 = vrot.slane %v2435, 4
    %v2437 = vmax.f32 %v2435, %v2436
    %v2438 = vrot.slane %v2437, 2
    %v2439 = vmax.f32 %v2437, %v2438
    %v2440 = vrot.slane %v2439, 1
    %v2441 = vmax.f32 %v2439, %v2440
    %v2442 = vsel %vm2147, %v987, -inf
    %v2443 = vrot.slane %v2442, 4
    %v2444 = vmax.f32 %v2442, %v2443
    %v2445 = vrot.slane %v2444, 2
    %v2446 = vmax.f32 %v2444, %v2445
    %v2447 = vrot.slane %v2446, 1
    %v2448 = vmax.f32 %v2446, %v2447
    %v2449 = vsel %vm2147, %v989, -inf
    %v2450 = vrot.slane %v2449, 4
    %v2451 = vmax.f32 %v2449, %v2450
    %v2452 = vrot.slane %v2451, 2
    %v2453 = vmax.f32 %v2451, %v2452
    %v2454 = vrot.slane %v2453, 1
    %v2455 = vmax.f32 %v2453, %v2454
    %v2456 = vsel %vm2147, %v997, -inf
    %v2457 = vrot.slane %v2456, 4
    %v2458 = vmax.f32 %v2456, %v2457
    %v2459 = vrot.slane %v2458, 2
    %v2460 = vmax.f32 %v2458, %v2459
    %v2461 = vrot.slane %v2460, 1
    %v2462 = vmax.f32 %v2460, %v2461
    %v2463 = vsel %vm2147, %v1005, -inf
    %v2464 = vrot.slane %v2463, 4
    %v2465 = vmax.f32 %v2463, %v2464
    %v2466 = vrot.slane %v2465, 2
    %v2467 = vmax.f32 %v2465, %v2466
    %v2468 = vrot.slane %v2467, 1
    %v2469 = vmax.f32 %v2467, %v2468
    %v2470 = vsel %vm2147, %v1004, -inf
    %v2471 = vrot.slane %v2470, 4
    %v2472 = vmax.f32 %v2470, %v2471
    %v2473 = vrot.slane %v2472, 2
    %v2474 = vmax.f32 %v2472, %v2473
    %v2475 = vrot.slane %v2474, 1
    %v2476 = vmax.f32 %v2474, %v2475
    %v2477 = vsel %vm2147, %v1006, -inf
    %v2478 = vrot.slane %v2477, 4
    %v2479 = vmax.f32 %v2477, %v2478
    %v2480 = vrot.slane %v2479, 2
    %v2481 = vmax.f32 %v2479, %v2480
    %v2482 = vrot.slane %v2481, 1
    %v2483 = vmax.f32 %v2481, %v2482
    %v2484 = vsel %vm2147, %v1014, -inf
    %v2485 = vrot.slane %v2484, 4
    %v2486 = vmax.f32 %v2484, %v2485
    %v2487 = vrot.slane %v2486, 2
    %v2488 = vmax.f32 %v2486, %v2487
    %v2489 = vrot.slane %v2488, 1
    %v2490 = vmax.f32 %v2488, %v2489
    %v2491 = vsel %vm2147, %v1022, -inf
    %v2492 = vrot.slane %v2491, 4
    %v2493 = vmax.f32 %v2491, %v2492
    %v2494 = vrot.slane %v2493, 2
    %v2495 = vmax.f32 %v2493, %v2494
    %v2496 = vrot.slane %v2495, 1
    %v2497 = vmax.f32 %v2495, %v2496
    %v2498 = vsel %vm2147, %v1021, -inf
    %v2499 = vrot.slane %v2498, 4
    %v2500 = vmax.f32 %v2498, %v2499
    %v2501 = vrot.slane %v2500, 2
    %v2502 = vmax.f32 %v2500, %v2501
    %v2503 = vrot.slane %v2502, 1
    %v2504 = vmax.f32 %v2502, %v2503
    %v2505 = vsel %vm2147, %v1023, -inf
    %v2506 = vrot.slane %v2505, 4
    %v2507 = vmax.f32 %v2505, %v2506
    %v2508 = vrot.slane %v2507, 2
    %v2509 = vmax.f32 %v2507, %v2508
    %v2510 = vrot.slane %v2509, 1
    %v2511 = vmax.f32 %v2509, %v2510
    %v2512 = vsel %vm2147, %v1031, -inf
    %v2513 = vrot.slane %v2512, 4
    %v2514 = vmax.f32 %v2512, %v2513
    %v2515 = vrot.slane %v2514, 2
    %v2516 = vmax.f32 %v2514, %v2515
    %v2517 = vrot.slane %v2516, 1
    %v2518 = vmax.f32 %v2516, %v2517
    %v2519 = vsel %vm2147, %v1039, -inf
    %v2520 = vrot.slane %v2519, 4
    %v2521 = vmax.f32 %v2519, %v2520
    %v2522 = vrot.slane %v2521, 2
    %v2523 = vmax.f32 %v2521, %v2522
    %v2524 = vrot.slane %v2523, 1
    %v2525 = vmax.f32 %v2523, %v2524
    %v2526 = vsel %vm2147, %v1038, -inf
    %v2527 = vrot.slane %v2526, 4
    %v2528 = vmax.f32 %v2526, %v2527
    %v2529 = vrot.slane %v2528, 2
    %v2530 = vmax.f32 %v2528, %v2529
    %v2531 = vrot.slane %v2530, 1
    %v2532 = vmax.f32 %v2530, %v2531
    %v2533 = vsel %vm2147, %v1040, -inf
    %v2534 = vrot.slane %v2533, 4
    %v2535 = vmax.f32 %v2533, %v2534
    %v2536 = vrot.slane %v2535, 2
    %v2537 = vmax.f32 %v2535, %v2536
    %v2538 = vrot.slane %v2537, 1
    %v2539 = vmax.f32 %v2537, %v2538
    %v2540 = vsel %vm2147, %v1048, -inf
    %v2541 = vrot.slane %v2540, 4
    %v2542 = vmax.f32 %v2540, %v2541
    %v2543 = vrot.slane %v2542, 2
    %v2544 = vmax.f32 %v2542, %v2543
    %v2545 = vrot.slane %v2544, 1
    %v2546 = vmax.f32 %v2544, %v2545
    %v2547 = vsel %vm2147, %v1056, -inf
    %v2548 = vrot.slane %v2547, 4
    %v2549 = vmax.f32 %v2547, %v2548
    %v2550 = vrot.slane %v2549, 2
    %v2551 = vmax.f32 %v2549, %v2550
    %v2552 = vrot.slane %v2551, 1
    %v2553 = vmax.f32 %v2551, %v2552
    %v2554 = vsel %vm2147, %v1055, -inf
    %v2555 = vrot.slane %v2554, 4
    %v2556 = vmax.f32 %v2554, %v2555
    %v2557 = vrot.slane %v2556, 2
    %v2558 = vmax.f32 %v2556, %v2557
    %v2559 = vrot.slane %v2558, 1
    %v2560 = vmax.f32 %v2558, %v2559
    %v2561 = vsel %vm2147, %v1057, -inf
    %v2562 = vrot.slane %v2561, 4
    %v2563 = vmax.f32 %v2561, %v2562
    %v2564 = vrot.slane %v2563, 2
    %v2565 = vmax.f32 %v2563, %v2564
    %v2566 = vrot.slane %v2565, 1
    %v2567 = vmax.f32 %v2565, %v2566
    %v2568 = vsel %vm2147, %v1065, -inf
    %v2569 = vrot.slane %v2568, 4
    %v2570 = vmax.f32 %v2568, %v2569
    %v2571 = vrot.slane %v2570, 2
    %v2572 = vmax.f32 %v2570, %v2571
    %v2573 = vrot.slane %v2572, 1
    %v2574 = vmax.f32 %v2572, %v2573
    %v2575 = vsel %vm2147, %v1073, -inf
    %v2576 = vrot.slane %v2575, 4
    %v2577 = vmax.f32 %v2575, %v2576
    %v2578 = vrot.slane %v2577, 2
    %v2579 = vmax.f32 %v2577, %v2578
    %v2580 = vrot.slane %v2579, 1
    %v2581 = vmax.f32 %v2579, %v2580
    %v2582 = vsel %vm2147, %v1072, -inf
    %v2583 = vrot.slane %v2582, 4
    %v2584 = vmax.f32 %v2582, %v2583
    %v2585 = vrot.slane %v2584, 2
    %v2586 = vmax.f32 %v2584, %v2585
    %v2587 = vrot.slane %v2586, 1
    %v2588 = vmax.f32 %v2586, %v2587
    %v2589 = vsel %vm2147, %v1074, -inf
    %v2590 = vrot.slane %v2589, 4
    %v2591 = vmax.f32 %v2589, %v2590
    %v2592 = vrot.slane %v2591, 2
    %v2593 = vmax.f32 %v2591, %v2592
    %v2594 = vrot.slane %v2593, 1
    %v2595 = vmax.f32 %v2593, %v2594
    %v2596 = vsel %vm2147, %v1082, -inf
    %v2597 = vrot.slane %v2596, 4
    %v2598 = vmax.f32 %v2596, %v2597
    %v2599 = vrot.slane %v2598, 2
    %v2600 = vmax.f32 %v2598, %v2599
    %v2601 = vrot.slane %v2600, 1
    %v2602 = vmax.f32 %v2600, %v2601
    %v2603 = vsel %vm2147, %v1090, -inf
    %v2604 = vrot.slane %v2603, 4
    %v2605 = vmax.f32 %v2603, %v2604
    %v2606 = vrot.slane %v2605, 2
    %v2607 = vmax.f32 %v2605, %v2606
    %v2608 = vrot.slane %v2607, 1
    %v2609 = vmax.f32 %v2607, %v2608
    %v2610 = vsel %vm2147, %v1089, -inf
    %v2611 = vrot.slane %v2610, 4
    %v2612 = vmax.f32 %v2610, %v2611
    %v2613 = vrot.slane %v2612, 2
    %v2614 = vmax.f32 %v2612, %v2613
    %v2615 = vrot.slane %v2614, 1
    %v2616 = vmax.f32 %v2614, %v2615
    %v2617 = vsel %vm2147, %v1091, -inf
    %v2618 = vrot.slane %v2617, 4
    %v2619 = vmax.f32 %v2617, %v2618
    %v2620 = vrot.slane %v2619, 2
    %v2621 = vmax.f32 %v2619, %v2620
    %v2622 = vrot.slane %v2621, 1
    %v2623 = vmax.f32 %v2621, %v2622
    %v2624 = vsel %vm2147, %v1099, -inf
    %v2625 = vrot.slane %v2624, 4
    %v2626 = vmax.f32 %v2624, %v2625
    %v2627 = vrot.slane %v2626, 2
    %v2628 = vmax.f32 %v2626, %v2627
    %v2629 = vrot.slane %v2628, 1
    %v2630 = vmax.f32 %v2628, %v2629
    %v2631 = vsel %vm2147, %v1107, -inf
    %v2632 = vrot.slane %v2631, 4
    %v2633 = vmax.f32 %v2631, %v2632
    %v2634 = vrot.slane %v2633, 2
    %v2635 = vmax.f32 %v2633, %v2634
    %v2636 = vrot.slane %v2635, 1
    %v2637 = vmax.f32 %v2635, %v2636
    %v2638 = vsel %vm2147, %v1106, -inf
    %v2639 = vrot.slane %v2638, 4
    %v2640 = vmax.f32 %v2638, %v2639
    %v2641 = vrot.slane %v2640, 2
    %v2642 = vmax.f32 %v2640, %v2641
    %v2643 = vrot.slane %v2642, 1
    %v2644 = vmax.f32 %v2642, %v2643
    %v2645 = vsel %vm2147, %v1108, -inf
    %v2646 = vrot.slane %v2645, 4
    %v2647 = vmax.f32 %v2645, %v2646
    %v2648 = vrot.slane %v2647, 2
    %v2649 = vmax.f32 %v2647, %v2648
    %v2650 = vrot.slane %v2649, 1
    %v2651 = vmax.f32 %v2649, %v2650
    %v2652 = vsel %vm2147, %v1116, -inf
    %v2653 = vrot.slane %v2652, 4
    %v2654 = vmax.f32 %v2652, %v2653
    %v2655 = vrot.slane %v2654, 2
    %v2656 = vmax.f32 %v2654, %v2655
    %v2657 = vrot.slane %v2656, 1
    %v2658 = vmax.f32 %v2656, %v2657
    %v2659 = vsel %vm2147, %v1124, -inf
    %v2660 = vrot.slane %v2659, 4
    %v2661 = vmax.f32 %v2659, %v2660
    %v2662 = vrot.slane %v2661, 2
    %v2663 = vmax.f32 %v2661, %v2662
    %v2664 = vrot.slane %v2663, 1
    %v2665 = vmax.f32 %v2663, %v2664
    %v2666 = vsel %vm2147, %v1123, -inf
    %v2667 = vrot.slane %v2666, 4
    %v2668 = vmax.f32 %v2666, %v2667
    %v2669 = vrot.slane %v2668, 2
    %v2670 = vmax.f32 %v2668, %v2669
    %v2671 = vrot.slane %v2670, 1
    %v2672 = vmax.f32 %v2670, %v2671
    %v2673 = vsel %vm2147, %v1125, -inf
    %v2674 = vrot.slane %v2673, 4
    %v2675 = vmax.f32 %v2673, %v2674
    %v2676 = vrot.slane %v2675, 2
    %v2677 = vmax.f32 %v2675, %v2676
    %v2678 = vrot.slane %v2677, 1
    %v2679 = vmax.f32 %v2677, %v2678
    %v2680 = vsel %vm2147, %v1133, -inf
    %v2681 = vrot.slane %v2680, 4
    %v2682 = vmax.f32 %v2680, %v2681
    %v2683 = vrot.slane %v2682, 2
    %v2684 = vmax.f32 %v2682, %v2683
    %v2685 = vrot.slane %v2684, 1
    %v2686 = vmax.f32 %v2684, %v2685
    %v2687 = vsel %vm2147, %v1141, -inf
    %v2688 = vrot.slane %v2687, 4
    %v2689 = vmax.f32 %v2687, %v2688
    %v2690 = vrot.slane %v2689, 2
    %v2691 = vmax.f32 %v2689, %v2690
    %v2692 = vrot.slane %v2691, 1
    %v2693 = vmax.f32 %v2691, %v2692
    %v2694 = vsel %vm2147, %v1140, -inf
    %v2695 = vrot.slane %v2694, 4
    %v2696 = vmax.f32 %v2694, %v2695
    %v2697 = vrot.slane %v2696, 2
    %v2698 = vmax.f32 %v2696, %v2697
    %v2699 = vrot.slane %v2698, 1
    %v2700 = vmax.f32 %v2698, %v2699
    %v2701 = vsel %vm2147, %v1142, -inf
    %v2702 = vrot.slane %v2701, 4
    %v2703 = vmax.f32 %v2701, %v2702
    %v2704 = vrot.slane %v2703, 2
    %v2705 = vmax.f32 %v2703, %v2704
    %v2706 = vrot.slane %v2705, 1
    %v2707 = vmax.f32 %v2705, %v2706
    %v2708 = vsel %vm2147, %v1150, -inf
    %v2709 = vrot.slane %v2708, 4
    %v2710 = vmax.f32 %v2708, %v2709
    %v2711 = vrot.slane %v2710, 2
    %v2712 = vmax.f32 %v2710, %v2711
    %v2713 = vrot.slane %v2712, 1
    %v2714 = vmax.f32 %v2712, %v2713
    %v2715 = vsel %vm2147, %v1158, -inf
    %v2716 = vrot.slane %v2715, 4
    %v2717 = vmax.f32 %v2715, %v2716
    %v2718 = vrot.slane %v2717, 2
    %v2719 = vmax.f32 %v2717, %v2718
    %v2720 = vrot.slane %v2719, 1
    %v2721 = vmax.f32 %v2719, %v2720
    %v2722 = vsel %vm2147, %v1157, -inf
    %v2723 = vrot.slane %v2722, 4
    %v2724 = vmax.f32 %v2722, %v2723
    %v2725 = vrot.slane %v2724, 2
    %v2726 = vmax.f32 %v2724, %v2725
    %v2727 = vrot.slane %v2726, 1
    %v2728 = vmax.f32 %v2726, %v2727
    %v2729 = vsel %vm2147, %v1159, -inf
    %v2730 = vrot.slane %v2729, 4
    %v2731 = vmax.f32 %v2729, %v2730
    %v2732 = vrot.slane %v2731, 2
    %v2733 = vmax.f32 %v2731, %v2732
    %v2734 = vrot.slane %v2733, 1
    %v2735 = vmax.f32 %v2733, %v2734
    %v2736 = vsel %vm2147, %v1167, -inf
    %v2737 = vrot.slane %v2736, 4
    %v2738 = vmax.f32 %v2736, %v2737
    %v2739 = vrot.slane %v2738, 2
    %v2740 = vmax.f32 %v2738, %v2739
    %v2741 = vrot.slane %v2740, 1
    %v2742 = vmax.f32 %v2740, %v2741
    %v2743 = vsel %vm2147, %v1175, -inf
    %v2744 = vrot.slane %v2743, 4
    %v2745 = vmax.f32 %v2743, %v2744
    %v2746 = vrot.slane %v2745, 2
    %v2747 = vmax.f32 %v2745, %v2746
    %v2748 = vrot.slane %v2747, 1
    %v2749 = vmax.f32 %v2747, %v2748
    %v2750 = vsel %vm2147, %v1174, -inf
    %v2751 = vrot.slane %v2750, 4
    %v2752 = vmax.f32 %v2750, %v2751
    %v2753 = vrot.slane %v2752, 2
    %v2754 = vmax.f32 %v2752, %v2753
    %v2755 = vrot.slane %v2754, 1
    %v2756 = vmax.f32 %v2754, %v2755
    %v2757 = vsel %vm2147, %v1176, -inf
    %v2758 = vrot.slane %v2757, 4
    %v2759 = vmax.f32 %v2757, %v2758
    %v2760 = vrot.slane %v2759, 2
    %v2761 = vmax.f32 %v2759, %v2760
    %v2762 = vrot.slane %v2761, 1
    %v2763 = vmax.f32 %v2761, %v2762
    %v2764 = vsel %vm2147, %v1184, -inf
    %v2765 = vrot.slane %v2764, 4
    %v2766 = vmax.f32 %v2764, %v2765
    %v2767 = vrot.slane %v2766, 2
    %v2768 = vmax.f32 %v2766, %v2767
    %v2769 = vrot.slane %v2768, 1
    %v2770 = vmax.f32 %v2768, %v2769
    %v2771 = vsel %vm2147, %v1192, -inf
    %v2772 = vrot.slane %v2771, 4
    %v2773 = vmax.f32 %v2771, %v2772
    %v2774 = vrot.slane %v2773, 2
    %v2775 = vmax.f32 %v2773, %v2774
    %v2776 = vrot.slane %v2775, 1
    %v2777 = vmax.f32 %v2775, %v2776
    %v2778 = vsel %vm2147, %v1191, -inf
    %v2779 = vrot.slane %v2778, 4
    %v2780 = vmax.f32 %v2778, %v2779
    %v2781 = vrot.slane %v2780, 2
    %v2782 = vmax.f32 %v2780, %v2781
    %v2783 = vrot.slane %v2782, 1
    %v2784 = vmax.f32 %v2782, %v2783
    %v2785 = vsel %vm2147, %v1193, -inf
    %v2786 = vrot.slane %v2785, 4
    %v2787 = vmax.f32 %v2785, %v2786
    %v2788 = vrot.slane %v2787, 2
    %v2789 = vmax.f32 %v2787, %v2788
    %v2790 = vrot.slane %v2789, 1
    %v2791 = vmax.f32 %v2789, %v2790
    %v2792 = vsel %vm2147, %v1201, -inf
    %v2793 = vrot.slane %v2792, 4
    %v2794 = vmax.f32 %v2792, %v2793
    %v2795 = vrot.slane %v2794, 2
    %v2796 = vmax.f32 %v2794, %v2795
    %v2797 = vrot.slane %v2796, 1
    %v2798 = vmax.f32 %v2796, %v2797
    %v2799 = vsel %vm2147, %v1209, -inf
    %v2800 = vrot.slane %v2799, 4
    %v2801 = vmax.f32 %v2799, %v2800
    %v2802 = vrot.slane %v2801, 2
    %v2803 = vmax.f32 %v2801, %v2802
    %v2804 = vrot.slane %v2803, 1
    %v2805 = vmax.f32 %v2803, %v2804
    %v2806 = vsel %vm2147, %v1208, -inf
    %v2807 = vrot.slane %v2806, 4
    %v2808 = vmax.f32 %v2806, %v2807
    %v2809 = vrot.slane %v2808, 2
    %v2810 = vmax.f32 %v2808, %v2809
    %v2811 = vrot.slane %v2810, 1
    %v2812 = vmax.f32 %v2810, %v2811
    %v2813 = vsel %vm2147, %v1210, -inf
    %v2814 = vrot.slane %v2813, 4
    %v2815 = vmax.f32 %v2813, %v2814
    %v2816 = vrot.slane %v2815, 2
    %v2817 = vmax.f32 %v2815, %v2816
    %v2818 = vrot.slane %v2817, 1
    %v2819 = vmax.f32 %v2817, %v2818
    %v2820 = vsel %vm2147, %v1218, -inf
    %v2821 = vrot.slane %v2820, 4
    %v2822 = vmax.f32 %v2820, %v2821
    %v2823 = vrot.slane %v2822, 2
    %v2824 = vmax.f32 %v2822, %v2823
    %v2825 = vrot.slane %v2824, 1
    %v2826 = vmax.f32 %v2824, %v2825
    %v2827 = vsel %vm2147, %v1226, -inf
    %v2828 = vrot.slane %v2827, 4
    %v2829 = vmax.f32 %v2827, %v2828
    %v2830 = vrot.slane %v2829, 2
    %v2831 = vmax.f32 %v2829, %v2830
    %v2832 = vrot.slane %v2831, 1
    %v2833 = vmax.f32 %v2831, %v2832
    %v2834 = vsel %vm2147, %v1225, -inf
    %v2835 = vrot.slane %v2834, 4
    %v2836 = vmax.f32 %v2834, %v2835
    %v2837 = vrot.slane %v2836, 2
    %v2838 = vmax.f32 %v2836, %v2837
    %v2839 = vrot.slane %v2838, 1
    %v2840 = vmax.f32 %v2838, %v2839
    %v2841 = vsel %vm2147, %v1227, -inf
    %v2842 = vrot.slane %v2841, 4
    %v2843 = vmax.f32 %v2841, %v2842
    %v2844 = vrot.slane %v2843, 2
    %v2845 = vmax.f32 %v2843, %v2844
    %v2846 = vrot.slane %v2845, 1
    %v2847 = vmax.f32 %v2845, %v2846
    %v2848 = vsel %vm2147, %v1235, -inf
    %v2849 = vrot.slane %v2848, 4
    %v2850 = vmax.f32 %v2848, %v2849
    %v2851 = vrot.slane %v2850, 2
    %v2852 = vmax.f32 %v2850, %v2851
    %v2853 = vrot.slane %v2852, 1
    %v2854 = vmax.f32 %v2852, %v2853
    %v2855 = vsel %vm2147, %v1243, -inf
    %v2856 = vrot.slane %v2855, 4
    %v2857 = vmax.f32 %v2855, %v2856
    %v2858 = vrot.slane %v2857, 2
    %v2859 = vmax.f32 %v2857, %v2858
    %v2860 = vrot.slane %v2859, 1
    %v2861 = vmax.f32 %v2859, %v2860
    %v2862 = vsel %vm2147, %v1242, -inf
    %v2863 = vrot.slane %v2862, 4
    %v2864 = vmax.f32 %v2862, %v2863
    %v2865 = vrot.slane %v2864, 2
    %v2866 = vmax.f32 %v2864, %v2865
    %v2867 = vrot.slane %v2866, 1
    %v2868 = vmax.f32 %v2866, %v2867
    %v2869 = vsel %vm2147, %v1244, -inf
    %v2870 = vrot.slane %v2869, 4
    %v2871 = vmax.f32 %v2869, %v2870
    %v2872 = vrot.slane %v2871, 2
    %v2873 = vmax.f32 %v2871, %v2872
    %v2874 = vrot.slane %v2873, 1
    %v2875 = vmax.f32 %v2873, %v2874
    %v2876 = vsel %vm2147, %v1252, -inf
    %v2877 = vrot.slane %v2876, 4
    %v2878 = vmax.f32 %v2876, %v2877
    %v2879 = vrot.slane %v2878, 2
    %v2880 = vmax.f32 %v2878, %v2879
    %v2881 = vrot.slane %v2880, 1
    %v2882 = vmax.f32 %v2880, %v2881
    %v2883 = vsel %vm2147, %v1260, -inf
    %v2884 = vrot.slane %v2883, 4
    %v2885 = vmax.f32 %v2883, %v2884
    %v2886 = vrot.slane %v2885, 2
    %v2887 = vmax.f32 %v2885, %v2886
    %v2888 = vrot.slane %v2887, 1
    %v2889 = vmax.f32 %v2887, %v2888
    %v2890 = vsel %vm2147, %v1259, -inf
    %v2891 = vrot.slane %v2890, 4
    %v2892 = vmax.f32 %v2890, %v2891
    %v2893 = vrot.slane %v2892, 2
    %v2894 = vmax.f32 %v2892, %v2893
    %v2895 = vrot.slane %v2894, 1
    %v2896 = vmax.f32 %v2894, %v2895
    %v2897 = vsel %vm2147, %v1261, -inf
    %v2898 = vrot.slane %v2897, 4
    %v2899 = vmax.f32 %v2897, %v2898
    %v2900 = vrot.slane %v2899, 2
    %v2901 = vmax.f32 %v2899, %v2900
    %v2902 = vrot.slane %v2901, 1
    %v2903 = vmax.f32 %v2901, %v2902
    %v2904 = vsel %vm2147, %v1269, -inf
    %v2905 = vrot.slane %v2904, 4
    %v2906 = vmax.f32 %v2904, %v2905
    %v2907 = vrot.slane %v2906, 2
    %v2908 = vmax.f32 %v2906, %v2907
    %v2909 = vrot.slane %v2908, 1
    %v2910 = vmax.f32 %v2908, %v2909
    %v2911 = vsel %vm2147, %v1277, -inf
    %v2912 = vrot.slane %v2911, 4
    %v2913 = vmax.f32 %v2911, %v2912
    %v2914 = vrot.slane %v2913, 2
    %v2915 = vmax.f32 %v2913, %v2914
    %v2916 = vrot.slane %v2915, 1
    %v2917 = vmax.f32 %v2915, %v2916
    %v2918 = vsel %vm2147, %v1276, -inf
    %v2919 = vrot.slane %v2918, 4
    %v2920 = vmax.f32 %v2918, %v2919
    %v2921 = vrot.slane %v2920, 2
    %v2922 = vmax.f32 %v2920, %v2921
    %v2923 = vrot.slane %v2922, 1
    %v2924 = vmax.f32 %v2922, %v2923
    %v2925 = vsel %vm2147, %v1278, -inf
    %v2926 = vrot.slane %v2925, 4
    %v2927 = vmax.f32 %v2925, %v2926
    %v2928 = vrot.slane %v2927, 2
    %v2929 = vmax.f32 %v2927, %v2928
    %v2930 = vrot.slane %v2929, 1
    %v2931 = vmax.f32 %v2929, %v2930
    %v2932 = vsel %vm2147, %v1286, -inf
    %v2933 = vrot.slane %v2932, 4
    %v2934 = vmax.f32 %v2932, %v2933
    %v2935 = vrot.slane %v2934, 2
    %v2936 = vmax.f32 %v2934, %v2935
    %v2937 = vrot.slane %v2936, 1
    %v2938 = vmax.f32 %v2936, %v2937
    %v2939 = vsel %vm2147, %v1294, -inf
    %v2940 = vrot.slane %v2939, 4
    %v2941 = vmax.f32 %v2939, %v2940
    %v2942 = vrot.slane %v2941, 2
    %v2943 = vmax.f32 %v2941, %v2942
    %v2944 = vrot.slane %v2943, 1
    %v2945 = vmax.f32 %v2943, %v2944
    %v2946 = vsel %vm2147, %v1293, -inf
    %v2947 = vrot.slane %v2946, 4
    %v2948 = vmax.f32 %v2946, %v2947
    %v2949 = vrot.slane %v2948, 2
    %v2950 = vmax.f32 %v2948, %v2949
    %v2951 = vrot.slane %v2950, 1
    %v2952 = vmax.f32 %v2950, %v2951
    %v2953 = vsel %vm2147, %v1295, -inf
    %v2954 = vrot.slane %v2953, 4
    %v2955 = vmax.f32 %v2953, %v2954
    %v2956 = vrot.slane %v2955, 2
    %v2957 = vmax.f32 %v2955, %v2956
    %v2958 = vrot.slane %v2957, 1
    %v2959 = vmax.f32 %v2957, %v2958
    %v2960 = vsel %vm2147, %v1303, -inf
    %v2961 = vrot.slane %v2960, 4
    %v2962 = vmax.f32 %v2960, %v2961
    %v2963 = vrot.slane %v2962, 2
    %v2964 = vmax.f32 %v2962, %v2963
    %v2965 = vrot.slane %v2964, 1
    %v2966 = vmax.f32 %v2964, %v2965
    %v2967 = vsel %vm2147, %v1311, -inf
    %v2968 = vrot.slane %v2967, 4
    %v2969 = vmax.f32 %v2967, %v2968
    %v2970 = vrot.slane %v2969, 2
    %v2971 = vmax.f32 %v2969, %v2970
    %v2972 = vrot.slane %v2971, 1
    %v2973 = vmax.f32 %v2971, %v2972
    %v2974 = vsel %vm2147, %v1310, -inf
    %v2975 = vrot.slane %v2974, 4
    %v2976 = vmax.f32 %v2974, %v2975
    %v2977 = vrot.slane %v2976, 2
    %v2978 = vmax.f32 %v2976, %v2977
    %v2979 = vrot.slane %v2978, 1
    %v2980 = vmax.f32 %v2978, %v2979
    %v2981 = vsel %vm2147, %v1312, -inf
    %v2982 = vrot.slane %v2981, 4
    %v2983 = vmax.f32 %v2981, %v2982
    %v2984 = vrot.slane %v2983, 2
    %v2985 = vmax.f32 %v2983, %v2984
    %v2986 = vrot.slane %v2985, 1
    %v2987 = vmax.f32 %v2985, %v2986
    %v2988 = vsel %vm2147, %v1320, -inf
    %v2989 = vrot.slane %v2988, 4
    %v2990 = vmax.f32 %v2988, %v2989
    %v2991 = vrot.slane %v2990, 2
    %v2992 = vmax.f32 %v2990, %v2991
    %v2993 = vrot.slane %v2992, 1
    %v2994 = vmax.f32 %v2992, %v2993
    %v2995 = vsel %vm2147, %v1328, -inf
    %v2996 = vrot.slane %v2995, 4
    %v2997 = vmax.f32 %v2995, %v2996
    %v2998 = vrot.slane %v2997, 2
    %v2999 = vmax.f32 %v2997, %v2998
    %v3000 = vrot.slane %v2999, 1
    %v3001 = vmax.f32 %v2999, %v3000
    %v3002 = vsel %vm2147, %v1327, -inf
    %v3003 = vrot.slane %v3002, 4
    %v3004 = vmax.f32 %v3002, %v3003
    %v3005 = vrot.slane %v3004, 2
    %v3006 = vmax.f32 %v3004, %v3005
    %v3007 = vrot.slane %v3006, 1
    %v3008 = vmax.f32 %v3006, %v3007
    %v3009 = vsel %vm2147, %v1329, -inf
    %v3010 = vrot.slane %v3009, 4
    %v3011 = vmax.f32 %v3009, %v3010
    %v3012 = vrot.slane %v3011, 2
    %v3013 = vmax.f32 %v3011, %v3012
    %v3014 = vrot.slane %v3013, 1
    %v3015 = vmax.f32 %v3013, %v3014
    %v3016 = vsel %vm2147, %v1337, -inf
    %v3017 = vrot.slane %v3016, 4
    %v3018 = vmax.f32 %v3016, %v3017
    %v3019 = vrot.slane %v3018, 2
    %v3020 = vmax.f32 %v3018, %v3019
    %v3021 = vrot.slane %v3020, 1
    %v3022 = vmax.f32 %v3020, %v3021
    %v3023 = vsel %vm2147, %v1345, -inf
    %v3024 = vrot.slane %v3023, 4
    %v3025 = vmax.f32 %v3023, %v3024
    %v3026 = vrot.slane %v3025, 2
    %v3027 = vmax.f32 %v3025, %v3026
    %v3028 = vrot.slane %v3027, 1
    %v3029 = vmax.f32 %v3027, %v3028
    %v3030 = vsel %vm2147, %v1344, -inf
    %v3031 = vrot.slane %v3030, 4
    %v3032 = vmax.f32 %v3030, %v3031
    %v3033 = vrot.slane %v3032, 2
    %v3034 = vmax.f32 %v3032, %v3033
    %v3035 = vrot.slane %v3034, 1
    %v3036 = vmax.f32 %v3034, %v3035
    %v3037 = vsel %vm2147, %v1346, -inf
    %v3038 = vrot.slane %v3037, 4
    %v3039 = vmax.f32 %v3037, %v3038
    %v3040 = vrot.slane %v3039, 2
    %v3041 = vmax.f32 %v3039, %v3040
    %v3042 = vrot.slane %v3041, 1
    %v3043 = vmax.f32 %v3041, %v3042
    %v3044 = vsel %vm2147, %v1354, -inf
    %v3045 = vrot.slane %v3044, 4
    %v3046 = vmax.f32 %v3044, %v3045
    %v3047 = vrot.slane %v3046, 2
    %v3048 = vmax.f32 %v3046, %v3047
    %v3049 = vrot.slane %v3048, 1
    %v3050 = vmax.f32 %v3048, %v3049
    %v3051 = vsel %vm2147, %v1362, -inf
    %v3052 = vrot.slane %v3051, 4
    %v3053 = vmax.f32 %v3051, %v3052
    %v3054 = vrot.slane %v3053, 2
    %v3055 = vmax.f32 %v3053, %v3054
    %v3056 = vrot.slane %v3055, 1
    %v3057 = vmax.f32 %v3055, %v3056
    %v3058 = vsel %vm2147, %v1361, -inf
    %v3059 = vrot.slane %v3058, 4
    %v3060 = vmax.f32 %v3058, %v3059
    %v3061 = vrot.slane %v3060, 2
    %v3062 = vmax.f32 %v3060, %v3061
    %v3063 = vrot.slane %v3062, 1
    %v3064 = vmax.f32 %v3062, %v3063
    %v3065 = vsel %vm2147, %v1363, -inf
    %v3066 = vrot.slane %v3065, 4
    %v3067 = vmax.f32 %v3065, %v3066
    %v3068 = vrot.slane %v3067, 2
    %v3069 = vmax.f32 %v3067, %v3068
    %v3070 = vrot.slane %v3069, 1
    %v3071 = vmax.f32 %v3069, %v3070
    %v3072 = vsel %vm2147, %v1371, -inf
    %v3073 = vrot.slane %v3072, 4
    %v3074 = vmax.f32 %v3072, %v3073
    %v3075 = vrot.slane %v3074, 2
    %v3076 = vmax.f32 %v3074, %v3075
    %v3077 = vrot.slane %v3076, 1
    %v3078 = vmax.f32 %v3076, %v3077
    %v3079 = vsel %vm2147, %v1379, -inf
    %v3080 = vrot.slane %v3079, 4
    %v3081 = vmax.f32 %v3079, %v3080
    %v3082 = vrot.slane %v3081, 2
    %v3083 = vmax.f32 %v3081, %v3082
    %v3084 = vrot.slane %v3083, 1
    %v3085 = vmax.f32 %v3083, %v3084
    %v3086 = vsel %vm2147, %v1378, -inf
    %v3087 = vrot.slane %v3086, 4
    %v3088 = vmax.f32 %v3086, %v3087
    %v3089 = vrot.slane %v3088, 2
    %v3090 = vmax.f32 %v3088, %v3089
    %v3091 = vrot.slane %v3090, 1
    %v3092 = vmax.f32 %v3090, %v3091
    %v3093 = vsel %vm2147, %v1380, -inf
    %v3094 = vrot.slane %v3093, 4
    %v3095 = vmax.f32 %v3093, %v3094
    %v3096 = vrot.slane %v3095, 2
    %v3097 = vmax.f32 %v3095, %v3096
    %v3098 = vrot.slane %v3097, 1
    %v3099 = vmax.f32 %v3097, %v3098
    %v3100 = vsel %vm2147, %v1388, -inf
    %v3101 = vrot.slane %v3100, 4
    %v3102 = vmax.f32 %v3100, %v3101
    %v3103 = vrot.slane %v3102, 2
    %v3104 = vmax.f32 %v3102, %v3103
    %v3105 = vrot.slane %v3104, 1
    %v3106 = vmax.f32 %v3104, %v3105
    %v3107 = vsel %vm2147, %v1396, -inf
    %v3108 = vrot.slane %v3107, 4
    %v3109 = vmax.f32 %v3107, %v3108
    %v3110 = vrot.slane %v3109, 2
    %v3111 = vmax.f32 %v3109, %v3110
    %v3112 = vrot.slane %v3111, 1
    %v3113 = vmax.f32 %v3111, %v3112
    %v3114 = vsel %vm2147, %v1395, -inf
    %v3115 = vrot.slane %v3114, 4
    %v3116 = vmax.f32 %v3114, %v3115
    %v3117 = vrot.slane %v3116, 2
    %v3118 = vmax.f32 %v3116, %v3117
    %v3119 = vrot.slane %v3118, 1
    %v3120 = vmax.f32 %v3118, %v3119
    %v3121 = vsel %vm2147, %v1397, -inf
    %v3122 = vrot.slane %v3121, 4
    %v3123 = vmax.f32 %v3121, %v3122
    %v3124 = vrot.slane %v3123, 2
    %v3125 = vmax.f32 %v3123, %v3124
    %v3126 = vrot.slane %v3125, 1
    %v3127 = vmax.f32 %v3125, %v3126
    %v3128 = vsel %vm2147, %v1405, -inf
    %v3129 = vrot.slane %v3128, 4
    %v3130 = vmax.f32 %v3128, %v3129
    %v3131 = vrot.slane %v3130, 2
    %v3132 = vmax.f32 %v3130, %v3131
    %v3133 = vrot.slane %v3132, 1
    %v3134 = vmax.f32 %v3132, %v3133
    %v3135 = vsel %vm2147, %v1413, -inf
    %v3136 = vrot.slane %v3135, 4
    %v3137 = vmax.f32 %v3135, %v3136
    %v3138 = vrot.slane %v3137, 2
    %v3139 = vmax.f32 %v3137, %v3138
    %v3140 = vrot.slane %v3139, 1
    %v3141 = vmax.f32 %v3139, %v3140
    %v3142 = vsel %vm2147, %v1412, -inf
    %v3143 = vrot.slane %v3142, 4
    %v3144 = vmax.f32 %v3142, %v3143
    %v3145 = vrot.slane %v3144, 2
    %v3146 = vmax.f32 %v3144, %v3145
    %v3147 = vrot.slane %v3146, 1
    %v3148 = vmax.f32 %v3146, %v3147
    %v3149 = vsel %vm2147, %v1414, -inf
    %v3150 = vrot.slane %v3149, 4
    %v3151 = vmax.f32 %v3149, %v3150
    %v3152 = vrot.slane %v3151, 2
    %v3153 = vmax.f32 %v3151, %v3152
    %v3154 = vrot.slane %v3153, 1
    %v3155 = vmax.f32 %v3153, %v3154
    %v3156 = vsel %vm2147, %v1422, -inf
    %v3157 = vrot.slane %v3156, 4
    %v3158 = vmax.f32 %v3156, %v3157
    %v3159 = vrot.slane %v3158, 2
    %v3160 = vmax.f32 %v3158, %v3159
    %v3161 = vrot.slane %v3160, 1
    %v3162 = vmax.f32 %v3160, %v3161
    %v3163 = vsel %vm2147, %v1430, -inf
    %v3164 = vrot.slane %v3163, 4
    %v3165 = vmax.f32 %v3163, %v3164
    %v3166 = vrot.slane %v3165, 2
    %v3167 = vmax.f32 %v3165, %v3166
    %v3168 = vrot.slane %v3167, 1
    %v3169 = vmax.f32 %v3167, %v3168
    %v3170 = vsel %vm2147, %v1429, -inf
    %v3171 = vrot.slane %v3170, 4
    %v3172 = vmax.f32 %v3170, %v3171
    %v3173 = vrot.slane %v3172, 2
    %v3174 = vmax.f32 %v3172, %v3173
    %v3175 = vrot.slane %v3174, 1
    %v3176 = vmax.f32 %v3174, %v3175
    %v3177 = vsel %vm2147, %v1431, -inf
    %v3178 = vrot.slane %v3177, 4
    %v3179 = vmax.f32 %v3177, %v3178
    %v3180 = vrot.slane %v3179, 2
    %v3181 = vmax.f32 %v3179, %v3180
    %v3182 = vrot.slane %v3181, 1
    %v3183 = vmax.f32 %v3181, %v3182
    %v3184 = vsel %vm2147, %v1439, -inf
    %v3185 = vrot.slane %v3184, 4
    %v3186 = vmax.f32 %v3184, %v3185
    %v3187 = vrot.slane %v3186, 2
    %v3188 = vmax.f32 %v3186, %v3187
    %v3189 = vrot.slane %v3188, 1
    %v3190 = vmax.f32 %v3188, %v3189
    %v3191 = vsel %vm2147, %v1447, -inf
    %v3192 = vrot.slane %v3191, 4
    %v3193 = vmax.f32 %v3191, %v3192
    %v3194 = vrot.slane %v3193, 2
    %v3195 = vmax.f32 %v3193, %v3194
    %v3196 = vrot.slane %v3195, 1
    %v3197 = vmax.f32 %v3195, %v3196
    %v3198 = vsel %vm2147, %v1446, -inf
    %v3199 = vrot.slane %v3198, 4
    %v3200 = vmax.f32 %v3198, %v3199
    %v3201 = vrot.slane %v3200, 2
    %v3202 = vmax.f32 %v3200, %v3201
    %v3203 = vrot.slane %v3202, 1
    %v3204 = vmax.f32 %v3202, %v3203
    %v3205 = vsel %vm2147, %v1448, -inf
    %v3206 = vrot.slane %v3205, 4
    %v3207 = vmax.f32 %v3205, %v3206
    %v3208 = vrot.slane %v3207, 2
    %v3209 = vmax.f32 %v3207, %v3208
    %v3210 = vrot.slane %v3209, 1
    %v3211 = vmax.f32 %v3209, %v3210
    %v3212 = vsel %vm2147, %v1456, -inf
    %v3213 = vrot.slane %v3212, 4
    %v3214 = vmax.f32 %v3212, %v3213
    %v3215 = vrot.slane %v3214, 2
    %v3216 = vmax.f32 %v3214, %v3215
    %v3217 = vrot.slane %v3216, 1
    %v3218 = vmax.f32 %v3216, %v3217
    %v3219 = vsel %vm2147, %v1464, -inf
    %v3220 = vrot.slane %v3219, 4
    %v3221 = vmax.f32 %v3219, %v3220
    %v3222 = vrot.slane %v3221, 2
    %v3223 = vmax.f32 %v3221, %v3222
    %v3224 = vrot.slane %v3223, 1
    %v3225 = vmax.f32 %v3223, %v3224
    %v3226 = vsel %vm2147, %v1463, -inf
    %v3227 = vrot.slane %v3226, 4
    %v3228 = vmax.f32 %v3226, %v3227
    %v3229 = vrot.slane %v3228, 2
    %v3230 = vmax.f32 %v3228, %v3229
    %v3231 = vrot.slane %v3230, 1
    %v3232 = vmax.f32 %v3230, %v3231
    %v3233 = vsel %vm2147, %v1465, -inf
    %v3234 = vrot.slane %v3233, 4
    %v3235 = vmax.f32 %v3233, %v3234
    %v3236 = vrot.slane %v3235, 2
    %v3237 = vmax.f32 %v3235, %v3236
    %v3238 = vrot.slane %v3237, 1
    %v3239 = vmax.f32 %v3237, %v3238
    %v3240 = vsel %vm2147, %v1473, -inf
    %v3241 = vrot.slane %v3240, 4
    %v3242 = vmax.f32 %v3240, %v3241
    %v3243 = vrot.slane %v3242, 2
    %v3244 = vmax.f32 %v3242, %v3243
    %v3245 = vrot.slane %v3244, 1
    %v3246 = vmax.f32 %v3244, %v3245
    %v3247 = vsel %vm2147, %v1481, -inf
    %v3248 = vrot.slane %v3247, 4
    %v3249 = vmax.f32 %v3247, %v3248
    %v3250 = vrot.slane %v3249, 2
    %v3251 = vmax.f32 %v3249, %v3250
    %v3252 = vrot.slane %v3251, 1
    %v3253 = vmax.f32 %v3251, %v3252
    %v3254 = vsel %vm2147, %v1480, -inf
    %v3255 = vrot.slane %v3254, 4
    %v3256 = vmax.f32 %v3254, %v3255
    %v3257 = vrot.slane %v3256, 2
    %v3258 = vmax.f32 %v3256, %v3257
    %v3259 = vrot.slane %v3258, 1
    %v3260 = vmax.f32 %v3258, %v3259
    %v3261 = vsel %vm2147, %v1482, -inf
    %v3262 = vrot.slane %v3261, 4
    %v3263 = vmax.f32 %v3261, %v3262
    %v3264 = vrot.slane %v3263, 2
    %v3265 = vmax.f32 %v3263, %v3264
    %v3266 = vrot.slane %v3265, 1
    %v3267 = vmax.f32 %v3265, %v3266
    %v3268 = vsel %vm2147, %v1490, -inf
    %v3269 = vrot.slane %v3268, 4
    %v3270 = vmax.f32 %v3268, %v3269
    %v3271 = vrot.slane %v3270, 2
    %v3272 = vmax.f32 %v3270, %v3271
    %v3273 = vrot.slane %v3272, 1
    %v3274 = vmax.f32 %v3272, %v3273
    %v3275 = vsel %vm2147, %v1498, -inf
    %v3276 = vrot.slane %v3275, 4
    %v3277 = vmax.f32 %v3275, %v3276
    %v3278 = vrot.slane %v3277, 2
    %v3279 = vmax.f32 %v3277, %v3278
    %v3280 = vrot.slane %v3279, 1
    %v3281 = vmax.f32 %v3279, %v3280
    %v3282 = vsel %vm2147, %v1497, -inf
    %v3283 = vrot.slane %v3282, 4
    %v3284 = vmax.f32 %v3282, %v3283
    %v3285 = vrot.slane %v3284, 2
    %v3286 = vmax.f32 %v3284, %v3285
    %v3287 = vrot.slane %v3286, 1
    %v3288 = vmax.f32 %v3286, %v3287
    %v3289 = vsel %vm2147, %v1499, -inf
    %v3290 = vrot.slane %v3289, 4
    %v3291 = vmax.f32 %v3289, %v3290
    %v3292 = vrot.slane %v3291, 2
    %v3293 = vmax.f32 %v3291, %v3292
    %v3294 = vrot.slane %v3293, 1
    %v3295 = vmax.f32 %v3293, %v3294
    %v3296 = vsel %vm2147, %v1507, -inf
    %v3297 = vrot.slane %v3296, 4
    %v3298 = vmax.f32 %v3296, %v3297
    %v3299 = vrot.slane %v3298, 2
    %v3300 = vmax.f32 %v3298, %v3299
    %v3301 = vrot.slane %v3300, 1
    %v3302 = vmax.f32 %v3300, %v3301
    %v3303 = vsel %vm2147, %v1515, -inf
    %v3304 = vrot.slane %v3303, 4
    %v3305 = vmax.f32 %v3303, %v3304
    %v3306 = vrot.slane %v3305, 2
    %v3307 = vmax.f32 %v3305, %v3306
    %v3308 = vrot.slane %v3307, 1
    %v3309 = vmax.f32 %v3307, %v3308
    %v3310 = vsel %vm2147, %v1514, -inf
    %v3311 = vrot.slane %v3310, 4
    %v3312 = vmax.f32 %v3310, %v3311
    %v3313 = vrot.slane %v3312, 2
    %v3314 = vmax.f32 %v3312, %v3313
    %v3315 = vrot.slane %v3314, 1
    %v3316 = vmax.f32 %v3314, %v3315
    %v3317 = vsel %vm2147, %v1516, -inf
    %v3318 = vrot.slane %v3317, 4
    %v3319 = vmax.f32 %v3317, %v3318
    %v3320 = vrot.slane %v3319, 2
    %v3321 = vmax.f32 %v3319, %v3320
    %v3322 = vrot.slane %v3321, 1
    %v3323 = vmax.f32 %v3321, %v3322
    %v3324 = vsel %vm2147, %v1524, -inf
    %v3325 = vrot.slane %v3324, 4
    %v3326 = vmax.f32 %v3324, %v3325
    %v3327 = vrot.slane %v3326, 2
    %v3328 = vmax.f32 %v3326, %v3327
    %v3329 = vrot.slane %v3328, 1
    %v3330 = vmax.f32 %v3328, %v3329
    %v3331 = vsel %vm2147, %v1532, -inf
    %v3332 = vrot.slane %v3331, 4
    %v3333 = vmax.f32 %v3331, %v3332
    %v3334 = vrot.slane %v3333, 2
    %v3335 = vmax.f32 %v3333, %v3334
    %v3336 = vrot.slane %v3335, 1
    %v3337 = vmax.f32 %v3335, %v3336
    %v3338 = vsel %vm2147, %v1531, -inf
    %v3339 = vrot.slane %v3338, 4
    %v3340 = vmax.f32 %v3338, %v3339
    %v3341 = vrot.slane %v3340, 2
    %v3342 = vmax.f32 %v3340, %v3341
    %v3343 = vrot.slane %v3342, 1
    %v3344 = vmax.f32 %v3342, %v3343
    %v3345 = vsel %vm2147, %v1533, -inf
    %v3346 = vrot.slane %v3345, 4
    %v3347 = vmax.f32 %v3345, %v3346
    %v3348 = vrot.slane %v3347, 2
    %v3349 = vmax.f32 %v3347, %v3348
    %v3350 = vrot.slane %v3349, 1
    %v3351 = vmax.f32 %v3349, %v3350
    %v3352 = vsel %vm2147, %v1541, -inf
    %v3353 = vrot.slane %v3352, 4
    %v3354 = vmax.f32 %v3352, %v3353
    %v3355 = vrot.slane %v3354, 2
    %v3356 = vmax.f32 %v3354, %v3355
    %v3357 = vrot.slane %v3356, 1
    %v3358 = vmax.f32 %v3356, %v3357
    %v3359 = vsel %vm2147, %v1549, -inf
    %v3360 = vrot.slane %v3359, 4
    %v3361 = vmax.f32 %v3359, %v3360
    %v3362 = vrot.slane %v3361, 2
    %v3363 = vmax.f32 %v3361, %v3362
    %v3364 = vrot.slane %v3363, 1
    %v3365 = vmax.f32 %v3363, %v3364
    %v3366 = vsel %vm2147, %v1548, -inf
    %v3367 = vrot.slane %v3366, 4
    %v3368 = vmax.f32 %v3366, %v3367
    %v3369 = vrot.slane %v3368, 2
    %v3370 = vmax.f32 %v3368, %v3369
    %v3371 = vrot.slane %v3370, 1
    %v3372 = vmax.f32 %v3370, %v3371
    %v3373 = vsel %vm2147, %v1550, -inf
    %v3374 = vrot.slane %v3373, 4
    %v3375 = vmax.f32 %v3373, %v3374
    %v3376 = vrot.slane %v3375, 2
    %v3377 = vmax.f32 %v3375, %v3376
    %v3378 = vrot.slane %v3377, 1
    %v3379 = vmax.f32 %v3377, %v3378
    %v3380 = vsel %vm2147, %v1558, -inf
    %v3381 = vrot.slane %v3380, 4
    %v3382 = vmax.f32 %v3380, %v3381
    %v3383 = vrot.slane %v3382, 2
    %v3384 = vmax.f32 %v3382, %v3383
    %v3385 = vrot.slane %v3384, 1
    %v3386 = vmax.f32 %v3384, %v3385
    %v3387 = vsel %vm2147, %v1566, -inf
    %v3388 = vrot.slane %v3387, 4
    %v3389 = vmax.f32 %v3387, %v3388
    %v3390 = vrot.slane %v3389, 2
    %v3391 = vmax.f32 %v3389, %v3390
    %v3392 = vrot.slane %v3391, 1
    %v3393 = vmax.f32 %v3391, %v3392
    %v3394 = vsel %vm2147, %v1565, -inf
    %v3395 = vrot.slane %v3394, 4
    %v3396 = vmax.f32 %v3394, %v3395
    %v3397 = vrot.slane %v3396, 2
    %v3398 = vmax.f32 %v3396, %v3397
    %v3399 = vrot.slane %v3398, 1
    %v3400 = vmax.f32 %v3398, %v3399
    %v3401 = vsel %vm2147, %v1567, -inf
    %v3402 = vrot.slane %v3401, 4
    %v3403 = vmax.f32 %v3401, %v3402
    %v3404 = vrot.slane %v3403, 2
    %v3405 = vmax.f32 %v3403, %v3404
    %v3406 = vrot.slane %v3405, 1
    %v3407 = vmax.f32 %v3405, %v3406
    %v3408 = vsel %vm2147, %v1575, -inf
    %v3409 = vrot.slane %v3408, 4
    %v3410 = vmax.f32 %v3408, %v3409
    %v3411 = vrot.slane %v3410, 2
    %v3412 = vmax.f32 %v3410, %v3411
    %v3413 = vrot.slane %v3412, 1
    %v3414 = vmax.f32 %v3412, %v3413
    %v3415 = vsel %vm2147, %v1583, -inf
    %v3416 = vrot.slane %v3415, 4
    %v3417 = vmax.f32 %v3415, %v3416
    %v3418 = vrot.slane %v3417, 2
    %v3419 = vmax.f32 %v3417, %v3418
    %v3420 = vrot.slane %v3419, 1
    %v3421 = vmax.f32 %v3419, %v3420
    %v3422 = vsel %vm2147, %v1582, -inf
    %v3423 = vrot.slane %v3422, 4
    %v3424 = vmax.f32 %v3422, %v3423
    %v3425 = vrot.slane %v3424, 2
    %v3426 = vmax.f32 %v3424, %v3425
    %v3427 = vrot.slane %v3426, 1
    %v3428 = vmax.f32 %v3426, %v3427
    %v3429 = vsel %vm2147, %v1584, -inf
    %v3430 = vrot.slane %v3429, 4
    %v3431 = vmax.f32 %v3429, %v3430
    %v3432 = vrot.slane %v3431, 2
    %v3433 = vmax.f32 %v3431, %v3432
    %v3434 = vrot.slane %v3433, 1
    %v3435 = vmax.f32 %v3433, %v3434
    %v3436 = vsel %vm2147, %v1592, -inf
    %v3437 = vrot.slane %v3436, 4
    %v3438 = vmax.f32 %v3436, %v3437
    %v3439 = vrot.slane %v3438, 2
    %v3440 = vmax.f32 %v3438, %v3439
    %v3441 = vrot.slane %v3440, 1
    %v3442 = vmax.f32 %v3440, %v3441
    %v3443 = vsel %vm2147, %v1600, -inf
    %v3444 = vrot.slane %v3443, 4
    %v3445 = vmax.f32 %v3443, %v3444
    %v3446 = vrot.slane %v3445, 2
    %v3447 = vmax.f32 %v3445, %v3446
    %v3448 = vrot.slane %v3447, 1
    %v3449 = vmax.f32 %v3447, %v3448
    %v3450 = vsel %vm2147, %v1599, -inf
    %v3451 = vrot.slane %v3450, 4
    %v3452 = vmax.f32 %v3450, %v3451
    %v3453 = vrot.slane %v3452, 2
    %v3454 = vmax.f32 %v3452, %v3453
    %v3455 = vrot.slane %v3454, 1
    %v3456 = vmax.f32 %v3454, %v3455
    %v3457 = vsel %vm2147, %v1601, -inf
    %v3458 = vrot.slane %v3457, 4
    %v3459 = vmax.f32 %v3457, %v3458
    %v3460 = vrot.slane %v3459, 2
    %v3461 = vmax.f32 %v3459, %v3460
    %v3462 = vrot.slane %v3461, 1
    %v3463 = vmax.f32 %v3461, %v3462
    %v3464 = vsel %vm2147, %v1609, -inf
    %v3465 = vrot.slane %v3464, 4
    %v3466 = vmax.f32 %v3464, %v3465
    %v3467 = vrot.slane %v3466, 2
    %v3468 = vmax.f32 %v3466, %v3467
    %v3469 = vrot.slane %v3468, 1
    %v3470 = vmax.f32 %v3468, %v3469
    %v3471 = vsel %vm2147, %v1617, -inf
    %v3472 = vrot.slane %v3471, 4
    %v3473 = vmax.f32 %v3471, %v3472
    %v3474 = vrot.slane %v3473, 2
    %v3475 = vmax.f32 %v3473, %v3474
    %v3476 = vrot.slane %v3475, 1
    %v3477 = vmax.f32 %v3475, %v3476
    %v3478 = vsel %vm2147, %v1616, -inf
    %v3479 = vrot.slane %v3478, 4
    %v3480 = vmax.f32 %v3478, %v3479
    %v3481 = vrot.slane %v3480, 2
    %v3482 = vmax.f32 %v3480, %v3481
    %v3483 = vrot.slane %v3482, 1
    %v3484 = vmax.f32 %v3482, %v3483
    %v3485 = vsel %vm2147, %v1618, -inf
    %v3486 = vrot.slane %v3485, 4
    %v3487 = vmax.f32 %v3485, %v3486
    %v3488 = vrot.slane %v3487, 2
    %v3489 = vmax.f32 %v3487, %v3488
    %v3490 = vrot.slane %v3489, 1
    %v3491 = vmax.f32 %v3489, %v3490
    %v3492 = vsel %vm2147, %v1626, -inf
    %v3493 = vrot.slane %v3492, 4
    %v3494 = vmax.f32 %v3492, %v3493
    %v3495 = vrot.slane %v3494, 2
    %v3496 = vmax.f32 %v3494, %v3495
    %v3497 = vrot.slane %v3496, 1
    %v3498 = vmax.f32 %v3496, %v3497
    %v3499 = vsel %vm2147, %v1634, -inf
    %v3500 = vrot.slane %v3499, 4
    %v3501 = vmax.f32 %v3499, %v3500
    %v3502 = vrot.slane %v3501, 2
    %v3503 = vmax.f32 %v3501, %v3502
    %v3504 = vrot.slane %v3503, 1
    %v3505 = vmax.f32 %v3503, %v3504
    %v3506 = vsel %vm2147, %v1633, -inf
    %v3507 = vrot.slane %v3506, 4
    %v3508 = vmax.f32 %v3506, %v3507
    %v3509 = vrot.slane %v3508, 2
    %v3510 = vmax.f32 %v3508, %v3509
    %v3511 = vrot.slane %v3510, 1
    %v3512 = vmax.f32 %v3510, %v3511
    %v3513 = vsel %vm2147, %v1635, -inf
    %v3514 = vrot.slane %v3513, 4
    %v3515 = vmax.f32 %v3513, %v3514
    %v3516 = vrot.slane %v3515, 2
    %v3517 = vmax.f32 %v3515, %v3516
    %v3518 = vrot.slane %v3517, 1
    %v3519 = vmax.f32 %v3517, %v3518
    %v3520 = vsel %vm2147, %v1643, -inf
    %v3521 = vrot.slane %v3520, 4
    %v3522 = vmax.f32 %v3520, %v3521
    %v3523 = vrot.slane %v3522, 2
    %v3524 = vmax.f32 %v3522, %v3523
    %v3525 = vrot.slane %v3524, 1
    %v3526 = vmax.f32 %v3524, %v3525
    %v3527 = vsel %vm2147, %v1651, -inf
    %v3528 = vrot.slane %v3527, 4
    %v3529 = vmax.f32 %v3527, %v3528
    %v3530 = vrot.slane %v3529, 2
    %v3531 = vmax.f32 %v3529, %v3530
    %v3532 = vrot.slane %v3531, 1
    %v3533 = vmax.f32 %v3531, %v3532
    %v3534 = vsel %vm2147, %v1650, -inf
    %v3535 = vrot.slane %v3534, 4
    %v3536 = vmax.f32 %v3534, %v3535
    %v3537 = vrot.slane %v3536, 2
    %v3538 = vmax.f32 %v3536, %v3537
    %v3539 = vrot.slane %v3538, 1
    %v3540 = vmax.f32 %v3538, %v3539
    %v3541 = vsel %vm2147, %v1652, -inf
    %v3542 = vrot.slane %v3541, 4
    %v3543 = vmax.f32 %v3541, %v3542
    %v3544 = vrot.slane %v3543, 2
    %v3545 = vmax.f32 %v3543, %v3544
    %v3546 = vrot.slane %v3545, 1
    %v3547 = vmax.f32 %v3545, %v3546
    %v3548 = vsel %vm2147, %v1660, -inf
    %v3549 = vrot.slane %v3548, 4
    %v3550 = vmax.f32 %v3548, %v3549
    %v3551 = vrot.slane %v3550, 2
    %v3552 = vmax.f32 %v3550, %v3551
    %v3553 = vrot.slane %v3552, 1
    %v3554 = vmax.f32 %v3552, %v3553
    %v3555 = vsel %vm2147, %v1668, -inf
    %v3556 = vrot.slane %v3555, 4
    %v3557 = vmax.f32 %v3555, %v3556
    %v3558 = vrot.slane %v3557, 2
    %v3559 = vmax.f32 %v3557, %v3558
    %v3560 = vrot.slane %v3559, 1
    %v3561 = vmax.f32 %v3559, %v3560
    %v3562 = vsel %vm2147, %v1667, -inf
    %v3563 = vrot.slane %v3562, 4
    %v3564 = vmax.f32 %v3562, %v3563
    %v3565 = vrot.slane %v3564, 2
    %v3566 = vmax.f32 %v3564, %v3565
    %v3567 = vrot.slane %v3566, 1
    %v3568 = vmax.f32 %v3566, %v3567
    %v3569 = vsel %vm2147, %v1669, -inf
    %v3570 = vrot.slane %v3569, 4
    %v3571 = vmax.f32 %v3569, %v3570
    %v3572 = vrot.slane %v3571, 2
    %v3573 = vmax.f32 %v3571, %v3572
    %v3574 = vrot.slane %v3573, 1
    %v3575 = vmax.f32 %v3573, %v3574
    %v3576 = vsel %vm2147, %v1677, -inf
    %v3577 = vrot.slane %v3576, 4
    %v3578 = vmax.f32 %v3576, %v3577
    %v3579 = vrot.slane %v3578, 2
    %v3580 = vmax.f32 %v3578, %v3579
    %v3581 = vrot.slane %v3580, 1
    %v3582 = vmax.f32 %v3580, %v3581
    %v3583 = vsel %vm2147, %v1685, -inf
    %v3584 = vrot.slane %v3583, 4
    %v3585 = vmax.f32 %v3583, %v3584
    %v3586 = vrot.slane %v3585, 2
    %v3587 = vmax.f32 %v3585, %v3586
    %v3588 = vrot.slane %v3587, 1
    %v3589 = vmax.f32 %v3587, %v3588
    %v3590 = vsel %vm2147, %v1684, -inf
    %v3591 = vrot.slane %v3590, 4
    %v3592 = vmax.f32 %v3590, %v3591
    %v3593 = vrot.slane %v3592, 2
    %v3594 = vmax.f32 %v3592, %v3593
    %v3595 = vrot.slane %v3594, 1
    %v3596 = vmax.f32 %v3594, %v3595
    %v3597 = vsel %vm2147, %v1686, -inf
    %v3598 = vrot.slane %v3597, 4
    %v3599 = vmax.f32 %v3597, %v3598
    %v3600 = vrot.slane %v3599, 2
    %v3601 = vmax.f32 %v3599, %v3600
    %v3602 = vrot.slane %v3601, 1
    %v3603 = vmax.f32 %v3601, %v3602
    %v3604 = vsel %vm2147, %v1694, -inf
    %v3605 = vrot.slane %v3604, 4
    %v3606 = vmax.f32 %v3604, %v3605
    %v3607 = vrot.slane %v3606, 2
    %v3608 = vmax.f32 %v3606, %v3607
    %v3609 = vrot.slane %v3608, 1
    %v3610 = vmax.f32 %v3608, %v3609
    %v3611 = vsel %vm2147, %v1702, -inf
    %v3612 = vrot.slane %v3611, 4
    %v3613 = vmax.f32 %v3611, %v3612
    %v3614 = vrot.slane %v3613, 2
    %v3615 = vmax.f32 %v3613, %v3614
    %v3616 = vrot.slane %v3615, 1
    %v3617 = vmax.f32 %v3615, %v3616
    %v3618 = vsel %vm2147, %v1701, -inf
    %v3619 = vrot.slane %v3618, 4
    %v3620 = vmax.f32 %v3618, %v3619
    %v3621 = vrot.slane %v3620, 2
    %v3622 = vmax.f32 %v3620, %v3621
    %v3623 = vrot.slane %v3622, 1
    %v3624 = vmax.f32 %v3622, %v3623
    %v3625 = vsel %vm2147, %v1703, -inf
    %v3626 = vrot.slane %v3625, 4
    %v3627 = vmax.f32 %v3625, %v3626
    %v3628 = vrot.slane %v3627, 2
    %v3629 = vmax.f32 %v3627, %v3628
    %v3630 = vrot.slane %v3629, 1
    %v3631 = vmax.f32 %v3629, %v3630
    %v3632 = vsel %vm2147, %v1711, -inf
    %v3633 = vrot.slane %v3632, 4
    %v3634 = vmax.f32 %v3632, %v3633
    %v3635 = vrot.slane %v3634, 2
    %v3636 = vmax.f32 %v3634, %v3635
    %v3637 = vrot.slane %v3636, 1
    %v3638 = vmax.f32 %v3636, %v3637
    %v3639 = vsel %vm2147, %v1719, -inf
    %v3640 = vrot.slane %v3639, 4
    %v3641 = vmax.f32 %v3639, %v3640
    %v3642 = vrot.slane %v3641, 2
    %v3643 = vmax.f32 %v3641, %v3642
    %v3644 = vrot.slane %v3643, 1
    %v3645 = vmax.f32 %v3643, %v3644
    %v3646 = vsel %vm2147, %v1718, -inf
    %v3647 = vrot.slane %v3646, 4
    %v3648 = vmax.f32 %v3646, %v3647
    %v3649 = vrot.slane %v3648, 2
    %v3650 = vmax.f32 %v3648, %v3649
    %v3651 = vrot.slane %v3650, 1
    %v3652 = vmax.f32 %v3650, %v3651
    %v3653 = vsel %vm2147, %v1720, -inf
    %v3654 = vrot.slane %v3653, 4
    %v3655 = vmax.f32 %v3653, %v3654
    %v3656 = vrot.slane %v3655, 2
    %v3657 = vmax.f32 %v3655, %v3656
    %v3658 = vrot.slane %v3657, 1
    %v3659 = vmax.f32 %v3657, %v3658
    %v3660 = vsel %vm2147, %v1728, -inf
    %v3661 = vrot.slane %v3660, 4
    %v3662 = vmax.f32 %v3660, %v3661
    %v3663 = vrot.slane %v3662, 2
    %v3664 = vmax.f32 %v3662, %v3663
    %v3665 = vrot.slane %v3664, 1
    %v3666 = vmax.f32 %v3664, %v3665
    %v3667 = vsel %vm2147, %v1736, -inf
    %v3668 = vrot.slane %v3667, 4
    %v3669 = vmax.f32 %v3667, %v3668
    %v3670 = vrot.slane %v3669, 2
    %v3671 = vmax.f32 %v3669, %v3670
    %v3672 = vrot.slane %v3671, 1
    %v3673 = vmax.f32 %v3671, %v3672
    %v3674 = vsel %vm2147, %v1735, -inf
    %v3675 = vrot.slane %v3674, 4
    %v3676 = vmax.f32 %v3674, %v3675
    %v3677 = vrot.slane %v3676, 2
    %v3678 = vmax.f32 %v3676, %v3677
    %v3679 = vrot.slane %v3678, 1
    %v3680 = vmax.f32 %v3678, %v3679
    %v3681 = vsel %vm2147, %v1737, -inf
    %v3682 = vrot.slane %v3681, 4
    %v3683 = vmax.f32 %v3681, %v3682
    %v3684 = vrot.slane %v3683, 2
    %v3685 = vmax.f32 %v3683, %v3684
    %v3686 = vrot.slane %v3685, 1
    %v3687 = vmax.f32 %v3685, %v3686
    %v3688 = vsel %vm2147, %v1745, -inf
    %v3689 = vrot.slane %v3688, 4
    %v3690 = vmax.f32 %v3688, %v3689
    %v3691 = vrot.slane %v3690, 2
    %v3692 = vmax.f32 %v3690, %v3691
    %v3693 = vrot.slane %v3692, 1
    %v3694 = vmax.f32 %v3692, %v3693
    %v3695 = vsel %vm2147, %v1753, -inf
    %v3696 = vrot.slane %v3695, 4
    %v3697 = vmax.f32 %v3695, %v3696
    %v3698 = vrot.slane %v3697, 2
    %v3699 = vmax.f32 %v3697, %v3698
    %v3700 = vrot.slane %v3699, 1
    %v3701 = vmax.f32 %v3699, %v3700
    %v3702 = vsel %vm2147, %v1752, -inf
    %v3703 = vrot.slane %v3702, 4
    %v3704 = vmax.f32 %v3702, %v3703
    %v3705 = vrot.slane %v3704, 2
    %v3706 = vmax.f32 %v3704, %v3705
    %v3707 = vrot.slane %v3706, 1
    %v3708 = vmax.f32 %v3706, %v3707
    %v3709 = vsel %vm2147, %v1754, -inf
    %v3710 = vrot.slane %v3709, 4
    %v3711 = vmax.f32 %v3709, %v3710
    %v3712 = vrot.slane %v3711, 2
    %v3713 = vmax.f32 %v3711, %v3712
    %v3714 = vrot.slane %v3713, 1
    %v3715 = vmax.f32 %v3713, %v3714
    %v3716 = vsel %vm2147, %v1762, -inf
    %v3717 = vrot.slane %v3716, 4
    %v3718 = vmax.f32 %v3716, %v3717
    %v3719 = vrot.slane %v3718, 2
    %v3720 = vmax.f32 %v3718, %v3719
    %v3721 = vrot.slane %v3720, 1
    %v3722 = vmax.f32 %v3720, %v3721
    %v3723 = vsel %vm2147, %v1770, -inf
    %v3724 = vrot.slane %v3723, 4
    %v3725 = vmax.f32 %v3723, %v3724
    %v3726 = vrot.slane %v3725, 2
    %v3727 = vmax.f32 %v3725, %v3726
    %v3728 = vrot.slane %v3727, 1
    %v3729 = vmax.f32 %v3727, %v3728
    %v3730 = vsel %vm2147, %v1769, -inf
    %v3731 = vrot.slane %v3730, 4
    %v3732 = vmax.f32 %v3730, %v3731
    %v3733 = vrot.slane %v3732, 2
    %v3734 = vmax.f32 %v3732, %v3733
    %v3735 = vrot.slane %v3734, 1
    %v3736 = vmax.f32 %v3734, %v3735
    %v3737 = vsel %vm2147, %v1771, -inf
    %v3738 = vrot.slane %v3737, 4
    %v3739 = vmax.f32 %v3737, %v3738
    %v3740 = vrot.slane %v3739, 2
    %v3741 = vmax.f32 %v3739, %v3740
    %v3742 = vrot.slane %v3741, 1
    %v3743 = vmax.f32 %v3741, %v3742
    %v3744 = vsel %vm2147, %v1779, -inf
    %v3745 = vrot.slane %v3744, 4
    %v3746 = vmax.f32 %v3744, %v3745
    %v3747 = vrot.slane %v3746, 2
    %v3748 = vmax.f32 %v3746, %v3747
    %v3749 = vrot.slane %v3748, 1
    %v3750 = vmax.f32 %v3748, %v3749
    %v3751 = vsel %vm2147, %v1787, -inf
    %v3752 = vrot.slane %v3751, 4
    %v3753 = vmax.f32 %v3751, %v3752
    %v3754 = vrot.slane %v3753, 2
    %v3755 = vmax.f32 %v3753, %v3754
    %v3756 = vrot.slane %v3755, 1
    %v3757 = vmax.f32 %v3755, %v3756
    %v3758 = vsel %vm2147, %v1786, -inf
    %v3759 = vrot.slane %v3758, 4
    %v3760 = vmax.f32 %v3758, %v3759
    %v3761 = vrot.slane %v3760, 2
    %v3762 = vmax.f32 %v3760, %v3761
    %v3763 = vrot.slane %v3762, 1
    %v3764 = vmax.f32 %v3762, %v3763
    %v3765 = vsel %vm2147, %v1788, -inf
    %v3766 = vrot.slane %v3765, 4
    %v3767 = vmax.f32 %v3765, %v3766
    %v3768 = vrot.slane %v3767, 2
    %v3769 = vmax.f32 %v3767, %v3768
    %v3770 = vrot.slane %v3769, 1
    %v3771 = vmax.f32 %v3769, %v3770
    %v3772 = vsel %vm2147, %v1796, -inf
    %v3773 = vrot.slane %v3772, 4
    %v3774 = vmax.f32 %v3772, %v3773
    %v3775 = vrot.slane %v3774, 2
    %v3776 = vmax.f32 %v3774, %v3775
    %v3777 = vrot.slane %v3776, 1
    %v3778 = vmax.f32 %v3776, %v3777
    %v3779 = vsel %vm2147, %v1804, -inf
    %v3780 = vrot.slane %v3779, 4
    %v3781 = vmax.f32 %v3779, %v3780
    %v3782 = vrot.slane %v3781, 2
    %v3783 = vmax.f32 %v3781, %v3782
    %v3784 = vrot.slane %v3783, 1
    %v3785 = vmax.f32 %v3783, %v3784
    %v3786 = vsel %vm2147, %v1803, -inf
    %v3787 = vrot.slane %v3786, 4
    %v3788 = vmax.f32 %v3786, %v3787
    %v3789 = vrot.slane %v3788, 2
    %v3790 = vmax.f32 %v3788, %v3789
    %v3791 = vrot.slane %v3790, 1
    %v3792 = vmax.f32 %v3790, %v3791
    %v3793 = vsel %vm2147, %v1805, -inf
    %v3794 = vrot.slane %v3793, 4
    %v3795 = vmax.f32 %v3793, %v3794
    %v3796 = vrot.slane %v3795, 2
    %v3797 = vmax.f32 %v3795, %v3796
    %v3798 = vrot.slane %v3797, 1
    %v3799 = vmax.f32 %v3797, %v3798
    %v3800 = vsel %vm2147, %v1813, -inf
    %v3801 = vrot.slane %v3800, 4
    %v3802 = vmax.f32 %v3800, %v3801
    %v3803 = vrot.slane %v3802, 2
    %v3804 = vmax.f32 %v3802, %v3803
    %v3805 = vrot.slane %v3804, 1
    %v3806 = vmax.f32 %v3804, %v3805
    %v3807 = vsel %vm2147, %v1821, -inf
    %v3808 = vrot.slane %v3807, 4
    %v3809 = vmax.f32 %v3807, %v3808
    %v3810 = vrot.slane %v3809, 2
    %v3811 = vmax.f32 %v3809, %v3810
    %v3812 = vrot.slane %v3811, 1
    %v3813 = vmax.f32 %v3811, %v3812
    %v3814 = vsel %vm2147, %v1820, -inf
    %v3815 = vrot.slane %v3814, 4
    %v3816 = vmax.f32 %v3814, %v3815
    %v3817 = vrot.slane %v3816, 2
    %v3818 = vmax.f32 %v3816, %v3817
    %v3819 = vrot.slane %v3818, 1
    %v3820 = vmax.f32 %v3818, %v3819
    %v3821 = vsel %vm2147, %v1822, -inf
    %v3822 = vrot.slane %v3821, 4
    %v3823 = vmax.f32 %v3821, %v3822
    %v3824 = vrot.slane %v3823, 2
    %v3825 = vmax.f32 %v3823, %v3824
    %v3826 = vrot.slane %v3825, 1
    %v3827 = vmax.f32 %v3825, %v3826
    %v3828 = vsel %vm2147, %v1830, -inf
    %v3829 = vrot.slane %v3828, 4
    %v3830 = vmax.f32 %v3828, %v3829
    %v3831 = vrot.slane %v3830, 2
    %v3832 = vmax.f32 %v3830, %v3831
    %v3833 = vrot.slane %v3832, 1
    %v3834 = vmax.f32 %v3832, %v3833
    %v3835 = vsel %vm2147, %v1838, -inf
    %v3836 = vrot.slane %v3835, 4
    %v3837 = vmax.f32 %v3835, %v3836
    %v3838 = vrot.slane %v3837, 2
    %v3839 = vmax.f32 %v3837, %v3838
    %v3840 = vrot.slane %v3839, 1
    %v3841 = vmax.f32 %v3839, %v3840
    %v3842 = vsel %vm2147, %v1837, -inf
    %v3843 = vrot.slane %v3842, 4
    %v3844 = vmax.f32 %v3842, %v3843
    %v3845 = vrot.slane %v3844, 2
    %v3846 = vmax.f32 %v3844, %v3845
    %v3847 = vrot.slane %v3846, 1
    %v3848 = vmax.f32 %v3846, %v3847
    %v3849 = vsel %vm2147, %v1839, -inf
    %v3850 = vrot.slane %v3849, 4
    %v3851 = vmax.f32 %v3849, %v3850
    %v3852 = vrot.slane %v3851, 2
    %v3853 = vmax.f32 %v3851, %v3852
    %v3854 = vrot.slane %v3853, 1
    %v3855 = vmax.f32 %v3853, %v3854
    %v3856 = vsel %vm2147, %v1847, -inf
    %v3857 = vrot.slane %v3856, 4
    %v3858 = vmax.f32 %v3856, %v3857
    %v3859 = vrot.slane %v3858, 2
    %v3860 = vmax.f32 %v3858, %v3859
    %v3861 = vrot.slane %v3860, 1
    %v3862 = vmax.f32 %v3860, %v3861
    %v3863 = vsel %vm2147, %v1855, -inf
    %v3864 = vrot.slane %v3863, 4
    %v3865 = vmax.f32 %v3863, %v3864
    %v3866 = vrot.slane %v3865, 2
    %v3867 = vmax.f32 %v3865, %v3866
    %v3868 = vrot.slane %v3867, 1
    %v3869 = vmax.f32 %v3867, %v3868
    %v3870 = vsel %vm2147, %v1854, -inf
    %v3871 = vrot.slane %v3870, 4
    %v3872 = vmax.f32 %v3870, %v3871
    %v3873 = vrot.slane %v3872, 2
    %v3874 = vmax.f32 %v3872, %v3873
    %v3875 = vrot.slane %v3874, 1
    %v3876 = vmax.f32 %v3874, %v3875
    %v3877 = vsel %vm2147, %v1856, -inf
    %v3878 = vrot.slane %v3877, 4
    %v3879 = vmax.f32 %v3877, %v3878
    %v3880 = vrot.slane %v3879, 2
    %v3881 = vmax.f32 %v3879, %v3880
    %v3882 = vrot.slane %v3881, 1
    %v3883 = vmax.f32 %v3881, %v3882
    %v3884 = vsel %vm2147, %v1864, -inf
    %v3885 = vrot.slane %v3884, 4
    %v3886 = vmax.f32 %v3884, %v3885
    %v3887 = vrot.slane %v3886, 2
    %v3888 = vmax.f32 %v3886, %v3887
    %v3889 = vrot.slane %v3888, 1
    %v3890 = vmax.f32 %v3888, %v3889
    %v3891 = vsel %vm2147, %v1872, -inf
    %v3892 = vrot.slane %v3891, 4
    %v3893 = vmax.f32 %v3891, %v3892
    %v3894 = vrot.slane %v3893, 2
    %v3895 = vmax.f32 %v3893, %v3894
    %v3896 = vrot.slane %v3895, 1
    %v3897 = vmax.f32 %v3895, %v3896
    %v3898 = vsel %vm2147, %v1871, -inf
    %v3899 = vrot.slane %v3898, 4
    %v3900 = vmax.f32 %v3898, %v3899
    %v3901 = vrot.slane %v3900, 2
    %v3902 = vmax.f32 %v3900, %v3901
    %v3903 = vrot.slane %v3902, 1
    %v3904 = vmax.f32 %v3902, %v3903
    %v3905 = vsel %vm2147, %v1873, -inf
    %v3906 = vrot.slane %v3905, 4
    %v3907 = vmax.f32 %v3905, %v3906
    %v3908 = vrot.slane %v3907, 2
    %v3909 = vmax.f32 %v3907, %v3908
    %v3910 = vrot.slane %v3909, 1
    %v3911 = vmax.f32 %v3909, %v3910
    %v3912 = vsel %vm2147, %v1881, -inf
    %v3913 = vrot.slane %v3912, 4
    %v3914 = vmax.f32 %v3912, %v3913
    %v3915 = vrot.slane %v3914, 2
    %v3916 = vmax.f32 %v3914, %v3915
    %v3917 = vrot.slane %v3916, 1
    %v3918 = vmax.f32 %v3916, %v3917
    %v3919 = vsel %vm2147, %v1889, -inf
    %v3920 = vrot.slane %v3919, 4
    %v3921 = vmax.f32 %v3919, %v3920
    %v3922 = vrot.slane %v3921, 2
    %v3923 = vmax.f32 %v3921, %v3922
    %v3924 = vrot.slane %v3923, 1
    %v3925 = vmax.f32 %v3923, %v3924
    %v3926 = vsel %vm2147, %v1888, -inf
    %v3927 = vrot.slane %v3926, 4
    %v3928 = vmax.f32 %v3926, %v3927
    %v3929 = vrot.slane %v3928, 2
    %v3930 = vmax.f32 %v3928, %v3929
    %v3931 = vrot.slane %v3930, 1
    %v3932 = vmax.f32 %v3930, %v3931
    %v3933 = vsel %vm2147, %v1890, -inf
    %v3934 = vrot.slane %v3933, 4
    %v3935 = vmax.f32 %v3933, %v3934
    %v3936 = vrot.slane %v3935, 2
    %v3937 = vmax.f32 %v3935, %v3936
    %v3938 = vrot.slane %v3937, 1
    %v3939 = vmax.f32 %v3937, %v3938
    %vm3940 = vcmask 261120
    %v3941 = vsel %vm3940, %v2154, -inf
    %v3942 = vsel %vm3940, %v2210, -inf
    %v3943 = vmax.f32 %v3941, %v3942
    %v3944 = vsel %vm3940, %v2161, -inf
    %v3945 = vsel %vm3940, %v2217, -inf
    %v3946 = vmax.f32 %v3944, %v3945
    %v3947 = vsel %vm3940, %v2168, -inf
    %v3948 = vsel %vm3940, %v2224, -inf
    %v3949 = vmax.f32 %v3947, %v3948
    %v3950 = vsel %vm3940, %v2175, -inf
    %v3951 = vsel %vm3940, %v2231, -inf
    %v3952 = vmax.f32 %v3950, %v3951
    %v3953 = vsel %vm3940, %v2182, -inf
    %v3954 = vsel %vm3940, %v2238, -inf
    %v3955 = vmax.f32 %v3953, %v3954
    %v3956 = vsel %vm3940, %v2189, -inf
    %v3957 = vsel %vm3940, %v2245, -inf
    %v3958 = vmax.f32 %v3956, %v3957
    %v3959 = vsel %vm3940, %v2196, -inf
    %v3960 = vsel %vm3940, %v2252, -inf
    %v3961 = vmax.f32 %v3959, %v3960
    %v3962 = vsel %vm3940, %v2203, -inf
    %v3963 = vsel %vm3940, %v2259, -inf
    %v3964 = vmax.f32 %v3962, %v3963
    %v3965 = vsel %vm3940, %v2266, -inf
    %v3966 = vsel %vm3940, %v2322, -inf
    %v3967 = vmax.f32 %v3965, %v3966
    %v3968 = vsel %vm3940, %v2273, -inf
    %v3969 = vsel %vm3940, %v2329, -inf
    %v3970 = vmax.f32 %v3968, %v3969
    %v3971 = vsel %vm3940, %v2280, -inf
    %v3972 = vsel %vm3940, %v2336, -inf
    %v3973 = vmax.f32 %v3971, %v3972
    %v3974 = vsel %vm3940, %v2287, -inf
    %v3975 = vsel %vm3940, %v2343, -inf
    %v3976 = vmax.f32 %v3974, %v3975
    %v3977 = vsel %vm3940, %v2294, -inf
    %v3978 = vsel %vm3940, %v2350, -inf
    %v3979 = vmax.f32 %v3977, %v3978
    %v3980 = vsel %vm3940, %v2301, -inf
    %v3981 = vsel %vm3940, %v2357, -inf
    %v3982 = vmax.f32 %v3980, %v3981
    %v3983 = vsel %vm3940, %v2308, -inf
    %v3984 = vsel %vm3940, %v2364, -inf
    %v3985 = vmax.f32 %v3983, %v3984
    %v3986 = vsel %vm3940, %v2315, -inf
    %v3987 = vsel %vm3940, %v2371, -inf
    %v3988 = vmax.f32 %v3986, %v3987
    %v3989 = vsel %vm3940, %v2378, -inf
    %v3990 = vsel %vm3940, %v2434, -inf
    %v3991 = vmax.f32 %v3989, %v3990
    %v3992 = vsel %vm3940, %v2385, -inf
    %v3993 = vsel %vm3940, %v2441, -inf
    %v3994 = vmax.f32 %v3992, %v3993
    %v3995 = vsel %vm3940, %v2392, -inf
    %v3996 = vsel %vm3940, %v2448, -inf
    %v3997 = vmax.f32 %v3995, %v3996
    %v3998 = vsel %vm3940, %v2399, -inf
    %v3999 = vsel %vm3940, %v2455, -inf
    %v4000 = vmax.f32 %v3998, %v3999
    %v4001 = vsel %vm3940, %v2406, -inf
    %v4002 = vsel %vm3940, %v2462, -inf
    %v4003 = vmax.f32 %v4001, %v4002
    %v4004 = vsel %vm3940, %v2413, -inf
    %v4005 = vsel %vm3940, %v2469, -inf
    %v4006 = vmax.f32 %v4004, %v4005
    %v4007 = vsel %vm3940, %v2420, -inf
    %v4008 = vsel %vm3940, %v2476, -inf
    %v4009 = vmax.f32 %v4007, %v4008
    %v4010 = vsel %vm3940, %v2427, -inf
    %v4011 = vsel %vm3940, %v2483, -inf
    %v4012 = vmax.f32 %v4010, %v4011
    %v4013 = vsel %vm3940, %v2490, -inf
    %v4014 = vsel %vm3940, %v2546, -inf
    %v4015 = vmax.f32 %v4013, %v4014
    %v4016 = vsel %vm3940, %v2497, -inf
    %v4017 = vsel %vm3940, %v2553, -inf
    %v4018 = vmax.f32 %v4016, %v4017
    %v4019 = vsel %vm3940, %v2504, -inf
    %v4020 = vsel %vm3940, %v2560, -inf
    %v4021 = vmax.f32 %v4019, %v4020
    %v4022 = vsel %vm3940, %v2511, -inf
    %v4023 = vsel %vm3940, %v2567, -inf
    %v4024 = vmax.f32 %v4022, %v4023
    %v4025 = vsel %vm3940, %v2518, -inf
    %v4026 = vsel %vm3940, %v2574, -inf
    %v4027 = vmax.f32 %v4025, %v4026
    %v4028 = vsel %vm3940, %v2525, -inf
    %v4029 = vsel %vm3940, %v2581, -inf
    %v4030 = vmax.f32 %v4028, %v4029
    %v4031 = vsel %vm3940, %v2532, -inf
    %v4032 = vsel %vm3940, %v2588, -inf
    %v4033 = vmax.f32 %v4031, %v4032
    %v4034 = vsel %vm3940, %v2539, -inf
    %v4035 = vsel %vm3940, %v2595, -inf
    %v4036 = vmax.f32 %v4034, %v4035
    %v4037 = vsel %vm3940, %v2602, -inf
    %v4038 = vsel %vm3940, %v2658, -inf
    %v4039 = vmax.f32 %v4037, %v4038
    %v4040 = vsel %vm3940, %v2609, -inf
    %v4041 = vsel %vm3940, %v2665, -inf
    %v4042 = vmax.f32 %v4040, %v4041
    %v4043 = vsel %vm3940, %v2616, -inf
    %v4044 = vsel %vm3940, %v2672, -inf
    %v4045 = vmax.f32 %v4043, %v4044
    %v4046 = vsel %vm3940, %v2623, -inf
    %v4047 = vsel %vm3940, %v2679, -inf
    %v4048 = vmax.f32 %v4046, %v4047
    %v4049 = vsel %vm3940, %v2630, -inf
    %v4050 = vsel %vm3940, %v2686, -inf
    %v4051 = vmax.f32 %v4049, %v4050
    %v4052 = vsel %vm3940, %v2637, -inf
    %v4053 = vsel %vm3940, %v2693, -inf
    %v4054 = vmax.f32 %v4052, %v4053
    %v4055 = vsel %vm3940, %v2644, -inf
    %v4056 = vsel %vm3940, %v2700, -inf
    %v4057 = vmax.f32 %v4055, %v4056
    %v4058 = vsel %vm3940, %v2651, -inf
    %v4059 = vsel %vm3940, %v2707, -inf
    %v4060 = vmax.f32 %v4058, %v4059
    %v4061 = vsel %vm3940, %v2714, -inf
    %v4062 = vsel %vm3940, %v2770, -inf
    %v4063 = vmax.f32 %v4061, %v4062
    %v4064 = vsel %vm3940, %v2721, -inf
    %v4065 = vsel %vm3940, %v2777, -inf
    %v4066 = vmax.f32 %v4064, %v4065
    %v4067 = vsel %vm3940, %v2728, -inf
    %v4068 = vsel %vm3940, %v2784, -inf
    %v4069 = vmax.f32 %v4067, %v4068
    %v4070 = vsel %vm3940, %v2735, -inf
    %v4071 = vsel %vm3940, %v2791, -inf
    %v4072 = vmax.f32 %v4070, %v4071
    %v4073 = vsel %vm3940, %v2742, -inf
    %v4074 = vsel %vm3940, %v2798, -inf
    %v4075 = vmax.f32 %v4073, %v4074
    %v4076 = vsel %vm3940, %v2749, -inf
    %v4077 = vsel %vm3940, %v2805, -inf
    %v4078 = vmax.f32 %v4076, %v4077
    %v4079 = vsel %vm3940, %v2756, -inf
    %v4080 = vsel %vm3940, %v2812, -inf
    %v4081 = vmax.f32 %v4079, %v4080
    %v4082 = vsel %vm3940, %v2763, -inf
    %v4083 = vsel %vm3940, %v2819, -inf
    %v4084 = vmax.f32 %v4082, %v4083
    %v4085 = vsel %vm3940, %v2826, -inf
    %v4086 = vsel %vm3940, %v2882, -inf
    %v4087 = vmax.f32 %v4085, %v4086
    %v4088 = vsel %vm3940, %v2833, -inf
    %v4089 = vsel %vm3940, %v2889, -inf
    %v4090 = vmax.f32 %v4088, %v4089
    %v4091 = vsel %vm3940, %v2840, -inf
    %v4092 = vsel %vm3940, %v2896, -inf
    %v4093 = vmax.f32 %v4091, %v4092
    %v4094 = vsel %vm3940, %v2847, -inf
    %v4095 = vsel %vm3940, %v2903, -inf
    %v4096 = vmax.f32 %v4094, %v4095
    %v4097 = vsel %vm3940, %v2854, -inf
    %v4098 = vsel %vm3940, %v2910, -inf
    %v4099 = vmax.f32 %v4097, %v4098
    %v4100 = vsel %vm3940, %v2861, -inf
    %v4101 = vsel %vm3940, %v2917, -inf
    %v4102 = vmax.f32 %v4100, %v4101
    %v4103 = vsel %vm3940, %v2868, -inf
    %v4104 = vsel %vm3940, %v2924, -inf
    %v4105 = vmax.f32 %v4103, %v4104
    %v4106 = vsel %vm3940, %v2875, -inf
    %v4107 = vsel %vm3940, %v2931, -inf
    %v4108 = vmax.f32 %v4106, %v4107
    %v4109 = vsel %vm3940, %v2938, -inf
    %v4110 = vsel %vm3940, %v2994, -inf
    %v4111 = vmax.f32 %v4109, %v4110
    %v4112 = vsel %vm3940, %v2945, -inf
    %v4113 = vsel %vm3940, %v3001, -inf
    %v4114 = vmax.f32 %v4112, %v4113
    %v4115 = vsel %vm3940, %v2952, -inf
    %v4116 = vsel %vm3940, %v3008, -inf
    %v4117 = vmax.f32 %v4115, %v4116
    %v4118 = vsel %vm3940, %v2959, -inf
    %v4119 = vsel %vm3940, %v3015, -inf
    %v4120 = vmax.f32 %v4118, %v4119
    %v4121 = vsel %vm3940, %v2966, -inf
    %v4122 = vsel %vm3940, %v3022, -inf
    %v4123 = vmax.f32 %v4121, %v4122
    %v4124 = vsel %vm3940, %v2973, -inf
    %v4125 = vsel %vm3940, %v3029, -inf
    %v4126 = vmax.f32 %v4124, %v4125
    %v4127 = vsel %vm3940, %v2980, -inf
    %v4128 = vsel %vm3940, %v3036, -inf
    %v4129 = vmax.f32 %v4127, %v4128
    %v4130 = vsel %vm3940, %v2987, -inf
    %v4131 = vsel %vm3940, %v3043, -inf
    %v4132 = vmax.f32 %v4130, %v4131
    %v4133 = vsel %vm3940, %v3050, -inf
    %v4134 = vsel %vm3940, %v3106, -inf
    %v4135 = vmax.f32 %v4133, %v4134
    %v4136 = vsel %vm3940, %v3057, -inf
    %v4137 = vsel %vm3940, %v3113, -inf
    %v4138 = vmax.f32 %v4136, %v4137
    %v4139 = vsel %vm3940, %v3064, -inf
    %v4140 = vsel %vm3940, %v3120, -inf
    %v4141 = vmax.f32 %v4139, %v4140
    %v4142 = vsel %vm3940, %v3071, -inf
    %v4143 = vsel %vm3940, %v3127, -inf
    %v4144 = vmax.f32 %v4142, %v4143
    %v4145 = vsel %vm3940, %v3078, -inf
    %v4146 = vsel %vm3940, %v3134, -inf
    %v4147 = vmax.f32 %v4145, %v4146
    %v4148 = vsel %vm3940, %v3085, -inf
    %v4149 = vsel %vm3940, %v3141, -inf
    %v4150 = vmax.f32 %v4148, %v4149
    %v4151 = vsel %vm3940, %v3092, -inf
    %v4152 = vsel %vm3940, %v3148, -inf
    %v4153 = vmax.f32 %v4151, %v4152
    %v4154 = vsel %vm3940, %v3099, -inf
    %v4155 = vsel %vm3940, %v3155, -inf
    %v4156 = vmax.f32 %v4154, %v4155
    %v4157 = vsel %vm3940, %v3162, -inf
    %v4158 = vsel %vm3940, %v3218, -inf
    %v4159 = vmax.f32 %v4157, %v4158
    %v4160 = vsel %vm3940, %v3169, -inf
    %v4161 = vsel %vm3940, %v3225, -inf
    %v4162 = vmax.f32 %v4160, %v4161
    %v4163 = vsel %vm3940, %v3176, -inf
    %v4164 = vsel %vm3940, %v3232, -inf
    %v4165 = vmax.f32 %v4163, %v4164
    %v4166 = vsel %vm3940, %v3183, -inf
    %v4167 = vsel %vm3940, %v3239, -inf
    %v4168 = vmax.f32 %v4166, %v4167
    %v4169 = vsel %vm3940, %v3190, -inf
    %v4170 = vsel %vm3940, %v3246, -inf
    %v4171 = vmax.f32 %v4169, %v4170
    %v4172 = vsel %vm3940, %v3197, -inf
    %v4173 = vsel %vm3940, %v3253, -inf
    %v4174 = vmax.f32 %v4172, %v4173
    %v4175 = vsel %vm3940, %v3204, -inf
    %v4176 = vsel %vm3940, %v3260, -inf
    %v4177 = vmax.f32 %v4175, %v4176
    %v4178 = vsel %vm3940, %v3211, -inf
    %v4179 = vsel %vm3940, %v3267, -inf
    %v4180 = vmax.f32 %v4178, %v4179
    %v4181 = vsel %vm3940, %v3274, -inf
    %v4182 = vsel %vm3940, %v3330, -inf
    %v4183 = vmax.f32 %v4181, %v4182
    %v4184 = vsel %vm3940, %v3281, -inf
    %v4185 = vsel %vm3940, %v3337, -inf
    %v4186 = vmax.f32 %v4184, %v4185
    %v4187 = vsel %vm3940, %v3288, -inf
    %v4188 = vsel %vm3940, %v3344, -inf
    %v4189 = vmax.f32 %v4187, %v4188
    %v4190 = vsel %vm3940, %v3295, -inf
    %v4191 = vsel %vm3940, %v3351, -inf
    %v4192 = vmax.f32 %v4190, %v4191
    %v4193 = vsel %vm3940, %v3302, -inf
    %v4194 = vsel %vm3940, %v3358, -inf
    %v4195 = vmax.f32 %v4193, %v4194
    %v4196 = vsel %vm3940, %v3309, -inf
    %v4197 = vsel %vm3940, %v3365, -inf
    %v4198 = vmax.f32 %v4196, %v4197
    %v4199 = vsel %vm3940, %v3316, -inf
    %v4200 = vsel %vm3940, %v3372, -inf
    %v4201 = vmax.f32 %v4199, %v4200
    %v4202 = vsel %vm3940, %v3323, -inf
    %v4203 = vsel %vm3940, %v3379, -inf
    %v4204 = vmax.f32 %v4202, %v4203
    %v4205 = vsel %vm3940, %v3386, -inf
    %v4206 = vsel %vm3940, %v3442, -inf
    %v4207 = vmax.f32 %v4205, %v4206
    %v4208 = vsel %vm3940, %v3393, -inf
    %v4209 = vsel %vm3940, %v3449, -inf
    %v4210 = vmax.f32 %v4208, %v4209
    %v4211 = vsel %vm3940, %v3400, -inf
    %v4212 = vsel %vm3940, %v3456, -inf
    %v4213 = vmax.f32 %v4211, %v4212
    %v4214 = vsel %vm3940, %v3407, -inf
    %v4215 = vsel %vm3940, %v3463, -inf
    %v4216 = vmax.f32 %v4214, %v4215
    %v4217 = vsel %vm3940, %v3414, -inf
    %v4218 = vsel %vm3940, %v3470, -inf
    %v4219 = vmax.f32 %v4217, %v4218
    %v4220 = vsel %vm3940, %v3421, -inf
    %v4221 = vsel %vm3940, %v3477, -inf
    %v4222 = vmax.f32 %v4220, %v4221
    %v4223 = vsel %vm3940, %v3428, -inf
    %v4224 = vsel %vm3940, %v3484, -inf
    %v4225 = vmax.f32 %v4223, %v4224
    %v4226 = vsel %vm3940, %v3435, -inf
    %v4227 = vsel %vm3940, %v3491, -inf
    %v4228 = vmax.f32 %v4226, %v4227
    %v4229 = vsel %vm3940, %v3498, -inf
    %v4230 = vsel %vm3940, %v3554, -inf
    %v4231 = vmax.f32 %v4229, %v4230
    %v4232 = vsel %vm3940, %v3505, -inf
    %v4233 = vsel %vm3940, %v3561, -inf
    %v4234 = vmax.f32 %v4232, %v4233
    %v4235 = vsel %vm3940, %v3512, -inf
    %v4236 = vsel %vm3940, %v3568, -inf
    %v4237 = vmax.f32 %v4235, %v4236
    %v4238 = vsel %vm3940, %v3519, -inf
    %v4239 = vsel %vm3940, %v3575, -inf
    %v4240 = vmax.f32 %v4238, %v4239
    %v4241 = vsel %vm3940, %v3526, -inf
    %v4242 = vsel %vm3940, %v3582, -inf
    %v4243 = vmax.f32 %v4241, %v4242
    %v4244 = vsel %vm3940, %v3533, -inf
    %v4245 = vsel %vm3940, %v3589, -inf
    %v4246 = vmax.f32 %v4244, %v4245
    %v4247 = vsel %vm3940, %v3540, -inf
    %v4248 = vsel %vm3940, %v3596, -inf
    %v4249 = vmax.f32 %v4247, %v4248
    %v4250 = vsel %vm3940, %v3547, -inf
    %v4251 = vsel %vm3940, %v3603, -inf
    %v4252 = vmax.f32 %v4250, %v4251
    %v4253 = vsel %vm3940, %v3610, -inf
    %v4254 = vsel %vm3940, %v3666, -inf
    %v4255 = vmax.f32 %v4253, %v4254
    %v4256 = vsel %vm3940, %v3617, -inf
    %v4257 = vsel %vm3940, %v3673, -inf
    %v4258 = vmax.f32 %v4256, %v4257
    %v4259 = vsel %vm3940, %v3624, -inf
    %v4260 = vsel %vm3940, %v3680, -inf
    %v4261 = vmax.f32 %v4259, %v4260
    %v4262 = vsel %vm3940, %v3631, -inf
    %v4263 = vsel %vm3940, %v3687, -inf
    %v4264 = vmax.f32 %v4262, %v4263
    %v4265 = vsel %vm3940, %v3638, -inf
    %v4266 = vsel %vm3940, %v3694, -inf
    %v4267 = vmax.f32 %v4265, %v4266
    %v4268 = vsel %vm3940, %v3645, -inf
    %v4269 = vsel %vm3940, %v3701, -inf
    %v4270 = vmax.f32 %v4268, %v4269
    %v4271 = vsel %vm3940, %v3652, -inf
    %v4272 = vsel %vm3940, %v3708, -inf
    %v4273 = vmax.f32 %v4271, %v4272
    %v4274 = vsel %vm3940, %v3659, -inf
    %v4275 = vsel %vm3940, %v3715, -inf
    %v4276 = vmax.f32 %v4274, %v4275
    %v4277 = vsel %vm3940, %v3722, -inf
    %v4278 = vsel %vm3940, %v3778, -inf
    %v4279 = vmax.f32 %v4277, %v4278
    %v4280 = vsel %vm3940, %v3729, -inf
    %v4281 = vsel %vm3940, %v3785, -inf
    %v4282 = vmax.f32 %v4280, %v4281
    %v4283 = vsel %vm3940, %v3736, -inf
    %v4284 = vsel %vm3940, %v3792, -inf
    %v4285 = vmax.f32 %v4283, %v4284
    %v4286 = vsel %vm3940, %v3743, -inf
    %v4287 = vsel %vm3940, %v3799, -inf
    %v4288 = vmax.f32 %v4286, %v4287
    %v4289 = vsel %vm3940, %v3750, -inf
    %v4290 = vsel %vm3940, %v3806, -inf
    %v4291 = vmax.f32 %v4289, %v4290
    %v4292 = vsel %vm3940, %v3757, -inf
    %v4293 = vsel %vm3940, %v3813, -inf
    %v4294 = vmax.f32 %v4292, %v4293
    %v4295 = vsel %vm3940, %v3764, -inf
    %v4296 = vsel %vm3940, %v3820, -inf
    %v4297 = vmax.f32 %v4295, %v4296
    %v4298 = vsel %vm3940, %v3771, -inf
    %v4299 = vsel %vm3940, %v3827, -inf
    %v4300 = vmax.f32 %v4298, %v4299
    %v4301 = vsel %vm3940, %v3834, -inf
    %v4302 = vsel %vm3940, %v3890, -inf
    %v4303 = vmax.f32 %v4301, %v4302
    %v4304 = vsel %vm3940, %v3841, -inf
    %v4305 = vsel %vm3940, %v3897, -inf
    %v4306 = vmax.f32 %v4304, %v4305
    %v4307 = vsel %vm3940, %v3848, -inf
    %v4308 = vsel %vm3940, %v3904, -inf
    %v4309 = vmax.f32 %v4307, %v4308
    %v4310 = vsel %vm3940, %v3855, -inf
    %v4311 = vsel %vm3940, %v3911, -inf
    %v4312 = vmax.f32 %v4310, %v4311
    %v4313 = vsel %vm3940, %v3862, -inf
    %v4314 = vsel %vm3940, %v3918, -inf
    %v4315 = vmax.f32 %v4313, %v4314
    %v4316 = vsel %vm3940, %v3869, -inf
    %v4317 = vsel %vm3940, %v3925, -inf
    %v4318 = vmax.f32 %v4316, %v4317
    %v4319 = vsel %vm3940, %v3876, -inf
    %v4320 = vsel %vm3940, %v3932, -inf
    %v4321 = vmax.f32 %v4319, %v4320
    %v4322 = vsel %vm3940, %v3883, -inf
    %v4323 = vsel %vm3940, %v3939, -inf
    %v4324 = vmax.f32 %v4322, %v4323
    %4325 = vst.msk [vmem:[#allocation2] sm:$0xff] %vm3940, 0.0
    %4326 = vst.msk [vmem:[#allocation2 + $0x8] sm:$0xff] %vm3940, 0.0
    %4327 = vst.msk [vmem:[#allocation2 + $0x10] sm:$0xff] %vm3940, 0.0
    %4328 = vst.msk [vmem:[#allocation2 + $0xf0] sm:$0xff] %vm3940, 0.0
    %4329 = vst.msk [vmem:[#allocation2 + $0xf8] sm:$0xff] %vm3940, 0.0
    %4330 = vst.msk [vmem:[#allocation2 + $0x100] sm:$0xff] %vm3940, 0.0
    %s4331 = scalar_lea.vmem [#allocation2], 216
    %4332 = vst.msk [vmem:[%s4331] sm:$0xff] %vm3940, 0.0
    %4333 = vst.msk [vmem:[%s4331 + $0x8] sm:$0xff] %vm3940, 0.0
    %4334 = vst.msk [vmem:[%s4331 + $0x10] sm:$0xff] %vm3940, 0.0
    %4335 = vst.msk [vmem:[%s4331 + $0xf0] sm:$0xff] %vm3940, 0.0
    %4336 = vst.msk [vmem:[%s4331 + $0xf8] sm:$0xff] %vm3940, 0.0
    %4337 = vst.msk [vmem:[%s4331 + $0x100] sm:$0xff] %vm3940, 0.0
    %4338 = vst.msk [vmem:[#allocation2] sm:$0xff] %vm3940, 0.0
    %4339 = vst.msk [vmem:[#allocation2 + $0x18] sm:$0xff] %vm3940, 0.0
    %4340 = vst.msk [vmem:[#allocation2 + $0x30] sm:$0xff] %vm3940, 0.0
    %4341 = vst.msk [vmem:[#allocation2 + $0x48] sm:$0xff] %vm3940, 0.0
    %4342 = vst.msk [vmem:[#allocation2 + $0x60] sm:$0xff] %vm3940, 0.0
    %4343 = vst.msk [vmem:[#allocation2 + $0x78] sm:$0xff] %vm3940, 0.0
    %4344 = vst.msk [vmem:[#allocation2 + $0x90] sm:$0xff] %vm3940, 0.0
    %4345 = vst.msk [vmem:[#allocation2 + $0xa8] sm:$0xff] %vm3940, 0.0
    %4346 = vst.msk [vmem:[#allocation2 + $0xc0] sm:$0xff] %vm3940, 0.0
    %4347 = vst.msk [vmem:[#allocation2 + $0xd8] sm:$0xff] %vm3940, 0.0
    %4348 = vst.msk [vmem:[#allocation2 + $0xf0] sm:$0xff] %vm3940, 0.0
    %4349 = vst.msk [vmem:[#allocation2 + $0x108] sm:$0xff] %vm3940, 0.0
    %4350 = vst.msk [vmem:[#allocation2 + $0x120] sm:$0xff] %vm3940, 0.0
    %4351 = vst.msk [vmem:[#allocation2 + $0x138] sm:$0xff] %vm3940, 0.0
    %4352 = vst.msk [vmem:[#allocation2 + $0x150] sm:$0xff] %vm3940, 0.0
    %4353 = vst.msk [vmem:[#allocation2 + $0x168] sm:$0xff] %vm3940, 0.0
    %4354 = vst.msk [vmem:[#allocation2 + $0x180] sm:$0xff] %vm3940, 0.0
    %4355 = vst.msk [vmem:[#allocation2 + $0x198] sm:$0xff] %vm3940, 0.0
    %4356 = vst.msk [vmem:[#allocation2 + $0x1b0] sm:$0xff] %vm3940, 0.0
    %4357 = vst.msk [vmem:[#allocation2 + $0x1c8] sm:$0xff] %vm3940, 0.0
    %4358 = vst.msk [vmem:[#allocation2 + $0x10] sm:$0xff] %vm3940, 0.0
    %4359 = vst.msk [vmem:[#allocation2 + $0x28] sm:$0xff] %vm3940, 0.0
    %4360 = vst.msk [vmem:[#allocation2 + $0x40] sm:$0xff] %vm3940, 0.0
    %4361 = vst.msk [vmem:[#allocation2 + $0x58] sm:$0xff] %vm3940, 0.0
    %4362 = vst.msk [vmem:[#allocation2 + $0x70] sm:$0xff] %vm3940, 0.0
    %4363 = vst.msk [vmem:[#allocation2 + $0x88] sm:$0xff] %vm3940, 0.0
    %4364 = vst.msk [vmem:[#allocation2 + $0xa0] sm:$0xff] %vm3940, 0.0
    %4365 = vst.msk [vmem:[#allocation2 + $0xb8] sm:$0xff] %vm3940, 0.0
    %4366 = vst.msk [vmem:[#allocation2 + $0xd0] sm:$0xff] %vm3940, 0.0
    %4367 = vst.msk [vmem:[#allocation2 + $0xe8] sm:$0xff] %vm3940, 0.0
    %4368 = vst.msk [vmem:[#allocation2 + $0x100] sm:$0xff] %vm3940, 0.0
    %4369 = vst.msk [vmem:[#allocation2 + $0x118] sm:$0xff] %vm3940, 0.0
    %4370 = vst.msk [vmem:[#allocation2 + $0x130] sm:$0xff] %vm3940, 0.0
    %4371 = vst.msk [vmem:[#allocation2 + $0x148] sm:$0xff] %vm3940, 0.0
    %4372 = vst.msk [vmem:[#allocation2 + $0x160] sm:$0xff] %vm3940, 0.0
    %4373 = vst.msk [vmem:[#allocation2 + $0x178] sm:$0xff] %vm3940, 0.0
    %4374 = vst.msk [vmem:[#allocation2 + $0x190] sm:$0xff] %vm3940, 0.0
    %4375 = vst.msk [vmem:[#allocation2 + $0x1a8] sm:$0xff] %vm3940, 0.0
    %4376 = vst.msk [vmem:[#allocation2 + $0x1c0] sm:$0xff] %vm3940, 0.0
    %4377 = vst.msk [vmem:[#allocation2 + $0x1d8] sm:$0xff] %vm3940, 0.0
    %vm4506 = vcmask 1041409
    %v4507 = vsel %vm4506, %v3946, %v3943
    %vm4508 = vcmask 1042434
    %v4509 = vsel %vm4508, %v3949, %v4507
    %vm4510 = vcmask 1043459
    %v4511 = vsel %vm4510, %v3952, %v4509
    %vm4512 = vcmask 1044484
    %v4513 = vsel %vm4512, %v3955, %v4511
    %vm4514 = vcmask 1045509
    %v4515 = vsel %vm4514, %v3958, %v4513
    %vm4516 = vcmask 1046534
    %v4517 = vsel %vm4516, %v3961, %v4515
    %vm4518 = vcmask 1047559
    %v4519 = vsel %vm4518, %v3964, %v4517
    %v4520 = vsel %vm4506, %v3970, %v3967
    %v4521 = vsel %vm4508, %v3973, %v4520
    %v4522 = vsel %vm4510, %v3976, %v4521
    %v4523 = vsel %vm4512, %v3979, %v4522
    %v4524 = vsel %vm4514, %v3982, %v4523
    %v4525 = vsel %vm4516, %v3985, %v4524
    %v4526 = vsel %vm4518, %v3988, %v4525
    %v4527 = vsel %vm4506, %v3994, %v3991
    %v4528 = vsel %vm4508, %v3997, %v4527
    %v4529 = vsel %vm4510, %v4000, %v4528
    %v4530 = vsel %vm4512, %v4003, %v4529
    %v4531 = vsel %vm4514, %v4006, %v4530
    %v4532 = vsel %vm4516, %v4009, %v4531
    %v4533 = vsel %vm4518, %v4012, %v4532
    %v4534 = vsel %vm4506, %v4018, %v4015
    %v4535 = vsel %vm4508, %v4021, %v4534
    %v4536 = vsel %vm4510, %v4024, %v4535
    %v4537 = vsel %vm4512, %v4027, %v4536
    %v4538 = vsel %vm4514, %v4030, %v4537
    %v4539 = vsel %vm4516, %v4033, %v4538
    %v4540 = vsel %vm4518, %v4036, %v4539
    %v4541 = vsel %vm4506, %v4042, %v4039
    %v4542 = vsel %vm4508, %v4045, %v4541
    %v4543 = vsel %vm4510, %v4048, %v4542
    %v4544 = vsel %vm4512, %v4051, %v4543
    %v4545 = vsel %vm4514, %v4054, %v4544
    %v4546 = vsel %vm4516, %v4057, %v4545
    %v4547 = vsel %vm4518, %v4060, %v4546
    %v4548 = vsel %vm4506, %v4066, %v4063
    %v4549 = vsel %vm4508, %v4069, %v4548
    %v4550 = vsel %vm4510, %v4072, %v4549
    %v4551 = vsel %vm4512, %v4075, %v4550
    %v4552 = vsel %vm4514, %v4078, %v4551
    %v4553 = vsel %vm4516, %v4081, %v4552
    %v4554 = vsel %vm4518, %v4084, %v4553
    %v4555 = vsel %vm4506, %v4090, %v4087
    %v4556 = vsel %vm4508, %v4093, %v4555
    %v4557 = vsel %vm4510, %v4096, %v4556
    %v4558 = vsel %vm4512, %v4099, %v4557
    %v4559 = vsel %vm4514, %v4102, %v4558
    %v4560 = vsel %vm4516, %v4105, %v4559
    %v4561 = vsel %vm4518, %v4108, %v4560
    %v4562 = vsel %vm4506, %v4114, %v4111
    %v4563 = vsel %vm4508, %v4117, %v4562
    %v4564 = vsel %vm4510, %v4120, %v4563
    %v4565 = vsel %vm4512, %v4123, %v4564
    %v4566 = vsel %vm4514, %v4126, %v4565
    %v4567 = vsel %vm4516, %v4129, %v4566
    %v4568 = vsel %vm4518, %v4132, %v4567
    %v4569 = vsel %vm4506, %v4138, %v4135
    %v4570 = vsel %vm4508, %v4141, %v4569
    %v4571 = vsel %vm4510, %v4144, %v4570
    %v4572 = vsel %vm4512, %v4147, %v4571
    %v4573 = vsel %vm4514, %v4150, %v4572
    %v4574 = vsel %vm4516, %v4153, %v4573
    %v4575 = vsel %vm4518, %v4156, %v4574
    %v4576 = vsel %vm4506, %v4162, %v4159
    %v4577 = vsel %vm4508, %v4165, %v4576
    %v4578 = vsel %vm4510, %v4168, %v4577
    %v4579 = vsel %vm4512, %v4171, %v4578
    %v4580 = vsel %vm4514, %v4174, %v4579
    %v4581 = vsel %vm4516, %v4177, %v4580
    %v4582 = vsel %vm4518, %v4180, %v4581
    %v4583 = vsel %vm4506, %v4186, %v4183
    %v4584 = vsel %vm4508, %v4189, %v4583
    %v4585 = vsel %vm4510, %v4192, %v4584
    %v4586 = vsel %vm4512, %v4195, %v4585
    %v4587 = vsel %vm4514, %v4198, %v4586
    %v4588 = vsel %vm4516, %v4201, %v4587
    %v4589 = vsel %vm4518, %v4204, %v4588
    %v4590 = vsel %vm4506, %v4210, %v4207
    %v4591 = vsel %vm4508, %v4213, %v4590
    %v4592 = vsel %vm4510, %v4216, %v4591
    %v4593 = vsel %vm4512, %v4219, %v4592
    %v4594 = vsel %vm4514, %v4222, %v4593
    %v4595 = vsel %vm4516, %v4225, %v4594
    %v4596 = vsel %vm4518, %v4228, %v4595
    %v4597 = vsel %vm4506, %v4234, %v4231
    %v4598 = vsel %vm4508, %v4237, %v4597
    %v4599 = vsel %vm4510, %v4240, %v4598
    %v4600 = vsel %vm4512, %v4243, %v4599
    %v4601 = vsel %vm4514, %v4246, %v4600
    %v4602 = vsel %vm4516, %v4249, %v4601
    %v4603 = vsel %vm4518, %v4252, %v4602
    %v4604 = vsel %vm4506, %v4258, %v4255
    %v4605 = vsel %vm4508, %v4261, %v4604
    %v4606 = vsel %vm4510, %v4264, %v4605
    %v4607 = vsel %vm4512, %v4267, %v4606
    %v4608 = vsel %vm4514, %v4270, %v4607
    %v4609 = vsel %vm4516, %v4273, %v4608
    %v4610 = vsel %vm4518, %v4276, %v4609
    %v4611 = vsel %vm4506, %v4282, %v4279
    %v4612 = vsel %vm4508, %v4285, %v4611
    %v4613 = vsel %vm4510, %v4288, %v4612
    %v4614 = vsel %vm4512, %v4291, %v4613
    %v4615 = vsel %vm4514, %v4294, %v4614
    %v4616 = vsel %vm4516, %v4297, %v4615
    %v4617 = vsel %vm4518, %v4300, %v4616
    %v4618 = vsel %vm4506, %v4306, %v4303
    %v4619 = vsel %vm4508, %v4309, %v4618
    %v4620 = vsel %vm4510, %v4312, %v4619
    %v4621 = vsel %vm4512, %v4315, %v4620
    %v4622 = vsel %vm4514, %v4318, %v4621
    %v4623 = vsel %vm4516, %v4321, %v4622
    %v4624 = vsel %vm4518, %v4324, %v4623
    %s4641 = scalar_lea.vmem [#allocation2], 24
    %4642 = vst.msk [vmem:[%s4641 + $0x8] sm:$0xff] %vm3940, %v4519
    %4643 = vst.msk [vmem:[%s4641 + $0x20] sm:$0xff] %vm3940, %v4526
    %4644 = vst.msk [vmem:[%s4641 + $0x38] sm:$0xff] %vm3940, %v4533
    %4645 = vst.msk [vmem:[%s4641 + $0x50] sm:$0xff] %vm3940, %v4540
    %4646 = vst.msk [vmem:[%s4641 + $0x68] sm:$0xff] %vm3940, %v4547
    %4647 = vst.msk [vmem:[%s4641 + $0x80] sm:$0xff] %vm3940, %v4554
    %4648 = vst.msk [vmem:[%s4641 + $0x98] sm:$0xff] %vm3940, %v4561
    %4649 = vst.msk [vmem:[%s4641 + $0xb0] sm:$0xff] %vm3940, %v4568
    %4650 = vst.msk [vmem:[%s4641 + $0xf8] sm:$0xff] %vm3940, %v4575
    %4651 = vst.msk [vmem:[%s4641 + $0x110] sm:$0xff] %vm3940, %v4582
    %4652 = vst.msk [vmem:[%s4641 + $0x128] sm:$0xff] %vm3940, %v4589
    %4653 = vst.msk [vmem:[%s4641 + $0x140] sm:$0xff] %vm3940, %v4596
    %4654 = vst.msk [vmem:[%s4641 + $0x158] sm:$0xff] %vm3940, %v4603
    %4655 = vst.msk [vmem:[%s4641 + $0x170] sm:$0xff] %vm3940, %v4610
    %4656 = vst.msk [vmem:[%s4641 + $0x188] sm:$0xff] %vm3940, %v4617
    %4657 = vst.msk [vmem:[%s4641 + $0x1a0] sm:$0xff] %vm3940, %v4624
    %v4658 = vld [vmem:[#allocation2 + $0x7] sm:$0xff]
    %v4659 = vld [vmem:[#allocation2 + $0x1f] sm:$0xff]
    %v4660 = vld [vmem:[#allocation2 + $0x37] sm:$0xff]
    %v4661 = vld [vmem:[#allocation2 + $0x4f] sm:$0xff]
    %v4662 = vld [vmem:[#allocation2 + $0x67] sm:$0xff]
    %v4663 = vld [vmem:[#allocation2 + $0x7f] sm:$0xff]
    %v4664 = vld [vmem:[#allocation2 + $0x97] sm:$0xff]
    %v4665 = vld [vmem:[#allocation2 + $0xaf] sm:$0xff]
    %v4666 = vld [vmem:[#allocation2 + $0xf7] sm:$0xff]
    %v4667 = vld [vmem:[#allocation2 + $0x10f] sm:$0xff]
    %v4668 = vld [vmem:[#allocation2 + $0x127] sm:$0xff]
    %v4669 = vld [vmem:[#allocation2 + $0x13f] sm:$0xff]
    %v4670 = vld [vmem:[#allocation2 + $0x157] sm:$0xff]
    %v4671 = vld [vmem:[#allocation2 + $0x16f] sm:$0xff]
    %v4672 = vld [vmem:[#allocation2 + $0x187] sm:$0xff]
    %v4673 = vld [vmem:[#allocation2 + $0x19f] sm:$0xff]
    %v4674 = vpack.c.bf16 %v4659, %v4658
    %v4675 = vpack.c.bf16 %v4661, %v4660
    %v4676 = vpack.c.bf16 %v4663, %v4662
    %v4677 = vpack.c.bf16 %v4665, %v4664
    %v4678 = vpack.c.bf16 %v4667, %v4666
    %v4679 = vpack.c.bf16 %v4669, %v4668
    %v4680 = vpack.c.bf16 %v4671, %v4670
    %v4681 = vpack.c.bf16 %v4673, %v4672
    %v4682 = vld [vmem:[%s3] sm:$0xf]
    %v4683 = vld [vmem:[%s3 + $0x4] sm:$0xf]
    %v4684 = vld [vmem:[%s3 + $0x8] sm:$0xf]
    %v4685 = vld [vmem:[%s3 + $0xc] sm:$0xf]
    %v4686 = vld [vmem:[#allocation2 + $0x8] sm:$0xff]
    %v4687 = vld [vmem:[#allocation2 + $0x20] sm:$0xff]
    %v4688 = vld [vmem:[#allocation2 + $0x38] sm:$0xff]
    %v4689 = vld [vmem:[#allocation2 + $0x50] sm:$0xff]
    %v4690 = vld [vmem:[#allocation2 + $0x68] sm:$0xff]
    %v4691 = vld [vmem:[#allocation2 + $0x80] sm:$0xff]
    %v4692 = vld [vmem:[#allocation2 + $0x98] sm:$0xff]
    %v4693 = vld [vmem:[#allocation2 + $0xb0] sm:$0xff]
    %v4694 = vld [vmem:[#allocation2 + $0xf8] sm:$0xff]
    %v4695 = vld [vmem:[#allocation2 + $0x110] sm:$0xff]
    %v4696 = vld [vmem:[#allocation2 + $0x128] sm:$0xff]
    %v4697 = vld [vmem:[#allocation2 + $0x140] sm:$0xff]
    %v4698 = vld [vmem:[#allocation2 + $0x158] sm:$0xff]
    %v4699 = vld [vmem:[#allocation2 + $0x170] sm:$0xff]
    %v4700 = vld [vmem:[#allocation2 + $0x188] sm:$0xff]
    %v4701 = vld [vmem:[#allocation2 + $0x1a0] sm:$0xff]
    %v4702 = vpack.c.bf16 %v4687, %v4686
    %v4703 = vpack.c.bf16 %v4689, %v4688
    %v4704 = vpack.c.bf16 %v4691, %v4690
    %v4705 = vpack.c.bf16 %v4693, %v4692
    %v4706 = vpack.c.bf16 %v4695, %v4694
    %v4707 = vpack.c.bf16 %v4697, %v4696
    %v4708 = vpack.c.bf16 %v4699, %v4698
    %v4709 = vpack.c.bf16 %v4701, %v4700
    %s4710 = scalar_lea.vmem %s3, 16
    %v4711 = vld [vmem:[%s4710] sm:$0xf]
    %v4712 = vld [vmem:[%s4710 + $0x4] sm:$0xf]
    %v4713 = vld [vmem:[%s4710 + $0x8] sm:$0xf]
    %v4714 = vld [vmem:[%s4710 + $0xc] sm:$0xf]
    %v4719 = vunpack.c.l.b16 %v4711
    %v4720 = vunpack.c.l.b16 %v4712
    %v4721 = vunpack.c.l.b16 %v4713
    %v4722 = vunpack.c.l.b16 %v4714
    %v4723 = vpack.c.b16 %v4720, %v4719
    %v4724 = vpack.c.b16 %v4722, %v4721
    %v4728 = vsel %vm3940, %v4702, 0
    %v4731 = vsel %vm3940, %v4703, 0
    %v4734 = vsel %vm3940, %v4704, 0
    %v4737 = vsel %vm3940, %v4705, 0
    %v4740 = vsel %vm3940, %v4706, 0
    %v4743 = vsel %vm3940, %v4707, 0
    %v4746 = vsel %vm3940, %v4708, 0
    %v4749 = vsel %vm3940, %v4709, 0
    %4751 = vmatprep.subr.bf16.mxu0 0
    %4752 = vmatpush1.bf16.msra.mxu0 %v4723
    %4753 = vmatprep.subr.bf16.mxu0 0
    %4754 = vmatpush1.bf16.msra.mxu0 %v4724
    %4755 = vmatprep.subr.bf16.mxu0 0
    %4756 = vmatpush1.bf16.msra.mxu0 0
    %4757 = vmatprep.subr.bf16.mxu0 0
    %4758 = vmatpush1.bf16.msra.mxu0 0
    %4759 = vmatprep.subr.bf16.mxu0 0
    %4760 = vmatpush1.bf16.msra.mxu0 0
    %4761 = vmatprep.subr.bf16.mxu0 0
    %4762 = vmatpush1.bf16.msra.mxu0 0
    %4763 = vmatprep.subr.bf16.mxu0 0
    %4764 = vmatpush1.bf16.msra.mxu0 0
    %4765 = vmatprep.subr.bf16.mxu0 0
    %4766 = vmatpush1.bf16.msra.mxu0 0
    %4767 = vmatprep.subr.bf16.mxu0 0
    %4768 = vmatpush1.bf16.msra.mxu0 0
    %4769 = vmatprep.subr.bf16.mxu0 0
    %4770 = vmatpush1.bf16.msra.mxu0 0
    %4771 = vmatprep.subr.bf16.mxu0 0
    %4772 = vmatpush1.bf16.msra.mxu0 0
    %4773 = vmatprep.subr.bf16.mxu0 0
    %4774 = vmatpush1.bf16.msra.mxu0 0
    %4775 = vmatprep.subr.bf16.mxu0 0
    %4776 = vmatpush1.bf16.msra.mxu0 0
    %4777 = vmatprep.subr.bf16.mxu0 0
    %4778 = vmatpush1.bf16.msra.mxu0 0
    %4779 = vmatprep.subr.bf16.mxu0 0
    %4780 = vmatpush1.bf16.msra.mxu0 0
    %4781 = vmatprep.subr.bf16.mxu0 0
    %4782 = vmatpush1.bf16.msra.mxu0 0
    %4783 = vmatprep.mubr.bf16.mxu0 0
    %4784 = vmatmul.mubr.bf16.gmra.mrb[0].mxu0 %v4728
    %v4785 = vpop.f32.mrb[0].mxu0
    %v4786 = vadd.f32 0.0, %v4785
    %v4787 = vpop.f32.mrb[0].mxu0
    %v4788 = vpop.f32.mrb[0].mxu0
    %v4789 = vadd.f32 0.0, %v4788
    %v4790 = vpop.f32.mrb[0].mxu0
    %4791 = vmatprep.mubr.bf16.mxu0 0
    %4792 = vmatmul.mubr.bf16.gmra.mrb[0].mxu0 %v4731
    %v4793 = vpop.f32.mrb[0].mxu0
    %v4794 = vadd.f32 0.0, %v4793
    %v4795 = vpop.f32.mrb[0].mxu0
    %v4796 = vpop.f32.mrb[0].mxu0
    %v4797 = vadd.f32 0.0, %v4796
    %v4798 = vpop.f32.mrb[0].mxu0
    %4799 = vmatprep.mubr.bf16.mxu0 0
    %4800 = vmatmul.mubr.bf16.gmra.mrb[0].mxu0 %v4734
    %v4801 = vpop.f32.mrb[0].mxu0
    %v4802 = vadd.f32 0.0, %v4801
    %v4803 = vpop.f32.mrb[0].mxu0
    %v4804 = vpop.f32.mrb[0].mxu0
    %v4805 = vadd.f32 0.0, %v4804
    %v4806 = vpop.f32.mrb[0].mxu0
    %4807 = vmatprep.mubr.bf16.mxu0 0
    %4808 = vmatmul.mubr.bf16.gmra.mrb[0].mxu0 %v4737
    %v4809 = vpop.f32.mrb[0].mxu0
    %v4810 = vadd.f32 0.0, %v4809
    %v4811 = vpop.f32.mrb[0].mxu0
    %v4812 = vpop.f32.mrb[0].mxu0
    %v4813 = vadd.f32 0.0, %v4812
    %v4814 = vpop.f32.mrb[0].mxu0
    %4815 = vmatprep.mubr.bf16.mxu0 0
    %4816 = vmatmul.mubr.bf16.gmra.mrb[0].mxu0 %v4740
    %v4817 = vpop.f32.mrb[0].mxu0
    %v4818 = vadd.f32 0.0, %v4817
    %v4819 = vpop.f32.mrb[0].mxu0
    %v4820 = vpop.f32.mrb[0].mxu0
    %v4821 = vadd.f32 0.0, %v4820
    %v4822 = vpop.f32.mrb[0].mxu0
    %4823 = vmatprep.mubr.bf16.mxu0 0
    %4824 = vmatmul.mubr.bf16.gmra.mrb[0].mxu0 %v4743
    %v4825 = vpop.f32.mrb[0].mxu0
    %v4826 = vadd.f32 0.0, %v4825
    %v4827 = vpop.f32.mrb[0].mxu0
    %v4828 = vpop.f32.mrb[0].mxu0
    %v4829 = vadd.f32 0.0, %v4828
    %v4830 = vpop.f32.mrb[0].mxu0
    %4831 = vmatprep.mubr.bf16.mxu0 0
    %4832 = vmatmul.mubr.bf16.gmra.mrb[0].mxu0 %v4746
    %v4833 = vpop.f32.mrb[0].mxu0
    %v4834 = vadd.f32 0.0, %v4833
    %v4835 = vpop.f32.mrb[0].mxu0
    %v4836 = vpop.f32.mrb[0].mxu0
    %v4837 = vadd.f32 0.0, %v4836
    %v4838 = vpop.f32.mrb[0].mxu0
    %4839 = vmatprep.mubr.bf16.mxu0 0
    %4840 = vmatmul.mubr.bf16.gmra.mrb[0].mxu0 %v4749
    %v4841 = vpop.f32.mrb[0].mxu0
    %v4842 = vadd.f32 0.0, %v4841
    %v4843 = vpop.f32.mrb[0].mxu0
    %v4844 = vpop.f32.mrb[0].mxu0
    %v4845 = vadd.f32 0.0, %v4844
    %v4846 = vpop.f32.mrb[0].mxu0
    %4847 = vdwg.mxu0
    %v4852 = vunpack.c.l.b16 %v4682
    %v4853 = vunpack.c.l.b16 %v4683
    %v4854 = vunpack.c.l.b16 %v4684
    %v4855 = vunpack.c.l.b16 %v4685
    %v4856 = vpack.c.b16 %v4853, %v4852
    %v4857 = vpack.c.b16 %v4855, %v4854
    %v4861 = vsel %vm3940, %v4674, 0
    %v4864 = vsel %vm3940, %v4675, 0
    %v4867 = vsel %vm3940, %v4676, 0
    %v4870 = vsel %vm3940, %v4677, 0
    %v4873 = vsel %vm3940, %v4678, 0
    %v4876 = vsel %vm3940, %v4679, 0
    %v4879 = vsel %vm3940, %v4680, 0
    %v4882 = vsel %vm3940, %v4681, 0
    %4884 = vmatprep.subr.bf16.mxu0 0
    %4885 = vmatpush1.bf16.msra.mxu0 %v4856
    %4886 = vmatprep.subr.bf16.mxu0 0
    %4887 = vmatpush1.bf16.msra.mxu0 %v4857
    %4888 = vmatprep.subr.bf16.mxu0 0
    %4889 = vmatpush1.bf16.msra.mxu0 0
    %4890 = vmatprep.subr.bf16.mxu0 0
    %4891 = vmatpush1.bf16.msra.mxu0 0
    %4892 = vmatprep.subr.bf16.mxu0 0
    %4893 = vmatpush1.bf16.msra.mxu0 0
    %4894 = vmatprep.subr.bf16.mxu0 0
    %4895 = vmatpush1.bf16.msra.mxu0 0
    %4896 = vmatprep.subr.bf16.mxu0 0
    %4897 = vmatpush1.bf16.msra.mxu0 0
    %4898 = vmatprep.subr.bf16.mxu0 0
    %4899 = vmatpush1.bf16.msra.mxu0 0
    %4900 = vmatprep.subr.bf16.mxu0 0
    %4901 = vmatpush1.bf16.msra.mxu0 0
    %4902 = vmatprep.subr.bf16.mxu0 0
    %4903 = vmatpush1.bf16.msra.mxu0 0
    %4904 = vmatprep.subr.bf16.mxu0 0
    %4905 = vmatpush1.bf16.msra.mxu0 0
    %4906 = vmatprep.subr.bf16.mxu0 0
    %4907 = vmatpush1.bf16.msra.mxu0 0
    %4908 = vmatprep.subr.bf16.mxu0 0
    %4909 = vmatpush1.bf16.msra.mxu0 0
    %4910 = vmatprep.subr.bf16.mxu0 0
    %4911 = vmatpush1.bf16.msra.mxu0 0
    %4912 = vmatprep.subr.bf16.mxu0 0
    %4913 = vmatpush1.bf16.msra.mxu0 0
    %4914 = vmatprep.subr.bf16.mxu0 0
    %4915 = vmatpush1.bf16.msra.mxu0 0
    %4916 = vmatprep.mubr.bf16.mxu0 0
    %4917 = vmatmul.mubr.bf16.gmra.mrb[0].mxu0 %v4861
    %v4918 = vpop.f32.mrb[0].mxu0
    %v4919 = vadd.f32 %v4786, %v4918
    %v4920 = vpop.f32.mrb[0].mxu0
    %v4921 = vpop.f32.mrb[0].mxu0
    %v4922 = vadd.f32 %v4789, %v4921
    %v4923 = vpop.f32.mrb[0].mxu0
    %4924 = vmatprep.mubr.bf16.mxu0 0
    %4925 = vmatmul.mubr.bf16.gmra.mrb[0].mxu0 %v4864
    %v4926 = vpop.f32.mrb[0].mxu0
    %v4927 = vadd.f32 %v4794, %v4926
    %v4928 = vpop.f32.mrb[0].mxu0
    %v4929 = vpop.f32.mrb[0].mxu0
    %v4930 = vadd.f32 %v4797, %v4929
    %v4931 = vpop.f32.mrb[0].mxu0
    %4932 = vmatprep.mubr.bf16.mxu0 0
    %4933 = vmatmul.mubr.bf16.gmra.mrb[0].mxu0 %v4867
    %v4934 = vpop.f32.mrb[0].mxu0
    %v4935 = vadd.f32 %v4802, %v4934
    %v4936 = vpop.f32.mrb[0].mxu0
    %v4937 = vpop.f32.mrb[0].mxu0
    %v4938 = vadd.f32 %v4805, %v4937
    %v4939 = vpop.f32.mrb[0].mxu0
    %4940 = vmatprep.mubr.bf16.mxu0 0
    %4941 = vmatmul.mubr.bf16.gmra.mrb[0].mxu0 %v4870
    %v4942 = vpop.f32.mrb[0].mxu0
    %v4943 = vadd.f32 %v4810, %v4942
    %v4944 = vpop.f32.mrb[0].mxu0
    %v4945 = vpop.f32.mrb[0].mxu0
    %v4946 = vadd.f32 %v4813, %v4945
    %v4947 = vpop.f32.mrb[0].mxu0
    %4948 = vmatprep.mubr.bf16.mxu0 0
    %4949 = vmatmul.mubr.bf16.gmra.mrb[0].mxu0 %v4873
    %v4950 = vpop.f32.mrb[0].mxu0
    %v4951 = vadd.f32 %v4818, %v4950
    %v4952 = vpop.f32.mrb[0].mxu0
    %v4953 = vpop.f32.mrb[0].mxu0
    %v4954 = vadd.f32 %v4821, %v4953
    %v4955 = vpop.f32.mrb[0].mxu0
    %4956 = vmatprep.mubr.bf16.mxu0 0
    %4957 = vmatmul.mubr.bf16.gmra.mrb[0].mxu0 %v4876
    %v4958 = vpop.f32.mrb[0].mxu0
    %v4959 = vadd.f32 %v4826, %v4958
    %v4960 = vpop.f32.mrb[0].mxu0
    %v4961 = vpop.f32.mrb[0].mxu0
    %v4962 = vadd.f32 %v4829, %v4961
    %v4963 = vpop.f32.mrb[0].mxu0
    %4964 = vmatprep.mubr.bf16.mxu0 0
    %4965 = vmatmul.mubr.bf16.gmra.mrb[0].mxu0 %v4879
    %v4966 = vpop.f32.mrb[0].mxu0
    %v4967 = vadd.f32 %v4834, %v4966
    %v4968 = vpop.f32.mrb[0].mxu0
    %v4969 = vpop.f32.mrb[0].mxu0
    %v4970 = vadd.f32 %v4837, %v4969
    %v4971 = vpop.f32.mrb[0].mxu0
    %4972 = vmatprep.mubr.bf16.mxu0 0
    %4973 = vmatmul.mubr.bf16.gmra.mrb[0].mxu0 %v4882
    %v4974 = vpop.f32.mrb[0].mxu0
    %v4975 = vadd.f32 %v4842, %v4974
    %v4976 = vpop.f32.mrb[0].mxu0
    %v4977 = vpop.f32.mrb[0].mxu0
    %v4978 = vadd.f32 %v4845, %v4977
    %v4979 = vpop.f32.mrb[0].mxu0
    %4980 = vdwg.mxu0
    %v4981 = vld [vmem:[#allocation2 + $0x9] sm:$0xff]
    %v4982 = vld [vmem:[#allocation2 + $0x21] sm:$0xff]
    %v4983 = vld [vmem:[#allocation2 + $0x39] sm:$0xff]
    %v4984 = vld [vmem:[#allocation2 + $0x51] sm:$0xff]
    %v4985 = vld [vmem:[#allocation2 + $0x69] sm:$0xff]
    %v4986 = vld [vmem:[#allocation2 + $0x81] sm:$0xff]
    %v4987 = vld [vmem:[#allocation2 + $0x99] sm:$0xff]
    %v4988 = vld [vmem:[#allocation2 + $0xb1] sm:$0xff]
    %v4989 = vld [vmem:[#allocation2 + $0xf9] sm:$0xff]
    %v4990 = vld [vmem:[#allocation2 + $0x111] sm:$0xff]
    %v4991 = vld [vmem:[#allocation2 + $0x129] sm:$0xff]
    %v4992 = vld [vmem:[#allocation2 + $0x141] sm:$0xff]
    %v4993 = vld [vmem:[#allocation2 + $0x159] sm:$0xff]
    %v4994 = vld [vmem:[#allocation2 + $0x171] sm:$0xff]
    %v4995 = vld [vmem:[#allocation2 + $0x189] sm:$0xff]
    %v4996 = vld [vmem:[#allocation2 + $0x1a1] sm:$0xff]
    %v4997 = vpack.c.bf16 %v4982, %v4981
    %v4998 = vpack.c.bf16 %v4984, %v4983
    %v4999 = vpack.c.bf16 %v4986, %v4985
    %v5000 = vpack.c.bf16 %v4988, %v4987
    %v5001 = vpack.c.bf16 %v4990, %v4989
    %v5002 = vpack.c.bf16 %v4992, %v4991
    %v5003 = vpack.c.bf16 %v4994, %v4993
    %v5004 = vpack.c.bf16 %v4996, %v4995
    %s5005 = scalar_lea.vmem %s3, 32
    %v5006 = vld [vmem:[%s5005] sm:$0xf]
    %v5007 = vld [vmem:[%s5005 + $0x4] sm:$0xf]
    %v5008 = vld [vmem:[%s5005 + $0x8] sm:$0xf]
    %v5009 = vld [vmem:[%s5005 + $0xc] sm:$0xf]
    %v5014 = vunpack.c.l.b16 %v5006
    %v5015 = vunpack.c.l.b16 %v5007
    %v5016 = vunpack.c.l.b16 %v5008
    %v5017 = vunpack.c.l.b16 %v5009
    %v5018 = vpack.c.b16 %v5015, %v5014
    %v5019 = vpack.c.b16 %v5017, %v5016
    %v5023 = vsel %vm3940, %v4997, 0
    %v5026 = vsel %vm3940, %v4998, 0
    %v5029 = vsel %vm3940, %v4999, 0
    %v5032 = vsel %vm3940, %v5000, 0
    %v5035 = vsel %vm3940, %v5001, 0
    %v5038 = vsel %vm3940, %v5002, 0
    %v5041 = vsel %vm3940, %v5003, 0
    %v5044 = vsel %vm3940, %v5004, 0
    %5046 = vmatprep.subr.bf16.mxu0 0
    %5047 = vmatpush1.bf16.msra.mxu0 %v5018
    %5048 = vmatprep.subr.bf16.mxu0 0
    %5049 = vmatpush1.bf16.msra.mxu0 %v5019
    %5050 = vmatprep.subr.bf16.mxu0 0
    %5051 = vmatpush1.bf16.msra.mxu0 0
    %5052 = vmatprep.subr.bf16.mxu0 0
    %5053 = vmatpush1.bf16.msra.mxu0 0
    %5054 = vmatprep.subr.bf16.mxu0 0
    %5055 = vmatpush1.bf16.msra.mxu0 0
    %5056 = vmatprep.subr.bf16.mxu0 0
    %5057 = vmatpush1.bf16.msra.mxu0 0
    %5058 = vmatprep.subr.bf16.mxu0 0
    %5059 = vmatpush1.bf16.msra.mxu0 0
    %5060 = vmatprep.subr.bf16.mxu0 0
    %5061 = vmatpush1.bf16.msra.mxu0 0
    %5062 = vmatprep.subr.bf16.mxu0 0
    %5063 = vmatpush1.bf16.msra.mxu0 0
    %5064 = vmatprep.subr.bf16.mxu0 0
    %5065 = vmatpush1.bf16.msra.mxu0 0
    %5066 = vmatprep.subr.bf16.mxu0 0
    %5067 = vmatpush1.bf16.msra.mxu0 0
    %5068 = vmatprep.subr.bf16.mxu0 0
    %5069 = vmatpush1.bf16.msra.mxu0 0
    %5070 = vmatprep.subr.bf16.mxu0 0
    %5071 = vmatpush1.bf16.msra.mxu0 0
    %5072 = vmatprep.subr.bf16.mxu0 0
    %5073 = vmatpush1.bf16.msra.mxu0 0
    %5074 = vmatprep.subr.bf16.mxu0 0
    %5075 = vmatpush1.bf16.msra.mxu0 0
    %5076 = vmatprep.subr.bf16.mxu0 0
    %5077 = vmatpush1.bf16.msra.mxu0 0
    %5078 = vmatprep.mubr.bf16.mxu0 0
    %5079 = vmatmul.mubr.bf16.gmra.mrb[0].mxu0 %v5023
    %v5080 = vpop.f32.mrb[0].mxu0
    %v5081 = vadd.f32 0.0, %v5080
    %v5082 = vpop.f32.mrb[0].mxu0
    %v5083 = vpop.f32.mrb[0].mxu0
    %v5084 = vadd.f32 0.0, %v5083
    %v5085 = vpop.f32.mrb[0].mxu0
    %5086 = vmatprep.mubr.bf16.mxu0 0
    %5087 = vmatmul.mubr.bf16.gmra.mrb[0].mxu0 %v5026
    %v5088 = vpop.f32.mrb[0].mxu0
    %v5089 = vadd.f32 0.0, %v5088
    %v5090 = vpop.f32.mrb[0].mxu0
    %v5091 = vpop.f32.mrb[0].mxu0
    %v5092 = vadd.f32 0.0, %v5091
    %v5093 = vpop.f32.mrb[0].mxu0
    %5094 = vmatprep.mubr.bf16.mxu0 0
    %5095 = vmatmul.mubr.bf16.gmra.mrb[0].mxu0 %v5029
    %v5096 = vpop.f32.mrb[0].mxu0
    %v5097 = vadd.f32 0.0, %v5096
    %v5098 = vpop.f32.mrb[0].mxu0
    %v5099 = vpop.f32.mrb[0].mxu0
    %v5100 = vadd.f32 0.0, %v5099
    %v5101 = vpop.f32.mrb[0].mxu0
    %5102 = vmatprep.mubr.bf16.mxu0 0
    %5103 = vmatmul.mubr.bf16.gmra.mrb[0].mxu0 %v5032
    %v5104 = vpop.f32.mrb[0].mxu0
    %v5105 = vadd.f32 0.0, %v5104
    %v5106 = vpop.f32.mrb[0].mxu0
    %v5107 = vpop.f32.mrb[0].mxu0
    %v5108 = vadd.f32 0.0, %v5107
    %v5109 = vpop.f32.mrb[0].mxu0
    %5110 = vmatprep.mubr.bf16.mxu0 0
    %5111 = vmatmul.mubr.bf16.gmra.mrb[0].mxu0 %v5035
    %v5112 = vpop.f32.mrb[0].mxu0
    %v5113 = vadd.f32 0.0, %v5112
    %v5114 = vpop.f32.mrb[0].mxu0
    %v5115 = vpop.f32.mrb[0].mxu0
    %v5116 = vadd.f32 0.0, %v5115
    %v5117 = vpop.f32.mrb[0].mxu0
    %5118 = vmatprep.mubr.bf16.mxu0 0
    %5119 = vmatmul.mubr.bf16.gmra.mrb[0].mxu0 %v5038
    %v5120 = vpop.f32.mrb[0].mxu0
    %v5121 = vadd.f32 0.0, %v5120
    %v5122 = vpop.f32.mrb[0].mxu0
    %v5123 = vpop.f32.mrb[0].mxu0
    %v5124 = vadd.f32 0.0, %v5123
    %v5125 = vpop.f32.mrb[0].mxu0
    %5126 = vmatprep.mubr.bf16.mxu0 0
    %5127 = vmatmul.mubr.bf16.gmra.mrb[0].mxu0 %v5041
    %v5128 = vpop.f32.mrb[0].mxu0
    %v5129 = vadd.f32 0.0, %v5128
    %v5130 = vpop.f32.mrb[0].mxu0
    %v5131 = vpop.f32.mrb[0].mxu0
    %v5132 = vadd.f32 0.0, %v5131
    %v5133 = vpop.f32.mrb[0].mxu0
    %5134 = vmatprep.mubr.bf16.mxu0 0
    %5135 = vmatmul.mubr.bf16.gmra.mrb[0].mxu0 %v5044
    %v5136 = vpop.f32.mrb[0].mxu0
    %v5137 = vadd.f32 0.0, %v5136
    %v5138 = vpop.f32.mrb[0].mxu0
    %v5139 = vpop.f32.mrb[0].mxu0
    %v5140 = vadd.f32 0.0, %v5139
    %v5141 = vpop.f32.mrb[0].mxu0
    %5142 = vdwg.mxu0
    %v5143 = vadd.f32 %v4919, %v5081
    %v5144 = vadd.f32 %v4922, %v5084
    %v5145 = vadd.f32 %v4927, %v5089
    %v5146 = vadd.f32 %v4930, %v5092
    %v5147 = vadd.f32 %v4935, %v5097
    %v5148 = vadd.f32 %v4938, %v5100
    %v5149 = vadd.f32 %v4943, %v5105
    %v5150 = vadd.f32 %v4946, %v5108
    %v5151 = vadd.f32 %v4951, %v5113
    %v5152 = vadd.f32 %v4954, %v5116
    %v5153 = vadd.f32 %v4959, %v5121
    %v5154 = vadd.f32 %v4962, %v5124
    %v5155 = vadd.f32 %v4967, %v5129
    %v5156 = vadd.f32 %v4970, %v5132
    %v5157 = vadd.f32 %v4975, %v5137
    %v5158 = vadd.f32 %v4978, %v5140
    %v5159 = vld [vmem:[%s4641 + $0x7] sm:$0xff]
    %v5160 = vld [vmem:[%s4641 + $0x1f] sm:$0xff]
    %v5161 = vld [vmem:[%s4641 + $0x37] sm:$0xff]
    %v5162 = vld [vmem:[%s4641 + $0x4f] sm:$0xff]
    %v5163 = vld [vmem:[%s4641 + $0x67] sm:$0xff]
    %v5164 = vld [vmem:[%s4641 + $0x7f] sm:$0xff]
    %v5165 = vld [vmem:[%s4641 + $0x97] sm:$0xff]
    %v5166 = vld [vmem:[%s4641 + $0xaf] sm:$0xff]
    %v5167 = vld [vmem:[%s4641 + $0xf7] sm:$0xff]
    %v5168 = vld [vmem:[%s4641 + $0x10f] sm:$0xff]
    %v5169 = vld [vmem:[%s4641 + $0x127] sm:$0xff]
    %v5170 = vld [vmem:[%s4641 + $0x13f] sm:$0xff]
    %v5171 = vld [vmem:[%s4641 + $0x157] sm:$0xff]
    %v5172 = vld [vmem:[%s4641 + $0x16f] sm:$0xff]
    %v5173 = vld [vmem:[%s4641 + $0x187] sm:$0xff]
    %v5174 = vld [vmem:[%s4641 + $0x19f] sm:$0xff]
    %v5175 = vpack.c.bf16 %v5160, %v5159
    %v5176 = vpack.c.bf16 %v5162, %v5161
    %v5177 = vpack.c.bf16 %v5164, %v5163
    %v5178 = vpack.c.bf16 %v5166, %v5165
    %v5179 = vpack.c.bf16 %v5168, %v5167
    %v5180 = vpack.c.bf16 %v5170, %v5169
    %v5181 = vpack.c.bf16 %v5172, %v5171
    %v5182 = vpack.c.bf16 %v5174, %v5173
    %s5183 = scalar_lea.vmem %s3, 48
    %v5184 = vld [vmem:[%s5183] sm:$0xf]
    %v5185 = vld [vmem:[%s5183 + $0x4] sm:$0xf]
    %v5186 = vld [vmem:[%s5183 + $0x8] sm:$0xf]
    %v5187 = vld [vmem:[%s5183 + $0xc] sm:$0xf]
    %v5192 = vunpack.c.l.b16 %v5184
    %v5193 = vunpack.c.l.b16 %v5185
    %v5194 = vunpack.c.l.b16 %v5186
    %v5195 = vunpack.c.l.b16 %v5187
    %v5196 = vpack.c.b16 %v5193, %v5192
    %v5197 = vpack.c.b16 %v5195, %v5194
    %v5201 = vsel %vm3940, %v5175, 0
    %v5204 = vsel %vm3940, %v5176, 0
    %v5207 = vsel %vm3940, %v5177, 0
    %v5210 = vsel %vm3940, %v5178, 0
    %v5213 = vsel %vm3940, %v5179, 0
    %v5216 = vsel %vm3940, %v5180, 0
    %v5219 = vsel %vm3940, %v5181, 0
    %v5222 = vsel %vm3940, %v5182, 0
    %5224 = vmatprep.subr.bf16.mxu0 0
    %5225 = vmatpush1.bf16.msra.mxu0 %v5196
    %5226 = vmatprep.subr.bf16.mxu0 0
    %5227 = vmatpush1.bf16.msra.mxu0 %v5197
    %5228 = vmatprep.subr.bf16.mxu0 0
    %5229 = vmatpush1.bf16.msra.mxu0 0
    %5230 = vmatprep.subr.bf16.mxu0 0
    %5231 = vmatpush1.bf16.msra.mxu0 0
    %5232 = vmatprep.subr.bf16.mxu0 0
    %5233 = vmatpush1.bf16.msra.mxu0 0
    %5234 = vmatprep.subr.bf16.mxu0 0
    %5235 = vmatpush1.bf16.msra.mxu0 0
    %5236 = vmatprep.subr.bf16.mxu0 0
    %5237 = vmatpush1.bf16.msra.mxu0 0
    %5238 = vmatprep.subr.bf16.mxu0 0
    %5239 = vmatpush1.bf16.msra.mxu0 0
    %5240 = vmatprep.subr.bf16.mxu0 0
    %5241 = vmatpush1.bf16.msra.mxu0 0
    %5242 = vmatprep.subr.bf16.mxu0 0
    %5243 = vmatpush1.bf16.msra.mxu0 0
    %5244 = vmatprep.subr.bf16.mxu0 0
    %5245 = vmatpush1.bf16.msra.mxu0 0
    %5246 = vmatprep.subr.bf16.mxu0 0
    %5247 = vmatpush1.bf16.msra.mxu0 0
    %5248 = vmatprep.subr.bf16.mxu0 0
    %5249 = vmatpush1.bf16.msra.mxu0 0
    %5250 = vmatprep.subr.bf16.mxu0 0
    %5251 = vmatpush1.bf16.msra.mxu0 0
    %5252 = vmatprep.subr.bf16.mxu0 0
    %5253 = vmatpush1.bf16.msra.mxu0 0
    %5254 = vmatprep.subr.bf16.mxu0 0
    %5255 = vmatpush1.bf16.msra.mxu0 0
    %5256 = vmatprep.mubr.bf16.mxu0 0
    %5257 = vmatmul.mubr.bf16.gmra.mrb[0].mxu0 %v5201
    %v5258 = vpop.f32.mrb[0].mxu0
    %v5259 = vadd.f32 0.0, %v5258
    %v5260 = vpop.f32.mrb[0].mxu0
    %v5261 = vpop.f32.mrb[0].mxu0
    %v5262 = vadd.f32 0.0, %v5261
    %v5263 = vpop.f32.mrb[0].mxu0
    %5264 = vmatprep.mubr.bf16.mxu0 0
    %5265 = vmatmul.mubr.bf16.gmra.mrb[0].mxu0 %v5204
    %v5266 = vpop.f32.mrb[0].mxu0
    %v5267 = vadd.f32 0.0, %v5266
    %v5268 = vpop.f32.mrb[0].mxu0
    %v5269 = vpop.f32.mrb[0].mxu0
    %v5270 = vadd.f32 0.0, %v5269
    %v5271 = vpop.f32.mrb[0].mxu0
    %5272 = vmatprep.mubr.bf16.mxu0 0
    %5273 = vmatmul.mubr.bf16.gmra.mrb[0].mxu0 %v5207
    %v5274 = vpop.f32.mrb[0].mxu0
    %v5275 = vadd.f32 0.0, %v5274
    %v5276 = vpop.f32.mrb[0].mxu0
    %v5277 = vpop.f32.mrb[0].mxu0
    %v5278 = vadd.f32 0.0, %v5277
    %v5279 = vpop.f32.mrb[0].mxu0
    %5280 = vmatprep.mubr.bf16.mxu0 0
    %5281 = vmatmul.mubr.bf16.gmra.mrb[0].mxu0 %v5210
    %v5282 = vpop.f32.mrb[0].mxu0
    %v5283 = vadd.f32 0.0, %v5282
    %v5284 = vpop.f32.mrb[0].mxu0
    %v5285 = vpop.f32.mrb[0].mxu0
    %v5286 = vadd.f32 0.0, %v5285
    %v5287 = vpop.f32.mrb[0].mxu0
    %5288 = vmatprep.mubr.bf16.mxu0 0
    %5289 = vmatmul.mubr.bf16.gmra.mrb[0].mxu0 %v5213
    %v5290 = vpop.f32.mrb[0].mxu0
    %v5291 = vadd.f32 0.0, %v5290
    %v5292 = vpop.f32.mrb[0].mxu0
    %v5293 = vpop.f32.mrb[0].mxu0
    %v5294 = vadd.f32 0.0, %v5293
    %v5295 = vpop.f32.mrb[0].mxu0
    %5296 = vmatprep.mubr.bf16.mxu0 0
    %5297 = vmatmul.mubr.bf16.gmra.mrb[0].mxu0 %v5216
    %v5298 = vpop.f32.mrb[0].mxu0
    %v5299 = vadd.f32 0.0, %v5298
    %v5300 = vpop.f32.mrb[0].mxu0
    %v5301 = vpop.f32.mrb[0].mxu0
    %v5302 = vadd.f32 0.0, %v5301
    %v5303 = vpop.f32.mrb[0].mxu0
    %5304 = vmatprep.mubr.bf16.mxu0 0
    %5305 = vmatmul.mubr.bf16.gmra.mrb[0].mxu0 %v5219
    %v5306 = vpop.f32.mrb[0].mxu0
    %v5307 = vadd.f32 0.0, %v5306
    %v5308 = vpop.f32.mrb[0].mxu0
    %v5309 = vpop.f32.mrb[0].mxu0
    %v5310 = vadd.f32 0.0, %v5309
    %v5311 = vpop.f32.mrb[0].mxu0
    %5312 = vmatprep.mubr.bf16.mxu0 0
    %5313 = vmatmul.mubr.bf16.gmra.mrb[0].mxu0 %v5222
    %v5314 = vpop.f32.mrb[0].mxu0
    %v5315 = vadd.f32 0.0, %v5314
    %v5316 = vpop.f32.mrb[0].mxu0
    %v5317 = vpop.f32.mrb[0].mxu0
    %v5318 = vadd.f32 0.0, %v5317
    %v5319 = vpop.f32.mrb[0].mxu0
    %5320 = vdwg.mxu0
    %v5321 = vadd.f32 %v5143, %v5259
    %v5322 = vadd.f32 %v5144, %v5262
    %v5323 = vadd.f32 %v5145, %v5267
    %v5324 = vadd.f32 %v5146, %v5270
    %v5325 = vadd.f32 %v5147, %v5275
    %v5326 = vadd.f32 %v5148, %v5278
    %v5327 = vadd.f32 %v5149, %v5283
    %v5328 = vadd.f32 %v5150, %v5286
    %v5329 = vadd.f32 %v5151, %v5291
    %v5330 = vadd.f32 %v5152, %v5294
    %v5331 = vadd.f32 %v5153, %v5299
    %v5332 = vadd.f32 %v5154, %v5302
    %v5333 = vadd.f32 %v5155, %v5307
    %v5334 = vadd.f32 %v5156, %v5310
    %v5335 = vadd.f32 %v5157, %v5315
    %v5336 = vadd.f32 %v5158, %v5318
    %v5337 = vld [vmem:[%s4641 + $0x8] sm:$0xff]
    %v5338 = vld [vmem:[%s4641 + $0x20] sm:$0xff]
    %v5339 = vld [vmem:[%s4641 + $0x38] sm:$0xff]
    %v5340 = vld [vmem:[%s4641 + $0x50] sm:$0xff]
    %v5341 = vld [vmem:[%s4641 + $0x68] sm:$0xff]
    %v5342 = vld [vmem:[%s4641 + $0x80] sm:$0xff]
    %v5343 = vld [vmem:[%s4641 + $0x98] sm:$0xff]
    %v5344 = vld [vmem:[%s4641 + $0xb0] sm:$0xff]
    %v5345 = vld [vmem:[%s4641 + $0xf8] sm:$0xff]
    %v5346 = vld [vmem:[%s4641 + $0x110] sm:$0xff]
    %v5347 = vld [vmem:[%s4641 + $0x128] sm:$0xff]
    %v5348 = vld [vmem:[%s4641 + $0x140] sm:$0xff]
    %v5349 = vld [vmem:[%s4641 + $0x158] sm:$0xff]
    %v5350 = vld [vmem:[%s4641 + $0x170] sm:$0xff]
    %v5351 = vld [vmem:[%s4641 + $0x188] sm:$0xff]
    %v5352 = vld [vmem:[%s4641 + $0x1a0] sm:$0xff]
    %v5353 = vpack.c.bf16 %v5338, %v5337
    %v5354 = vpack.c.bf16 %v5340, %v5339
    %v5355 = vpack.c.bf16 %v5342, %v5341
    %v5356 = vpack.c.bf16 %v5344, %v5343
    %v5357 = vpack.c.bf16 %v5346, %v5345
    %v5358 = vpack.c.bf16 %v5348, %v5347
    %v5359 = vpack.c.bf16 %v5350, %v5349
    %v5360 = vpack.c.bf16 %v5352, %v5351
    %s5361 = scalar_lea.vmem %s3, 64
    %v5362 = vld [vmem:[%s5361] sm:$0xf]
    %v5363 = vld [vmem:[%s5361 + $0x4] sm:$0xf]
    %v5364 = vld [vmem:[%s5361 + $0x8] sm:$0xf]
    %v5365 = vld [vmem:[%s5361 + $0xc] sm:$0xf]
    %v5370 = vunpack.c.l.b16 %v5362
    %v5371 = vunpack.c.l.b16 %v5363
    %v5372 = vunpack.c.l.b16 %v5364
    %v5373 = vunpack.c.l.b16 %v5365
    %v5374 = vpack.c.b16 %v5371, %v5370
    %v5375 = vpack.c.b16 %v5373, %v5372
    %v5379 = vsel %vm3940, %v5353, 0
    %v5382 = vsel %vm3940, %v5354, 0
    %v5385 = vsel %vm3940, %v5355, 0
    %v5388 = vsel %vm3940, %v5356, 0
    %v5391 = vsel %vm3940, %v5357, 0
    %v5394 = vsel %vm3940, %v5358, 0
    %v5397 = vsel %vm3940, %v5359, 0
    %v5400 = vsel %vm3940, %v5360, 0
    %5402 = vmatprep.subr.bf16.mxu0 0
    %5403 = vmatpush1.bf16.msra.mxu0 %v5374
    %5404 = vmatprep.subr.bf16.mxu0 0
    %5405 = vmatpush1.bf16.msra.mxu0 %v5375
    %5406 = vmatprep.subr.bf16.mxu0 0
    %5407 = vmatpush1.bf16.msra.mxu0 0
    %5408 = vmatprep.subr.bf16.mxu0 0
    %5409 = vmatpush1.bf16.msra.mxu0 0
    %5410 = vmatprep.subr.bf16.mxu0 0
    %5411 = vmatpush1.bf16.msra.mxu0 0
    %5412 = vmatprep.subr.bf16.mxu0 0
    %5413 = vmatpush1.bf16.msra.mxu0 0
    %5414 = vmatprep.subr.bf16.mxu0 0
    %5415 = vmatpush1.bf16.msra.mxu0 0
    %5416 = vmatprep.subr.bf16.mxu0 0
    %5417 = vmatpush1.bf16.msra.mxu0 0
    %5418 = vmatprep.subr.bf16.mxu0 0
    %5419 = vmatpush1.bf16.msra.mxu0 0
    %5420 = vmatprep.subr.bf16.mxu0 0
    %5421 = vmatpush1.bf16.msra.mxu0 0
    %5422 = vmatprep.subr.bf16.mxu0 0
    %5423 = vmatpush1.bf16.msra.mxu0 0
    %5424 = vmatprep.subr.bf16.mxu0 0
    %5425 = vmatpush1.bf16.msra.mxu0 0
    %5426 = vmatprep.subr.bf16.mxu0 0
    %5427 = vmatpush1.bf16.msra.mxu0 0
    %5428 = vmatprep.subr.bf16.mxu0 0
    %5429 = vmatpush1.bf16.msra.mxu0 0
    %5430 = vmatprep.subr.bf16.mxu0 0
    %5431 = vmatpush1.bf16.msra.mxu0 0
    %5432 = vmatprep.subr.bf16.mxu0 0
    %5433 = vmatpush1.bf16.msra.mxu0 0
    %5434 = vmatprep.mubr.bf16.mxu0 0
    %5435 = vmatmul.mubr.bf16.gmra.mrb[0].mxu0 %v5379
    %v5436 = vpop.f32.mrb[0].mxu0
    %v5437 = vadd.f32 0.0, %v5436
    %v5438 = vpop.f32.mrb[0].mxu0
    %v5439 = vpop.f32.mrb[0].mxu0
    %v5440 = vadd.f32 0.0, %v5439
    %v5441 = vpop.f32.mrb[0].mxu0
    %5442 = vmatprep.mubr.bf16.mxu0 0
    %5443 = vmatmul.mubr.bf16.gmra.mrb[0].mxu0 %v5382
    %v5444 = vpop.f32.mrb[0].mxu0
    %v5445 = vadd.f32 0.0, %v5444
    %v5446 = vpop.f32.mrb[0].mxu0
    %v5447 = vpop.f32.mrb[0].mxu0
    %v5448 = vadd.f32 0.0, %v5447
    %v5449 = vpop.f32.mrb[0].mxu0
    %5450 = vmatprep.mubr.bf16.mxu0 0
    %5451 = vmatmul.mubr.bf16.gmra.mrb[0].mxu0 %v5385
    %v5452 = vpop.f32.mrb[0].mxu0
    %v5453 = vadd.f32 0.0, %v5452
    %v5454 = vpop.f32.mrb[0].mxu0
    %v5455 = vpop.f32.mrb[0].mxu0
    %v5456 = vadd.f32 0.0, %v5455
    %v5457 = vpop.f32.mrb[0].mxu0
    %5458 = vmatprep.mubr.bf16.mxu0 0
    %5459 = vmatmul.mubr.bf16.gmra.mrb[0].mxu0 %v5388
    %v5460 = vpop.f32.mrb[0].mxu0
    %v5461 = vadd.f32 0.0, %v5460
    %v5462 = vpop.f32.mrb[0].mxu0
    %v5463 = vpop.f32.mrb[0].mxu0
    %v5464 = vadd.f32 0.0, %v5463
    %v5465 = vpop.f32.mrb[0].mxu0
    %5466 = vmatprep.mubr.bf16.mxu0 0
    %5467 = vmatmul.mubr.bf16.gmra.mrb[0].mxu0 %v5391
    %v5468 = vpop.f32.mrb[0].mxu0
    %v5469 = vadd.f32 0.0, %v5468
    %v5470 = vpop.f32.mrb[0].mxu0
    %v5471 = vpop.f32.mrb[0].mxu0
    %v5472 = vadd.f32 0.0, %v5471
    %v5473 = vpop.f32.mrb[0].mxu0
    %5474 = vmatprep.mubr.bf16.mxu0 0
    %5475 = vmatmul.mubr.bf16.gmra.mrb[0].mxu0 %v5394
    %v5476 = vpop.f32.mrb[0].mxu0
    %v5477 = vadd.f32 0.0, %v5476
    %v5478 = vpop.f32.mrb[0].mxu0
    %v5479 = vpop.f32.mrb[0].mxu0
    %v5480 = vadd.f32 0.0, %v5479
    %v5481 = vpop.f32.mrb[0].mxu0
    %5482 = vmatprep.mubr.bf16.mxu0 0
    %5483 = vmatmul.mubr.bf16.gmra.mrb[0].mxu0 %v5397
    %v5484 = vpop.f32.mrb[0].mxu0
    %v5485 = vadd.f32 0.0, %v5484
    %v5486 = vpop.f32.mrb[0].mxu0
    %v5487 = vpop.f32.mrb[0].mxu0
    %v5488 = vadd.f32 0.0, %v5487
    %v5489 = vpop.f32.mrb[0].mxu0
    %5490 = vmatprep.mubr.bf16.mxu0 0
    %5491 = vmatmul.mubr.bf16.gmra.mrb[0].mxu0 %v5400
    %v5492 = vpop.f32.mrb[0].mxu0
    %v5493 = vadd.f32 0.0, %v5492
    %v5494 = vpop.f32.mrb[0].mxu0
    %v5495 = vpop.f32.mrb[0].mxu0
    %v5496 = vadd.f32 0.0, %v5495
    %v5497 = vpop.f32.mrb[0].mxu0
    %5498 = vdwg.mxu0
    %v5499 = vadd.f32 %v5321, %v5437
    %v5500 = vadd.f32 %v5322, %v5440
    %v5501 = vadd.f32 %v5323, %v5445
    %v5502 = vadd.f32 %v5324, %v5448
    %v5503 = vadd.f32 %v5325, %v5453
    %v5504 = vadd.f32 %v5326, %v5456
    %v5505 = vadd.f32 %v5327, %v5461
    %v5506 = vadd.f32 %v5328, %v5464
    %v5507 = vadd.f32 %v5329, %v5469
    %v5508 = vadd.f32 %v5330, %v5472
    %v5509 = vadd.f32 %v5331, %v5477
    %v5510 = vadd.f32 %v5332, %v5480
    %v5511 = vadd.f32 %v5333, %v5485
    %v5512 = vadd.f32 %v5334, %v5488
    %v5513 = vadd.f32 %v5335, %v5493
    %v5514 = vadd.f32 %v5336, %v5496
    %v5515 = vld [vmem:[%s4641 + $0x9] sm:$0xff]
    %v5516 = vld [vmem:[%s4641 + $0x21] sm:$0xff]
    %v5517 = vld [vmem:[%s4641 + $0x39] sm:$0xff]
    %v5518 = vld [vmem:[%s4641 + $0x51] sm:$0xff]
    %v5519 = vld [vmem:[%s4641 + $0x69] sm:$0xff]
    %v5520 = vld [vmem:[%s4641 + $0x81] sm:$0xff]
    %v5521 = vld [vmem:[%s4641 + $0x99] sm:$0xff]
    %v5522 = vld [vmem:[%s4641 + $0xb1] sm:$0xff]
    %v5523 = vld [vmem:[%s4641 + $0xf9] sm:$0xff]
    %v5524 = vld [vmem:[%s4641 + $0x111] sm:$0xff]
    %v5525 = vld [vmem:[%s4641 + $0x129] sm:$0xff]
    %v5526 = vld [vmem:[%s4641 + $0x141] sm:$0xff]
    %v5527 = vld [vmem:[%s4641 + $0x159] sm:$0xff]
    %v5528 = vld [vmem:[%s4641 + $0x171] sm:$0xff]
    %v5529 = vld [vmem:[%s4641 + $0x189] sm:$0xff]
    %v5530 = vld [vmem:[%s4641 + $0x1a1] sm:$0xff]
    %v5531 = vpack.c.bf16 %v5516, %v5515
    %v5532 = vpack.c.bf16 %v5518, %v5517
    %v5533 = vpack.c.bf16 %v5520, %v5519
    %v5534 = vpack.c.bf16 %v5522, %v5521
    %v5535 = vpack.c.bf16 %v5524, %v5523
    %v5536 = vpack.c.bf16 %v5526, %v5525
    %v5537 = vpack.c.bf16 %v5528, %v5527
    %v5538 = vpack.c.bf16 %v5530, %v5529
    %s5539 = scalar_lea.vmem %s3, 80
    %v5540 = vld [vmem:[%s5539] sm:$0xf]
    %v5541 = vld [vmem:[%s5539 + $0x4] sm:$0xf]
    %v5542 = vld [vmem:[%s5539 + $0x8] sm:$0xf]
    %v5543 = vld [vmem:[%s5539 + $0xc] sm:$0xf]
    %v5548 = vunpack.c.l.b16 %v5540
    %v5549 = vunpack.c.l.b16 %v5541
    %v5550 = vunpack.c.l.b16 %v5542
    %v5551 = vunpack.c.l.b16 %v5543
    %v5552 = vpack.c.b16 %v5549, %v5548
    %v5553 = vpack.c.b16 %v5551, %v5550
    %v5557 = vsel %vm3940, %v5531, 0
    %v5560 = vsel %vm3940, %v5532, 0
    %v5563 = vsel %vm3940, %v5533, 0
    %v5566 = vsel %vm3940, %v5534, 0
    %v5569 = vsel %vm3940, %v5535, 0
    %v5572 = vsel %vm3940, %v5536, 0
    %v5575 = vsel %vm3940, %v5537, 0
    %v5578 = vsel %vm3940, %v5538, 0
    %5580 = vmatprep.subr.bf16.mxu0 0
    %5581 = vmatpush1.bf16.msra.mxu0 %v5552
    %5582 = vmatprep.subr.bf16.mxu0 0
    %5583 = vmatpush1.bf16.msra.mxu0 %v5553
    %5584 = vmatprep.subr.bf16.mxu0 0
    %5585 = vmatpush1.bf16.msra.mxu0 0
    %5586 = vmatprep.subr.bf16.mxu0 0
    %5587 = vmatpush1.bf16.msra.mxu0 0
    %5588 = vmatprep.subr.bf16.mxu0 0
    %5589 = vmatpush1.bf16.msra.mxu0 0
    %5590 = vmatprep.subr.bf16.mxu0 0
    %5591 = vmatpush1.bf16.msra.mxu0 0
    %5592 = vmatprep.subr.bf16.mxu0 0
    %5593 = vmatpush1.bf16.msra.mxu0 0
    %5594 = vmatprep.subr.bf16.mxu0 0
    %5595 = vmatpush1.bf16.msra.mxu0 0
    %5596 = vmatprep.subr.bf16.mxu0 0
    %5597 = vmatpush1.bf16.msra.mxu0 0
    %5598 = vmatprep.subr.bf16.mxu0 0
    %5599 = vmatpush1.bf16.msra.mxu0 0
    %5600 = vmatprep.subr.bf16.mxu0 0
    %5601 = vmatpush1.bf16.msra.mxu0 0
    %5602 = vmatprep.subr.bf16.mxu0 0
    %5603 = vmatpush1.bf16.msra.mxu0 0
    %5604 = vmatprep.subr.bf16.mxu0 0
    %5605 = vmatpush1.bf16.msra.mxu0 0
    %5606 = vmatprep.subr.bf16.mxu0 0
    %5607 = vmatpush1.bf16.msra.mxu0 0
    %5608 = vmatprep.subr.bf16.mxu0 0
    %5609 = vmatpush1.bf16.msra.mxu0 0
    %5610 = vmatprep.subr.bf16.mxu0 0
    %5611 = vmatpush1.bf16.msra.mxu0 0
    %5612 = vmatprep.mubr.bf16.mxu0 0
    %5613 = vmatmul.mubr.bf16.gmra.mrb[0].mxu0 %v5557
    %v5614 = vpop.f32.mrb[0].mxu0
    %v5615 = vadd.f32 0.0, %v5614
    %v5616 = vpop.f32.mrb[0].mxu0
    %v5617 = vpop.f32.mrb[0].mxu0
    %v5618 = vadd.f32 0.0, %v5617
    %v5619 = vpop.f32.mrb[0].mxu0
    %5620 = vmatprep.mubr.bf16.mxu0 0
    %5621 = vmatmul.mubr.bf16.gmra.mrb[0].mxu0 %v5560
    %v5622 = vpop.f32.mrb[0].mxu0
    %v5623 = vadd.f32 0.0, %v5622
    %v5624 = vpop.f32.mrb[0].mxu0
    %v5625 = vpop.f32.mrb[0].mxu0
    %v5626 = vadd.f32 0.0, %v5625
    %v5627 = vpop.f32.mrb[0].mxu0
    %5628 = vmatprep.mubr.bf16.mxu0 0
    %5629 = vmatmul.mubr.bf16.gmra.mrb[0].mxu0 %v5563
    %v5630 = vpop.f32.mrb[0].mxu0
    %v5631 = vadd.f32 0.0, %v5630
    %v5632 = vpop.f32.mrb[0].mxu0
    %v5633 = vpop.f32.mrb[0].mxu0
    %v5634 = vadd.f32 0.0, %v5633
    %v5635 = vpop.f32.mrb[0].mxu0
    %5636 = vmatprep.mubr.bf16.mxu0 0
    %5637 = vmatmul.mubr.bf16.gmra.mrb[0].mxu0 %v5566
    %v5638 = vpop.f32.mrb[0].mxu0
    %v5639 = vadd.f32 0.0, %v5638
    %v5640 = vpop.f32.mrb[0].mxu0
    %v5641 = vpop.f32.mrb[0].mxu0
    %v5642 = vadd.f32 0.0, %v5641
    %v5643 = vpop.f32.mrb[0].mxu0
    %5644 = vmatprep.mubr.bf16.mxu0 0
    %5645 = vmatmul.mubr.bf16.gmra.mrb[0].mxu0 %v5569
    %v5646 = vpop.f32.mrb[0].mxu0
    %v5647 = vadd.f32 0.0, %v5646
    %v5648 = vpop.f32.mrb[0].mxu0
    %v5649 = vpop.f32.mrb[0].mxu0
    %v5650 = vadd.f32 0.0, %v5649
    %v5651 = vpop.f32.mrb[0].mxu0
    %5652 = vmatprep.mubr.bf16.mxu0 0
    %5653 = vmatmul.mubr.bf16.gmra.mrb[0].mxu0 %v5572
    %v5654 = vpop.f32.mrb[0].mxu0
    %v5655 = vadd.f32 0.0, %v5654
    %v5656 = vpop.f32.mrb[0].mxu0
    %v5657 = vpop.f32.mrb[0].mxu0
    %v5658 = vadd.f32 0.0, %v5657
    %v5659 = vpop.f32.mrb[0].mxu0
    %5660 = vmatprep.mubr.bf16.mxu0 0
    %5661 = vmatmul.mubr.bf16.gmra.mrb[0].mxu0 %v5575
    %v5662 = vpop.f32.mrb[0].mxu0
    %v5663 = vadd.f32 0.0, %v5662
    %v5664 = vpop.f32.mrb[0].mxu0
    %v5665 = vpop.f32.mrb[0].mxu0
    %v5666 = vadd.f32 0.0, %v5665
    %v5667 = vpop.f32.mrb[0].mxu0
    %5668 = vmatprep.mubr.bf16.mxu0 0
    %5669 = vmatmul.mubr.bf16.gmra.mrb[0].mxu0 %v5578
    %v5670 = vpop.f32.mrb[0].mxu0
    %v5671 = vadd.f32 0.0, %v5670
    %v5672 = vpop.f32.mrb[0].mxu0
    %v5673 = vpop.f32.mrb[0].mxu0
    %v5674 = vadd.f32 0.0, %v5673
    %v5675 = vpop.f32.mrb[0].mxu0
    %5676 = vdwg.mxu0
    %v5677 = vadd.f32 %v5499, %v5615
    %v5678 = vadd.f32 %v5500, %v5618
    %v5679 = vadd.f32 %v5501, %v5623
    %v5680 = vadd.f32 %v5502, %v5626
    %v5681 = vadd.f32 %v5503, %v5631
    %v5682 = vadd.f32 %v5504, %v5634
    %v5683 = vadd.f32 %v5505, %v5639
    %v5684 = vadd.f32 %v5506, %v5642
    %v5685 = vadd.f32 %v5507, %v5647
    %v5686 = vadd.f32 %v5508, %v5650
    %v5687 = vadd.f32 %v5509, %v5655
    %v5688 = vadd.f32 %v5510, %v5658
    %v5689 = vadd.f32 %v5511, %v5663
    %v5690 = vadd.f32 %v5512, %v5666
    %v5691 = vadd.f32 %v5513, %v5671
    %v5692 = vadd.f32 %v5514, %v5674
    %s5693 = scalar_lea.vmem [#allocation2], 48
    %v5694 = vld [vmem:[%s5693 + $0x7] sm:$0xff]
    %v5695 = vld [vmem:[%s5693 + $0x1f] sm:$0xff]
    %v5696 = vld [vmem:[%s5693 + $0x37] sm:$0xff]
    %v5697 = vld [vmem:[%s5693 + $0x4f] sm:$0xff]
    %v5698 = vld [vmem:[%s5693 + $0x67] sm:$0xff]
    %v5699 = vld [vmem:[%s5693 + $0x7f] sm:$0xff]
    %v5700 = vld [vmem:[%s5693 + $0x97] sm:$0xff]
    %v5701 = vld [vmem:[%s5693 + $0xaf] sm:$0xff]
    %v5702 = vld [vmem:[%s5693 + $0xf7] sm:$0xff]
    %v5703 = vld [vmem:[%s5693 + $0x10f] sm:$0xff]
    %v5704 = vld [vmem:[%s5693 + $0x127] sm:$0xff]
    %v5705 = vld [vmem:[%s5693 + $0x13f] sm:$0xff]
    %v5706 = vld [vmem:[%s5693 + $0x157] sm:$0xff]
    %v5707 = vld [vmem:[%s5693 + $0x16f] sm:$0xff]
    %v5708 = vld [vmem:[%s5693 + $0x187] sm:$0xff]
    %v5709 = vld [vmem:[%s5693 + $0x19f] sm:$0xff]
    %v5710 = vpack.c.bf16 %v5695, %v5694
    %v5711 = vpack.c.bf16 %v5697, %v5696
    %v5712 = vpack.c.bf16 %v5699, %v5698
    %v5713 = vpack.c.bf16 %v5701, %v5700
    %v5714 = vpack.c.bf16 %v5703, %v5702
    %v5715 = vpack.c.bf16 %v5705, %v5704
    %v5716 = vpack.c.bf16 %v5707, %v5706
    %v5717 = vpack.c.bf16 %v5709, %v5708
    %s5718 = scalar_lea.vmem %s3, 96
    %v5719 = vld [vmem:[%s5718] sm:$0xf]
    %v5720 = vld [vmem:[%s5718 + $0x4] sm:$0xf]
    %v5721 = vld [vmem:[%s5718 + $0x8] sm:$0xf]
    %v5722 = vld [vmem:[%s5718 + $0xc] sm:$0xf]
    %v5727 = vunpack.c.l.b16 %v5719
    %v5728 = vunpack.c.l.b16 %v5720
    %v5729 = vunpack.c.l.b16 %v5721
    %v5730 = vunpack.c.l.b16 %v5722
    %v5731 = vpack.c.b16 %v5728, %v5727
    %v5732 = vpack.c.b16 %v5730, %v5729
    %v5736 = vsel %vm3940, %v5710, 0
    %v5739 = vsel %vm3940, %v5711, 0
    %v5742 = vsel %vm3940, %v5712, 0
    %v5745 = vsel %vm3940, %v5713, 0
    %v5748 = vsel %vm3940, %v5714, 0
    %v5751 = vsel %vm3940, %v5715, 0
    %v5754 = vsel %vm3940, %v5716, 0
    %v5757 = vsel %vm3940, %v5717, 0
    %5759 = vmatprep.subr.bf16.mxu0 0
    %5760 = vmatpush1.bf16.msra.mxu0 %v5731
    %5761 = vmatprep.subr.bf16.mxu0 0
    %5762 = vmatpush1.bf16.msra.mxu0 %v5732
    %5763 = vmatprep.subr.bf16.mxu0 0
    %5764 = vmatpush1.bf16.msra.mxu0 0
    %5765 = vmatprep.subr.bf16.mxu0 0
    %5766 = vmatpush1.bf16.msra.mxu0 0
    %5767 = vmatprep.subr.bf16.mxu0 0
    %5768 = vmatpush1.bf16.msra.mxu0 0
    %5769 = vmatprep.subr.bf16.mxu0 0
    %5770 = vmatpush1.bf16.msra.mxu0 0
    %5771 = vmatprep.subr.bf16.mxu0 0
    %5772 = vmatpush1.bf16.msra.mxu0 0
    %5773 = vmatprep.subr.bf16.mxu0 0
    %5774 = vmatpush1.bf16.msra.mxu0 0
    %5775 = vmatprep.subr.bf16.mxu0 0
    %5776 = vmatpush1.bf16.msra.mxu0 0
    %5777 = vmatprep.subr.bf16.mxu0 0
    %5778 = vmatpush1.bf16.msra.mxu0 0
    %5779 = vmatprep.subr.bf16.mxu0 0
    %5780 = vmatpush1.bf16.msra.mxu0 0
    %5781 = vmatprep.subr.bf16.mxu0 0
    %5782 = vmatpush1.bf16.msra.mxu0 0
    %5783 = vmatprep.subr.bf16.mxu0 0
    %5784 = vmatpush1.bf16.msra.mxu0 0
    %5785 = vmatprep.subr.bf16.mxu0 0
    %5786 = vmatpush1.bf16.msra.mxu0 0
    %5787 = vmatprep.subr.bf16.mxu0 0
    %5788 = vmatpush1.bf16.msra.mxu0 0
    %5789 = vmatprep.subr.bf16.mxu0 0
    %5790 = vmatpush1.bf16.msra.mxu0 0
    %5791 = vmatprep.mubr.bf16.mxu0 0
    %5792 = vmatmul.mubr.bf16.gmra.mrb[0].mxu0 %v5736
    %v5793 = vpop.f32.mrb[0].mxu0
    %v5794 = vadd.f32 0.0, %v5793
    %v5795 = vpop.f32.mrb[0].mxu0
    %v5796 = vpop.f32.mrb[0].mxu0
    %v5797 = vadd.f32 0.0, %v5796
    %v5798 = vpop.f32.mrb[0].mxu0
    %5799 = vmatprep.mubr.bf16.mxu0 0
    %5800 = vmatmul.mubr.bf16.gmra.mrb[0].mxu0 %v5739
    %v5801 = vpop.f32.mrb[0].mxu0
    %v5802 = vadd.f32 0.0, %v5801
    %v5803 = vpop.f32.mrb[0].mxu0
    %v5804 = vpop.f32.mrb[0].mxu0
    %v5805 = vadd.f32 0.0, %v5804
    %v5806 = vpop.f32.mrb[0].mxu0
    %5807 = vmatprep.mubr.bf16.mxu0 0
    %5808 = vmatmul.mubr.bf16.gmra.mrb[0].mxu0 %v5742
    %v5809 = vpop.f32.mrb[0].mxu0
    %v5810 = vadd.f32 0.0, %v5809
    %v5811 = vpop.f32.mrb[0].mxu0
    %v5812 = vpop.f32.mrb[0].mxu0
    %v5813 = vadd.f32 0.0, %v5812
    %v5814 = vpop.f32.mrb[0].mxu0
    %5815 = vmatprep.mubr.bf16.mxu0 0
    %5816 = vmatmul.mubr.bf16.gmra.mrb[0].mxu0 %v5745
    %v5817 = vpop.f32.mrb[0].mxu0
    %v5818 = vadd.f32 0.0, %v5817
    %v5819 = vpop.f32.mrb[0].mxu0
    %v5820 = vpop.f32.mrb[0].mxu0
    %v5821 = vadd.f32 0.0, %v5820
    %v5822 = vpop.f32.mrb[0].mxu0
    %5823 = vmatprep.mubr.bf16.mxu0 0
    %5824 = vmatmul.mubr.bf16.gmra.mrb[0].mxu0 %v5748
    %v5825 = vpop.f32.mrb[0].mxu0
    %v5826 = vadd.f32 0.0, %v5825
    %v5827 = vpop.f32.mrb[0].mxu0
    %v5828 = vpop.f32.mrb[0].mxu0
    %v5829 = vadd.f32 0.0, %v5828
    %v5830 = vpop.f32.mrb[0].mxu0
    %5831 = vmatprep.mubr.bf16.mxu0 0
    %5832 = vmatmul.mubr.bf16.gmra.mrb[0].mxu0 %v5751
    %v5833 = vpop.f32.mrb[0].mxu0
    %v5834 = vadd.f32 0.0, %v5833
    %v5835 = vpop.f32.mrb[0].mxu0
    %v5836 = vpop.f32.mrb[0].mxu0
    %v5837 = vadd.f32 0.0, %v5836
    %v5838 = vpop.f32.mrb[0].mxu0
    %5839 = vmatprep.mubr.bf16.mxu0 0
    %5840 = vmatmul.mubr.bf16.gmra.mrb[0].mxu0 %v5754
    %v5841 = vpop.f32.mrb[0].mxu0
    %v5842 = vadd.f32 0.0, %v5841
    %v5843 = vpop.f32.mrb[0].mxu0
    %v5844 = vpop.f32.mrb[0].mxu0
    %v5845 = vadd.f32 0.0, %v5844
    %v5846 = vpop.f32.mrb[0].mxu0
    %5847 = vmatprep.mubr.bf16.mxu0 0
    %5848 = vmatmul.mubr.bf16.gmra.mrb[0].mxu0 %v5757
    %v5849 = vpop.f32.mrb[0].mxu0
    %v5850 = vadd.f32 0.0, %v5849
    %v5851 = vpop.f32.mrb[0].mxu0
    %v5852 = vpop.f32.mrb[0].mxu0
    %v5853 = vadd.f32 0.0, %v5852
    %v5854 = vpop.f32.mrb[0].mxu0
    %5855 = vdwg.mxu0
    %v5856 = vadd.f32 %v5677, %v5794
    %v5857 = vadd.f32 %v5678, %v5797
    %v5858 = vadd.f32 %v5679, %v5802
    %v5859 = vadd.f32 %v5680, %v5805
    %v5860 = vadd.f32 %v5681, %v5810
    %v5861 = vadd.f32 %v5682, %v5813
    %v5862 = vadd.f32 %v5683, %v5818
    %v5863 = vadd.f32 %v5684, %v5821
    %v5864 = vadd.f32 %v5685, %v5826
    %v5865 = vadd.f32 %v5686, %v5829
    %v5866 = vadd.f32 %v5687, %v5834
    %v5867 = vadd.f32 %v5688, %v5837
    %v5868 = vadd.f32 %v5689, %v5842
    %v5869 = vadd.f32 %v5690, %v5845
    %v5870 = vadd.f32 %v5691, %v5850
    %v5871 = vadd.f32 %v5692, %v5853
    %v5872 = vld [vmem:[%s5693 + $0x8] sm:$0xff]
    %v5873 = vld [vmem:[%s5693 + $0x20] sm:$0xff]
    %v5874 = vld [vmem:[%s5693 + $0x38] sm:$0xff]
    %v5875 = vld [vmem:[%s5693 + $0x50] sm:$0xff]
    %v5876 = vld [vmem:[%s5693 + $0x68] sm:$0xff]
    %v5877 = vld [vmem:[%s5693 + $0x80] sm:$0xff]
    %v5878 = vld [vmem:[%s5693 + $0x98] sm:$0xff]
    %v5879 = vld [vmem:[%s5693 + $0xb0] sm:$0xff]
    %v5880 = vld [vmem:[%s5693 + $0xf8] sm:$0xff]
    %v5881 = vld [vmem:[%s5693 + $0x110] sm:$0xff]
    %v5882 = vld [vmem:[%s5693 + $0x128] sm:$0xff]
    %v5883 = vld [vmem:[%s5693 + $0x140] sm:$0xff]
    %v5884 = vld [vmem:[%s5693 + $0x158] sm:$0xff]
    %v5885 = vld [vmem:[%s5693 + $0x170] sm:$0xff]
    %v5886 = vld [vmem:[%s5693 + $0x188] sm:$0xff]
    %v5887 = vld [vmem:[%s5693 + $0x1a0] sm:$0xff]
    %v5888 = vpack.c.bf16 %v5873, %v5872
    %v5889 = vpack.c.bf16 %v5875, %v5874
    %v5890 = vpack.c.bf16 %v5877, %v5876
    %v5891 = vpack.c.bf16 %v5879, %v5878
    %v5892 = vpack.c.bf16 %v5881, %v5880
    %v5893 = vpack.c.bf16 %v5883, %v5882
    %v5894 = vpack.c.bf16 %v5885, %v5884
    %v5895 = vpack.c.bf16 %v5887, %v5886
    %s5896 = scalar_lea.vmem %s3, 112
    %v5897 = vld [vmem:[%s5896] sm:$0xf]
    %v5898 = vld [vmem:[%s5896 + $0x4] sm:$0xf]
    %v5899 = vld [vmem:[%s5896 + $0x8] sm:$0xf]
    %v5900 = vld [vmem:[%s5896 + $0xc] sm:$0xf]
    %v5905 = vunpack.c.l.b16 %v5897
    %v5906 = vunpack.c.l.b16 %v5898
    %v5907 = vunpack.c.l.b16 %v5899
    %v5908 = vunpack.c.l.b16 %v5900
    %v5909 = vpack.c.b16 %v5906, %v5905
    %v5910 = vpack.c.b16 %v5908, %v5907
    %v5914 = vsel %vm3940, %v5888, 0
    %v5917 = vsel %vm3940, %v5889, 0
    %v5920 = vsel %vm3940, %v5890, 0
    %v5923 = vsel %vm3940, %v5891, 0
    %v5926 = vsel %vm3940, %v5892, 0
    %v5929 = vsel %vm3940, %v5893, 0
    %v5932 = vsel %vm3940, %v5894, 0
    %v5935 = vsel %vm3940, %v5895, 0
    %5937 = vmatprep.subr.bf16.mxu0 0
    %5938 = vmatpush1.bf16.msra.mxu0 %v5909
    %5939 = vmatprep.subr.bf16.mxu0 0
    %5940 = vmatpush1.bf16.msra.mxu0 %v5910
    %5941 = vmatprep.subr.bf16.mxu0 0
    %5942 = vmatpush1.bf16.msra.mxu0 0
    %5943 = vmatprep.subr.bf16.mxu0 0
    %5944 = vmatpush1.bf16.msra.mxu0 0
    %5945 = vmatprep.subr.bf16.mxu0 0
    %5946 = vmatpush1.bf16.msra.mxu0 0
    %5947 = vmatprep.subr.bf16.mxu0 0
    %5948 = vmatpush1.bf16.msra.mxu0 0
    %5949 = vmatprep.subr.bf16.mxu0 0
    %5950 = vmatpush1.bf16.msra.mxu0 0
    %5951 = vmatprep.subr.bf16.mxu0 0
    %5952 = vmatpush1.bf16.msra.mxu0 0
    %5953 = vmatprep.subr.bf16.mxu0 0
    %5954 = vmatpush1.bf16.msra.mxu0 0
    %5955 = vmatprep.subr.bf16.mxu0 0
    %5956 = vmatpush1.bf16.msra.mxu0 0
    %5957 = vmatprep.subr.bf16.mxu0 0
    %5958 = vmatpush1.bf16.msra.mxu0 0
    %5959 = vmatprep.subr.bf16.mxu0 0
    %5960 = vmatpush1.bf16.msra.mxu0 0
    %5961 = vmatprep.subr.bf16.mxu0 0
    %5962 = vmatpush1.bf16.msra.mxu0 0
    %5963 = vmatprep.subr.bf16.mxu0 0
    %5964 = vmatpush1.bf16.msra.mxu0 0
    %5965 = vmatprep.subr.bf16.mxu0 0
    %5966 = vmatpush1.bf16.msra.mxu0 0
    %5967 = vmatprep.subr.bf16.mxu0 0
    %5968 = vmatpush1.bf16.msra.mxu0 0
    %5969 = vmatprep.mubr.bf16.mxu0 0
    %5970 = vmatmul.mubr.bf16.gmra.mrb[0].mxu0 %v5914
    %v5971 = vpop.f32.mrb[0].mxu0
    %v5972 = vadd.f32 0.0, %v5971
    %v5973 = vpop.f32.mrb[0].mxu0
    %v5974 = vpop.f32.mrb[0].mxu0
    %v5975 = vadd.f32 0.0, %v5974
    %v5976 = vpop.f32.mrb[0].mxu0
    %5977 = vmatprep.mubr.bf16.mxu0 0
    %5978 = vmatmul.mubr.bf16.gmra.mrb[0].mxu0 %v5917
    %v5979 = vpop.f32.mrb[0].mxu0
    %v5980 = vadd.f32 0.0, %v5979
    %v5981 = vpop.f32.mrb[0].mxu0
    %v5982 = vpop.f32.mrb[0].mxu0
    %v5983 = vadd.f32 0.0, %v5982
    %v5984 = vpop.f32.mrb[0].mxu0
    %5985 = vmatprep.mubr.bf16.mxu0 0
    %5986 = vmatmul.mubr.bf16.gmra.mrb[0].mxu0 %v5920
    %v5987 = vpop.f32.mrb[0].mxu0
    %v5988 = vadd.f32 0.0, %v5987
    %v5989 = vpop.f32.mrb[0].mxu0
    %v5990 = vpop.f32.mrb[0].mxu0
    %v5991 = vadd.f32 0.0, %v5990
    %v5992 = vpop.f32.mrb[0].mxu0
    %5993 = vmatprep.mubr.bf16.mxu0 0
    %5994 = vmatmul.mubr.bf16.gmra.mrb[0].mxu0 %v5923
    %v5995 = vpop.f32.mrb[0].mxu0
    %v5996 = vadd.f32 0.0, %v5995
    %v5997 = vpop.f32.mrb[0].mxu0
    %v5998 = vpop.f32.mrb[0].mxu0
    %v5999 = vadd.f32 0.0, %v5998
    %v6000 = vpop.f32.mrb[0].mxu0
    %6001 = vmatprep.mubr.bf16.mxu0 0
    %6002 = vmatmul.mubr.bf16.gmra.mrb[0].mxu0 %v5926
    %v6003 = vpop.f32.mrb[0].mxu0
    %v6004 = vadd.f32 0.0, %v6003
    %v6005 = vpop.f32.mrb[0].mxu0
    %v6006 = vpop.f32.mrb[0].mxu0
    %v6007 = vadd.f32 0.0, %v6006
    %v6008 = vpop.f32.mrb[0].mxu0
    %6009 = vmatprep.mubr.bf16.mxu0 0
    %6010 = vmatmul.mubr.bf16.gmra.mrb[0].mxu0 %v5929
    %v6011 = vpop.f32.mrb[0].mxu0
    %v6012 = vadd.f32 0.0, %v6011
    %v6013 = vpop.f32.mrb[0].mxu0
    %v6014 = vpop.f32.mrb[0].mxu0
    %v6015 = vadd.f32 0.0, %v6014
    %v6016 = vpop.f32.mrb[0].mxu0
    %6017 = vmatprep.mubr.bf16.mxu0 0
    %6018 = vmatmul.mubr.bf16.gmra.mrb[0].mxu0 %v5932
    %v6019 = vpop.f32.mrb[0].mxu0
    %v6020 = vadd.f32 0.0, %v6019
    %v6021 = vpop.f32.mrb[0].mxu0
    %v6022 = vpop.f32.mrb[0].mxu0
    %v6023 = vadd.f32 0.0, %v6022
    %v6024 = vpop.f32.mrb[0].mxu0
    %6025 = vmatprep.mubr.bf16.mxu0 0
    %6026 = vmatmul.mubr.bf16.gmra.mrb[0].mxu0 %v5935
    %v6027 = vpop.f32.mrb[0].mxu0
    %v6028 = vadd.f32 0.0, %v6027
    %v6029 = vpop.f32.mrb[0].mxu0
    %v6030 = vpop.f32.mrb[0].mxu0
    %v6031 = vadd.f32 0.0, %v6030
    %v6032 = vpop.f32.mrb[0].mxu0
    %6033 = vdwg.mxu0
    %v6034 = vadd.f32 %v5856, %v5972
    %v6035 = vadd.f32 %v5857, %v5975
    %v6036 = vadd.f32 %v5858, %v5980
    %v6037 = vadd.f32 %v5859, %v5983
    %v6038 = vadd.f32 %v5860, %v5988
    %v6039 = vadd.f32 %v5861, %v5991
    %v6040 = vadd.f32 %v5862, %v5996
    %v6041 = vadd.f32 %v5863, %v5999
    %v6042 = vadd.f32 %v5864, %v6004
    %v6043 = vadd.f32 %v5865, %v6007
    %v6044 = vadd.f32 %v5866, %v6012
    %v6045 = vadd.f32 %v5867, %v6015
    %v6046 = vadd.f32 %v5868, %v6020
    %v6047 = vadd.f32 %v5869, %v6023
    %v6048 = vadd.f32 %v5870, %v6028
    %v6049 = vadd.f32 %v5871, %v6031
    %v6050 = vld [vmem:[%s5693 + $0x9] sm:$0xff]
    %v6051 = vld [vmem:[%s5693 + $0x21] sm:$0xff]
    %v6052 = vld [vmem:[%s5693 + $0x39] sm:$0xff]
    %v6053 = vld [vmem:[%s5693 + $0x51] sm:$0xff]
    %v6054 = vld [vmem:[%s5693 + $0x69] sm:$0xff]
    %v6055 = vld [vmem:[%s5693 + $0x81] sm:$0xff]
    %v6056 = vld [vmem:[%s5693 + $0x99] sm:$0xff]
    %v6057 = vld [vmem:[%s5693 + $0xb1] sm:$0xff]
    %v6058 = vld [vmem:[%s5693 + $0xf9] sm:$0xff]
    %v6059 = vld [vmem:[%s5693 + $0x111] sm:$0xff]
    %v6060 = vld [vmem:[%s5693 + $0x129] sm:$0xff]
    %v6061 = vld [vmem:[%s5693 + $0x141] sm:$0xff]
    %v6062 = vld [vmem:[%s5693 + $0x159] sm:$0xff]
    %v6063 = vld [vmem:[%s5693 + $0x171] sm:$0xff]
    %v6064 = vld [vmem:[%s5693 + $0x189] sm:$0xff]
    %v6065 = vld [vmem:[%s5693 + $0x1a1] sm:$0xff]
    %v6066 = vpack.c.bf16 %v6051, %v6050
    %v6067 = vpack.c.bf16 %v6053, %v6052
    %v6068 = vpack.c.bf16 %v6055, %v6054
    %v6069 = vpack.c.bf16 %v6057, %v6056
    %v6070 = vpack.c.bf16 %v6059, %v6058
    %v6071 = vpack.c.bf16 %v6061, %v6060
    %v6072 = vpack.c.bf16 %v6063, %v6062
    %v6073 = vpack.c.bf16 %v6065, %v6064
    %s6074 = scalar_lea.vmem %s3, 128
    %v6075 = vld [vmem:[%s6074] sm:$0xf]
    %v6076 = vld [vmem:[%s6074 + $0x4] sm:$0xf]
    %v6077 = vld [vmem:[%s6074 + $0x8] sm:$0xf]
    %v6078 = vld [vmem:[%s6074 + $0xc] sm:$0xf]
    %v6083 = vunpack.c.l.b16 %v6075
    %v6084 = vunpack.c.l.b16 %v6076
    %v6085 = vunpack.c.l.b16 %v6077
    %v6086 = vunpack.c.l.b16 %v6078
    %v6087 = vpack.c.b16 %v6084, %v6083
    %v6088 = vpack.c.b16 %v6086, %v6085
    %v6092 = vsel %vm3940, %v6066, 0
    %v6095 = vsel %vm3940, %v6067, 0
    %v6098 = vsel %vm3940, %v6068, 0
    %v6101 = vsel %vm3940, %v6069, 0
    %v6104 = vsel %vm3940, %v6070, 0
    %v6107 = vsel %vm3940, %v6071, 0
    %v6110 = vsel %vm3940, %v6072, 0
    %v6113 = vsel %vm3940, %v6073, 0
    %6115 = vmatprep.subr.bf16.mxu0 0
    %6116 = vmatpush1.bf16.msra.mxu0 %v6087
    %6117 = vmatprep.subr.bf16.mxu0 0
    %6118 = vmatpush1.bf16.msra.mxu0 %v6088
    %6119 = vmatprep.subr.bf16.mxu0 0
    %6120 = vmatpush1.bf16.msra.mxu0 0
    %6121 = vmatprep.subr.bf16.mxu0 0
    %6122 = vmatpush1.bf16.msra.mxu0 0
    %6123 = vmatprep.subr.bf16.mxu0 0
    %6124 = vmatpush1.bf16.msra.mxu0 0
    %6125 = vmatprep.subr.bf16.mxu0 0
    %6126 = vmatpush1.bf16.msra.mxu0 0
    %6127 = vmatprep.subr.bf16.mxu0 0
    %6128 = vmatpush1.bf16.msra.mxu0 0
    %6129 = vmatprep.subr.bf16.mxu0 0
    %6130 = vmatpush1.bf16.msra.mxu0 0
    %6131 = vmatprep.subr.bf16.mxu0 0
    %6132 = vmatpush1.bf16.msra.mxu0 0
    %6133 = vmatprep.subr.bf16.mxu0 0
    %6134 = vmatpush1.bf16.msra.mxu0 0
    %6135 = vmatprep.subr.bf16.mxu0 0
    %6136 = vmatpush1.bf16.msra.mxu0 0
    %6137 = vmatprep.subr.bf16.mxu0 0
    %6138 = vmatpush1.bf16.msra.mxu0 0
    %6139 = vmatprep.subr.bf16.mxu0 0
    %6140 = vmatpush1.bf16.msra.mxu0 0
    %6141 = vmatprep.subr.bf16.mxu0 0
    %6142 = vmatpush1.bf16.msra.mxu0 0
    %6143 = vmatprep.subr.bf16.mxu0 0
    %6144 = vmatpush1.bf16.msra.mxu0 0
    %6145 = vmatprep.subr.bf16.mxu0 0
    %6146 = vmatpush1.bf16.msra.mxu0 0
    %6147 = vmatprep.mubr.bf16.mxu0 0
    %6148 = vmatmul.mubr.bf16.gmra.mrb[0].mxu0 %v6092
    %v6149 = vpop.f32.mrb[0].mxu0
    %v6150 = vadd.f32 0.0, %v6149
    %v6151 = vpop.f32.mrb[0].mxu0
    %v6152 = vpop.f32.mrb[0].mxu0
    %v6153 = vadd.f32 0.0, %v6152
    %v6154 = vpop.f32.mrb[0].mxu0
    %6155 = vmatprep.mubr.bf16.mxu0 0
    %6156 = vmatmul.mubr.bf16.gmra.mrb[0].mxu0 %v6095
    %v6157 = vpop.f32.mrb[0].mxu0
    %v6158 = vadd.f32 0.0, %v6157
    %v6159 = vpop.f32.mrb[0].mxu0
    %v6160 = vpop.f32.mrb[0].mxu0
    %v6161 = vadd.f32 0.0, %v6160
    %v6162 = vpop.f32.mrb[0].mxu0
    %6163 = vmatprep.mubr.bf16.mxu0 0
    %6164 = vmatmul.mubr.bf16.gmra.mrb[0].mxu0 %v6098
    %v6165 = vpop.f32.mrb[0].mxu0
    %v6166 = vadd.f32 0.0, %v6165
    %v6167 = vpop.f32.mrb[0].mxu0
    %v6168 = vpop.f32.mrb[0].mxu0
    %v6169 = vadd.f32 0.0, %v6168
    %v6170 = vpop.f32.mrb[0].mxu0
    %6171 = vmatprep.mubr.bf16.mxu0 0
    %6172 = vmatmul.mubr.bf16.gmra.mrb[0].mxu0 %v6101
    %v6173 = vpop.f32.mrb[0].mxu0
    %v6174 = vadd.f32 0.0, %v6173
    %v6175 = vpop.f32.mrb[0].mxu0
    %v6176 = vpop.f32.mrb[0].mxu0
    %v6177 = vadd.f32 0.0, %v6176
    %v6178 = vpop.f32.mrb[0].mxu0
    %6179 = vmatprep.mubr.bf16.mxu0 0
    %6180 = vmatmul.mubr.bf16.gmra.mrb[0].mxu0 %v6104
    %v6181 = vpop.f32.mrb[0].mxu0
    %v6182 = vadd.f32 0.0, %v6181
    %v6183 = vpop.f32.mrb[0].mxu0
    %v6184 = vpop.f32.mrb[0].mxu0
    %v6185 = vadd.f32 0.0, %v6184
    %v6186 = vpop.f32.mrb[0].mxu0
    %6187 = vmatprep.mubr.bf16.mxu0 0
    %6188 = vmatmul.mubr.bf16.gmra.mrb[0].mxu0 %v6107
    %v6189 = vpop.f32.mrb[0].mxu0
    %v6190 = vadd.f32 0.0, %v6189
    %v6191 = vpop.f32.mrb[0].mxu0
    %v6192 = vpop.f32.mrb[0].mxu0
    %v6193 = vadd.f32 0.0, %v6192
    %v6194 = vpop.f32.mrb[0].mxu0
    %6195 = vmatprep.mubr.bf16.mxu0 0
    %6196 = vmatmul.mubr.bf16.gmra.mrb[0].mxu0 %v6110
    %v6197 = vpop.f32.mrb[0].mxu0
    %v6198 = vadd.f32 0.0, %v6197
    %v6199 = vpop.f32.mrb[0].mxu0
    %v6200 = vpop.f32.mrb[0].mxu0
    %v6201 = vadd.f32 0.0, %v6200
    %v6202 = vpop.f32.mrb[0].mxu0
    %6203 = vmatprep.mubr.bf16.mxu0 0
    %6204 = vmatmul.mubr.bf16.gmra.mrb[0].mxu0 %v6113
    %v6205 = vpop.f32.mrb[0].mxu0
    %v6206 = vadd.f32 0.0, %v6205
    %v6207 = vpop.f32.mrb[0].mxu0
    %v6208 = vpop.f32.mrb[0].mxu0
    %v6209 = vadd.f32 0.0, %v6208
    %v6210 = vpop.f32.mrb[0].mxu0
    %6211 = vdwg.mxu0
    %v6212 = vadd.f32 %v6034, %v6150
    %v6213 = vadd.f32 %v6035, %v6153
    %v6214 = vadd.f32 %v6036, %v6158
    %v6215 = vadd.f32 %v6037, %v6161
    %v6216 = vadd.f32 %v6038, %v6166
    %v6217 = vadd.f32 %v6039, %v6169
    %v6218 = vadd.f32 %v6040, %v6174
    %v6219 = vadd.f32 %v6041, %v6177
    %v6220 = vadd.f32 %v6042, %v6182
    %v6221 = vadd.f32 %v6043, %v6185
    %v6222 = vadd.f32 %v6044, %v6190
    %v6223 = vadd.f32 %v6045, %v6193
    %v6224 = vadd.f32 %v6046, %v6198
    %v6225 = vadd.f32 %v6047, %v6201
    %v6226 = vadd.f32 %v6048, %v6206
    %v6227 = vadd.f32 %v6049, %v6209
    %v6228 = vld [vmem:[%s4] sm:$0x1]
    %v6230 = vlaneseq
    %v6231 = vshrl.u32 %v6230, 7
    %v6232 = vsub.s32 0, %v6231
    %v6233 = vrot.slane %v6228, %v6232
    %v6235 = vadd.f32 %v6212, %v6233
    %v6236 = vadd.f32 %v6213, %v6233
    %v6237 = vadd.f32 %v6214, %v6233
    %v6238 = vadd.f32 %v6215, %v6233
    %v6239 = vadd.f32 %v6216, %v6233
    %v6240 = vadd.f32 %v6217, %v6233
    %v6241 = vadd.f32 %v6218, %v6233
    %v6242 = vadd.f32 %v6219, %v6233
    %v6243 = vadd.f32 %v6220, %v6233
    %v6244 = vadd.f32 %v6221, %v6233
    %v6245 = vadd.f32 %v6222, %v6233
    %v6246 = vadd.f32 %v6223, %v6233
    %v6247 = vadd.f32 %v6224, %v6233
    %v6248 = vadd.f32 %v6225, %v6233
    %v6249 = vadd.f32 %v6226, %v6233
    %v6250 = vadd.f32 %v6227, %v6233
    %v6251 = vmax.f32 %v6235, 0.0
    %v6252 = vmax.f32 %v6236, 0.0
    %v6253 = vmax.f32 %v6237, 0.0
    %v6254 = vmax.f32 %v6238, 0.0
    %v6255 = vmax.f32 %v6239, 0.0
    %v6256 = vmax.f32 %v6240, 0.0
    %v6257 = vmax.f32 %v6241, 0.0
    %v6258 = vmax.f32 %v6242, 0.0
    %v6259 = vmax.f32 %v6243, 0.0
    %v6260 = vmax.f32 %v6244, 0.0
    %v6261 = vmax.f32 %v6245, 0.0
    %v6262 = vmax.f32 %v6246, 0.0
    %v6263 = vmax.f32 %v6247, 0.0
    %v6264 = vmax.f32 %v6248, 0.0
    %v6265 = vmax.f32 %v6249, 0.0
    %v6266 = vmax.f32 %v6250, 0.0
    %v6283 = vcombine.high %v6251, %v6251
    %v6285 = vunpack.c.l.s4 1983009808
    %v6286 = vunpack.c.0.s8 %v6285
    %v6287 = vlaneseq
    %v6288 = vshrl.u32 %v6287, 7
    %v6289 = vsub.s32 %v6286, %v6288
    %v6290 = vrot.slane %v6251, %v6289
    %v6292 = vunpack.c.l.s4 1983009808
    %v6293 = vunpack.c.0.s8 %v6292
    %v6294 = vlaneseq
    %v6295 = vshrl.u32 %v6294, 7
    %v6296 = vsub.s32 %v6293, %v6295
    %v6297 = vrot.slane %v6283, %v6296
    %v6298 = vcombine.high %v6290, %v6290
    %v6299 = vcombine.high %v6297, %v6297
    %v6300 = vcombine.high %v6252, %v6252
    %v6302 = vunpack.c.l.s4 1983009808
    %v6303 = vunpack.c.0.s8 %v6302
    %v6304 = vlaneseq
    %v6305 = vshrl.u32 %v6304, 7
    %v6306 = vsub.s32 %v6303, %v6305
    %v6307 = vrot.slane %v6252, %v6306
    %v6309 = vunpack.c.l.s4 1983009808
    %v6310 = vunpack.c.0.s8 %v6309
    %v6311 = vlaneseq
    %v6312 = vshrl.u32 %v6311, 7
    %v6313 = vsub.s32 %v6310, %v6312
    %v6314 = vrot.slane %v6300, %v6313
    %v6315 = vcombine.high %v6307, %v6307
    %v6316 = vcombine.high %v6314, %v6314
    %v6317 = vcombine.high %v6253, %v6253
    %v6319 = vunpack.c.l.s4 1983009808
    %v6320 = vunpack.c.0.s8 %v6319
    %v6321 = vlaneseq
    %v6322 = vshrl.u32 %v6321, 7
    %v6323 = vsub.s32 %v6320, %v6322
    %v6324 = vrot.slane %v6253, %v6323
    %v6326 = vunpack.c.l.s4 1983009808
    %v6327 = vunpack.c.0.s8 %v6326
    %v6328 = vlaneseq
    %v6329 = vshrl.u32 %v6328, 7
    %v6330 = vsub.s32 %v6327, %v6329
    %v6331 = vrot.slane %v6317, %v6330
    %v6332 = vcombine.high %v6324, %v6324
    %v6333 = vcombine.high %v6331, %v6331
    %v6334 = vcombine.high %v6254, %v6254
    %v6336 = vunpack.c.l.s4 1983009808
    %v6337 = vunpack.c.0.s8 %v6336
    %v6338 = vlaneseq
    %v6339 = vshrl.u32 %v6338, 7
    %v6340 = vsub.s32 %v6337, %v6339
    %v6341 = vrot.slane %v6254, %v6340
    %v6343 = vunpack.c.l.s4 1983009808
    %v6344 = vunpack.c.0.s8 %v6343
    %v6345 = vlaneseq
    %v6346 = vshrl.u32 %v6345, 7
    %v6347 = vsub.s32 %v6344, %v6346
    %v6348 = vrot.slane %v6334, %v6347
    %v6349 = vcombine.high %v6341, %v6341
    %v6350 = vcombine.high %v6348, %v6348
    %v6351 = vcombine.high %v6255, %v6255
    %v6353 = vunpack.c.l.s4 1983009808
    %v6354 = vunpack.c.0.s8 %v6353
    %v6355 = vlaneseq
    %v6356 = vshrl.u32 %v6355, 7
    %v6357 = vsub.s32 %v6354, %v6356
    %v6358 = vrot.slane %v6255, %v6357
    %v6360 = vunpack.c.l.s4 1983009808
    %v6361 = vunpack.c.0.s8 %v6360
    %v6362 = vlaneseq
    %v6363 = vshrl.u32 %v6362, 7
    %v6364 = vsub.s32 %v6361, %v6363
    %v6365 = vrot.slane %v6351, %v6364
    %v6366 = vcombine.high %v6358, %v6358
    %v6367 = vcombine.high %v6365, %v6365
    %v6368 = vcombine.high %v6256, %v6256
    %v6370 = vunpack.c.l.s4 1983009808
    %v6371 = vunpack.c.0.s8 %v6370
    %v6372 = vlaneseq
    %v6373 = vshrl.u32 %v6372, 7
    %v6374 = vsub.s32 %v6371, %v6373
    %v6375 = vrot.slane %v6256, %v6374
    %v6377 = vunpack.c.l.s4 1983009808
    %v6378 = vunpack.c.0.s8 %v6377
    %v6379 = vlaneseq
    %v6380 = vshrl.u32 %v6379, 7
    %v6381 = vsub.s32 %v6378, %v6380
    %v6382 = vrot.slane %v6368, %v6381
    %v6383 = vcombine.high %v6375, %v6375
    %v6384 = vcombine.high %v6382, %v6382
    %v6385 = vcombine.high %v6257, %v6257
    %v6387 = vunpack.c.l.s4 1983009808
    %v6388 = vunpack.c.0.s8 %v6387
    %v6389 = vlaneseq
    %v6390 = vshrl.u32 %v6389, 7
    %v6391 = vsub.s32 %v6388, %v6390
    %v6392 = vrot.slane %v6257, %v6391
    %v6394 = vunpack.c.l.s4 1983009808
    %v6395 = vunpack.c.0.s8 %v6394
    %v6396 = vlaneseq
    %v6397 = vshrl.u32 %v6396, 7
    %v6398 = vsub.s32 %v6395, %v6397
    %v6399 = vrot.slane %v6385, %v6398
    %v6400 = vcombine.high %v6392, %v6392
    %v6401 = vcombine.high %v6399, %v6399
    %v6402 = vcombine.high %v6258, %v6258
    %v6404 = vunpack.c.l.s4 1983009808
    %v6405 = vunpack.c.0.s8 %v6404
    %v6406 = vlaneseq
    %v6407 = vshrl.u32 %v6406, 7
    %v6408 = vsub.s32 %v6405, %v6407
    %v6409 = vrot.slane %v6258, %v6408
    %v6411 = vunpack.c.l.s4 1983009808
    %v6412 = vunpack.c.0.s8 %v6411
    %v6413 = vlaneseq
    %v6414 = vshrl.u32 %v6413, 7
    %v6415 = vsub.s32 %v6412, %v6414
    %v6416 = vrot.slane %v6402, %v6415
    %v6417 = vcombine.high %v6409, %v6409
    %v6418 = vcombine.high %v6416, %v6416
    %v6419 = vcombine.high %v6259, %v6259
    %v6421 = vunpack.c.l.s4 1983009808
    %v6422 = vunpack.c.0.s8 %v6421
    %v6423 = vlaneseq
    %v6424 = vshrl.u32 %v6423, 7
    %v6425 = vsub.s32 %v6422, %v6424
    %v6426 = vrot.slane %v6259, %v6425
    %v6428 = vunpack.c.l.s4 1983009808
    %v6429 = vunpack.c.0.s8 %v6428
    %v6430 = vlaneseq
    %v6431 = vshrl.u32 %v6430, 7
    %v6432 = vsub.s32 %v6429, %v6431
    %v6433 = vrot.slane %v6419, %v6432
    %v6434 = vcombine.high %v6426, %v6426
    %v6435 = vcombine.high %v6433, %v6433
    %v6436 = vcombine.high %v6260, %v6260
    %v6438 = vunpack.c.l.s4 1983009808
    %v6439 = vunpack.c.0.s8 %v6438
    %v6440 = vlaneseq
    %v6441 = vshrl.u32 %v6440, 7
    %v6442 = vsub.s32 %v6439, %v6441
    %v6443 = vrot.slane %v6260, %v6442
    %v6445 = vunpack.c.l.s4 1983009808
    %v6446 = vunpack.c.0.s8 %v6445
    %v6447 = vlaneseq
    %v6448 = vshrl.u32 %v6447, 7
    %v6449 = vsub.s32 %v6446, %v6448
    %v6450 = vrot.slane %v6436, %v6449
    %v6451 = vcombine.high %v6443, %v6443
    %v6452 = vcombine.high %v6450, %v6450
    %v6453 = vcombine.high %v6261, %v6261
    %v6455 = vunpack.c.l.s4 1983009808
    %v6456 = vunpack.c.0.s8 %v6455
    %v6457 = vlaneseq
    %v6458 = vshrl.u32 %v6457, 7
    %v6459 = vsub.s32 %v6456, %v6458
    %v6460 = vrot.slane %v6261, %v6459
    %v6462 = vunpack.c.l.s4 1983009808
    %v6463 = vunpack.c.0.s8 %v6462
    %v6464 = vlaneseq
    %v6465 = vshrl.u32 %v6464, 7
    %v6466 = vsub.s32 %v6463, %v6465
    %v6467 = vrot.slane %v6453, %v6466
    %v6468 = vcombine.high %v6460, %v6460
    %v6469 = vcombine.high %v6467, %v6467
    %v6470 = vcombine.high %v6262, %v6262
    %v6472 = vunpack.c.l.s4 1983009808
    %v6473 = vunpack.c.0.s8 %v6472
    %v6474 = vlaneseq
    %v6475 = vshrl.u32 %v6474, 7
    %v6476 = vsub.s32 %v6473, %v6475
    %v6477 = vrot.slane %v6262, %v6476
    %v6479 = vunpack.c.l.s4 1983009808
    %v6480 = vunpack.c.0.s8 %v6479
    %v6481 = vlaneseq
    %v6482 = vshrl.u32 %v6481, 7
    %v6483 = vsub.s32 %v6480, %v6482
    %v6484 = vrot.slane %v6470, %v6483
    %v6485 = vcombine.high %v6477, %v6477
    %v6486 = vcombine.high %v6484, %v6484
    %v6487 = vcombine.high %v6263, %v6263
    %v6489 = vunpack.c.l.s4 1983009808
    %v6490 = vunpack.c.0.s8 %v6489
    %v6491 = vlaneseq
    %v6492 = vshrl.u32 %v6491, 7
    %v6493 = vsub.s32 %v6490, %v6492
    %v6494 = vrot.slane %v6263, %v6493
    %v6496 = vunpack.c.l.s4 1983009808
    %v6497 = vunpack.c.0.s8 %v6496
    %v6498 = vlaneseq
    %v6499 = vshrl.u32 %v6498, 7
    %v6500 = vsub.s32 %v6497, %v6499
    %v6501 = vrot.slane %v6487, %v6500
    %v6502 = vcombine.high %v6494, %v6494
    %v6503 = vcombine.high %v6501, %v6501
    %v6504 = vcombine.high %v6264, %v6264
    %v6506 = vunpack.c.l.s4 1983009808
    %v6507 = vunpack.c.0.s8 %v6506
    %v6508 = vlaneseq
    %v6509 = vshrl.u32 %v6508, 7
    %v6510 = vsub.s32 %v6507, %v6509
    %v6511 = vrot.slane %v6264, %v6510
    %v6513 = vunpack.c.l.s4 1983009808
    %v6514 = vunpack.c.0.s8 %v6513
    %v6515 = vlaneseq
    %v6516 = vshrl.u32 %v6515, 7
    %v6517 = vsub.s32 %v6514, %v6516
    %v6518 = vrot.slane %v6504, %v6517
    %v6519 = vcombine.high %v6511, %v6511
    %v6520 = vcombine.high %v6518, %v6518
    %v6521 = vcombine.high %v6265, %v6265
    %v6523 = vunpack.c.l.s4 1983009808
    %v6524 = vunpack.c.0.s8 %v6523
    %v6525 = vlaneseq
    %v6526 = vshrl.u32 %v6525, 7
    %v6527 = vsub.s32 %v6524, %v6526
    %v6528 = vrot.slane %v6265, %v6527
    %v6530 = vunpack.c.l.s4 1983009808
    %v6531 = vunpack.c.0.s8 %v6530
    %v6532 = vlaneseq
    %v6533 = vshrl.u32 %v6532, 7
    %v6534 = vsub.s32 %v6531, %v6533
    %v6535 = vrot.slane %v6521, %v6534
    %v6536 = vcombine.high %v6528, %v6528
    %v6537 = vcombine.high %v6535, %v6535
    %v6538 = vcombine.high %v6266, %v6266
    %v6540 = vunpack.c.l.s4 1983009808
    %v6541 = vunpack.c.0.s8 %v6540
    %v6542 = vlaneseq
    %v6543 = vshrl.u32 %v6542, 7
    %v6544 = vsub.s32 %v6541, %v6543
    %v6545 = vrot.slane %v6266, %v6544
    %v6547 = vunpack.c.l.s4 1983009808
    %v6548 = vunpack.c.0.s8 %v6547
    %v6549 = vlaneseq
    %v6550 = vshrl.u32 %v6549, 7
    %v6551 = vsub.s32 %v6548, %v6550
    %v6552 = vrot.slane %v6538, %v6551
    %v6553 = vcombine.high %v6545, %v6545
    %v6554 = vcombine.high %v6552, %v6552
    %vm6619 = vcmask 517120
    %v6620 = vsel %vm6619, %v6290, -inf
    %v6621 = vrot.slane %v6620, 4
    %v6622 = vmax.f32 %v6620, %v6621
    %v6623 = vrot.slane %v6622, 2
    %v6624 = vmax.f32 %v6622, %v6623
    %v6625 = vrot.slane %v6624, 1
    %v6626 = vmax.f32 %v6624, %v6625
    %v6627 = vsel %vm6619, %v6298, -inf
    %v6628 = vrot.slane %v6627, 4
    %v6629 = vmax.f32 %v6627, %v6628
    %v6630 = vrot.slane %v6629, 2
    %v6631 = vmax.f32 %v6629, %v6630
    %v6632 = vrot.slane %v6631, 1
    %v6633 = vmax.f32 %v6631, %v6632
    %v6634 = vsel %vm6619, %v6297, -inf
    %v6635 = vrot.slane %v6634, 4
    %v6636 = vmax.f32 %v6634, %v6635
    %v6637 = vrot.slane %v6636, 2
    %v6638 = vmax.f32 %v6636, %v6637
    %v6639 = vrot.slane %v6638, 1
    %v6640 = vmax.f32 %v6638, %v6639
    %v6641 = vsel %vm6619, %v6299, -inf
    %v6642 = vrot.slane %v6641, 4
    %v6643 = vmax.f32 %v6641, %v6642
    %v6644 = vrot.slane %v6643, 2
    %v6645 = vmax.f32 %v6643, %v6644
    %v6646 = vrot.slane %v6645, 1
    %v6647 = vmax.f32 %v6645, %v6646
    %v6648 = vsel %vm6619, %v6307, -inf
    %v6649 = vrot.slane %v6648, 4
    %v6650 = vmax.f32 %v6648, %v6649
    %v6651 = vrot.slane %v6650, 2
    %v6652 = vmax.f32 %v6650, %v6651
    %v6653 = vrot.slane %v6652, 1
    %v6654 = vmax.f32 %v6652, %v6653
    %v6655 = vsel %vm6619, %v6315, -inf
    %v6656 = vrot.slane %v6655, 4
    %v6657 = vmax.f32 %v6655, %v6656
    %v6658 = vrot.slane %v6657, 2
    %v6659 = vmax.f32 %v6657, %v6658
    %v6660 = vrot.slane %v6659, 1
    %v6661 = vmax.f32 %v6659, %v6660
    %v6662 = vsel %vm6619, %v6314, -inf
    %v6663 = vrot.slane %v6662, 4
    %v6664 = vmax.f32 %v6662, %v6663
    %v6665 = vrot.slane %v6664, 2
    %v6666 = vmax.f32 %v6664, %v6665
    %v6667 = vrot.slane %v6666, 1
    %v6668 = vmax.f32 %v6666, %v6667
    %v6669 = vsel %vm6619, %v6316, -inf
    %v6670 = vrot.slane %v6669, 4
    %v6671 = vmax.f32 %v6669, %v6670
    %v6672 = vrot.slane %v6671, 2
    %v6673 = vmax.f32 %v6671, %v6672
    %v6674 = vrot.slane %v6673, 1
    %v6675 = vmax.f32 %v6673, %v6674
    %v6676 = vsel %vm6619, %v6324, -inf
    %v6677 = vrot.slane %v6676, 4
    %v6678 = vmax.f32 %v6676, %v6677
    %v6679 = vrot.slane %v6678, 2
    %v6680 = vmax.f32 %v6678, %v6679
    %v6681 = vrot.slane %v6680, 1
    %v6682 = vmax.f32 %v6680, %v6681
    %v6683 = vsel %vm6619, %v6332, -inf
    %v6684 = vrot.slane %v6683, 4
    %v6685 = vmax.f32 %v6683, %v6684
    %v6686 = vrot.slane %v6685, 2
    %v6687 = vmax.f32 %v6685, %v6686
    %v6688 = vrot.slane %v6687, 1
    %v6689 = vmax.f32 %v6687, %v6688
    %v6690 = vsel %vm6619, %v6331, -inf
    %v6691 = vrot.slane %v6690, 4
    %v6692 = vmax.f32 %v6690, %v6691
    %v6693 = vrot.slane %v6692, 2
    %v6694 = vmax.f32 %v6692, %v6693
    %v6695 = vrot.slane %v6694, 1
    %v6696 = vmax.f32 %v6694, %v6695
    %v6697 = vsel %vm6619, %v6333, -inf
    %v6698 = vrot.slane %v6697, 4
    %v6699 = vmax.f32 %v6697, %v6698
    %v6700 = vrot.slane %v6699, 2
    %v6701 = vmax.f32 %v6699, %v6700
    %v6702 = vrot.slane %v6701, 1
    %v6703 = vmax.f32 %v6701, %v6702
    %v6704 = vsel %vm6619, %v6341, -inf
    %v6705 = vrot.slane %v6704, 4
    %v6706 = vmax.f32 %v6704, %v6705
    %v6707 = vrot.slane %v6706, 2
    %v6708 = vmax.f32 %v6706, %v6707
    %v6709 = vrot.slane %v6708, 1
    %v6710 = vmax.f32 %v6708, %v6709
    %v6711 = vsel %vm6619, %v6349, -inf
    %v6712 = vrot.slane %v6711, 4
    %v6713 = vmax.f32 %v6711, %v6712
    %v6714 = vrot.slane %v6713, 2
    %v6715 = vmax.f32 %v6713, %v6714
    %v6716 = vrot.slane %v6715, 1
    %v6717 = vmax.f32 %v6715, %v6716
    %v6718 = vsel %vm6619, %v6348, -inf
    %v6719 = vrot.slane %v6718, 4
    %v6720 = vmax.f32 %v6718, %v6719
    %v6721 = vrot.slane %v6720, 2
    %v6722 = vmax.f32 %v6720, %v6721
    %v6723 = vrot.slane %v6722, 1
    %v6724 = vmax.f32 %v6722, %v6723
    %v6725 = vsel %vm6619, %v6350, -inf
    %v6726 = vrot.slane %v6725, 4
    %v6727 = vmax.f32 %v6725, %v6726
    %v6728 = vrot.slane %v6727, 2
    %v6729 = vmax.f32 %v6727, %v6728
    %v6730 = vrot.slane %v6729, 1
    %v6731 = vmax.f32 %v6729, %v6730
    %v6732 = vsel %vm6619, %v6358, -inf
    %v6733 = vrot.slane %v6732, 4
    %v6734 = vmax.f32 %v6732, %v6733
    %v6735 = vrot.slane %v6734, 2
    %v6736 = vmax.f32 %v6734, %v6735
    %v6737 = vrot.slane %v6736, 1
    %v6738 = vmax.f32 %v6736, %v6737
    %v6739 = vsel %vm6619, %v6366, -inf
    %v6740 = vrot.slane %v6739, 4
    %v6741 = vmax.f32 %v6739, %v6740
    %v6742 = vrot.slane %v6741, 2
    %v6743 = vmax.f32 %v6741, %v6742
    %v6744 = vrot.slane %v6743, 1
    %v6745 = vmax.f32 %v6743, %v6744
    %v6746 = vsel %vm6619, %v6365, -inf
    %v6747 = vrot.slane %v6746, 4
    %v6748 = vmax.f32 %v6746, %v6747
    %v6749 = vrot.slane %v6748, 2
    %v6750 = vmax.f32 %v6748, %v6749
    %v6751 = vrot.slane %v6750, 1
    %v6752 = vmax.f32 %v6750, %v6751
    %v6753 = vsel %vm6619, %v6367, -inf
    %v6754 = vrot.slane %v6753, 4
    %v6755 = vmax.f32 %v6753, %v6754
    %v6756 = vrot.slane %v6755, 2
    %v6757 = vmax.f32 %v6755, %v6756
    %v6758 = vrot.slane %v6757, 1
    %v6759 = vmax.f32 %v6757, %v6758
    %v6760 = vsel %vm6619, %v6375, -inf
    %v6761 = vrot.slane %v6760, 4
    %v6762 = vmax.f32 %v6760, %v6761
    %v6763 = vrot.slane %v6762, 2
    %v6764 = vmax.f32 %v6762, %v6763
    %v6765 = vrot.slane %v6764, 1
    %v6766 = vmax.f32 %v6764, %v6765
    %v6767 = vsel %vm6619, %v6383, -inf
    %v6768 = vrot.slane %v6767, 4
    %v6769 = vmax.f32 %v6767, %v6768
    %v6770 = vrot.slane %v6769, 2
    %v6771 = vmax.f32 %v6769, %v6770
    %v6772 = vrot.slane %v6771, 1
    %v6773 = vmax.f32 %v6771, %v6772
    %v6774 = vsel %vm6619, %v6382, -inf
    %v6775 = vrot.slane %v6774, 4
    %v6776 = vmax.f32 %v6774, %v6775
    %v6777 = vrot.slane %v6776, 2
    %v6778 = vmax.f32 %v6776, %v6777
    %v6779 = vrot.slane %v6778, 1
    %v6780 = vmax.f32 %v6778, %v6779
    %v6781 = vsel %vm6619, %v6384, -inf
    %v6782 = vrot.slane %v6781, 4
    %v6783 = vmax.f32 %v6781, %v6782
    %v6784 = vrot.slane %v6783, 2
    %v6785 = vmax.f32 %v6783, %v6784
    %v6786 = vrot.slane %v6785, 1
    %v6787 = vmax.f32 %v6785, %v6786
    %v6788 = vsel %vm6619, %v6392, -inf
    %v6789 = vrot.slane %v6788, 4
    %v6790 = vmax.f32 %v6788, %v6789
    %v6791 = vrot.slane %v6790, 2
    %v6792 = vmax.f32 %v6790, %v6791
    %v6793 = vrot.slane %v6792, 1
    %v6794 = vmax.f32 %v6792, %v6793
    %v6795 = vsel %vm6619, %v6400, -inf
    %v6796 = vrot.slane %v6795, 4
    %v6797 = vmax.f32 %v6795, %v6796
    %v6798 = vrot.slane %v6797, 2
    %v6799 = vmax.f32 %v6797, %v6798
    %v6800 = vrot.slane %v6799, 1
    %v6801 = vmax.f32 %v6799, %v6800
    %v6802 = vsel %vm6619, %v6399, -inf
    %v6803 = vrot.slane %v6802, 4
    %v6804 = vmax.f32 %v6802, %v6803
    %v6805 = vrot.slane %v6804, 2
    %v6806 = vmax.f32 %v6804, %v6805
    %v6807 = vrot.slane %v6806, 1
    %v6808 = vmax.f32 %v6806, %v6807
    %v6809 = vsel %vm6619, %v6401, -inf
    %v6810 = vrot.slane %v6809, 4
    %v6811 = vmax.f32 %v6809, %v6810
    %v6812 = vrot.slane %v6811, 2
    %v6813 = vmax.f32 %v6811, %v6812
    %v6814 = vrot.slane %v6813, 1
    %v6815 = vmax.f32 %v6813, %v6814
    %v6816 = vsel %vm6619, %v6409, -inf
    %v6817 = vrot.slane %v6816, 4
    %v6818 = vmax.f32 %v6816, %v6817
    %v6819 = vrot.slane %v6818, 2
    %v6820 = vmax.f32 %v6818, %v6819
    %v6821 = vrot.slane %v6820, 1
    %v6822 = vmax.f32 %v6820, %v6821
    %v6823 = vsel %vm6619, %v6417, -inf
    %v6824 = vrot.slane %v6823, 4
    %v6825 = vmax.f32 %v6823, %v6824
    %v6826 = vrot.slane %v6825, 2
    %v6827 = vmax.f32 %v6825, %v6826
    %v6828 = vrot.slane %v6827, 1
    %v6829 = vmax.f32 %v6827, %v6828
    %v6830 = vsel %vm6619, %v6416, -inf
    %v6831 = vrot.slane %v6830, 4
    %v6832 = vmax.f32 %v6830, %v6831
    %v6833 = vrot.slane %v6832, 2
    %v6834 = vmax.f32 %v6832, %v6833
    %v6835 = vrot.slane %v6834, 1
    %v6836 = vmax.f32 %v6834, %v6835
    %v6837 = vsel %vm6619, %v6418, -inf
    %v6838 = vrot.slane %v6837, 4
    %v6839 = vmax.f32 %v6837, %v6838
    %v6840 = vrot.slane %v6839, 2
    %v6841 = vmax.f32 %v6839, %v6840
    %v6842 = vrot.slane %v6841, 1
    %v6843 = vmax.f32 %v6841, %v6842
    %v6844 = vsel %vm6619, %v6426, -inf
    %v6845 = vrot.slane %v6844, 4
    %v6846 = vmax.f32 %v6844, %v6845
    %v6847 = vrot.slane %v6846, 2
    %v6848 = vmax.f32 %v6846, %v6847
    %v6849 = vrot.slane %v6848, 1
    %v6850 = vmax.f32 %v6848, %v6849
    %v6851 = vsel %vm6619, %v6434, -inf
    %v6852 = vrot.slane %v6851, 4
    %v6853 = vmax.f32 %v6851, %v6852
    %v6854 = vrot.slane %v6853, 2
    %v6855 = vmax.f32 %v6853, %v6854
    %v6856 = vrot.slane %v6855, 1
    %v6857 = vmax.f32 %v6855, %v6856
    %v6858 = vsel %vm6619, %v6433, -inf
    %v6859 = vrot.slane %v6858, 4
    %v6860 = vmax.f32 %v6858, %v6859
    %v6861 = vrot.slane %v6860, 2
    %v6862 = vmax.f32 %v6860, %v6861
    %v6863 = vrot.slane %v6862, 1
    %v6864 = vmax.f32 %v6862, %v6863
    %v6865 = vsel %vm6619, %v6435, -inf
    %v6866 = vrot.slane %v6865, 4
    %v6867 = vmax.f32 %v6865, %v6866
    %v6868 = vrot.slane %v6867, 2
    %v6869 = vmax.f32 %v6867, %v6868
    %v6870 = vrot.slane %v6869, 1
    %v6871 = vmax.f32 %v6869, %v6870
    %v6872 = vsel %vm6619, %v6443, -inf
    %v6873 = vrot.slane %v6872, 4
    %v6874 = vmax.f32 %v6872, %v6873
    %v6875 = vrot.slane %v6874, 2
    %v6876 = vmax.f32 %v6874, %v6875
    %v6877 = vrot.slane %v6876, 1
    %v6878 = vmax.f32 %v6876, %v6877
    %v6879 = vsel %vm6619, %v6451, -inf
    %v6880 = vrot.slane %v6879, 4
    %v6881 = vmax.f32 %v6879, %v6880
    %v6882 = vrot.slane %v6881, 2
    %v6883 = vmax.f32 %v6881, %v6882
    %v6884 = vrot.slane %v6883, 1
    %v6885 = vmax.f32 %v6883, %v6884
    %v6886 = vsel %vm6619, %v6450, -inf
    %v6887 = vrot.slane %v6886, 4
    %v6888 = vmax.f32 %v6886, %v6887
    %v6889 = vrot.slane %v6888, 2
    %v6890 = vmax.f32 %v6888, %v6889
    %v6891 = vrot.slane %v6890, 1
    %v6892 = vmax.f32 %v6890, %v6891
    %v6893 = vsel %vm6619, %v6452, -inf
    %v6894 = vrot.slane %v6893, 4
    %v6895 = vmax.f32 %v6893, %v6894
    %v6896 = vrot.slane %v6895, 2
    %v6897 = vmax.f32 %v6895, %v6896
    %v6898 = vrot.slane %v6897, 1
    %v6899 = vmax.f32 %v6897, %v6898
    %v6900 = vsel %vm6619, %v6460, -inf
    %v6901 = vrot.slane %v6900, 4
    %v6902 = vmax.f32 %v6900, %v6901
    %v6903 = vrot.slane %v6902, 2
    %v6904 = vmax.f32 %v6902, %v6903
    %v6905 = vrot.slane %v6904, 1
    %v6906 = vmax.f32 %v6904, %v6905
    %v6907 = vsel %vm6619, %v6468, -inf
    %v6908 = vrot.slane %v6907, 4
    %v6909 = vmax.f32 %v6907, %v6908
    %v6910 = vrot.slane %v6909, 2
    %v6911 = vmax.f32 %v6909, %v6910
    %v6912 = vrot.slane %v6911, 1
    %v6913 = vmax.f32 %v6911, %v6912
    %v6914 = vsel %vm6619, %v6467, -inf
    %v6915 = vrot.slane %v6914, 4
    %v6916 = vmax.f32 %v6914, %v6915
    %v6917 = vrot.slane %v6916, 2
    %v6918 = vmax.f32 %v6916, %v6917
    %v6919 = vrot.slane %v6918, 1
    %v6920 = vmax.f32 %v6918, %v6919
    %v6921 = vsel %vm6619, %v6469, -inf
    %v6922 = vrot.slane %v6921, 4
    %v6923 = vmax.f32 %v6921, %v6922
    %v6924 = vrot.slane %v6923, 2
    %v6925 = vmax.f32 %v6923, %v6924
    %v6926 = vrot.slane %v6925, 1
    %v6927 = vmax.f32 %v6925, %v6926
    %v6928 = vsel %vm6619, %v6477, -inf
    %v6929 = vrot.slane %v6928, 4
    %v6930 = vmax.f32 %v6928, %v6929
    %v6931 = vrot.slane %v6930, 2
    %v6932 = vmax.f32 %v6930, %v6931
    %v6933 = vrot.slane %v6932, 1
    %v6934 = vmax.f32 %v6932, %v6933
    %v6935 = vsel %vm6619, %v6485, -inf
    %v6936 = vrot.slane %v6935, 4
    %v6937 = vmax.f32 %v6935, %v6936
    %v6938 = vrot.slane %v6937, 2
    %v6939 = vmax.f32 %v6937, %v6938
    %v6940 = vrot.slane %v6939, 1
    %v6941 = vmax.f32 %v6939, %v6940
    %v6942 = vsel %vm6619, %v6484, -inf
    %v6943 = vrot.slane %v6942, 4
    %v6944 = vmax.f32 %v6942, %v6943
    %v6945 = vrot.slane %v6944, 2
    %v6946 = vmax.f32 %v6944, %v6945
    %v6947 = vrot.slane %v6946, 1
    %v6948 = vmax.f32 %v6946, %v6947
    %v6949 = vsel %vm6619, %v6486, -inf
    %v6950 = vrot.slane %v6949, 4
    %v6951 = vmax.f32 %v6949, %v6950
    %v6952 = vrot.slane %v6951, 2
    %v6953 = vmax.f32 %v6951, %v6952
    %v6954 = vrot.slane %v6953, 1
    %v6955 = vmax.f32 %v6953, %v6954
    %v6956 = vsel %vm6619, %v6494, -inf
    %v6957 = vrot.slane %v6956, 4
    %v6958 = vmax.f32 %v6956, %v6957
    %v6959 = vrot.slane %v6958, 2
    %v6960 = vmax.f32 %v6958, %v6959
    %v6961 = vrot.slane %v6960, 1
    %v6962 = vmax.f32 %v6960, %v6961
    %v6963 = vsel %vm6619, %v6502, -inf
    %v6964 = vrot.slane %v6963, 4
    %v6965 = vmax.f32 %v6963, %v6964
    %v6966 = vrot.slane %v6965, 2
    %v6967 = vmax.f32 %v6965, %v6966
    %v6968 = vrot.slane %v6967, 1
    %v6969 = vmax.f32 %v6967, %v6968
    %v6970 = vsel %vm6619, %v6501, -inf
    %v6971 = vrot.slane %v6970, 4
    %v6972 = vmax.f32 %v6970, %v6971
    %v6973 = vrot.slane %v6972, 2
    %v6974 = vmax.f32 %v6972, %v6973
    %v6975 = vrot.slane %v6974, 1
    %v6976 = vmax.f32 %v6974, %v6975
    %v6977 = vsel %vm6619, %v6503, -inf
    %v6978 = vrot.slane %v6977, 4
    %v6979 = vmax.f32 %v6977, %v6978
    %v6980 = vrot.slane %v6979, 2
    %v6981 = vmax.f32 %v6979, %v6980
    %v6982 = vrot.slane %v6981, 1
    %v6983 = vmax.f32 %v6981, %v6982
    %v6984 = vsel %vm6619, %v6511, -inf
    %v6985 = vrot.slane %v6984, 4
    %v6986 = vmax.f32 %v6984, %v6985
    %v6987 = vrot.slane %v6986, 2
    %v6988 = vmax.f32 %v6986, %v6987
    %v6989 = vrot.slane %v6988, 1
    %v6990 = vmax.f32 %v6988, %v6989
    %v6991 = vsel %vm6619, %v6519, -inf
    %v6992 = vrot.slane %v6991, 4
    %v6993 = vmax.f32 %v6991, %v6992
    %v6994 = vrot.slane %v6993, 2
    %v6995 = vmax.f32 %v6993, %v6994
    %v6996 = vrot.slane %v6995, 1
    %v6997 = vmax.f32 %v6995, %v6996
    %v6998 = vsel %vm6619, %v6518, -inf
    %v6999 = vrot.slane %v6998, 4
    %v7000 = vmax.f32 %v6998, %v6999
    %v7001 = vrot.slane %v7000, 2
    %v7002 = vmax.f32 %v7000, %v7001
    %v7003 = vrot.slane %v7002, 1
    %v7004 = vmax.f32 %v7002, %v7003
    %v7005 = vsel %vm6619, %v6520, -inf
    %v7006 = vrot.slane %v7005, 4
    %v7007 = vmax.f32 %v7005, %v7006
    %v7008 = vrot.slane %v7007, 2
    %v7009 = vmax.f32 %v7007, %v7008
    %v7010 = vrot.slane %v7009, 1
    %v7011 = vmax.f32 %v7009, %v7010
    %v7012 = vsel %vm6619, %v6528, -inf
    %v7013 = vrot.slane %v7012, 4
    %v7014 = vmax.f32 %v7012, %v7013
    %v7015 = vrot.slane %v7014, 2
    %v7016 = vmax.f32 %v7014, %v7015
    %v7017 = vrot.slane %v7016, 1
    %v7018 = vmax.f32 %v7016, %v7017
    %v7019 = vsel %vm6619, %v6536, -inf
    %v7020 = vrot.slane %v7019, 4
    %v7021 = vmax.f32 %v7019, %v7020
    %v7022 = vrot.slane %v7021, 2
    %v7023 = vmax.f32 %v7021, %v7022
    %v7024 = vrot.slane %v7023, 1
    %v7025 = vmax.f32 %v7023, %v7024
    %v7026 = vsel %vm6619, %v6535, -inf
    %v7027 = vrot.slane %v7026, 4
    %v7028 = vmax.f32 %v7026, %v7027
    %v7029 = vrot.slane %v7028, 2
    %v7030 = vmax.f32 %v7028, %v7029
    %v7031 = vrot.slane %v7030, 1
    %v7032 = vmax.f32 %v7030, %v7031
    %v7033 = vsel %vm6619, %v6537, -inf
    %v7034 = vrot.slane %v7033, 4
    %v7035 = vmax.f32 %v7033, %v7034
    %v7036 = vrot.slane %v7035, 2
    %v7037 = vmax.f32 %v7035, %v7036
    %v7038 = vrot.slane %v7037, 1
    %v7039 = vmax.f32 %v7037, %v7038
    %v7040 = vsel %vm6619, %v6545, -inf
    %v7041 = vrot.slane %v7040, 4
    %v7042 = vmax.f32 %v7040, %v7041
    %v7043 = vrot.slane %v7042, 2
    %v7044 = vmax.f32 %v7042, %v7043
    %v7045 = vrot.slane %v7044, 1
    %v7046 = vmax.f32 %v7044, %v7045
    %v7047 = vsel %vm6619, %v6553, -inf
    %v7048 = vrot.slane %v7047, 4
    %v7049 = vmax.f32 %v7047, %v7048
    %v7050 = vrot.slane %v7049, 2
    %v7051 = vmax.f32 %v7049, %v7050
    %v7052 = vrot.slane %v7051, 1
    %v7053 = vmax.f32 %v7051, %v7052
    %v7054 = vsel %vm6619, %v6552, -inf
    %v7055 = vrot.slane %v7054, 4
    %v7056 = vmax.f32 %v7054, %v7055
    %v7057 = vrot.slane %v7056, 2
    %v7058 = vmax.f32 %v7056, %v7057
    %v7059 = vrot.slane %v7058, 1
    %v7060 = vmax.f32 %v7058, %v7059
    %v7061 = vsel %vm6619, %v6554, -inf
    %v7062 = vrot.slane %v7061, 4
    %v7063 = vmax.f32 %v7061, %v7062
    %v7064 = vrot.slane %v7063, 2
    %v7065 = vmax.f32 %v7063, %v7064
    %v7066 = vrot.slane %v7065, 1
    %v7067 = vmax.f32 %v7065, %v7066
    %vm7068 = vcmask 523264
    %v7069 = vsel %vm7068, %v6626, -inf
    %v7070 = vsel %vm7068, %v6654, -inf
    %v7071 = vmax.f32 %v7069, %v7070
    %v7072 = vsel %vm7068, %v6633, -inf
    %v7073 = vsel %vm7068, %v6661, -inf
    %v7074 = vmax.f32 %v7072, %v7073
    %v7075 = vsel %vm7068, %v6640, -inf
    %v7076 = vsel %vm7068, %v6668, -inf
    %v7077 = vmax.f32 %v7075, %v7076
    %v7078 = vsel %vm7068, %v6647, -inf
    %v7079 = vsel %vm7068, %v6675, -inf
    %v7080 = vmax.f32 %v7078, %v7079
    %v7081 = vsel %vm7068, %v6682, -inf
    %v7082 = vsel %vm7068, %v6710, -inf
    %v7083 = vmax.f32 %v7081, %v7082
    %v7084 = vsel %vm7068, %v6689, -inf
    %v7085 = vsel %vm7068, %v6717, -inf
    %v7086 = vmax.f32 %v7084, %v7085
    %v7087 = vsel %vm7068, %v6696, -inf
    %v7088 = vsel %vm7068, %v6724, -inf
    %v7089 = vmax.f32 %v7087, %v7088
    %v7090 = vsel %vm7068, %v6703, -inf
    %v7091 = vsel %vm7068, %v6731, -inf
    %v7092 = vmax.f32 %v7090, %v7091
    %v7093 = vsel %vm7068, %v6738, -inf
    %v7094 = vsel %vm7068, %v6766, -inf
    %v7095 = vmax.f32 %v7093, %v7094
    %v7096 = vsel %vm7068, %v6745, -inf
    %v7097 = vsel %vm7068, %v6773, -inf
    %v7098 = vmax.f32 %v7096, %v7097
    %v7099 = vsel %vm7068, %v6752, -inf
    %v7100 = vsel %vm7068, %v6780, -inf
    %v7101 = vmax.f32 %v7099, %v7100
    %v7102 = vsel %vm7068, %v6759, -inf
    %v7103 = vsel %vm7068, %v6787, -inf
    %v7104 = vmax.f32 %v7102, %v7103
    %v7105 = vsel %vm7068, %v6794, -inf
    %v7106 = vsel %vm7068, %v6822, -inf
    %v7107 = vmax.f32 %v7105, %v7106
    %v7108 = vsel %vm7068, %v6801, -inf
    %v7109 = vsel %vm7068, %v6829, -inf
    %v7110 = vmax.f32 %v7108, %v7109
    %v7111 = vsel %vm7068, %v6808, -inf
    %v7112 = vsel %vm7068, %v6836, -inf
    %v7113 = vmax.f32 %v7111, %v7112
    %v7114 = vsel %vm7068, %v6815, -inf
    %v7115 = vsel %vm7068, %v6843, -inf
    %v7116 = vmax.f32 %v7114, %v7115
    %v7117 = vsel %vm7068, %v6850, -inf
    %v7118 = vsel %vm7068, %v6878, -inf
    %v7119 = vmax.f32 %v7117, %v7118
    %v7120 = vsel %vm7068, %v6857, -inf
    %v7121 = vsel %vm7068, %v6885, -inf
    %v7122 = vmax.f32 %v7120, %v7121
    %v7123 = vsel %vm7068, %v6864, -inf
    %v7124 = vsel %vm7068, %v6892, -inf
    %v7125 = vmax.f32 %v7123, %v7124
    %v7126 = vsel %vm7068, %v6871, -inf
    %v7127 = vsel %vm7068, %v6899, -inf
    %v7128 = vmax.f32 %v7126, %v7127
    %v7129 = vsel %vm7068, %v6906, -inf
    %v7130 = vsel %vm7068, %v6934, -inf
    %v7131 = vmax.f32 %v7129, %v7130
    %v7132 = vsel %vm7068, %v6913, -inf
    %v7133 = vsel %vm7068, %v6941, -inf
    %v7134 = vmax.f32 %v7132, %v7133
    %v7135 = vsel %vm7068, %v6920, -inf
    %v7136 = vsel %vm7068, %v6948, -inf
    %v7137 = vmax.f32 %v7135, %v7136
    %v7138 = vsel %vm7068, %v6927, -inf
    %v7139 = vsel %vm7068, %v6955, -inf
    %v7140 = vmax.f32 %v7138, %v7139
    %v7141 = vsel %vm7068, %v6962, -inf
    %v7142 = vsel %vm7068, %v6990, -inf
    %v7143 = vmax.f32 %v7141, %v7142
    %v7144 = vsel %vm7068, %v6969, -inf
    %v7145 = vsel %vm7068, %v6997, -inf
    %v7146 = vmax.f32 %v7144, %v7145
    %v7147 = vsel %vm7068, %v6976, -inf
    %v7148 = vsel %vm7068, %v7004, -inf
    %v7149 = vmax.f32 %v7147, %v7148
    %v7150 = vsel %vm7068, %v6983, -inf
    %v7151 = vsel %vm7068, %v7011, -inf
    %v7152 = vmax.f32 %v7150, %v7151
    %v7153 = vsel %vm7068, %v7018, -inf
    %v7154 = vsel %vm7068, %v7046, -inf
    %v7155 = vmax.f32 %v7153, %v7154
    %v7156 = vsel %vm7068, %v7025, -inf
    %v7157 = vsel %vm7068, %v7053, -inf
    %v7158 = vmax.f32 %v7156, %v7157
    %v7159 = vsel %vm7068, %v7032, -inf
    %v7160 = vsel %vm7068, %v7060, -inf
    %v7161 = vmax.f32 %v7159, %v7160
    %v7162 = vsel %vm7068, %v7039, -inf
    %v7163 = vsel %vm7068, %v7067, -inf
    %v7164 = vmax.f32 %v7162, %v7163
    %7165 = vst [vmem:[#allocation3] sm:$0xff] 0.0
    %7166 = vst [vmem:[#allocation3 + $0x8] sm:$0xff] 0.0
    %7167 = vst [vmem:[#allocation3 + $0x10] sm:$0xff] 0.0
    %7168 = vst [vmem:[#allocation3 + $0x18] sm:$0xff] 0.0
    %v7172 = vunpack.c.l.s4 1983009808
    %v7173 = vunpack.c.0.s8 %v7172
    %v7174 = vlaneseq
    %v7175 = vshrl.u32 %v7174, 7
    %v7176 = vsub.s32 %v7173, %v7175
    %v7177 = vrot.slane %v7071, %v7176
    %v7179 = vunpack.c.l.s4 1983009808
    %v7180 = vunpack.c.0.s8 %v7179
    %v7181 = vlaneseq
    %v7182 = vshrl.u32 %v7181, 7
    %v7183 = vsub.s32 %v7180, %v7182
    %v7184 = vrot.slane %v7119, %v7183
    %v7185 = vsel %vm4512, %v7177, %v7177
    %v7186 = vsel %vm4516, %v7177, %v7185
    %v7187 = vrot.slane %v7184, 7
    %v7188 = vsel %vm4506, %v7187, %v7186
    %v7189 = vsel %vm4510, %v7187, %v7188
    %v7190 = vsel %vm4514, %v7187, %v7189
    %v7191 = vsel %vm4518, %v7187, %v7190
    %7193 = vst.msk [vmem:[#allocation3] sm:$0x3] %vm6619, %v7191
    %v7197 = vunpack.c.l.s4 1983009808
    %v7198 = vunpack.c.0.s8 %v7197
    %v7199 = vlaneseq
    %v7200 = vshrl.u32 %v7199, 7
    %v7201 = vsub.s32 %v7198, %v7200
    %v7202 = vrot.slane %v7074, %v7201
    %v7204 = vunpack.c.l.s4 1983009808
    %v7205 = vunpack.c.0.s8 %v7204
    %v7206 = vlaneseq
    %v7207 = vshrl.u32 %v7206, 7
    %v7208 = vsub.s32 %v7205, %v7207
    %v7209 = vrot.slane %v7122, %v7208
    %v7210 = vsel %vm4512, %v7202, %v7202
    %v7211 = vsel %vm4516, %v7202, %v7210
    %v7212 = vrot.slane %v7209, 7
    %v7213 = vsel %vm4506, %v7212, %v7211
    %v7214 = vsel %vm4510, %v7212, %v7213
    %v7215 = vsel %vm4514, %v7212, %v7214
    %v7216 = vsel %vm4518, %v7212, %v7215
    %7218 = vst.msk [vmem:[#allocation3 + $0x2] sm:$0x3] %vm6619, %v7216
    %v7222 = vunpack.c.l.s4 1983009808
    %v7223 = vunpack.c.0.s8 %v7222
    %v7224 = vlaneseq
    %v7225 = vshrl.u32 %v7224, 7
    %v7226 = vsub.s32 %v7223, %v7225
    %v7227 = vrot.slane %v7077, %v7226
    %v7229 = vunpack.c.l.s4 1983009808
    %v7230 = vunpack.c.0.s8 %v7229
    %v7231 = vlaneseq
    %v7232 = vshrl.u32 %v7231, 7
    %v7233 = vsub.s32 %v7230, %v7232
    %v7234 = vrot.slane %v7125, %v7233
    %v7235 = vsel %vm4512, %v7227, %v7227
    %v7236 = vsel %vm4516, %v7227, %v7235
    %v7237 = vrot.slane %v7234, 7
    %v7238 = vsel %vm4506, %v7237, %v7236
    %v7239 = vsel %vm4510, %v7237, %v7238
    %v7240 = vsel %vm4514, %v7237, %v7239
    %v7241 = vsel %vm4518, %v7237, %v7240
    %7243 = vst.msk [vmem:[#allocation3 + $0x4] sm:$0x3] %vm6619, %v7241
    %v7247 = vunpack.c.l.s4 1983009808
    %v7248 = vunpack.c.0.s8 %v7247
    %v7249 = vlaneseq
    %v7250 = vshrl.u32 %v7249, 7
    %v7251 = vsub.s32 %v7248, %v7250
    %v7252 = vrot.slane %v7080, %v7251
    %v7254 = vunpack.c.l.s4 1983009808
    %v7255 = vunpack.c.0.s8 %v7254
    %v7256 = vlaneseq
    %v7257 = vshrl.u32 %v7256, 7
    %v7258 = vsub.s32 %v7255, %v7257
    %v7259 = vrot.slane %v7128, %v7258
    %v7260 = vsel %vm4512, %v7252, %v7252
    %v7261 = vsel %vm4516, %v7252, %v7260
    %v7262 = vrot.slane %v7259, 7
    %v7263 = vsel %vm4506, %v7262, %v7261
    %v7264 = vsel %vm4510, %v7262, %v7263
    %v7265 = vsel %vm4514, %v7262, %v7264
    %v7266 = vsel %vm4518, %v7262, %v7265
    %7268 = vst.msk [vmem:[#allocation3 + $0x6] sm:$0x3] %vm6619, %v7266
    %v7272 = vunpack.c.l.s4 1983009808
    %v7273 = vunpack.c.0.s8 %v7272
    %v7274 = vlaneseq
    %v7275 = vshrl.u32 %v7274, 7
    %v7276 = vsub.s32 %v7273, %v7275
    %v7277 = vrot.slane %v7083, %v7276
    %v7279 = vunpack.c.l.s4 1983009808
    %v7280 = vunpack.c.0.s8 %v7279
    %v7281 = vlaneseq
    %v7282 = vshrl.u32 %v7281, 7
    %v7283 = vsub.s32 %v7280, %v7282
    %v7284 = vrot.slane %v7131, %v7283
    %v7285 = vsel %vm4512, %v7277, %v7277
    %v7286 = vsel %vm4516, %v7277, %v7285
    %v7287 = vrot.slane %v7284, 7
    %v7288 = vsel %vm4506, %v7287, %v7286
    %v7289 = vsel %vm4510, %v7287, %v7288
    %v7290 = vsel %vm4514, %v7287, %v7289
    %v7291 = vsel %vm4518, %v7287, %v7290
    %7293 = vst.msk [vmem:[#allocation3 + $0x8] sm:$0x3] %vm6619, %v7291
    %v7297 = vunpack.c.l.s4 1983009808
    %v7298 = vunpack.c.0.s8 %v7297
    %v7299 = vlaneseq
    %v7300 = vshrl.u32 %v7299, 7
    %v7301 = vsub.s32 %v7298, %v7300
    %v7302 = vrot.slane %v7086, %v7301
    %v7304 = vunpack.c.l.s4 1983009808
    %v7305 = vunpack.c.0.s8 %v7304
    %v7306 = vlaneseq
    %v7307 = vshrl.u32 %v7306, 7
    %v7308 = vsub.s32 %v7305, %v7307
    %v7309 = vrot.slane %v7134, %v7308
    %v7310 = vsel %vm4512, %v7302, %v7302
    %v7311 = vsel %vm4516, %v7302, %v7310
    %v7312 = vrot.slane %v7309, 7
    %v7313 = vsel %vm4506, %v7312, %v7311
    %v7314 = vsel %vm4510, %v7312, %v7313
    %v7315 = vsel %vm4514, %v7312, %v7314
    %v7316 = vsel %vm4518, %v7312, %v7315
    %7318 = vst.msk [vmem:[#allocation3 + $0xa] sm:$0x3] %vm6619, %v7316
    %v7322 = vunpack.c.l.s4 1983009808
    %v7323 = vunpack.c.0.s8 %v7322
    %v7324 = vlaneseq
    %v7325 = vshrl.u32 %v7324, 7
    %v7326 = vsub.s32 %v7323, %v7325
    %v7327 = vrot.slane %v7089, %v7326
    %v7329 = vunpack.c.l.s4 1983009808
    %v7330 = vunpack.c.0.s8 %v7329
    %v7331 = vlaneseq
    %v7332 = vshrl.u32 %v7331, 7
    %v7333 = vsub.s32 %v7330, %v7332
    %v7334 = vrot.slane %v7137, %v7333
    %v7335 = vsel %vm4512, %v7327, %v7327
    %v7336 = vsel %vm4516, %v7327, %v7335
    %v7337 = vrot.slane %v7334, 7
    %v7338 = vsel %vm4506, %v7337, %v7336
    %v7339 = vsel %vm4510, %v7337, %v7338
    %v7340 = vsel %vm4514, %v7337, %v7339
    %v7341 = vsel %vm4518, %v7337, %v7340
    %7343 = vst.msk [vmem:[#allocation3 + $0xc] sm:$0x3] %vm6619, %v7341
    %v7347 = vunpack.c.l.s4 1983009808
    %v7348 = vunpack.c.0.s8 %v7347
    %v7349 = vlaneseq
    %v7350 = vshrl.u32 %v7349, 7
    %v7351 = vsub.s32 %v7348, %v7350
    %v7352 = vrot.slane %v7092, %v7351
    %v7354 = vunpack.c.l.s4 1983009808
    %v7355 = vunpack.c.0.s8 %v7354
    %v7356 = vlaneseq
    %v7357 = vshrl.u32 %v7356, 7
    %v7358 = vsub.s32 %v7355, %v7357
    %v7359 = vrot.slane %v7140, %v7358
    %v7360 = vsel %vm4512, %v7352, %v7352
    %v7361 = vsel %vm4516, %v7352, %v7360
    %v7362 = vrot.slane %v7359, 7
    %v7363 = vsel %vm4506, %v7362, %v7361
    %v7364 = vsel %vm4510, %v7362, %v7363
    %v7365 = vsel %vm4514, %v7362, %v7364
    %v7366 = vsel %vm4518, %v7362, %v7365
    %7368 = vst.msk [vmem:[#allocation3 + $0xe] sm:$0x3] %vm6619, %v7366
    %v7372 = vunpack.c.l.s4 1983009808
    %v7373 = vunpack.c.0.s8 %v7372
    %v7374 = vlaneseq
    %v7375 = vshrl.u32 %v7374, 7
    %v7376 = vsub.s32 %v7373, %v7375
    %v7377 = vrot.slane %v7095, %v7376
    %v7379 = vunpack.c.l.s4 1983009808
    %v7380 = vunpack.c.0.s8 %v7379
    %v7381 = vlaneseq
    %v7382 = vshrl.u32 %v7381, 7
    %v7383 = vsub.s32 %v7380, %v7382
    %v7384 = vrot.slane %v7143, %v7383
    %v7385 = vsel %vm4512, %v7377, %v7377
    %v7386 = vsel %vm4516, %v7377, %v7385
    %v7387 = vrot.slane %v7384, 7
    %v7388 = vsel %vm4506, %v7387, %v7386
    %v7389 = vsel %vm4510, %v7387, %v7388
    %v7390 = vsel %vm4514, %v7387, %v7389
    %v7391 = vsel %vm4518, %v7387, %v7390
    %7393 = vst.msk [vmem:[#allocation3 + $0x10] sm:$0x3] %vm6619, %v7391
    %v7397 = vunpack.c.l.s4 1983009808
    %v7398 = vunpack.c.0.s8 %v7397
    %v7399 = vlaneseq
    %v7400 = vshrl.u32 %v7399, 7
    %v7401 = vsub.s32 %v7398, %v7400
    %v7402 = vrot.slane %v7098, %v7401
    %v7404 = vunpack.c.l.s4 1983009808
    %v7405 = vunpack.c.0.s8 %v7404
    %v7406 = vlaneseq
    %v7407 = vshrl.u32 %v7406, 7
    %v7408 = vsub.s32 %v7405, %v7407
    %v7409 = vrot.slane %v7146, %v7408
    %v7410 = vsel %vm4512, %v7402, %v7402
    %v7411 = vsel %vm4516, %v7402, %v7410
    %v7412 = vrot.slane %v7409, 7
    %v7413 = vsel %vm4506, %v7412, %v7411
    %v7414 = vsel %vm4510, %v7412, %v7413
    %v7415 = vsel %vm4514, %v7412, %v7414
    %v7416 = vsel %vm4518, %v7412, %v7415
    %7418 = vst.msk [vmem:[#allocation3 + $0x12] sm:$0x3] %vm6619, %v7416
    %v7422 = vunpack.c.l.s4 1983009808
    %v7423 = vunpack.c.0.s8 %v7422
    %v7424 = vlaneseq
    %v7425 = vshrl.u32 %v7424, 7
    %v7426 = vsub.s32 %v7423, %v7425
    %v7427 = vrot.slane %v7101, %v7426
    %v7429 = vunpack.c.l.s4 1983009808
    %v7430 = vunpack.c.0.s8 %v7429
    %v7431 = vlaneseq
    %v7432 = vshrl.u32 %v7431, 7
    %v7433 = vsub.s32 %v7430, %v7432
    %v7434 = vrot.slane %v7149, %v7433
    %v7435 = vsel %vm4512, %v7427, %v7427
    %v7436 = vsel %vm4516, %v7427, %v7435
    %v7437 = vrot.slane %v7434, 7
    %v7438 = vsel %vm4506, %v7437, %v7436
    %v7439 = vsel %vm4510, %v7437, %v7438
    %v7440 = vsel %vm4514, %v7437, %v7439
    %v7441 = vsel %vm4518, %v7437, %v7440
    %7443 = vst.msk [vmem:[#allocation3 + $0x14] sm:$0x3] %vm6619, %v7441
    %v7447 = vunpack.c.l.s4 1983009808
    %v7448 = vunpack.c.0.s8 %v7447
    %v7449 = vlaneseq
    %v7450 = vshrl.u32 %v7449, 7
    %v7451 = vsub.s32 %v7448, %v7450
    %v7452 = vrot.slane %v7104, %v7451
    %v7454 = vunpack.c.l.s4 1983009808
    %v7455 = vunpack.c.0.s8 %v7454
    %v7456 = vlaneseq
    %v7457 = vshrl.u32 %v7456, 7
    %v7458 = vsub.s32 %v7455, %v7457
    %v7459 = vrot.slane %v7152, %v7458
    %v7460 = vsel %vm4512, %v7452, %v7452
    %v7461 = vsel %vm4516, %v7452, %v7460
    %v7462 = vrot.slane %v7459, 7
    %v7463 = vsel %vm4506, %v7462, %v7461
    %v7464 = vsel %vm4510, %v7462, %v7463
    %v7465 = vsel %vm4514, %v7462, %v7464
    %v7466 = vsel %vm4518, %v7462, %v7465
    %7468 = vst.msk [vmem:[#allocation3 + $0x16] sm:$0x3] %vm6619, %v7466
    %v7472 = vunpack.c.l.s4 1983009808
    %v7473 = vunpack.c.0.s8 %v7472
    %v7474 = vlaneseq
    %v7475 = vshrl.u32 %v7474, 7
    %v7476 = vsub.s32 %v7473, %v7475
    %v7477 = vrot.slane %v7107, %v7476
    %v7479 = vunpack.c.l.s4 1983009808
    %v7480 = vunpack.c.0.s8 %v7479
    %v7481 = vlaneseq
    %v7482 = vshrl.u32 %v7481, 7
    %v7483 = vsub.s32 %v7480, %v7482
    %v7484 = vrot.slane %v7155, %v7483
    %v7485 = vsel %vm4512, %v7477, %v7477
    %v7486 = vsel %vm4516, %v7477, %v7485
    %v7487 = vrot.slane %v7484, 7
    %v7488 = vsel %vm4506, %v7487, %v7486
    %v7489 = vsel %vm4510, %v7487, %v7488
    %v7490 = vsel %vm4514, %v7487, %v7489
    %v7491 = vsel %vm4518, %v7487, %v7490
    %7493 = vst.msk [vmem:[#allocation3 + $0x18] sm:$0x3] %vm6619, %v7491
    %v7497 = vunpack.c.l.s4 1983009808
    %v7498 = vunpack.c.0.s8 %v7497
    %v7499 = vlaneseq
    %v7500 = vshrl.u32 %v7499, 7
    %v7501 = vsub.s32 %v7498, %v7500
    %v7502 = vrot.slane %v7110, %v7501
    %v7504 = vunpack.c.l.s4 1983009808
    %v7505 = vunpack.c.0.s8 %v7504
    %v7506 = vlaneseq
    %v7507 = vshrl.u32 %v7506, 7
    %v7508 = vsub.s32 %v7505, %v7507
    %v7509 = vrot.slane %v7158, %v7508
    %v7510 = vsel %vm4512, %v7502, %v7502
    %v7511 = vsel %vm4516, %v7502, %v7510
    %v7512 = vrot.slane %v7509, 7
    %v7513 = vsel %vm4506, %v7512, %v7511
    %v7514 = vsel %vm4510, %v7512, %v7513
    %v7515 = vsel %vm4514, %v7512, %v7514
    %v7516 = vsel %vm4518, %v7512, %v7515
    %7518 = vst.msk [vmem:[#allocation3 + $0x1a] sm:$0x3] %vm6619, %v7516
    %v7522 = vunpack.c.l.s4 1983009808
    %v7523 = vunpack.c.0.s8 %v7522
    %v7524 = vlaneseq
    %v7525 = vshrl.u32 %v7524, 7
    %v7526 = vsub.s32 %v7523, %v7525
    %v7527 = vrot.slane %v7113, %v7526
    %v7529 = vunpack.c.l.s4 1983009808
    %v7530 = vunpack.c.0.s8 %v7529
    %v7531 = vlaneseq
    %v7532 = vshrl.u32 %v7531, 7
    %v7533 = vsub.s32 %v7530, %v7532
    %v7534 = vrot.slane %v7161, %v7533
    %v7535 = vsel %vm4512, %v7527, %v7527
    %v7536 = vsel %vm4516, %v7527, %v7535
    %v7537 = vrot.slane %v7534, 7
    %v7538 = vsel %vm4506, %v7537, %v7536
    %v7539 = vsel %vm4510, %v7537, %v7538
    %v7540 = vsel %vm4514, %v7537, %v7539
    %v7541 = vsel %vm4518, %v7537, %v7540
    %7543 = vst.msk [vmem:[#allocation3 + $0x1c] sm:$0x3] %vm6619, %v7541
    %v7547 = vunpack.c.l.s4 1983009808
    %v7548 = vunpack.c.0.s8 %v7547
    %v7549 = vlaneseq
    %v7550 = vshrl.u32 %v7549, 7
    %v7551 = vsub.s32 %v7548, %v7550
    %v7552 = vrot.slane %v7116, %v7551
    %v7554 = vunpack.c.l.s4 1983009808
    %v7555 = vunpack.c.0.s8 %v7554
    %v7556 = vlaneseq
    %v7557 = vshrl.u32 %v7556, 7
    %v7558 = vsub.s32 %v7555, %v7557
    %v7559 = vrot.slane %v7164, %v7558
    %v7560 = vsel %vm4512, %v7552, %v7552
    %v7561 = vsel %vm4516, %v7552, %v7560
    %v7562 = vrot.slane %v7559, 7
    %v7563 = vsel %vm4506, %v7562, %v7561
    %v7564 = vsel %vm4510, %v7562, %v7563
    %v7565 = vsel %vm4514, %v7562, %v7564
    %v7566 = vsel %vm4518, %v7562, %v7565
    %7568 = vst.msk [vmem:[#allocation3 + $0x1e] sm:$0x3] %vm6619, %v7566
    %v7569 = vld [vmem:[#allocation3] sm:$0xff]
    %v7570 = vld [vmem:[#allocation3 + $0x8] sm:$0xff]
    %v7571 = vld [vmem:[#allocation3 + $0x10] sm:$0xff]
    %v7572 = vld [vmem:[#allocation3 + $0x18] sm:$0xff]
    %v7577 = vcombine.high %v7569, %v7569
    %v7579 = vunpack.c.l.s4 1983009808
    %v7580 = vunpack.c.0.s8 %v7579
    %v7581 = vlaneseq
    %v7582 = vshrl.u32 %v7581, 7
    %v7583 = vsub.s32 %v7580, %v7582
    %v7584 = vrot.slane %v7569, %v7583
    %v7586 = vunpack.c.l.s4 1983009808
    %v7587 = vunpack.c.0.s8 %v7586
    %v7588 = vlaneseq
    %v7589 = vshrl.u32 %v7588, 7
    %v7590 = vsub.s32 %v7587, %v7589
    %v7591 = vrot.slane %v7577, %v7590
    %v7592 = vcombine.high %v7584, %v7584
    %v7593 = vcombine.high %v7591, %v7591
    %v7594 = vcombine.high %v7570, %v7570
    %v7596 = vunpack.c.l.s4 1983009808
    %v7597 = vunpack.c.0.s8 %v7596
    %v7598 = vlaneseq
    %v7599 = vshrl.u32 %v7598, 7
    %v7600 = vsub.s32 %v7597, %v7599
    %v7601 = vrot.slane %v7570, %v7600
    %v7603 = vunpack.c.l.s4 1983009808
    %v7604 = vunpack.c.0.s8 %v7603
    %v7605 = vlaneseq
    %v7606 = vshrl.u32 %v7605, 7
    %v7607 = vsub.s32 %v7604, %v7606
    %v7608 = vrot.slane %v7594, %v7607
    %v7609 = vcombine.high %v7601, %v7601
    %v7610 = vcombine.high %v7608, %v7608
    %v7611 = vcombine.high %v7571, %v7571
    %v7613 = vunpack.c.l.s4 1983009808
    %v7614 = vunpack.c.0.s8 %v7613
    %v7615 = vlaneseq
    %v7616 = vshrl.u32 %v7615, 7
    %v7617 = vsub.s32 %v7614, %v7616
    %v7618 = vrot.slane %v7571, %v7617
    %v7620 = vunpack.c.l.s4 1983009808
    %v7621 = vunpack.c.0.s8 %v7620
    %v7622 = vlaneseq
    %v7623 = vshrl.u32 %v7622, 7
    %v7624 = vsub.s32 %v7621, %v7623
    %v7625 = vrot.slane %v7611, %v7624
    %v7626 = vcombine.high %v7618, %v7618
    %v7627 = vcombine.high %v7625, %v7625
    %v7628 = vcombine.high %v7572, %v7572
    %v7630 = vunpack.c.l.s4 1983009808
    %v7631 = vunpack.c.0.s8 %v7630
    %v7632 = vlaneseq
    %v7633 = vshrl.u32 %v7632, 7
    %v7634 = vsub.s32 %v7631, %v7633
    %v7635 = vrot.slane %v7572, %v7634
    %v7637 = vunpack.c.l.s4 1983009808
    %v7638 = vunpack.c.0.s8 %v7637
    %v7639 = vlaneseq
    %v7640 = vshrl.u32 %v7639, 7
    %v7641 = vsub.s32 %v7638, %v7640
    %v7642 = vrot.slane %v7628, %v7641
    %v7643 = vcombine.high %v7635, %v7635
    %v7644 = vcombine.high %v7642, %v7642
    %v7661 = vpack.c.bf16 %v7584, %v7584
    %v7662 = vpack.c.bf16 %v7592, %v7592
    %v7663 = vpack.c.bf16 %v7591, %v7591
    %v7664 = vpack.c.bf16 %v7593, %v7593
    %v7665 = vpack.c.bf16 %v7601, %v7601
    %v7666 = vpack.c.bf16 %v7609, %v7609
    %v7667 = vpack.c.bf16 %v7608, %v7608
    %v7668 = vpack.c.bf16 %v7610, %v7610
    %v7669 = vpack.c.bf16 %v7618, %v7618
    %v7670 = vpack.c.bf16 %v7626, %v7626
    %v7671 = vpack.c.bf16 %v7625, %v7625
    %v7672 = vpack.c.bf16 %v7627, %v7627
    %v7673 = vpack.c.bf16 %v7635, %v7635
    %v7674 = vpack.c.bf16 %v7643, %v7643
    %v7675 = vpack.c.bf16 %v7642, %v7642
    %v7676 = vpack.c.bf16 %v7644, %v7644
    %v7677 = vld [vmem:[%s5] sm:$0xf]
    %v7678 = vld [vmem:[%s5 + $0x4] sm:$0xf]
    %v7679 = vld [vmem:[%s5 + $0x8] sm:$0xf]
    %v7680 = vld [vmem:[%s5 + $0xc] sm:$0xf]
    %v7681 = vld [vmem:[%s5 + $0x10] sm:$0xf]
    %v7682 = vld [vmem:[%s5 + $0x14] sm:$0xf]
    %v7683 = vld [vmem:[%s5 + $0x18] sm:$0xf]
    %v7684 = vld [vmem:[%s5 + $0x1c] sm:$0xf]
    %v7685 = vld [vmem:[%s5 + $0x20] sm:$0xf]
    %v7686 = vld [vmem:[%s5 + $0x24] sm:$0xf]
    %v7687 = vld [vmem:[%s5 + $0x28] sm:$0xf]
    %v7688 = vld [vmem:[%s5 + $0x2c] sm:$0xf]
    %v7689 = vld [vmem:[%s5 + $0x30] sm:$0xf]
    %v7690 = vld [vmem:[%s5 + $0x34] sm:$0xf]
    %v7691 = vld [vmem:[%s5 + $0x38] sm:$0xf]
    %v7692 = vld [vmem:[%s5 + $0x3c] sm:$0xf]
    %v7693 = vld [vmem:[%s5 + $0x40] sm:$0xf]
    %v7694 = vld [vmem:[%s5 + $0x44] sm:$0xf]
    %v7695 = vld [vmem:[%s5 + $0x48] sm:$0xf]
    %v7696 = vld [vmem:[%s5 + $0x4c] sm:$0xf]
    %v7697 = vld [vmem:[%s5 + $0x50] sm:$0xf]
    %v7698 = vld [vmem:[%s5 + $0x54] sm:$0xf]
    %v7699 = vld [vmem:[%s5 + $0x58] sm:$0xf]
    %v7700 = vld [vmem:[%s5 + $0x5c] sm:$0xf]
    %v7701 = vld [vmem:[%s5 + $0x60] sm:$0xf]
    %v7702 = vld [vmem:[%s5 + $0x64] sm:$0xf]
    %v7703 = vld [vmem:[%s5 + $0x68] sm:$0xf]
    %v7704 = vld [vmem:[%s5 + $0x6c] sm:$0xf]
    %v7705 = vld [vmem:[%s5 + $0x70] sm:$0xf]
    %v7706 = vld [vmem:[%s5 + $0x74] sm:$0xf]
    %v7707 = vld [vmem:[%s5 + $0x78] sm:$0xf]
    %v7708 = vld [vmem:[%s5 + $0x7c] sm:$0xf]
    %v7709 = vld [vmem:[%s5 + $0x80] sm:$0xf]
    %v7710 = vld [vmem:[%s5 + $0x84] sm:$0xf]
    %v7711 = vld [vmem:[%s5 + $0x88] sm:$0xf]
    %v7712 = vld [vmem:[%s5 + $0x8c] sm:$0xf]
    %v7713 = vld [vmem:[%s5 + $0x90] sm:$0xf]
    %v7714 = vld [vmem:[%s5 + $0x94] sm:$0xf]
    %v7715 = vld [vmem:[%s5 + $0x98] sm:$0xf]
    %v7716 = vld [vmem:[%s5 + $0x9c] sm:$0xf]
    %v7717 = vld [vmem:[%s5 + $0xa0] sm:$0xf]
    %v7718 = vld [vmem:[%s5 + $0xa4] sm:$0xf]
    %v7719 = vld [vmem:[%s5 + $0xa8] sm:$0xf]
    %v7720 = vld [vmem:[%s5 + $0xac] sm:$0xf]
    %v7721 = vld [vmem:[%s5 + $0xb0] sm:$0xf]
    %v7722 = vld [vmem:[%s5 + $0xb4] sm:$0xf]
    %v7723 = vld [vmem:[%s5 + $0xb8] sm:$0xf]
    %v7724 = vld [vmem:[%s5 + $0xbc] sm:$0xf]
    %v7725 = vld [vmem:[%s5 + $0xc0] sm:$0xf]
    %v7726 = vld [vmem:[%s5 + $0xc4] sm:$0xf]
    %v7727 = vld [vmem:[%s5 + $0xc8] sm:$0xf]
    %v7728 = vld [vmem:[%s5 + $0xcc] sm:$0xf]
    %v7729 = vld [vmem:[%s5 + $0xd0] sm:$0xf]
    %v7730 = vld [vmem:[%s5 + $0xd4] sm:$0xf]
    %v7731 = vld [vmem:[%s5 + $0xd8] sm:$0xf]
    %v7732 = vld [vmem:[%s5 + $0xdc] sm:$0xf]
    %v7733 = vld [vmem:[%s5 + $0xe0] sm:$0xf]
    %v7734 = vld [vmem:[%s5 + $0xe4] sm:$0xf]
    %v7735 = vld [vmem:[%s5 + $0xe8] sm:$0xf]
    %v7736 = vld [vmem:[%s5 + $0xec] sm:$0xf]
    %v7737 = vld [vmem:[%s5 + $0xf0] sm:$0xf]
    %v7738 = vld [vmem:[%s5 + $0xf4] sm:$0xf]
    %v7739 = vld [vmem:[%s5 + $0xf8] sm:$0xf]
    %v7740 = vld [vmem:[%s5 + $0xfc] sm:$0xf]
    %v7741 = vld [vmem:[%s5 + $0x100] sm:$0xf]
    %v7742 = vld [vmem:[%s5 + $0x104] sm:$0xf]
    %v7743 = vld [vmem:[%s5 + $0x108] sm:$0xf]
    %v7744 = vld [vmem:[%s5 + $0x10c] sm:$0xf]
    %v7745 = vld [vmem:[%s5 + $0x110] sm:$0xf]
    %v7746 = vld [vmem:[%s5 + $0x114] sm:$0xf]
    %v7747 = vld [vmem:[%s5 + $0x118] sm:$0xf]
    %v7748 = vld [vmem:[%s5 + $0x11c] sm:$0xf]
    %v7749 = vld [vmem:[%s5 + $0x120] sm:$0xf]
    %v7750 = vld [vmem:[%s5 + $0x124] sm:$0xf]
    %v7751 = vld [vmem:[%s5 + $0x128] sm:$0xf]
    %v7752 = vld [vmem:[%s5 + $0x12c] sm:$0xf]
    %v7753 = vld [vmem:[%s5 + $0x130] sm:$0xf]
    %v7754 = vld [vmem:[%s5 + $0x134] sm:$0xf]
    %v7755 = vld [vmem:[%s5 + $0x138] sm:$0xf]
    %v7756 = vld [vmem:[%s5 + $0x13c] sm:$0xf]
    %v7757 = vld [vmem:[%s5 + $0x140] sm:$0xf]
    %v7758 = vld [vmem:[%s5 + $0x144] sm:$0xf]
    %v7759 = vld [vmem:[%s5 + $0x148] sm:$0xf]
    %v7760 = vld [vmem:[%s5 + $0x14c] sm:$0xf]
    %v7761 = vld [vmem:[%s5 + $0x150] sm:$0xf]
    %v7762 = vld [vmem:[%s5 + $0x154] sm:$0xf]
    %v7763 = vld [vmem:[%s5 + $0x158] sm:$0xf]
    %v7764 = vld [vmem:[%s5 + $0x15c] sm:$0xf]
    %v7765 = vld [vmem:[%s5 + $0x160] sm:$0xf]
    %v7766 = vld [vmem:[%s5 + $0x164] sm:$0xf]
    %v7767 = vld [vmem:[%s5 + $0x168] sm:$0xf]
    %v7768 = vld [vmem:[%s5 + $0x16c] sm:$0xf]
    %v7769 = vld [vmem:[%s5 + $0x170] sm:$0xf]
    %v7770 = vld [vmem:[%s5 + $0x174] sm:$0xf]
    %v7771 = vld [vmem:[%s5 + $0x178] sm:$0xf]
    %v7772 = vld [vmem:[%s5 + $0x17c] sm:$0xf]
    %v7773 = vld [vmem:[%s5 + $0x180] sm:$0xf]
    %v7774 = vld [vmem:[%s5 + $0x184] sm:$0xf]
    %v7775 = vld [vmem:[%s5 + $0x188] sm:$0xf]
    %v7776 = vld [vmem:[%s5 + $0x18c] sm:$0xf]
    %v7777 = vld [vmem:[%s5 + $0x190] sm:$0xf]
    %v7778 = vld [vmem:[%s5 + $0x194] sm:$0xf]
    %v7779 = vld [vmem:[%s5 + $0x198] sm:$0xf]
    %v7780 = vld [vmem:[%s5 + $0x19c] sm:$0xf]
    %v7781 = vld [vmem:[%s5 + $0x1a0] sm:$0xf]
    %v7782 = vld [vmem:[%s5 + $0x1a4] sm:$0xf]
    %v7783 = vld [vmem:[%s5 + $0x1a8] sm:$0xf]
    %v7784 = vld [vmem:[%s5 + $0x1ac] sm:$0xf]
    %v7785 = vld [vmem:[%s5 + $0x1b0] sm:$0xf]
    %v7786 = vld [vmem:[%s5 + $0x1b4] sm:$0xf]
    %v7787 = vld [vmem:[%s5 + $0x1b8] sm:$0xf]
    %v7788 = vld [vmem:[%s5 + $0x1bc] sm:$0xf]
    %v7789 = vld [vmem:[%s5 + $0x1c0] sm:$0xf]
    %v7790 = vld [vmem:[%s5 + $0x1c4] sm:$0xf]
    %v7791 = vld [vmem:[%s5 + $0x1c8] sm:$0xf]
    %v7792 = vld [vmem:[%s5 + $0x1cc] sm:$0xf]
    %v7793 = vld [vmem:[%s5 + $0x1d0] sm:$0xf]
    %v7794 = vld [vmem:[%s5 + $0x1d4] sm:$0xf]
    %v7795 = vld [vmem:[%s5 + $0x1d8] sm:$0xf]
    %v7796 = vld [vmem:[%s5 + $0x1dc] sm:$0xf]
    %v7797 = vld [vmem:[%s5 + $0x1e0] sm:$0xf]
    %v7798 = vld [vmem:[%s5 + $0x1e4] sm:$0xf]
    %v7799 = vld [vmem:[%s5 + $0x1e8] sm:$0xf]
    %v7800 = vld [vmem:[%s5 + $0x1ec] sm:$0xf]
    %v7801 = vld [vmem:[%s5 + $0x1f0] sm:$0xf]
    %v7802 = vld [vmem:[%s5 + $0x1f4] sm:$0xf]
    %v7803 = vld [vmem:[%s5 + $0x1f8] sm:$0xf]
    %v7804 = vld [vmem:[%s5 + $0x1fc] sm:$0xf]
    %v7805 = vld [vmem:[%s5 + $0x200] sm:$0xf]
    %v7806 = vld [vmem:[%s5 + $0x204] sm:$0xf]
    %v7807 = vld [vmem:[%s5 + $0x208] sm:$0xf]
    %v7808 = vld [vmem:[%s5 + $0x20c] sm:$0xf]
    %v7809 = vld [vmem:[%s5 + $0x210] sm:$0xf]
    %v7810 = vld [vmem:[%s5 + $0x214] sm:$0xf]
    %v7811 = vld [vmem:[%s5 + $0x218] sm:$0xf]
    %v7812 = vld [vmem:[%s5 + $0x21c] sm:$0xf]
    %v7813 = vld [vmem:[%s5 + $0x220] sm:$0xf]
    %v7814 = vld [vmem:[%s5 + $0x224] sm:$0xf]
    %v7815 = vld [vmem:[%s5 + $0x228] sm:$0xf]
    %v7816 = vld [vmem:[%s5 + $0x22c] sm:$0xf]
    %v7817 = vld [vmem:[%s5 + $0x230] sm:$0xf]
    %v7818 = vld [vmem:[%s5 + $0x234] sm:$0xf]
    %v7819 = vld [vmem:[%s5 + $0x238] sm:$0xf]
    %v7820 = vld [vmem:[%s5 + $0x23c] sm:$0xf]
    %v7821 = vld [vmem:[%s5 + $0x240] sm:$0xf]
    %v7822 = vld [vmem:[%s5 + $0x244] sm:$0xf]
    %v7823 = vld [vmem:[%s5 + $0x248] sm:$0xf]
    %v7824 = vld [vmem:[%s5 + $0x24c] sm:$0xf]
    %v7825 = vld [vmem:[%s5 + $0x250] sm:$0xf]
    %v7826 = vld [vmem:[%s5 + $0x254] sm:$0xf]
    %v7827 = vld [vmem:[%s5 + $0x258] sm:$0xf]
    %v7828 = vld [vmem:[%s5 + $0x25c] sm:$0xf]
    %v7829 = vld [vmem:[%s5 + $0x260] sm:$0xf]
    %v7830 = vld [vmem:[%s5 + $0x264] sm:$0xf]
    %v7831 = vld [vmem:[%s5 + $0x268] sm:$0xf]
    %v7832 = vld [vmem:[%s5 + $0x26c] sm:$0xf]
    %v7833 = vld [vmem:[%s5 + $0x270] sm:$0xf]
    %v7834 = vld [vmem:[%s5 + $0x274] sm:$0xf]
    %v7835 = vld [vmem:[%s5 + $0x278] sm:$0xf]
    %v7836 = vld [vmem:[%s5 + $0x27c] sm:$0xf]
    %v7837 = vld [vmem:[%s5 + $0x280] sm:$0xf]
    %v7838 = vld [vmem:[%s5 + $0x284] sm:$0xf]
    %v7839 = vld [vmem:[%s5 + $0x288] sm:$0xf]
    %v7840 = vld [vmem:[%s5 + $0x28c] sm:$0xf]
    %v7841 = vld [vmem:[%s5 + $0x290] sm:$0xf]
    %v7842 = vld [vmem:[%s5 + $0x294] sm:$0xf]
    %v7843 = vld [vmem:[%s5 + $0x298] sm:$0xf]
    %v7844 = vld [vmem:[%s5 + $0x29c] sm:$0xf]
    %v7845 = vld [vmem:[%s5 + $0x2a0] sm:$0xf]
    %v7846 = vld [vmem:[%s5 + $0x2a4] sm:$0xf]
    %v7847 = vld [vmem:[%s5 + $0x2a8] sm:$0xf]
    %v7848 = vld [vmem:[%s5 + $0x2ac] sm:$0xf]
    %v7849 = vld [vmem:[%s5 + $0x2b0] sm:$0xf]
    %v7850 = vld [vmem:[%s5 + $0x2b4] sm:$0xf]
    %v7851 = vld [vmem:[%s5 + $0x2b8] sm:$0xf]
    %v7852 = vld [vmem:[%s5 + $0x2bc] sm:$0xf]
    %v7853 = vld [vmem:[%s5 + $0x2c0] sm:$0xf]
    %v7854 = vld [vmem:[%s5 + $0x2c4] sm:$0xf]
    %v7855 = vld [vmem:[%s5 + $0x2c8] sm:$0xf]
    %v7856 = vld [vmem:[%s5 + $0x2cc] sm:$0xf]
    %v7857 = vld [vmem:[%s5 + $0x2d0] sm:$0xf]
    %v7858 = vld [vmem:[%s5 + $0x2d4] sm:$0xf]
    %v7859 = vld [vmem:[%s5 + $0x2d8] sm:$0xf]
    %v7860 = vld [vmem:[%s5 + $0x2dc] sm:$0xf]
    %v7861 = vld [vmem:[%s5 + $0x2e0] sm:$0xf]
    %v7862 = vld [vmem:[%s5 + $0x2e4] sm:$0xf]
    %v7863 = vld [vmem:[%s5 + $0x2e8] sm:$0xf]
    %v7864 = vld [vmem:[%s5 + $0x2ec] sm:$0xf]
    %v7865 = vld [vmem:[%s5 + $0x2f0] sm:$0xf]
    %v7866 = vld [vmem:[%s5 + $0x2f4] sm:$0xf]
    %v7867 = vld [vmem:[%s5 + $0x2f8] sm:$0xf]
    %v7868 = vld [vmem:[%s5 + $0x2fc] sm:$0xf]
    %v7869 = vld [vmem:[%s5 + $0x300] sm:$0xf]
    %v7870 = vld [vmem:[%s5 + $0x304] sm:$0xf]
    %v7871 = vld [vmem:[%s5 + $0x308] sm:$0xf]
    %v7872 = vld [vmem:[%s5 + $0x30c] sm:$0xf]
    %v7873 = vld [vmem:[%s5 + $0x310] sm:$0xf]
    %v7874 = vld [vmem:[%s5 + $0x314] sm:$0xf]
    %v7875 = vld [vmem:[%s5 + $0x318] sm:$0xf]
    %v7876 = vld [vmem:[%s5 + $0x31c] sm:$0xf]
    %v7877 = vld [vmem:[%s5 + $0x320] sm:$0xf]
    %v7878 = vld [vmem:[%s5 + $0x324] sm:$0xf]
    %v7879 = vld [vmem:[%s5 + $0x328] sm:$0xf]
    %v7880 = vld [vmem:[%s5 + $0x32c] sm:$0xf]
    %v7881 = vld [vmem:[%s5 + $0x330] sm:$0xf]
    %v7882 = vld [vmem:[%s5 + $0x334] sm:$0xf]
    %v7883 = vld [vmem:[%s5 + $0x338] sm:$0xf]
    %v7884 = vld [vmem:[%s5 + $0x33c] sm:$0xf]
    %v7885 = vld [vmem:[%s5 + $0x340] sm:$0xf]
    %v7886 = vld [vmem:[%s5 + $0x344] sm:$0xf]
    %v7887 = vld [vmem:[%s5 + $0x348] sm:$0xf]
    %v7888 = vld [vmem:[%s5 + $0x34c] sm:$0xf]
    %v7889 = vld [vmem:[%s5 + $0x350] sm:$0xf]
    %v7890 = vld [vmem:[%s5 + $0x354] sm:$0xf]
    %v7891 = vld [vmem:[%s5 + $0x358] sm:$0xf]
    %v7892 = vld [vmem:[%s5 + $0x35c] sm:$0xf]
    %v7893 = vld [vmem:[%s5 + $0x360] sm:$0xf]
    %v7894 = vld [vmem:[%s5 + $0x364] sm:$0xf]
    %v7895 = vld [vmem:[%s5 + $0x368] sm:$0xf]
    %v7896 = vld [vmem:[%s5 + $0x36c] sm:$0xf]
    %v7897 = vld [vmem:[%s5 + $0x370] sm:$0xf]
    %v7898 = vld [vmem:[%s5 + $0x374] sm:$0xf]
    %v7899 = vld [vmem:[%s5 + $0x378] sm:$0xf]
    %v7900 = vld [vmem:[%s5 + $0x37c] sm:$0xf]
    %v7901 = vld [vmem:[%s5 + $0x380] sm:$0xf]
    %v7902 = vld [vmem:[%s5 + $0x384] sm:$0xf]
    %v7903 = vld [vmem:[%s5 + $0x388] sm:$0xf]
    %v7904 = vld [vmem:[%s5 + $0x38c] sm:$0xf]
    %v7905 = vld [vmem:[%s5 + $0x390] sm:$0xf]
    %v7906 = vld [vmem:[%s5 + $0x394] sm:$0xf]
    %v7907 = vld [vmem:[%s5 + $0x398] sm:$0xf]
    %v7908 = vld [vmem:[%s5 + $0x39c] sm:$0xf]
    %v7909 = vld [vmem:[%s5 + $0x3a0] sm:$0xf]
    %v7910 = vld [vmem:[%s5 + $0x3a4] sm:$0xf]
    %v7911 = vld [vmem:[%s5 + $0x3a8] sm:$0xf]
    %v7912 = vld [vmem:[%s5 + $0x3ac] sm:$0xf]
    %v7913 = vld [vmem:[%s5 + $0x3b0] sm:$0xf]
    %v7914 = vld [vmem:[%s5 + $0x3b4] sm:$0xf]
    %v7915 = vld [vmem:[%s5 + $0x3b8] sm:$0xf]
    %v7916 = vld [vmem:[%s5 + $0x3bc] sm:$0xf]
    %v7917 = vld [vmem:[%s5 + $0x3c0] sm:$0xf]
    %v7918 = vld [vmem:[%s5 + $0x3c4] sm:$0xf]
    %v7919 = vld [vmem:[%s5 + $0x3c8] sm:$0xf]
    %v7920 = vld [vmem:[%s5 + $0x3cc] sm:$0xf]
    %v7921 = vld [vmem:[%s5 + $0x3d0] sm:$0xf]
    %v7922 = vld [vmem:[%s5 + $0x3d4] sm:$0xf]
    %v7923 = vld [vmem:[%s5 + $0x3d8] sm:$0xf]
    %v7924 = vld [vmem:[%s5 + $0x3dc] sm:$0xf]
    %v7925 = vld [vmem:[%s5 + $0x3e0] sm:$0xf]
    %v7926 = vld [vmem:[%s5 + $0x3e4] sm:$0xf]
    %v7927 = vld [vmem:[%s5 + $0x3e8] sm:$0xf]
    %v7928 = vld [vmem:[%s5 + $0x3ec] sm:$0xf]
    %v7929 = vld [vmem:[%s5 + $0x3f0] sm:$0xf]
    %v7930 = vld [vmem:[%s5 + $0x3f4] sm:$0xf]
    %v7931 = vld [vmem:[%s5 + $0x3f8] sm:$0xf]
    %v7932 = vld [vmem:[%s5 + $0x3fc] sm:$0xf]
    %v7933 = vld [vmem:[%s6] sm:$0x1]
    %v7935 = vlaneseq
    %v7936 = vshrl.u32 %v7935, 7
    %v7937 = vsub.s32 0, %v7936
    %v7938 = vrot.slane %v7933, %v7937
    %v8196 = vunpack.c.l.b16 %v7677
    %v8197 = vunpack.c.l.b16 %v7678
    %v8198 = vunpack.c.l.b16 %v7679
    %v8199 = vunpack.c.l.b16 %v7680
    %v8200 = vunpack.c.l.b16 %v7681
    %v8201 = vunpack.c.l.b16 %v7682
    %v8202 = vunpack.c.l.b16 %v7683
    %v8203 = vunpack.c.l.b16 %v7684
    %v8204 = vunpack.c.l.b16 %v7685
    %v8205 = vunpack.c.l.b16 %v7686
    %v8206 = vunpack.c.l.b16 %v7687
    %v8207 = vunpack.c.l.b16 %v7688
    %v8208 = vunpack.c.l.b16 %v7689
    %v8209 = vunpack.c.l.b16 %v7690
    %v8210 = vunpack.c.l.b16 %v7691
    %v8211 = vunpack.c.l.b16 %v7692
    %v8212 = vunpack.c.l.b16 %v7693
    %v8213 = vunpack.c.l.b16 %v7694
    %v8214 = vunpack.c.l.b16 %v7695
    %v8215 = vunpack.c.l.b16 %v7696
    %v8216 = vunpack.c.l.b16 %v7697
    %v8217 = vunpack.c.l.b16 %v7698
    %v8218 = vunpack.c.l.b16 %v7699
    %v8219 = vunpack.c.l.b16 %v7700
    %v8220 = vunpack.c.l.b16 %v7701
    %v8221 = vunpack.c.l.b16 %v7702
    %v8222 = vunpack.c.l.b16 %v7703
    %v8223 = vunpack.c.l.b16 %v7704
    %v8224 = vunpack.c.l.b16 %v7705
    %v8225 = vunpack.c.l.b16 %v7706
    %v8226 = vunpack.c.l.b16 %v7707
    %v8227 = vunpack.c.l.b16 %v7708
    %v8228 = vunpack.c.l.b16 %v7709
    %v8229 = vunpack.c.l.b16 %v7710
    %v8230 = vunpack.c.l.b16 %v7711
    %v8231 = vunpack.c.l.b16 %v7712
    %v8232 = vunpack.c.l.b16 %v7713
    %v8233 = vunpack.c.l.b16 %v7714
    %v8234 = vunpack.c.l.b16 %v7715
    %v8235 = vunpack.c.l.b16 %v7716
    %v8236 = vunpack.c.l.b16 %v7717
    %v8237 = vunpack.c.l.b16 %v7718
    %v8238 = vunpack.c.l.b16 %v7719
    %v8239 = vunpack.c.l.b16 %v7720
    %v8240 = vunpack.c.l.b16 %v7721
    %v8241 = vunpack.c.l.b16 %v7722
    %v8242 = vunpack.c.l.b16 %v7723
    %v8243 = vunpack.c.l.b16 %v7724
    %v8244 = vunpack.c.l.b16 %v7725
    %v8245 = vunpack.c.l.b16 %v7726
    %v8246 = vunpack.c.l.b16 %v7727
    %v8247 = vunpack.c.l.b16 %v7728
    %v8248 = vunpack.c.l.b16 %v7729
    %v8249 = vunpack.c.l.b16 %v7730
    %v8250 = vunpack.c.l.b16 %v7731
    %v8251 = vunpack.c.l.b16 %v7732
    %v8252 = vunpack.c.l.b16 %v7733
    %v8253 = vunpack.c.l.b16 %v7734
    %v8254 = vunpack.c.l.b16 %v7735
    %v8255 = vunpack.c.l.b16 %v7736
    %v8256 = vunpack.c.l.b16 %v7737
    %v8257 = vunpack.c.l.b16 %v7738
    %v8258 = vunpack.c.l.b16 %v7739
    %v8259 = vunpack.c.l.b16 %v7740
    %v8260 = vunpack.c.l.b16 %v7741
    %v8261 = vunpack.c.l.b16 %v7742
    %v8262 = vunpack.c.l.b16 %v7743
    %v8263 = vunpack.c.l.b16 %v7744
    %v8264 = vunpack.c.l.b16 %v7745
    %v8265 = vunpack.c.l.b16 %v7746
    %v8266 = vunpack.c.l.b16 %v7747
    %v8267 = vunpack.c.l.b16 %v7748
    %v8268 = vunpack.c.l.b16 %v7749
    %v8269 = vunpack.c.l.b16 %v7750
    %v8270 = vunpack.c.l.b16 %v7751
    %v8271 = vunpack.c.l.b16 %v7752
    %v8272 = vunpack.c.l.b16 %v7753
    %v8273 = vunpack.c.l.b16 %v7754
    %v8274 = vunpack.c.l.b16 %v7755
    %v8275 = vunpack.c.l.b16 %v7756
    %v8276 = vunpack.c.l.b16 %v7757
    %v8277 = vunpack.c.l.b16 %v7758
    %v8278 = vunpack.c.l.b16 %v7759
    %v8279 = vunpack.c.l.b16 %v7760
    %v8280 = vunpack.c.l.b16 %v7761
    %v8281 = vunpack.c.l.b16 %v7762
    %v8282 = vunpack.c.l.b16 %v7763
    %v8283 = vunpack.c.l.b16 %v7764
    %v8284 = vunpack.c.l.b16 %v7765
    %v8285 = vunpack.c.l.b16 %v7766
    %v8286 = vunpack.c.l.b16 %v7767
    %v8287 = vunpack.c.l.b16 %v7768
    %v8288 = vunpack.c.l.b16 %v7769
    %v8289 = vunpack.c.l.b16 %v7770
    %v8290 = vunpack.c.l.b16 %v7771
    %v8291 = vunpack.c.l.b16 %v7772
    %v8292 = vunpack.c.l.b16 %v7773
    %v8293 = vunpack.c.l.b16 %v7774
    %v8294 = vunpack.c.l.b16 %v7775
    %v8295 = vunpack.c.l.b16 %v7776
    %v8296 = vunpack.c.l.b16 %v7777
    %v8297 = vunpack.c.l.b16 %v7778
    %v8298 = vunpack.c.l.b16 %v7779
    %v8299 = vunpack.c.l.b16 %v7780
    %v8300 = vunpack.c.l.b16 %v7781
    %v8301 = vunpack.c.l.b16 %v7782
    %v8302 = vunpack.c.l.b16 %v7783
    %v8303 = vunpack.c.l.b16 %v7784
    %v8304 = vunpack.c.l.b16 %v7785
    %v8305 = vunpack.c.l.b16 %v7786
    %v8306 = vunpack.c.l.b16 %v7787
    %v8307 = vunpack.c.l.b16 %v7788
    %v8308 = vunpack.c.l.b16 %v7789
    %v8309 = vunpack.c.l.b16 %v7790
    %v8310 = vunpack.c.l.b16 %v7791
    %v8311 = vunpack.c.l.b16 %v7792
    %v8312 = vunpack.c.l.b16 %v7793
    %v8313 = vunpack.c.l.b16 %v7794
    %v8314 = vunpack.c.l.b16 %v7795
    %v8315 = vunpack.c.l.b16 %v7796
    %v8316 = vunpack.c.l.b16 %v7797
    %v8317 = vunpack.c.l.b16 %v7798
    %v8318 = vunpack.c.l.b16 %v7799
    %v8319 = vunpack.c.l.b16 %v7800
    %v8320 = vunpack.c.l.b16 %v7801
    %v8321 = vunpack.c.l.b16 %v7802
    %v8322 = vunpack.c.l.b16 %v7803
    %v8323 = vunpack.c.l.b16 %v7804
    %v8324 = vunpack.c.l.b16 %v7805
    %v8325 = vunpack.c.l.b16 %v7806
    %v8326 = vunpack.c.l.b16 %v7807
    %v8327 = vunpack.c.l.b16 %v7808
    %v8328 = vunpack.c.l.b16 %v7809
    %v8329 = vunpack.c.l.b16 %v7810
    %v8330 = vunpack.c.l.b16 %v7811
    %v8331 = vunpack.c.l.b16 %v7812
    %v8332 = vunpack.c.l.b16 %v7813
    %v8333 = vunpack.c.l.b16 %v7814
    %v8334 = vunpack.c.l.b16 %v7815
    %v8335 = vunpack.c.l.b16 %v7816
    %v8336 = vunpack.c.l.b16 %v7817
    %v8337 = vunpack.c.l.b16 %v7818
    %v8338 = vunpack.c.l.b16 %v7819
    %v8339 = vunpack.c.l.b16 %v7820
    %v8340 = vunpack.c.l.b16 %v7821
    %v8341 = vunpack.c.l.b16 %v7822
    %v8342 = vunpack.c.l.b16 %v7823
    %v8343 = vunpack.c.l.b16 %v7824
    %v8344 = vunpack.c.l.b16 %v7825
    %v8345 = vunpack.c.l.b16 %v7826
    %v8346 = vunpack.c.l.b16 %v7827
    %v8347 = vunpack.c.l.b16 %v7828
    %v8348 = vunpack.c.l.b16 %v7829
    %v8349 = vunpack.c.l.b16 %v7830
    %v8350 = vunpack.c.l.b16 %v7831
    %v8351 = vunpack.c.l.b16 %v7832
    %v8352 = vunpack.c.l.b16 %v7833
    %v8353 = vunpack.c.l.b16 %v7834
    %v8354 = vunpack.c.l.b16 %v7835
    %v8355 = vunpack.c.l.b16 %v7836
    %v8356 = vunpack.c.l.b16 %v7837
    %v8357 = vunpack.c.l.b16 %v7838
    %v8358 = vunpack.c.l.b16 %v7839
    %v8359 = vunpack.c.l.b16 %v7840
    %v8360 = vunpack.c.l.b16 %v7841
    %v8361 = vunpack.c.l.b16 %v7842
    %v8362 = vunpack.c.l.b16 %v7843
    %v8363 = vunpack.c.l.b16 %v7844
    %v8364 = vunpack.c.l.b16 %v7845
    %v8365 = vunpack.c.l.b16 %v7846
    %v8366 = vunpack.c.l.b16 %v7847
    %v8367 = vunpack.c.l.b16 %v7848
    %v8368 = vunpack.c.l.b16 %v7849
    %v8369 = vunpack.c.l.b16 %v7850
    %v8370 = vunpack.c.l.b16 %v7851
    %v8371 = vunpack.c.l.b16 %v7852
    %v8372 = vunpack.c.l.b16 %v7853
    %v8373 = vunpack.c.l.b16 %v7854
    %v8374 = vunpack.c.l.b16 %v7855
    %v8375 = vunpack.c.l.b16 %v7856
    %v8376 = vunpack.c.l.b16 %v7857
    %v8377 = vunpack.c.l.b16 %v7858
    %v8378 = vunpack.c.l.b16 %v7859
    %v8379 = vunpack.c.l.b16 %v7860
    %v8380 = vunpack.c.l.b16 %v7861
    %v8381 = vunpack.c.l.b16 %v7862
    %v8382 = vunpack.c.l.b16 %v7863
    %v8383 = vunpack.c.l.b16 %v7864
    %v8384 = vunpack.c.l.b16 %v7865
    %v8385 = vunpack.c.l.b16 %v7866
    %v8386 = vunpack.c.l.b16 %v7867
    %v8387 = vunpack.c.l.b16 %v7868
    %v8388 = vunpack.c.l.b16 %v7869
    %v8389 = vunpack.c.l.b16 %v7870
    %v8390 = vunpack.c.l.b16 %v7871
    %v8391 = vunpack.c.l.b16 %v7872
    %v8392 = vunpack.c.l.b16 %v7873
    %v8393 = vunpack.c.l.b16 %v7874
    %v8394 = vunpack.c.l.b16 %v7875
    %v8395 = vunpack.c.l.b16 %v7876
    %v8396 = vunpack.c.l.b16 %v7877
    %v8397 = vunpack.c.l.b16 %v7878
    %v8398 = vunpack.c.l.b16 %v7879
    %v8399 = vunpack.c.l.b16 %v7880
    %v8400 = vunpack.c.l.b16 %v7881
    %v8401 = vunpack.c.l.b16 %v7882
    %v8402 = vunpack.c.l.b16 %v7883
    %v8403 = vunpack.c.l.b16 %v7884
    %v8404 = vunpack.c.l.b16 %v7885
    %v8405 = vunpack.c.l.b16 %v7886
    %v8406 = vunpack.c.l.b16 %v7887
    %v8407 = vunpack.c.l.b16 %v7888
    %v8408 = vunpack.c.l.b16 %v7889
    %v8409 = vunpack.c.l.b16 %v7890
    %v8410 = vunpack.c.l.b16 %v7891
    %v8411 = vunpack.c.l.b16 %v7892
    %v8412 = vunpack.c.l.b16 %v7893
    %v8413 = vunpack.c.l.b16 %v7894
    %v8414 = vunpack.c.l.b16 %v7895
    %v8415 = vunpack.c.l.b16 %v7896
    %v8416 = vunpack.c.l.b16 %v7897
    %v8417 = vunpack.c.l.b16 %v7898
    %v8418 = vunpack.c.l.b16 %v7899
    %v8419 = vunpack.c.l.b16 %v7900
    %v8420 = vunpack.c.l.b16 %v7901
    %v8421 = vunpack.c.l.b16 %v7902
    %v8422 = vunpack.c.l.b16 %v7903
    %v8423 = vunpack.c.l.b16 %v7904
    %v8424 = vunpack.c.l.b16 %v7905
    %v8425 = vunpack.c.l.b16 %v7906
    %v8426 = vunpack.c.l.b16 %v7907
    %v8427 = vunpack.c.l.b16 %v7908
    %v8428 = vunpack.c.l.b16 %v7909
    %v8429 = vunpack.c.l.b16 %v7910
    %v8430 = vunpack.c.l.b16 %v7911
    %v8431 = vunpack.c.l.b16 %v7912
    %v8432 = vunpack.c.l.b16 %v7913
    %v8433 = vunpack.c.l.b16 %v7914
    %v8434 = vunpack.c.l.b16 %v7915
    %v8435 = vunpack.c.l.b16 %v7916
    %v8436 = vunpack.c.l.b16 %v7917
    %v8437 = vunpack.c.l.b16 %v7918
    %v8438 = vunpack.c.l.b16 %v7919
    %v8439 = vunpack.c.l.b16 %v7920
    %v8440 = vunpack.c.l.b16 %v7921
    %v8441 = vunpack.c.l.b16 %v7922
    %v8442 = vunpack.c.l.b16 %v7923
    %v8443 = vunpack.c.l.b16 %v7924
    %v8444 = vunpack.c.l.b16 %v7925
    %v8445 = vunpack.c.l.b16 %v7926
    %v8446 = vunpack.c.l.b16 %v7927
    %v8447 = vunpack.c.l.b16 %v7928
    %v8448 = vunpack.c.l.b16 %v7929
    %v8449 = vunpack.c.l.b16 %v7930
    %v8450 = vunpack.c.l.b16 %v7931
    %v8451 = vunpack.c.l.b16 %v7932
    %v8452 = vpack.c.b16 %v8197, %v8196
    %v8453 = vpack.c.b16 %v8199, %v8198
    %v8454 = vpack.c.b16 %v8201, %v8200
    %v8455 = vpack.c.b16 %v8203, %v8202
    %v8456 = vpack.c.b16 %v8205, %v8204
    %v8457 = vpack.c.b16 %v8207, %v8206
    %v8458 = vpack.c.b16 %v8209, %v8208
    %v8459 = vpack.c.b16 %v8211, %v8210
    %v8460 = vpack.c.b16 %v8213, %v8212
    %v8461 = vpack.c.b16 %v8215, %v8214
    %v8462 = vpack.c.b16 %v8217, %v8216
    %v8463 = vpack.c.b16 %v8219, %v8218
    %v8464 = vpack.c.b16 %v8221, %v8220
    %v8465 = vpack.c.b16 %v8223, %v8222
    %v8466 = vpack.c.b16 %v8225, %v8224
    %v8467 = vpack.c.b16 %v8227, %v8226
    %v8468 = vpack.c.b16 %v8229, %v8228
    %v8469 = vpack.c.b16 %v8231, %v8230
    %v8470 = vpack.c.b16 %v8233, %v8232
    %v8471 = vpack.c.b16 %v8235, %v8234
    %v8472 = vpack.c.b16 %v8237, %v8236
    %v8473 = vpack.c.b16 %v8239, %v8238
    %v8474 = vpack.c.b16 %v8241, %v8240
    %v8475 = vpack.c.b16 %v8243, %v8242
    %v8476 = vpack.c.b16 %v8245, %v8244
    %v8477 = vpack.c.b16 %v8247, %v8246
    %v8478 = vpack.c.b16 %v8249, %v8248
    %v8479 = vpack.c.b16 %v8251, %v8250
    %v8480 = vpack.c.b16 %v8253, %v8252
    %v8481 = vpack.c.b16 %v8255, %v8254
    %v8482 = vpack.c.b16 %v8257, %v8256
    %v8483 = vpack.c.b16 %v8259, %v8258
    %v8484 = vpack.c.b16 %v8261, %v8260
    %v8485 = vpack.c.b16 %v8263, %v8262
    %v8486 = vpack.c.b16 %v8265, %v8264
    %v8487 = vpack.c.b16 %v8267, %v8266
    %v8488 = vpack.c.b16 %v8269, %v8268
    %v8489 = vpack.c.b16 %v8271, %v8270
    %v8490 = vpack.c.b16 %v8273, %v8272
    %v8491 = vpack.c.b16 %v8275, %v8274
    %v8492 = vpack.c.b16 %v8277, %v8276
    %v8493 = vpack.c.b16 %v8279, %v8278
    %v8494 = vpack.c.b16 %v8281, %v8280
    %v8495 = vpack.c.b16 %v8283, %v8282
    %v8496 = vpack.c.b16 %v8285, %v8284
    %v8497 = vpack.c.b16 %v8287, %v8286
    %v8498 = vpack.c.b16 %v8289, %v8288
    %v8499 = vpack.c.b16 %v8291, %v8290
    %v8500 = vpack.c.b16 %v8293, %v8292
    %v8501 = vpack.c.b16 %v8295, %v8294
    %v8502 = vpack.c.b16 %v8297, %v8296
    %v8503 = vpack.c.b16 %v8299, %v8298
    %v8504 = vpack.c.b16 %v8301, %v8300
    %v8505 = vpack.c.b16 %v8303, %v8302
    %v8506 = vpack.c.b16 %v8305, %v8304
    %v8507 = vpack.c.b16 %v8307, %v8306
    %v8508 = vpack.c.b16 %v8309, %v8308
    %v8509 = vpack.c.b16 %v8311, %v8310
    %v8510 = vpack.c.b16 %v8313, %v8312
    %v8511 = vpack.c.b16 %v8315, %v8314
    %v8512 = vpack.c.b16 %v8317, %v8316
    %v8513 = vpack.c.b16 %v8319, %v8318
    %v8514 = vpack.c.b16 %v8321, %v8320
    %v8515 = vpack.c.b16 %v8323, %v8322
    %v8516 = vpack.c.b16 %v8325, %v8324
    %v8517 = vpack.c.b16 %v8327, %v8326
    %v8518 = vpack.c.b16 %v8329, %v8328
    %v8519 = vpack.c.b16 %v8331, %v8330
    %v8520 = vpack.c.b16 %v8333, %v8332
    %v8521 = vpack.c.b16 %v8335, %v8334
    %v8522 = vpack.c.b16 %v8337, %v8336
    %v8523 = vpack.c.b16 %v8339, %v8338
    %v8524 = vpack.c.b16 %v8341, %v8340
    %v8525 = vpack.c.b16 %v8343, %v8342
    %v8526 = vpack.c.b16 %v8345, %v8344
    %v8527 = vpack.c.b16 %v8347, %v8346
    %v8528 = vpack.c.b16 %v8349, %v8348
    %v8529 = vpack.c.b16 %v8351, %v8350
    %v8530 = vpack.c.b16 %v8353, %v8352
    %v8531 = vpack.c.b16 %v8355, %v8354
    %v8532 = vpack.c.b16 %v8357, %v8356
    %v8533 = vpack.c.b16 %v8359, %v8358
    %v8534 = vpack.c.b16 %v8361, %v8360
    %v8535 = vpack.c.b16 %v8363, %v8362
    %v8536 = vpack.c.b16 %v8365, %v8364
    %v8537 = vpack.c.b16 %v8367, %v8366
    %v8538 = vpack.c.b16 %v8369, %v8368
    %v8539 = vpack.c.b16 %v8371, %v8370
    %v8540 = vpack.c.b16 %v8373, %v8372
    %v8541 = vpack.c.b16 %v8375, %v8374
    %v8542 = vpack.c.b16 %v8377, %v8376
    %v8543 = vpack.c.b16 %v8379, %v8378
    %v8544 = vpack.c.b16 %v8381, %v8380
    %v8545 = vpack.c.b16 %v8383, %v8382
    %v8546 = vpack.c.b16 %v8385, %v8384
    %v8547 = vpack.c.b16 %v8387, %v8386
    %v8548 = vpack.c.b16 %v8389, %v8388
    %v8549 = vpack.c.b16 %v8391, %v8390
    %v8550 = vpack.c.b16 %v8393, %v8392
    %v8551 = vpack.c.b16 %v8395, %v8394
    %v8552 = vpack.c.b16 %v8397, %v8396
    %v8553 = vpack.c.b16 %v8399, %v8398
    %v8554 = vpack.c.b16 %v8401, %v8400
    %v8555 = vpack.c.b16 %v8403, %v8402
    %v8556 = vpack.c.b16 %v8405, %v8404
    %v8557 = vpack.c.b16 %v8407, %v8406
    %v8558 = vpack.c.b16 %v8409, %v8408
    %v8559 = vpack.c.b16 %v8411, %v8410
    %v8560 = vpack.c.b16 %v8413, %v8412
    %v8561 = vpack.c.b16 %v8415, %v8414
    %v8562 = vpack.c.b16 %v8417, %v8416
    %v8563 = vpack.c.b16 %v8419, %v8418
    %v8564 = vpack.c.b16 %v8421, %v8420
    %v8565 = vpack.c.b16 %v8423, %v8422
    %v8566 = vpack.c.b16 %v8425, %v8424
    %v8567 = vpack.c.b16 %v8427, %v8426
    %v8568 = vpack.c.b16 %v8429, %v8428
    %v8569 = vpack.c.b16 %v8431, %v8430
    %v8570 = vpack.c.b16 %v8433, %v8432
    %v8571 = vpack.c.b16 %v8435, %v8434
    %v8572 = vpack.c.b16 %v8437, %v8436
    %v8573 = vpack.c.b16 %v8439, %v8438
    %v8574 = vpack.c.b16 %v8441, %v8440
    %v8575 = vpack.c.b16 %v8443, %v8442
    %v8576 = vpack.c.b16 %v8445, %v8444
    %v8577 = vpack.c.b16 %v8447, %v8446
    %v8578 = vpack.c.b16 %v8449, %v8448
    %v8579 = vpack.c.b16 %v8451, %v8450
    %8708 = vmatprep.subr.bf16.mxu0 0
    %8709 = vmatpush1.bf16.msra.mxu0 %v8452
    %8710 = vmatprep.subr.bf16.mxu0 0
    %8711 = vmatpush1.bf16.msra.mxu0 %v8453
    %8712 = vmatprep.subr.bf16.mxu0 0
    %8713 = vmatpush1.bf16.msra.mxu0 %v8454
    %8714 = vmatprep.subr.bf16.mxu0 0
    %8715 = vmatpush1.bf16.msra.mxu0 %v8455
    %8716 = vmatprep.subr.bf16.mxu0 0
    %8717 = vmatpush1.bf16.msra.mxu0 %v8456
    %8718 = vmatprep.subr.bf16.mxu0 0
    %8719 = vmatpush1.bf16.msra.mxu0 %v8457
    %8720 = vmatprep.subr.bf16.mxu0 0
    %8721 = vmatpush1.bf16.msra.mxu0 %v8458
    %8722 = vmatprep.subr.bf16.mxu0 0
    %8723 = vmatpush1.bf16.msra.mxu0 %v8459
    %8724 = vmatprep.subr.bf16.mxu0 0
    %8725 = vmatpush1.bf16.msra.mxu0 %v8460
    %8726 = vmatprep.subr.bf16.mxu0 0
    %8727 = vmatpush1.bf16.msra.mxu0 %v8461
    %8728 = vmatprep.subr.bf16.mxu0 0
    %8729 = vmatpush1.bf16.msra.mxu0 %v8462
    %8730 = vmatprep.subr.bf16.mxu0 0
    %8731 = vmatpush1.bf16.msra.mxu0 %v8463
    %8732 = vmatprep.subr.bf16.mxu0 0
    %8733 = vmatpush1.bf16.msra.mxu0 %v8464
    %8734 = vmatprep.subr.bf16.mxu0 0
    %8735 = vmatpush1.bf16.msra.mxu0 %v8465
    %8736 = vmatprep.subr.bf16.mxu0 0
    %8737 = vmatpush1.bf16.msra.mxu0 %v8466
    %8738 = vmatprep.subr.bf16.mxu0 0
    %8739 = vmatpush1.bf16.msra.mxu0 %v8467
    %8740 = vmatprep.mubr.bf16.mxu0 %v7662
    %8741 = vmatmul.mubr.bf16.gmra.mrb[0].mxu0 %v7661
    %v8742 = vpop.f32.mrb[0].mxu0
    %v8743 = vadd.f32 %v7938, %v8742
    %v8744 = vpop.f32.mrb[0].mxu0
    %v8745 = vpop.f32.mrb[0].mxu0
    %v8746 = vpop.f32.mrb[0].mxu0
    %8747 = vdwg.mxu0
    %8748 = vmatprep.subr.bf16.mxu0 0
    %8749 = vmatpush1.bf16.msra.mxu0 %v8468
    %8750 = vmatprep.subr.bf16.mxu0 0
    %8751 = vmatpush1.bf16.msra.mxu0 %v8469
    %8752 = vmatprep.subr.bf16.mxu0 0
    %8753 = vmatpush1.bf16.msra.mxu0 %v8470
    %8754 = vmatprep.subr.bf16.mxu0 0
    %8755 = vmatpush1.bf16.msra.mxu0 %v8471
    %8756 = vmatprep.subr.bf16.mxu0 0
    %8757 = vmatpush1.bf16.msra.mxu0 %v8472
    %8758 = vmatprep.subr.bf16.mxu0 0
    %8759 = vmatpush1.bf16.msra.mxu0 %v8473
    %8760 = vmatprep.subr.bf16.mxu0 0
    %8761 = vmatpush1.bf16.msra.mxu0 %v8474
    %8762 = vmatprep.subr.bf16.mxu0 0
    %8763 = vmatpush1.bf16.msra.mxu0 %v8475
    %8764 = vmatprep.subr.bf16.mxu0 0
    %8765 = vmatpush1.bf16.msra.mxu0 %v8476
    %8766 = vmatprep.subr.bf16.mxu0 0
    %8767 = vmatpush1.bf16.msra.mxu0 %v8477
    %8768 = vmatprep.subr.bf16.mxu0 0
    %8769 = vmatpush1.bf16.msra.mxu0 %v8478
    %8770 = vmatprep.subr.bf16.mxu0 0
    %8771 = vmatpush1.bf16.msra.mxu0 %v8479
    %8772 = vmatprep.subr.bf16.mxu0 0
    %8773 = vmatpush1.bf16.msra.mxu0 %v8480
    %8774 = vmatprep.subr.bf16.mxu0 0
    %8775 = vmatpush1.bf16.msra.mxu0 %v8481
    %8776 = vmatprep.subr.bf16.mxu0 0
    %8777 = vmatpush1.bf16.msra.mxu0 %v8482
    %8778 = vmatprep.subr.bf16.mxu0 0
    %8779 = vmatpush1.bf16.msra.mxu0 %v8483
    %8780 = vmatprep.mubr.bf16.mxu0 %v7664
    %8781 = vmatmul.mubr.bf16.gmra.mrb[0].mxu0 %v7663
    %v8782 = vpop.f32.mrb[0].mxu0
    %v8783 = vadd.f32 %v8743, %v8782
    %v8784 = vpop.f32.mrb[0].mxu0
    %v8785 = vpop.f32.mrb[0].mxu0
    %v8786 = vpop.f32.mrb[0].mxu0
    %8787 = vdwg.mxu0
    %8788 = vmatprep.subr.bf16.mxu0 0
    %8789 = vmatpush1.bf16.msra.mxu0 %v8484
    %8790 = vmatprep.subr.bf16.mxu0 0
    %8791 = vmatpush1.bf16.msra.mxu0 %v8485
    %8792 = vmatprep.subr.bf16.mxu0 0
    %8793 = vmatpush1.bf16.msra.mxu0 %v8486
    %8794 = vmatprep.subr.bf16.mxu0 0
    %8795 = vmatpush1.bf16.msra.mxu0 %v8487
    %8796 = vmatprep.subr.bf16.mxu0 0
    %8797 = vmatpush1.bf16.msra.mxu0 %v8488
    %8798 = vmatprep.subr.bf16.mxu0 0
    %8799 = vmatpush1.bf16.msra.mxu0 %v8489
    %8800 = vmatprep.subr.bf16.mxu0 0
    %8801 = vmatpush1.bf16.msra.mxu0 %v8490
    %8802 = vmatprep.subr.bf16.mxu0 0
    %8803 = vmatpush1.bf16.msra.mxu0 %v8491
    %8804 = vmatprep.subr.bf16.mxu0 0
    %8805 = vmatpush1.bf16.msra.mxu0 %v8492
    %8806 = vmatprep.subr.bf16.mxu0 0
    %8807 = vmatpush1.bf16.msra.mxu0 %v8493
    %8808 = vmatprep.subr.bf16.mxu0 0
    %8809 = vmatpush1.bf16.msra.mxu0 %v8494
    %8810 = vmatprep.subr.bf16.mxu0 0
    %8811 = vmatpush1.bf16.msra.mxu0 %v8495
    %8812 = vmatprep.subr.bf16.mxu0 0
    %8813 = vmatpush1.bf16.msra.mxu0 %v8496
    %8814 = vmatprep.subr.bf16.mxu0 0
    %8815 = vmatpush1.bf16.msra.mxu0 %v8497
    %8816 = vmatprep.subr.bf16.mxu0 0
    %8817 = vmatpush1.bf16.msra.mxu0 %v8498
    %8818 = vmatprep.subr.bf16.mxu0 0
    %8819 = vmatpush1.bf16.msra.mxu0 %v8499
    %8820 = vmatprep.mubr.bf16.mxu0 %v7666
    %8821 = vmatmul.mubr.bf16.gmra.mrb[0].mxu0 %v7665
    %v8822 = vpop.f32.mrb[0].mxu0
    %v8823 = vadd.f32 %v8783, %v8822
    %v8824 = vpop.f32.mrb[0].mxu0
    %v8825 = vpop.f32.mrb[0].mxu0
    %v8826 = vpop.f32.mrb[0].mxu0
    %8827 = vdwg.mxu0
    %8828 = vmatprep.subr.bf16.mxu0 0
    %8829 = vmatpush1.bf16.msra.mxu0 %v8500
    %8830 = vmatprep.subr.bf16.mxu0 0
    %8831 = vmatpush1.bf16.msra.mxu0 %v8501
    %8832 = vmatprep.subr.bf16.mxu0 0
    %8833 = vmatpush1.bf16.msra.mxu0 %v8502
    %8834 = vmatprep.subr.bf16.mxu0 0
    %8835 = vmatpush1.bf16.msra.mxu0 %v8503
    %8836 = vmatprep.subr.bf16.mxu0 0
    %8837 = vmatpush1.bf16.msra.mxu0 %v8504
    %8838 = vmatprep.subr.bf16.mxu0 0
    %8839 = vmatpush1.bf16.msra.mxu0 %v8505
    %8840 = vmatprep.subr.bf16.mxu0 0
    %8841 = vmatpush1.bf16.msra.mxu0 %v8506
    %8842 = vmatprep.subr.bf16.mxu0 0
    %8843 = vmatpush1.bf16.msra.mxu0 %v8507
    %8844 = vmatprep.subr.bf16.mxu0 0
    %8845 = vmatpush1.bf16.msra.mxu0 %v8508
    %8846 = vmatprep.subr.bf16.mxu0 0
    %8847 = vmatpush1.bf16.msra.mxu0 %v8509
    %8848 = vmatprep.subr.bf16.mxu0 0
    %8849 = vmatpush1.bf16.msra.mxu0 %v8510
    %8850 = vmatprep.subr.bf16.mxu0 0
    %8851 = vmatpush1.bf16.msra.mxu0 %v8511
    %8852 = vmatprep.subr.bf16.mxu0 0
    %8853 = vmatpush1.bf16.msra.mxu0 %v8512
    %8854 = vmatprep.subr.bf16.mxu0 0
    %8855 = vmatpush1.bf16.msra.mxu0 %v8513
    %8856 = vmatprep.subr.bf16.mxu0 0
    %8857 = vmatpush1.bf16.msra.mxu0 %v8514
    %8858 = vmatprep.subr.bf16.mxu0 0
    %8859 = vmatpush1.bf16.msra.mxu0 %v8515
    %8860 = vmatprep.mubr.bf16.mxu0 %v7668
    %8861 = vmatmul.mubr.bf16.gmra.mrb[0].mxu0 %v7667
    %v8862 = vpop.f32.mrb[0].mxu0
    %v8863 = vadd.f32 %v8823, %v8862
    %v8864 = vpop.f32.mrb[0].mxu0
    %v8865 = vpop.f32.mrb[0].mxu0
    %v8866 = vpop.f32.mrb[0].mxu0
    %8867 = vdwg.mxu0
    %8868 = vmatprep.subr.bf16.mxu0 0
    %8869 = vmatpush1.bf16.msra.mxu0 %v8516
    %8870 = vmatprep.subr.bf16.mxu0 0
    %8871 = vmatpush1.bf16.msra.mxu0 %v8517
    %8872 = vmatprep.subr.bf16.mxu0 0
    %8873 = vmatpush1.bf16.msra.mxu0 %v8518
    %8874 = vmatprep.subr.bf16.mxu0 0
    %8875 = vmatpush1.bf16.msra.mxu0 %v8519
    %8876 = vmatprep.subr.bf16.mxu0 0
    %8877 = vmatpush1.bf16.msra.mxu0 %v8520
    %8878 = vmatprep.subr.bf16.mxu0 0
    %8879 = vmatpush1.bf16.msra.mxu0 %v8521
    %8880 = vmatprep.subr.bf16.mxu0 0
    %8881 = vmatpush1.bf16.msra.mxu0 %v8522
    %8882 = vmatprep.subr.bf16.mxu0 0
    %8883 = vmatpush1.bf16.msra.mxu0 %v8523
    %8884 = vmatprep.subr.bf16.mxu0 0
    %8885 = vmatpush1.bf16.msra.mxu0 %v8524
    %8886 = vmatprep.subr.bf16.mxu0 0
    %8887 = vmatpush1.bf16.msra.mxu0 %v8525
    %8888 = vmatprep.subr.bf16.mxu0 0
    %8889 = vmatpush1.bf16.msra.mxu0 %v8526
    %8890 = vmatprep.subr.bf16.mxu0 0
    %8891 = vmatpush1.bf16.msra.mxu0 %v8527
    %8892 = vmatprep.subr.bf16.mxu0 0
    %8893 = vmatpush1.bf16.msra.mxu0 %v8528
    %8894 = vmatprep.subr.bf16.mxu0 0
    %8895 = vmatpush1.bf16.msra.mxu0 %v8529
    %8896 = vmatprep.subr.bf16.mxu0 0
    %8897 = vmatpush1.bf16.msra.mxu0 %v8530
    %8898 = vmatprep.subr.bf16.mxu0 0
    %8899 = vmatpush1.bf16.msra.mxu0 %v8531
    %8900 = vmatprep.mubr.bf16.mxu0 %v7670
    %8901 = vmatmul.mubr.bf16.gmra.mrb[0].mxu0 %v7669
    %v8902 = vpop.f32.mrb[0].mxu0
    %v8903 = vadd.f32 %v8863, %v8902
    %v8904 = vpop.f32.mrb[0].mxu0
    %v8905 = vpop.f32.mrb[0].mxu0
    %v8906 = vpop.f32.mrb[0].mxu0
    %8907 = vdwg.mxu0
    %8908 = vmatprep.subr.bf16.mxu0 0
    %8909 = vmatpush1.bf16.msra.mxu0 %v8532
    %8910 = vmatprep.subr.bf16.mxu0 0
    %8911 = vmatpush1.bf16.msra.mxu0 %v8533
    %8912 = vmatprep.subr.bf16.mxu0 0
    %8913 = vmatpush1.bf16.msra.mxu0 %v8534
    %8914 = vmatprep.subr.bf16.mxu0 0
    %8915 = vmatpush1.bf16.msra.mxu0 %v8535
    %8916 = vmatprep.subr.bf16.mxu0 0
    %8917 = vmatpush1.bf16.msra.mxu0 %v8536
    %8918 = vmatprep.subr.bf16.mxu0 0
    %8919 = vmatpush1.bf16.msra.mxu0 %v8537
    %8920 = vmatprep.subr.bf16.mxu0 0
    %8921 = vmatpush1.bf16.msra.mxu0 %v8538
    %8922 = vmatprep.subr.bf16.mxu0 0
    %8923 = vmatpush1.bf16.msra.mxu0 %v8539
    %8924 = vmatprep.subr.bf16.mxu0 0
    %8925 = vmatpush1.bf16.msra.mxu0 %v8540
    %8926 = vmatprep.subr.bf16.mxu0 0
    %8927 = vmatpush1.bf16.msra.mxu0 %v8541
    %8928 = vmatprep.subr.bf16.mxu0 0
    %8929 = vmatpush1.bf16.msra.mxu0 %v8542
    %8930 = vmatprep.subr.bf16.mxu0 0
    %8931 = vmatpush1.bf16.msra.mxu0 %v8543
    %8932 = vmatprep.subr.bf16.mxu0 0
    %8933 = vmatpush1.bf16.msra.mxu0 %v8544
    %8934 = vmatprep.subr.bf16.mxu0 0
    %8935 = vmatpush1.bf16.msra.mxu0 %v8545
    %8936 = vmatprep.subr.bf16.mxu0 0
    %8937 = vmatpush1.bf16.msra.mxu0 %v8546
    %8938 = vmatprep.subr.bf16.mxu0 0
    %8939 = vmatpush1.bf16.msra.mxu0 %v8547
    %8940 = vmatprep.mubr.bf16.mxu0 %v7672
    %8941 = vmatmul.mubr.bf16.gmra.mrb[0].mxu0 %v7671
    %v8942 = vpop.f32.mrb[0].mxu0
    %v8943 = vadd.f32 %v8903, %v8942
    %v8944 = vpop.f32.mrb[0].mxu0
    %v8945 = vpop.f32.mrb[0].mxu0
    %v8946 = vpop.f32.mrb[0].mxu0
    %8947 = vdwg.mxu0
    %8948 = vmatprep.subr.bf16.mxu0 0
    %8949 = vmatpush1.bf16.msra.mxu0 %v8548
    %8950 = vmatprep.subr.bf16.mxu0 0
    %8951 = vmatpush1.bf16.msra.mxu0 %v8549
    %8952 = vmatprep.subr.bf16.mxu0 0
    %8953 = vmatpush1.bf16.msra.mxu0 %v8550
    %8954 = vmatprep.subr.bf16.mxu0 0
    %8955 = vmatpush1.bf16.msra.mxu0 %v8551
    %8956 = vmatprep.subr.bf16.mxu0 0
    %8957 = vmatpush1.bf16.msra.mxu0 %v8552
    %8958 = vmatprep.subr.bf16.mxu0 0
    %8959 = vmatpush1.bf16.msra.mxu0 %v8553
    %8960 = vmatprep.subr.bf16.mxu0 0
    %8961 = vmatpush1.bf16.msra.mxu0 %v8554
    %8962 = vmatprep.subr.bf16.mxu0 0
    %8963 = vmatpush1.bf16.msra.mxu0 %v8555
    %8964 = vmatprep.subr.bf16.mxu0 0
    %8965 = vmatpush1.bf16.msra.mxu0 %v8556
    %8966 = vmatprep.subr.bf16.mxu0 0
    %8967 = vmatpush1.bf16.msra.mxu0 %v8557
    %8968 = vmatprep.subr.bf16.mxu0 0
    %8969 = vmatpush1.bf16.msra.mxu0 %v8558
    %8970 = vmatprep.subr.bf16.mxu0 0
    %8971 = vmatpush1.bf16.msra.mxu0 %v8559
    %8972 = vmatprep.subr.bf16.mxu0 0
    %8973 = vmatpush1.bf16.msra.mxu0 %v8560
    %8974 = vmatprep.subr.bf16.mxu0 0
    %8975 = vmatpush1.bf16.msra.mxu0 %v8561
    %8976 = vmatprep.subr.bf16.mxu0 0
    %8977 = vmatpush1.bf16.msra.mxu0 %v8562
    %8978 = vmatprep.subr.bf16.mxu0 0
    %8979 = vmatpush1.bf16.msra.mxu0 %v8563
    %8980 = vmatprep.mubr.bf16.mxu0 %v7674
    %8981 = vmatmul.mubr.bf16.gmra.mrb[0].mxu0 %v7673
    %v8982 = vpop.f32.mrb[0].mxu0
    %v8983 = vadd.f32 %v8943, %v8982
    %v8984 = vpop.f32.mrb[0].mxu0
    %v8985 = vpop.f32.mrb[0].mxu0
    %v8986 = vpop.f32.mrb[0].mxu0
    %8987 = vdwg.mxu0
    %8988 = vmatprep.subr.bf16.mxu0 0
    %8989 = vmatpush1.bf16.msra.mxu0 %v8564
    %8990 = vmatprep.subr.bf16.mxu0 0
    %8991 = vmatpush1.bf16.msra.mxu0 %v8565
    %8992 = vmatprep.subr.bf16.mxu0 0
    %8993 = vmatpush1.bf16.msra.mxu0 %v8566
    %8994 = vmatprep.subr.bf16.mxu0 0
    %8995 = vmatpush1.bf16.msra.mxu0 %v8567
    %8996 = vmatprep.subr.bf16.mxu0 0
    %8997 = vmatpush1.bf16.msra.mxu0 %v8568
    %8998 = vmatprep.subr.bf16.mxu0 0
    %8999 = vmatpush1.bf16.msra.mxu0 %v8569
    %9000 = vmatprep.subr.bf16.mxu0 0
    %9001 = vmatpush1.bf16.msra.mxu0 %v8570
    %9002 = vmatprep.subr.bf16.mxu0 0
    %9003 = vmatpush1.bf16.msra.mxu0 %v8571
    %9004 = vmatprep.subr.bf16.mxu0 0
    %9005 = vmatpush1.bf16.msra.mxu0 %v8572
    %9006 = vmatprep.subr.bf16.mxu0 0
    %9007 = vmatpush1.bf16.msra.mxu0 %v8573
    %9008 = vmatprep.subr.bf16.mxu0 0
    %9009 = vmatpush1.bf16.msra.mxu0 %v8574
    %9010 = vmatprep.subr.bf16.mxu0 0
    %9011 = vmatpush1.bf16.msra.mxu0 %v8575
    %9012 = vmatprep.subr.bf16.mxu0 0
    %9013 = vmatpush1.bf16.msra.mxu0 %v8576
    %9014 = vmatprep.subr.bf16.mxu0 0
    %9015 = vmatpush1.bf16.msra.mxu0 %v8577
    %9016 = vmatprep.subr.bf16.mxu0 0
    %9017 = vmatpush1.bf16.msra.mxu0 %v8578
    %9018 = vmatprep.subr.bf16.mxu0 0
    %9019 = vmatpush1.bf16.msra.mxu0 %v8579
    %9020 = vmatprep.mubr.bf16.mxu0 %v7676
    %9021 = vmatmul.mubr.bf16.gmra.mrb[0].mxu0 %v7675
    %v9022 = vpop.f32.mrb[0].mxu0
    %v9023 = vadd.f32 %v8983, %v9022
    %v9024 = vpop.f32.mrb[0].mxu0
    %v9025 = vpop.f32.mrb[0].mxu0
    %v9026 = vpop.f32.mrb[0].mxu0
    %9027 = vdwg.mxu0
    %v9028 = vmax.f32 %v9023, 0.0
    %v9029 = vpack.c.bf16 %v9028, %v9028
    %v9030 = vld [vmem:[%s7] sm:$0xf]
    %v9031 = vld [vmem:[%s7 + $0x4] sm:$0xf]
    %v9032 = vld [vmem:[%s7 + $0x8] sm:$0xf]
    %v9033 = vld [vmem:[%s7 + $0xc] sm:$0xf]
    %v9034 = vld [vmem:[%s7 + $0x10] sm:$0xf]
    %v9035 = vld [vmem:[%s7 + $0x14] sm:$0xf]
    %v9036 = vld [vmem:[%s7 + $0x18] sm:$0xf]
    %v9037 = vld [vmem:[%s7 + $0x1c] sm:$0xf]
    %v9038 = vld [vmem:[%s7 + $0x20] sm:$0xf]
    %v9039 = vld [vmem:[%s7 + $0x24] sm:$0xf]
    %v9040 = vld [vmem:[%s7 + $0x28] sm:$0xf]
    %v9041 = vld [vmem:[%s7 + $0x2c] sm:$0xf]
    %v9042 = vld [vmem:[%s7 + $0x30] sm:$0xf]
    %v9043 = vld [vmem:[%s7 + $0x34] sm:$0xf]
    %v9044 = vld [vmem:[%s7 + $0x38] sm:$0xf]
    %v9045 = vld [vmem:[%s7 + $0x3c] sm:$0xf]
    %v9046 = vld [vmem:[%s8] sm:$0x1]
    %v9048 = vlaneseq
    %v9049 = vshrl.u32 %v9048, 7
    %v9050 = vsub.s32 0, %v9049
    %v9051 = vrot.slane %v9046, %v9050
    %v9069 = vunpack.c.l.b16 %v9030
    %v9070 = vunpack.c.l.b16 %v9031
    %v9071 = vunpack.c.l.b16 %v9032
    %v9072 = vunpack.c.l.b16 %v9033
    %v9073 = vunpack.c.l.b16 %v9034
    %v9074 = vunpack.c.l.b16 %v9035
    %v9075 = vunpack.c.l.b16 %v9036
    %v9076 = vunpack.c.l.b16 %v9037
    %v9077 = vunpack.c.l.b16 %v9038
    %v9078 = vunpack.c.l.b16 %v9039
    %v9079 = vunpack.c.l.b16 %v9040
    %v9080 = vunpack.c.l.b16 %v9041
    %v9081 = vunpack.c.l.b16 %v9042
    %v9082 = vunpack.c.l.b16 %v9043
    %v9083 = vunpack.c.l.b16 %v9044
    %v9084 = vunpack.c.l.b16 %v9045
    %v9085 = vpack.c.b16 %v9070, %v9069
    %v9086 = vpack.c.b16 %v9072, %v9071
    %v9087 = vpack.c.b16 %v9074, %v9073
    %v9088 = vpack.c.b16 %v9076, %v9075
    %v9089 = vpack.c.b16 %v9078, %v9077
    %v9090 = vpack.c.b16 %v9080, %v9079
    %v9091 = vpack.c.b16 %v9082, %v9081
    %v9092 = vpack.c.b16 %v9084, %v9083
    %9101 = vmatprep.subr.bf16.mxu0 0
    %9102 = vmatpush1.bf16.msra.mxu0 %v9085
    %9103 = vmatprep.subr.bf16.mxu0 0
    %9104 = vmatpush1.bf16.msra.mxu0 %v9086
    %9105 = vmatprep.subr.bf16.mxu0 0
    %9106 = vmatpush1.bf16.msra.mxu0 %v9087
    %9107 = vmatprep.subr.bf16.mxu0 0
    %9108 = vmatpush1.bf16.msra.mxu0 %v9088
    %9109 = vmatprep.subr.bf16.mxu0 0
    %9110 = vmatpush1.bf16.msra.mxu0 %v9089
    %9111 = vmatprep.subr.bf16.mxu0 0
    %9112 = vmatpush1.bf16.msra.mxu0 %v9090
    %9113 = vmatprep.subr.bf16.mxu0 0
    %9114 = vmatpush1.bf16.msra.mxu0 %v9091
    %9115 = vmatprep.subr.bf16.mxu0 0
    %9116 = vmatpush1.bf16.msra.mxu0 %v9092
    %9117 = vmatprep.subr.bf16.mxu0 0
    %9118 = vmatpush1.bf16.msra.mxu0 0
    %9119 = vmatprep.subr.bf16.mxu0 0
    %9120 = vmatpush1.bf16.msra.mxu0 0
    %9121 = vmatprep.subr.bf16.mxu0 0
    %9122 = vmatpush1.bf16.msra.mxu0 0
    %9123 = vmatprep.subr.bf16.mxu0 0
    %9124 = vmatpush1.bf16.msra.mxu0 0
    %9125 = vmatprep.subr.bf16.mxu0 0
    %9126 = vmatpush1.bf16.msra.mxu0 0
    %9127 = vmatprep.subr.bf16.mxu0 0
    %9128 = vmatpush1.bf16.msra.mxu0 0
    %9129 = vmatprep.subr.bf16.mxu0 0
    %9130 = vmatpush1.bf16.msra.mxu0 0
    %9131 = vmatprep.subr.bf16.mxu0 0
    %9132 = vmatpush1.bf16.msra.mxu0 0
    %9133 = vmatprep.mubr.bf16.mxu0 0
    %9134 = vmatmul.mubr.bf16.gmra.mrb[0].mxu0 %v9029
    %v9135 = vpop.f32.mrb[0].mxu0
    %v9136 = vadd.f32 %v9051, %v9135
    %v9137 = vpop.f32.mrb[0].mxu0
    %v9138 = vpop.f32.mrb[0].mxu0
    %v9139 = vpop.f32.mrb[0].mxu0
    %9140 = vdwg.mxu0
    %v9141 = vsel %vm382, %v9136, -inf
    %9142 = vmax.xlane.f32.xlu0 %v9141
    %v9143 = vpop.xlane.xlu0 %9142
    %v9144 = vsub.f32 %v9136, %v9143
    %v9145 = vmul.f32 %v9144, 1.442695
    %v9146 = vpow.pop %v9145
    %v9147 = vsel %vm382, %v9146, 0.0
    %9148 = vadd.xlane.f32.xlu0 %v9147
    %v9149 = vpop.xlane.xlu0 %9148
    %v9150 = vrcp.pop %v9149
    %v9151 = vmul.f32 %v9146, %v9150
    %9152 = vst [vmem:[#allocation4] sm:$0x3] %v9151
    // Predicated region
    $region38: #{eegcnn_forward.1} parent=1 // pred_check
      _
    $region39: #{eegcnn_forward.1} parent=1 // pred_check_branch
      %9154 = sbr.rel (0) target = $region41
    $region40: #{eegcnn_forward.1} parent=1 // pred_region
      %s9156 = ssub.s32 32, 32
      %9157 = vsyncadd [#allocation5], %s9156
      %s9159 = sshll.u32 [#allocation4], 4
      %s9160 = int_to_ptr.vmem [resolvable:$true] %s9159
      %9162 = dma.vmem_to_hbm [thread:$0]  %s9160, 32, %s9, [#allocation5]
    $region41: #{eegcnn_forward.1} parent=1 // pred_fallthru
      _
    // Predicated region
    $region42: #{eegcnn_forward.1} parent=1 // pred_check
      _
    $region43: #{eegcnn_forward.1} parent=1 // pred_check_branch
      %9164 = sbr.rel (0) target = $region45
    $region44: #{eegcnn_forward.1} parent=1 // pred_region
      %9165 = dma.done [#allocation5], 32
    $region45: #{eegcnn_forward.1} parent=1 // pred_fallthru
      _
    %9166 = vsyncpa [#allocation5], 1

</llo_original>
